<compile_context>
chip_gen: v7x
topology: tpu7x:2x2x1
jax: 0.10.0
libtpu: 0.0.40
codegen_flags: <defaults>
</compile_context>

<pallas_src>
import jax
import jax.numpy as jnp
from jax.experimental import pallas as pl
from jax.experimental.pallas import tpu as pltpu

LEAKY_SLOPE = 0.01      # torch.nn.functional.leaky_relu default
BN_EPS = 1e-5           # torch.nn.BatchNorm2d default


def _leaky(v):
    return jnp.where(v >= 0, v, LEAKY_SLOPE * v)


# ------------------------------ Pallas kernel --------------------------------
def _make_res_block_kernel(NB, H, W, C):
    """Fused res-block kernel processing NB images per grid step."""
    C4, C16 = C // 4, C // 16
    HW = H * W
    M = NB * HW                      # GEMM M dimension for conv1 / conv2 / conv3
    HP, WP = H + 2, W + 2

    def kernel(x_ref, w1_ref, b1_ref, w2_ref, b2_ref, w3_ref, b3_ref,
               scale_ref, o_ref, h1p_ref):
        # ---- conv1: 1x1, C -> C/4 (+bias, leaky) as one (M,C)x(C,C4) GEMM ----
        x_bf = x_ref[...].reshape(M, C).astype(jnp.bfloat16)
        h1 = jnp.dot(x_bf, w1_ref[...], preferred_element_type=jnp.float32)
        h1 = _leaky(h1 + b1_ref[...]).astype(jnp.bfloat16)         # (M, C4) bf16

        # ---- conv2: 3x3 pad=1 as ONE im2col GEMM ------------------------------
        # bf16 halo scratch holds NB stacked (H+2, W+2, C4) bands.  Zero only
        # the 1-element border; the interior is fully overwritten every step.
        zrow = jnp.zeros((1, WP, C4), jnp.bfloat16)
        zcol = jnp.zeros((H, 1, C4), jnp.bfloat16)
        for n in range(NB):
            r0 = n * HP
            h1p_ref[pl.ds(r0, 1), :, :] = zrow                     # top border
            h1p_ref[pl.ds(r0 + H + 1, 1), :, :] = zrow             # bottom border
            h1p_ref[pl.ds(r0 + 1, H), pl.ds(0, 1), :] = zcol       # left border
            h1p_ref[pl.ds(r0 + 1, H), pl.ds(W + 1, 1), :] = zcol   # right border
            h1p_ref[pl.ds(r0 + 1, H), pl.ds(1, W), :] = (
                h1[n * HW:(n + 1) * HW].reshape(H, W, C4))

        # Gather the 9 shifted taps into a lane-dense (M, 9*C4) im2col operand;
        # a single K=9*C4 GEMM replaces nine K=C4 fill-dominated GEMMs.
        cols = []
        for n in range(NB):
            r0 = n * HP
            taps = [h1p_ref[pl.ds(r0 + ki, H), pl.ds(kj, W), :]
                    for ki in range(3) for kj in range(3)]
            cols.append(jnp.concatenate(taps, axis=-1).reshape(HW, 9 * C4))
        col = cols[0] if NB == 1 else jnp.concatenate(cols, axis=0)

        h2 = jnp.dot(col, w2_ref[...], preferred_element_type=jnp.float32)
        h2 = _leaky(h2 + b2_ref[...]).astype(jnp.bfloat16)          # (M, C16)

        # ---- conv3 (BN scale pre-folded) + residual*scale + leaky -------------
        h3 = jnp.dot(h2, w3_ref[...], preferred_element_type=jnp.float32)
        xin = x_ref[...].reshape(M, C)        # re-read residual late (VMEM hit)
        y = _leaky(h3 + b3_ref[...] + xin * scale_ref[...])
        o_ref[...] = y.reshape(NB, H, W, C).astype(o_ref.dtype)

    return kernel


# ------------------------------- wrappers --------------------------------------
def _is_megacore_chip():
    """True for chips whose JAX device exposes 2 TensorCores (e.g. v7x)."""
    try:
        kind = jax.devices()[0].device_kind.lower()
    except Exception:
        return False
    return "v7" in kind


def res_block_forward_nhwc(x_nhwc, params):
    """Fused Res_block forward, NHWC in / NHWC out (BN in eval mode)."""
    N, H, W, C = x_nhwc.shape
    assert C % 16 == 0, "Res_block requires in_channels divisible by 16"
    C4, C16 = C // 4, C // 16

    bn = params["bn"]
    scale = bn["gamma"] / jnp.sqrt(bn["running_var"] + BN_EPS)
    shift = bn["beta"] - bn["running_mean"] * scale

    # HWIO conv weights -> GEMM operands (bf16 for the MXU, f32 biases).
    w1 = params["c1"]["w"].reshape(C, C4).astype(jnp.bfloat16)
    b1 = params["c1"]["b"].reshape(1, C4).astype(jnp.float32)
    w2 = params["c2"]["w"].reshape(9 * C4, C16).astype(jnp.bfloat16)  # im2col layout
    b2 = params["c2"]["b"].reshape(1, C16).astype(jnp.float32)
    # Fold BN into conv3:  leaky((xin + h2@W3 + b3)*s + t)
    #                    = leaky(h2@(W3*s) + (b3*s + t) + xin*s)
    w3 = (params["c3"]["w"].reshape(C16, C) * scale[None, :]).astype(jnp.bfloat16)
    b3 = (params["c3"]["b"] * scale + shift).reshape(1, C).astype(jnp.float32)
    scale2 = scale.reshape(1, C).astype(jnp.float32)

    # Grid per generation: fold batch into GEMM-M on single-TC chips (v5e/v6e),
    # keep an N-parallel grid on megacore chips (v7x: 2 TensorCores / chip).
    if _is_megacore_chip() and N > 1:
        NB, sem = 1, ("parallel",)
    else:
        NB, sem = N, ("arbitrary",)
    grid = (N // NB,)

    grid_spec = pltpu.PrefetchScalarGridSpec(
        num_scalar_prefetch=0,
        grid=grid,
        in_specs=[
            pl.BlockSpec((NB, H, W, C), lambda n: (n, 0, 0, 0)),    # x
            pl.BlockSpec((C, C4), lambda n: (0, 0)),                # w1
            pl.BlockSpec((1, C4), lambda n: (0, 0)),                # b1
            pl.BlockSpec((9 * C4, C16), lambda n: (0, 0)),          # w2 (im2col)
            pl.BlockSpec((1, C16), lambda n: (0, 0)),               # b2
            pl.BlockSpec((C16, C), lambda n: (0, 0)),               # w3 (BN folded)
            pl.BlockSpec((1, C), lambda n: (0, 0)),                 # b3 (BN folded)
            pl.BlockSpec((1, C), lambda n: (0, 0)),                 # BN scale (residual)
        ],
        out_specs=pl.BlockSpec((NB, H, W, C), lambda n: (n, 0, 0, 0)),
        # bf16 halo scratch: NB stacked (H+2) x (W+2) x C4 bands.
        scratch_shapes=[pltpu.VMEM((NB * (H + 2), W + 2, C4), jnp.bfloat16)],
    )

    # Output kept f32 to match the PyTorch module; switch to bf16 if the
    # downstream consumer tolerates it (saves ~25% of kernel HBM traffic).
    return pl.pallas_call(
        _make_res_block_kernel(NB, H, W, C),
        out_shape=jax.ShapeDtypeStruct((N, H, W, C), jnp.float32),
        grid_spec=grid_spec,
        compiler_params=pltpu.CompilerParams(dimension_semantics=sem),
    )(x_nhwc, w1, b1, w2, b2, w3, b3, scale2)


def res_block_forward_nchw(x_nchw, params):
    """NCHW compatibility wrapper.  The transposes cost ~2x the kernel's HBM
    traffic; keep activations NHWC end-to-end and call the NHWC entry instead."""
    x = jnp.transpose(x_nchw, (0, 2, 3, 1))
    y = res_block_forward_nhwc(x, params)
    return jnp.transpose(y, (0, 3, 1, 2))


# ------------------------- pure-JAX reference (f32, NHWC) ---------------------
def res_block_ref_nhwc(x, params):
    def conv(h, w_hwio, b, pad):
        y = jax.lax.conv_general_dilated(
            h, w_hwio, window_strides=(1, 1),
            padding=[(pad, pad), (pad, pad)],
            dimension_numbers=("NHWC", "HWIO", "NHWC"))
        return y + b

    h = _leaky(conv(x, params["c1"]["w"], params["c1"]["b"], 0))
    h = _leaky(conv(h, params["c2"]["w"], params["c2"]["b"], 1))
    h = conv(h, params["c3"]["w"], params["c3"]["b"], 0)
    z = x + h
    bn = params["bn"]
    sc = bn["gamma"] / jnp.sqrt(bn["running_var"] + BN_EPS)
    z = (z - bn["running_mean"]) * sc + bn["beta"]
    return _leaky(z)


# ------------------------------- params init ----------------------------------
def init_res_block_params(key, c):
    ks = jax.random.split(key, 7)

    def conv_init(k, kh, kw, ci, co):
        kw_, kb_ = jax.random.split(k)
        bound = 1.0 / float((kh * kw * ci) ** 0.5)      # PyTorch-like init
        w = jax.random.uniform(kw_, (kh, kw, ci, co), jnp.float32, -bound, bound)
        b = jax.random.uniform(kb_, (co,), jnp.float32, -bound, bound)
        return {"w": w, "b": b}

    return {
        "c1": conv_init(ks[0], 1, 1, c, c // 4),
        "c2": conv_init(ks[1], 3, 3, c // 4, c // 16),
        "c3": conv_init(ks[2], 1, 1, c // 16, c),
        "bn": {
            "gamma": 1.0 + 0.1 * jax.random.normal(ks[3], (c,), jnp.float32),
            "beta": 0.1 * jax.random.normal(ks[4], (c,), jnp.float32),
            "running_mean": 0.05 * jax.random.normal(ks[5], (c,), jnp.float32),
            "running_var": 1.0 + 0.1 * jax.random.uniform(ks[6], (c,), jnp.float32),
        },
    }


# ----------------------------------- main --------------------------------------
if __name__ == "__main__":
    N, H, W, C = 2, 16, 16, 128                      # NHWC end-to-end (no transposes)

    key = jax.random.PRNGKey(0)
    kx, kp = jax.random.split(key)
    params = init_res_block_params(kp, C)
    x = jax.random.normal(kx, (N, H, W, C), jnp.float32)

    fwd = jax.jit(res_block_forward_nhwc)
    out = jax.block_until_ready(fwd(x, params))

    ref = res_block_ref_nhwc(x, params)

    assert out.shape == (N, H, W, C)
    assert bool(jnp.all(jnp.isfinite(out)))
    rel_l2 = float(jnp.linalg.norm(out - ref) / jnp.linalg.norm(ref))
    assert rel_l2 < 0.03, f"relative L2 error too large: {rel_l2}"

    print("KERNEL_OK")
</pallas_src>

<mosaic_0001>
module attributes {stable_mosaic.version = 11 : i64} {
  func.func @kernel(%arg0: i32, %arg1: memref<2x16x16x128xf32, #tpu.memory_space<vmem>>, %arg2: memref<128x32xbf16, #tpu.memory_space<vmem>>, %arg3: memref<1x32xf32, #tpu.memory_space<vmem>>, %arg4: memref<288x8xbf16, #tpu.memory_space<vmem>>, %arg5: memref<1x8xf32, #tpu.memory_space<vmem>>, %arg6: memref<8x128xbf16, #tpu.memory_space<vmem>>, %arg7: memref<1x128xf32, #tpu.memory_space<vmem>>, %arg8: memref<1x128xf32, #tpu.memory_space<vmem>>, %arg9: memref<2x16x16x128xf32, #tpu.memory_space<vmem>>, %arg10: memref<36x18x32xbf16, #tpu.memory_space<vmem>>) attributes {dimension_semantics = [#tpu.dimension_semantics<arbitrary>], iteration_bounds = array<i64: 1>, scalar_prefetch = 0 : i64, scratch_operands = 1 : i64, tpu.core_type = #tpu.core_type<tc>, window_params = [{transform_indices = @transform_0, window_bounds = array<i64: 2, 16, 16, 128>}, {pipeline_mode = #tpu.pipeline_mode<synchronous>, transform_indices = @transform_1, window_bounds = array<i64: 128, 32>}, {pipeline_mode = #tpu.pipeline_mode<synchronous>, transform_indices = @transform_2, window_bounds = array<i64: 1, 32>}, {pipeline_mode = #tpu.pipeline_mode<synchronous>, transform_indices = @transform_3, window_bounds = array<i64: 288, 8>}, {pipeline_mode = #tpu.pipeline_mode<synchronous>, transform_indices = @transform_4, window_bounds = array<i64: 1, 8>}, {pipeline_mode = #tpu.pipeline_mode<synchronous>, transform_indices = @transform_5, window_bounds = array<i64: 8, 128>}, {pipeline_mode = #tpu.pipeline_mode<synchronous>, transform_indices = @transform_6, window_bounds = array<i64: 1, 128>}, {pipeline_mode = #tpu.pipeline_mode<synchronous>, transform_indices = @transform_7, window_bounds = array<i64: 1, 128>}, {transform_indices = @transform_8, window_bounds = array<i64: 2, 16, 16, 128>}]} {
    %c0 = arith.constant 0 : index
    %c0_0 = arith.constant 0 : index
    %c0_1 = arith.constant 0 : index
    %c0_2 = arith.constant 0 : index
    %0 = vector.load %arg1[%c0, %c0_0, %c0_1, %c0_2] : memref<2x16x16x128xf32, #tpu.memory_space<vmem>>, vector<2x16x16x128xf32>
    %1 = vector.shape_cast %0 : vector<2x16x16x128xf32> to vector<512x128xf32>
    %2 = arith.truncf %1 : vector<512x128xf32> to vector<512x128xbf16>
    %c0_3 = arith.constant 0 : index
    %c0_4 = arith.constant 0 : index
    %3 = vector.load %arg2[%c0_3, %c0_4] : memref<128x32xbf16, #tpu.memory_space<vmem>>, vector<128x32xbf16>
    %cst = arith.constant dense<0.000000e+00> : vector<512x32xf32>
    %4 = tpu.matmul %2, %3, %cst {dimension_numbers = #tpu.dot_dimension_numbers<[1], [0], [0], [1], [0, 0, 1, 1], [], []>} : vector<512x128xbf16>, vector<128x32xbf16>, vector<512x32xf32> -> vector<512x32xf32>
    %c0_5 = arith.constant 0 : index
    %c0_6 = arith.constant 0 : index
    %5 = vector.load %arg3[%c0_5, %c0_6] : memref<1x32xf32, #tpu.memory_space<vmem>>, vector<1x32xf32>
    %6 = vector.broadcast %5 : vector<1x32xf32> to vector<512x32xf32>
    %7 = arith.addf %4, %6 : vector<512x32xf32>
    %cst_7 = arith.constant 0.000000e+00 : f32
    %8 = vector.broadcast %cst_7 : f32 to vector<512x32xf32>
    %9 = arith.cmpf oge, %7, %8 : vector<512x32xf32>
    %cst_8 = arith.constant 0.00999999977 : f32
    %10 = vector.broadcast %cst_8 : f32 to vector<512x32xf32>
    %11 = arith.mulf %10, %7 : vector<512x32xf32>
    %12 = arith.select %9, %7, %11 : vector<512x32xi1>, vector<512x32xf32>
    %13 = arith.truncf %12 : vector<512x32xf32> to vector<512x32xbf16>
    %cst_9 = arith.constant 0.000000e+00 : bf16
    %14 = vector.broadcast %cst_9 : bf16 to vector<1x18x32xbf16>
    %cst_10 = arith.constant 0.000000e+00 : bf16
    %15 = vector.broadcast %cst_10 : bf16 to vector<16x1x32xbf16>
    %c0_11 = arith.constant 0 : index
    %c0_12 = arith.constant 0 : index
    %c0_13 = arith.constant 0 : index
    %16 = vector.load %arg10[%c0_11, %c0_12, %c0_13] : memref<36x18x32xbf16, #tpu.memory_space<vmem>>, vector<1x18x32xbf16>
    tpu.vector_store %arg10[%c0_11, %c0_12, %c0_13], %14 {strides = array<i32>} : memref<36x18x32xbf16, #tpu.memory_space<vmem>>, vector<1x18x32xbf16>,
    %c17 = arith.constant 17 : index
    %c0_14 = arith.constant 0 : index
    %c0_15 = arith.constant 0 : index
    %17 = vector.load %arg10[%c17, %c0_14, %c0_15] : memref<36x18x32xbf16, #tpu.memory_space<vmem>>, vector<1x18x32xbf16>
    tpu.vector_store %arg10[%c17, %c0_14, %c0_15], %14 {strides = array<i32>} : memref<36x18x32xbf16, #tpu.memory_space<vmem>>, vector<1x18x32xbf16>,
    %c1 = arith.constant 1 : index
    %c0_16 = arith.constant 0 : index
    %c0_17 = arith.constant 0 : index
    %18 = vector.load %arg10[%c1, %c0_16, %c0_17] : memref<36x18x32xbf16, #tpu.memory_space<vmem>>, vector<16x1x32xbf16>
    tpu.vector_store %arg10[%c1, %c0_16, %c0_17], %15 {strides = array<i32>} : memref<36x18x32xbf16, #tpu.memory_space<vmem>>, vector<16x1x32xbf16>,
    %c1_18 = arith.constant 1 : index
    %c17_19 = arith.constant 17 : index
    %c0_20 = arith.constant 0 : index
    %19 = vector.load %arg10[%c1_18, %c17_19, %c0_20] : memref<36x18x32xbf16, #tpu.memory_space<vmem>>, vector<16x1x32xbf16>
    tpu.vector_store %arg10[%c1_18, %c17_19, %c0_20], %15 {strides = array<i32>} : memref<36x18x32xbf16, #tpu.memory_space<vmem>>, vector<16x1x32xbf16>,
    %20 = vector.extract_strided_slice %13 {offsets = [0, 0], sizes = [256, 32], strides = [1, 1]} : vector<512x32xbf16> to vector<256x32xbf16>
    %21 = vector.shape_cast %20 : vector<256x32xbf16> to vector<16x16x32xbf16>
    %c1_21 = arith.constant 1 : index
    %c1_22 = arith.constant 1 : index
    %c0_23 = arith.constant 0 : index
    %22 = vector.load %arg10[%c1_21, %c1_22, %c0_23] : memref<36x18x32xbf16, #tpu.memory_space<vmem>>, vector<16x16x32xbf16>
    tpu.vector_store %arg10[%c1_21, %c1_22, %c0_23], %21 {strides = array<i32>} : memref<36x18x32xbf16, #tpu.memory_space<vmem>>, vector<16x16x32xbf16>,
    %c18 = arith.constant 18 : index
    %c0_24 = arith.constant 0 : index
    %c0_25 = arith.constant 0 : index
    %23 = vector.load %arg10[%c18, %c0_24, %c0_25] : memref<36x18x32xbf16, #tpu.memory_space<vmem>>, vector<1x18x32xbf16>
    tpu.vector_store %arg10[%c18, %c0_24, %c0_25], %14 {strides = array<i32>} : memref<36x18x32xbf16, #tpu.memory_space<vmem>>, vector<1x18x32xbf16>,
    %c35 = arith.constant 35 : index
    %c0_26 = arith.constant 0 : index
    %c0_27 = arith.constant 0 : index
    %24 = vector.load %arg10[%c35, %c0_26, %c0_27] : memref<36x18x32xbf16, #tpu.memory_space<vmem>>, vector<1x18x32xbf16>
    tpu.vector_store %arg10[%c35, %c0_26, %c0_27], %14 {strides = array<i32>} : memref<36x18x32xbf16, #tpu.memory_space<vmem>>, vector<1x18x32xbf16>,
    %c19 = arith.constant 19 : index
    %c0_28 = arith.constant 0 : index
    %c0_29 = arith.constant 0 : index
    %25 = vector.load %arg10[%c19, %c0_28, %c0_29] : memref<36x18x32xbf16, #tpu.memory_space<vmem>>, vector<16x1x32xbf16>
    tpu.vector_store %arg10[%c19, %c0_28, %c0_29], %15 {strides = array<i32>} : memref<36x18x32xbf16, #tpu.memory_space<vmem>>, vector<16x1x32xbf16>,
    %c19_30 = arith.constant 19 : index
    %c17_31 = arith.constant 17 : index
    %c0_32 = arith.constant 0 : index
    %26 = vector.load %arg10[%c19_30, %c17_31, %c0_32] : memref<36x18x32xbf16, #tpu.memory_space<vmem>>, vector<16x1x32xbf16>
    tpu.vector_store %arg10[%c19_30, %c17_31, %c0_32], %15 {strides = array<i32>} : memref<36x18x32xbf16, #tpu.memory_space<vmem>>, vector<16x1x32xbf16>,
    %27 = vector.extract_strided_slice %13 {offsets = [256, 0], sizes = [256, 32], strides = [1, 1]} : vector<512x32xbf16> to vector<256x32xbf16>
    %28 = vector.shape_cast %27 : vector<256x32xbf16> to vector<16x16x32xbf16>
    %c19_33 = arith.constant 19 : index
    %c1_34 = arith.constant 1 : index
    %c0_35 = arith.constant 0 : index
    %29 = vector.load %arg10[%c19_33, %c1_34, %c0_35] : memref<36x18x32xbf16, #tpu.memory_space<vmem>>, vector<16x16x32xbf16>
    tpu.vector_store %arg10[%c19_33, %c1_34, %c0_35], %28 {strides = array<i32>} : memref<36x18x32xbf16, #tpu.memory_space<vmem>>, vector<16x16x32xbf16>,
    %c0_36 = arith.constant 0 : index
    %c0_37 = arith.constant 0 : index
    %c0_38 = arith.constant 0 : index
    %30 = vector.load %arg10[%c0_36, %c0_37, %c0_38] : memref<36x18x32xbf16, #tpu.memory_space<vmem>>, vector<16x16x32xbf16>
    %c0_39 = arith.constant 0 : index
    %c1_40 = arith.constant 1 : index
    %c0_41 = arith.constant 0 : index
    %31 = vector.load %arg10[%c0_39, %c1_40, %c0_41] : memref<36x18x32xbf16, #tpu.memory_space<vmem>>, vector<16x16x32xbf16>
    %c0_42 = arith.constant 0 : index
    %c2 = arith.constant 2 : index
    %c0_43 = arith.constant 0 : index
    %32 = vector.load %arg10[%c0_42, %c2, %c0_43] : memref<36x18x32xbf16, #tpu.memory_space<vmem>>, vector<16x16x32xbf16>
    %c1_44 = arith.constant 1 : index
    %c0_45 = arith.constant 0 : index
    %c0_46 = arith.constant 0 : index
    %33 = vector.load %arg10[%c1_44, %c0_45, %c0_46] : memref<36x18x32xbf16, #tpu.memory_space<vmem>>, vector<16x16x32xbf16>
    %c1_47 = arith.constant 1 : index
    %c1_48 = arith.constant 1 : index
    %c0_49 = arith.constant 0 : index
    %34 = vector.load %arg10[%c1_47, %c1_48, %c0_49] : memref<36x18x32xbf16, #tpu.memory_space<vmem>>, vector<16x16x32xbf16>
    %c1_50 = arith.constant 1 : index
    %c2_51 = arith.constant 2 : index
    %c0_52 = arith.constant 0 : index
    %35 = vector.load %arg10[%c1_50, %c2_51, %c0_52] : memref<36x18x32xbf16, #tpu.memory_space<vmem>>, vector<16x16x32xbf16>
    %c2_53 = arith.constant 2 : index
    %c0_54 = arith.constant 0 : index
    %c0_55 = arith.constant 0 : index
    %36 = vector.load %arg10[%c2_53, %c0_54, %c0_55] : memref<36x18x32xbf16, #tpu.memory_space<vmem>>, vector<16x16x32xbf16>
    %c2_56 = arith.constant 2 : index
    %c1_57 = arith.constant 1 : index
    %c0_58 = arith.constant 0 : index
    %37 = vector.load %arg10[%c2_56, %c1_57, %c0_58] : memref<36x18x32xbf16, #tpu.memory_space<vmem>>, vector<16x16x32xbf16>
    %c2_59 = arith.constant 2 : index
    %c2_60 = arith.constant 2 : index
    %c0_61 = arith.constant 0 : index
    %38 = vector.load %arg10[%c2_59, %c2_60, %c0_61] : memref<36x18x32xbf16, #tpu.memory_space<vmem>>, vector<16x16x32xbf16>
    %39 = tpu.concatenate %30, %31, %32, %33, %34, %35, %36, %37, %38 in 2 : vector<16x16x32xbf16>, vector<16x16x32xbf16>, vector<16x16x32xbf16>, vector<16x16x32xbf16>, vector<16x16x32xbf16>, vector<16x16x32xbf16>, vector<16x16x32xbf16>, vector<16x16x32xbf16>, vector<16x16x32xbf16> -> vector<16x16x288xbf16>
    %40 = vector.shape_cast %39 : vector<16x16x288xbf16> to vector<256x288xbf16>
    %c18_62 = arith.constant 18 : index
    %c0_63 = arith.constant 0 : index
    %c0_64 = arith.constant 0 : index
    %41 = vector.load %arg10[%c18_62, %c0_63, %c0_64] : memref<36x18x32xbf16, #tpu.memory_space<vmem>>, vector<16x16x32xbf16>
    %c18_65 = arith.constant 18 : index
    %c1_66 = arith.constant 1 : index
    %c0_67 = arith.constant 0 : index
    %42 = vector.load %arg10[%c18_65, %c1_66, %c0_67] : memref<36x18x32xbf16, #tpu.memory_space<vmem>>, vector<16x16x32xbf16>
    %c18_68 = arith.constant 18 : index
    %c2_69 = arith.constant 2 : index
    %c0_70 = arith.constant 0 : index
    %43 = vector.load %arg10[%c18_68, %c2_69, %c0_70] : memref<36x18x32xbf16, #tpu.memory_space<vmem>>, vector<16x16x32xbf16>
    %c19_71 = arith.constant 19 : index
    %c0_72 = arith.constant 0 : index
    %c0_73 = arith.constant 0 : index
    %44 = vector.load %arg10[%c19_71, %c0_72, %c0_73] : memref<36x18x32xbf16, #tpu.memory_space<vmem>>, vector<16x16x32xbf16>
    %c19_74 = arith.constant 19 : index
    %c1_75 = arith.constant 1 : index
    %c0_76 = arith.constant 0 : index
    %45 = vector.load %arg10[%c19_74, %c1_75, %c0_76] : memref<36x18x32xbf16, #tpu.memory_space<vmem>>, vector<16x16x32xbf16>
    %c19_77 = arith.constant 19 : index
    %c2_78 = arith.constant 2 : index
    %c0_79 = arith.constant 0 : index
    %46 = vector.load %arg10[%c19_77, %c2_78, %c0_79] : memref<36x18x32xbf16, #tpu.memory_space<vmem>>, vector<16x16x32xbf16>
    %c20 = arith.constant 20 : index
    %c0_80 = arith.constant 0 : index
    %c0_81 = arith.constant 0 : index
    %47 = vector.load %arg10[%c20, %c0_80, %c0_81] : memref<36x18x32xbf16, #tpu.memory_space<vmem>>, vector<16x16x32xbf16>
    %c20_82 = arith.constant 20 : index
    %c1_83 = arith.constant 1 : index
    %c0_84 = arith.constant 0 : index
    %48 = vector.load %arg10[%c20_82, %c1_83, %c0_84] : memref<36x18x32xbf16, #tpu.memory_space<vmem>>, vector<16x16x32xbf16>
    %c20_85 = arith.constant 20 : index
    %c2_86 = arith.constant 2 : index
    %c0_87 = arith.constant 0 : index
    %49 = vector.load %arg10[%c20_85, %c2_86, %c0_87] : memref<36x18x32xbf16, #tpu.memory_space<vmem>>, vector<16x16x32xbf16>
    %50 = tpu.concatenate %41, %42, %43, %44, %45, %46, %47, %48, %49 in 2 : vector<16x16x32xbf16>, vector<16x16x32xbf16>, vector<16x16x32xbf16>, vector<16x16x32xbf16>, vector<16x16x32xbf16>, vector<16x16x32xbf16>, vector<16x16x32xbf16>, vector<16x16x32xbf16>, vector<16x16x32xbf16> -> vector<16x16x288xbf16>
    %51 = vector.shape_cast %50 : vector<16x16x288xbf16> to vector<256x288xbf16>
    %52 = tpu.concatenate %40, %51 in 0 : vector<256x288xbf16>, vector<256x288xbf16> -> vector<512x288xbf16>
    %c0_88 = arith.constant 0 : index
    %c0_89 = arith.constant 0 : index
    %53 = vector.load %arg4[%c0_88, %c0_89] : memref<288x8xbf16, #tpu.memory_space<vmem>>, vector<288x8xbf16>
    %cst_90 = arith.constant dense<0.000000e+00> : vector<512x8xf32>
    %54 = tpu.matmul %52, %53, %cst_90 {dimension_numbers = #tpu.dot_dimension_numbers<[1], [0], [0], [1], [0, 0, 1, 1], [], []>} : vector<512x288xbf16>, vector<288x8xbf16>, vector<512x8xf32> -> vector<512x8xf32>
    %c0_91 = arith.constant 0 : index
    %c0_92 = arith.constant 0 : index
    %55 = vector.load %arg5[%c0_91, %c0_92] : memref<1x8xf32, #tpu.memory_space<vmem>>, vector<1x8xf32>
    %56 = vector.broadcast %55 : vector<1x8xf32> to vector<512x8xf32>
    %57 = arith.addf %54, %56 : vector<512x8xf32>
    %cst_93 = arith.constant 0.000000e+00 : f32
    %58 = vector.broadcast %cst_93 : f32 to vector<512x8xf32>
    %59 = arith.cmpf oge, %57, %58 : vector<512x8xf32>
    %cst_94 = arith.constant 0.00999999977 : f32
    %60 = vector.broadcast %cst_94 : f32 to vector<512x8xf32>
    %61 = arith.mulf %60, %57 : vector<512x8xf32>
    %62 = arith.select %59, %57, %61 : vector<512x8xi1>, vector<512x8xf32>
    %63 = arith.truncf %62 : vector<512x8xf32> to vector<512x8xbf16>
    %c0_95 = arith.constant 0 : index
    %c0_96 = arith.constant 0 : index
    %64 = vector.load %arg6[%c0_95, %c0_96] : memref<8x128xbf16, #tpu.memory_space<vmem>>, vector<8x128xbf16>
    %cst_97 = arith.constant dense<0.000000e+00> : vector<512x128xf32>
    %65 = tpu.matmul %63, %64, %cst_97 {dimension_numbers = #tpu.dot_dimension_numbers<[1], [0], [0], [1], [0, 0, 1, 1], [], []>} : vector<512x8xbf16>, vector<8x128xbf16>, vector<512x128xf32> -> vector<512x128xf32>
    %c0_98 = arith.constant 0 : index
    %c0_99 = arith.constant 0 : index
    %c0_100 = arith.constant 0 : index
    %c0_101 = arith.constant 0 : index
    %66 = vector.load %arg1[%c0_98, %c0_99, %c0_100, %c0_101] : memref<2x16x16x128xf32, #tpu.memory_space<vmem>>, vector<2x16x16x128xf32>
    %67 = vector.shape_cast %66 : vector<2x16x16x128xf32> to vector<512x128xf32>
    %c0_102 = arith.constant 0 : index
    %c0_103 = arith.constant 0 : index
    %68 = vector.load %arg7[%c0_102, %c0_103] : memref<1x128xf32, #tpu.memory_space<vmem>>, vector<1x128xf32>
    %69 = vector.broadcast %68 : vector<1x128xf32> to vector<512x128xf32>
    %70 = arith.addf %65, %69 : vector<512x128xf32>
    %c0_104 = arith.constant 0 : index
    %c0_105 = arith.constant 0 : index
    %71 = vector.load %arg8[%c0_104, %c0_105] : memref<1x128xf32, #tpu.memory_space<vmem>>, vector<1x128xf32>
    %72 = vector.broadcast %71 : vector<1x128xf32> to vector<512x128xf32>
    %73 = arith.mulf %67, %72 : vector<512x128xf32>
    %74 = arith.addf %70, %73 : vector<512x128xf32>
    %cst_106 = arith.constant 0.000000e+00 : f32
    %75 = vector.broadcast %cst_106 : f32 to vector<512x128xf32>
    %76 = arith.cmpf oge, %74, %75 : vector<512x128xf32>
    %cst_107 = arith.constant 0.00999999977 : f32
    %77 = vector.broadcast %cst_107 : f32 to vector<512x128xf32>
    %78 = arith.mulf %77, %74 : vector<512x128xf32>
    %79 = arith.select %76, %74, %78 : vector<512x128xi1>, vector<512x128xf32>
    %80 = vector.shape_cast %79 : vector<512x128xf32> to vector<2x16x16x128xf32>
    %c0_108 = arith.constant 0 : index
    %c0_109 = arith.constant 0 : index
    %c0_110 = arith.constant 0 : index
    %c0_111 = arith.constant 0 : index
    %81 = vector.load %arg9[%c0_108, %c0_109, %c0_110, %c0_111] : memref<2x16x16x128xf32, #tpu.memory_space<vmem>>, vector<2x16x16x128xf32>
    tpu.vector_store %arg9[%c0_108, %c0_109, %c0_110, %c0_111], %80 {strides = array<i32>} : memref<2x16x16x128xf32, #tpu.memory_space<vmem>>, vector<2x16x16x128xf32>,
    return
  }
  func.func @transform_0(%arg0: i32) -> (i32, i32, i32, i32) {
    %c0_i32 = arith.constant 0 : i32
    %c0_i32_0 = arith.constant 0 : i32
    %c0_i32_1 = arith.constant 0 : i32
    %c0_i32_2 = arith.constant 0 : i32
    return %arg0, %c0_i32, %c0_i32_0, %c0_i32_1 : i32, i32, i32, i32
  }
  func.func @transform_1(%arg0: i32) -> (i32, i32) {
    %c0_i32 = arith.constant 0 : i32
    %c0_i32_0 = arith.constant 0 : i32
    %c0_i32_1 = arith.constant 0 : i32
    return %c0_i32, %c0_i32_0 : i32, i32
  }
  func.func @transform_2(%arg0: i32) -> (i32, i32) {
    %c0_i32 = arith.constant 0 : i32
    %c0_i32_0 = arith.constant 0 : i32
    %c0_i32_1 = arith.constant 0 : i32
    return %c0_i32, %c0_i32_0 : i32, i32
  }
  func.func @transform_3(%arg0: i32) -> (i32, i32) {
    %c0_i32 = arith.constant 0 : i32
    %c0_i32_0 = arith.constant 0 : i32
    %c0_i32_1 = arith.constant 0 : i32
    return %c0_i32, %c0_i32_0 : i32, i32
  }
  func.func @transform_4(%arg0: i32) -> (i32, i32) {
    %c0_i32 = arith.constant 0 : i32
    %c0_i32_0 = arith.constant 0 : i32
    %c0_i32_1 = arith.constant 0 : i32
    return %c0_i32, %c0_i32_0 : i32, i32
  }
  func.func @transform_5(%arg0: i32) -> (i32, i32) {
    %c0_i32 = arith.constant 0 : i32
    %c0_i32_0 = arith.constant 0 : i32
    %c0_i32_1 = arith.constant 0 : i32
    return %c0_i32, %c0_i32_0 : i32, i32
  }
  func.func @transform_6(%arg0: i32) -> (i32, i32) {
    %c0_i32 = arith.constant 0 : i32
    %c0_i32_0 = arith.constant 0 : i32
    %c0_i32_1 = arith.constant 0 : i32
    return %c0_i32, %c0_i32_0 : i32, i32
  }
  func.func @transform_7(%arg0: i32) -> (i32, i32) {
    %c0_i32 = arith.constant 0 : i32
    %c0_i32_0 = arith.constant 0 : i32
    %c0_i32_1 = arith.constant 0 : i32
    return %c0_i32, %c0_i32_0 : i32, i32
  }
  func.func @transform_8(%arg0: i32) -> (i32, i32, i32, i32) {
    %c0_i32 = arith.constant 0 : i32
    %c0_i32_0 = arith.constant 0 : i32
    %c0_i32_1 = arith.constant 0 : i32
    %c0_i32_2 = arith.constant 0 : i32
    return %arg0, %c0_i32, %c0_i32_0, %c0_i32_1 : i32, i32, i32, i32
  }
}

</mosaic_0001>

<llo_original>
// kernel: res_block_forward_nhwc.1
$region0: #{res_block_forward_nhwc.1}
  #allocation0 [shape = 'u32[]', space=smem, size = 0x4, offset = 0x4, fixed_abs, tag = 'smem constant byte address 0x4 - core index']
  #allocation1 [shape = 'u32[144,128]{1,0:T(1,128)}', space=vmem, size = 0x12000, scoped, tag = 'internal scratch']
  #allocation2 [shape = 'bf16[36,18,32]{2,1,0:T(8,128)(2,1)}', space=vmem, size = 0x36000, scoped, tag = 'scratch operand']
  %s0 = inlined_call_operand.hbm [shape: f32[2,16,16,128], index: 0, kind: input, shape index: {}]
  %s1 = inlined_call_operand.vmem [shape: bf16[128,32], index: 1, kind: input, shape index: {}]
  %s2 = inlined_call_operand.vmem [shape: f32[1,32], index: 2, kind: input, shape index: {}]
  %s3 = inlined_call_operand.vmem [shape: bf16[288,8], index: 3, kind: input, shape index: {}]
  %s4 = inlined_call_operand.vmem [shape: f32[1,8], index: 4, kind: input, shape index: {}]
  %s5 = inlined_call_operand.vmem [shape: bf16[8,128], index: 5, kind: input, shape index: {}]
  %s6 = inlined_call_operand.vmem [shape: f32[1,128], index: 6, kind: input, shape index: {}]
  %s7 = inlined_call_operand.vmem [shape: f32[1,128], index: 7, kind: input, shape index: {}]
  %s8 = inlined_call_operand.hbm [shape: f32[2,16,16,128], index: 8, kind: output, shape index: {}]
  %s9 = sld [smem:[#allocation0]]
  $region46: #{res_block_forward_nhwc.1} parent=0
    _
  %s11 = ssub.s32 1, %s9
  %s12 = scalar_select 0, %s11, %s9
  $region1: #{res_block_forward_nhwc.1} parent=0
    #allocation3 [shape = 'u8[262144]{0}', space=vmem, size = 0x40000, scoped, tag = 'input window, operand 0, single buffered']
    #allocation4 [shape = 's32[1]{0}', space=sflag, size = 0x4, scoped, tag = 'scoped memory for res_block_forward_nhwc.1']
    #allocation5 [shape = 's32[1]{0}', space=sflag, size = 0x4, scoped, tag = 'scoped memory for res_block_forward_nhwc.1']
    #allocation6 [shape = 'u8[262144]{0}', space=vmem, size = 0x40000, scoped, tag = 'output window, operand 0, single buffered']
    %13 = vsyncpa [#allocation4], 0
    %14 = vsyncpa [#allocation5], 0
    // Predicated region
    $region2: #{res_block_forward_nhwc.1} parent=1 // pred_check
      _
    $region3: #{res_block_forward_nhwc.1} parent=1 // pred_check_branch
      %16 = sbr.rel (0) target = $region5
    $region4: #{res_block_forward_nhwc.1} parent=1 // pred_region
      %s18 = ssub.s32 8192, 8192
      %19 = vsyncadd [#allocation4], %s18
      %s20 = sshll.u32 [#allocation3], 4
      %s21 = int_to_ptr.vmem [resolvable:$true] %s20
      %26 = dma.hbm_to_vmem [thread:$0]  %s0, 8192, %s21, [#allocation4], 128, 128, 8
    $region5: #{res_block_forward_nhwc.1} parent=1 // pred_fallthru
      _
    // Predicated region
    $region6: #{res_block_forward_nhwc.1} parent=1 // pred_check
      _
    $region7: #{res_block_forward_nhwc.1} parent=1 // pred_check_branch
      %28 = sbr.rel (0) target = $region9
    $region8: #{res_block_forward_nhwc.1} parent=1 // pred_region
      _
    $region9: #{res_block_forward_nhwc.1} parent=1 // pred_fallthru
      _
    // Predicated region
    $region10: #{res_block_forward_nhwc.1} parent=1 // pred_check
      _
    $region11: #{res_block_forward_nhwc.1} parent=1 // pred_check_branch
      %30 = sbr.rel (0) target = $region13
    $region12: #{res_block_forward_nhwc.1} parent=1 // pred_region
      _
    $region13: #{res_block_forward_nhwc.1} parent=1 // pred_fallthru
      _
    // Predicated region
    $region14: #{res_block_forward_nhwc.1} parent=1 // pred_check
      _
    $region15: #{res_block_forward_nhwc.1} parent=1 // pred_check_branch
      %32 = sbr.rel (0) target = $region17
    $region16: #{res_block_forward_nhwc.1} parent=1 // pred_region
      _
    $region17: #{res_block_forward_nhwc.1} parent=1 // pred_fallthru
      _
    // Predicated region
    $region18: #{res_block_forward_nhwc.1} parent=1 // pred_check
      _
    $region19: #{res_block_forward_nhwc.1} parent=1 // pred_check_branch
      %34 = sbr.rel (0) target = $region21
    $region20: #{res_block_forward_nhwc.1} parent=1 // pred_region
      _
    $region21: #{res_block_forward_nhwc.1} parent=1 // pred_fallthru
      _
    // Predicated region
    $region22: #{res_block_forward_nhwc.1} parent=1 // pred_check
      _
    $region23: #{res_block_forward_nhwc.1} parent=1 // pred_check_branch
      %36 = sbr.rel (0) target = $region25
    $region24: #{res_block_forward_nhwc.1} parent=1 // pred_region
      _
    $region25: #{res_block_forward_nhwc.1} parent=1 // pred_fallthru
      _
    // Predicated region
    $region26: #{res_block_forward_nhwc.1} parent=1 // pred_check
      _
    $region27: #{res_block_forward_nhwc.1} parent=1 // pred_check_branch
      %38 = sbr.rel (0) target = $region29
    $region28: #{res_block_forward_nhwc.1} parent=1 // pred_region
      _
    $region29: #{res_block_forward_nhwc.1} parent=1 // pred_fallthru
      _
    // Predicated region
    $region30: #{res_block_forward_nhwc.1} parent=1 // pred_check
      _
    $region31: #{res_block_forward_nhwc.1} parent=1 // pred_check_branch
      %40 = sbr.rel (0) target = $region33
    $region32: #{res_block_forward_nhwc.1} parent=1 // pred_region
      _
    $region33: #{res_block_forward_nhwc.1} parent=1 // pred_fallthru
      _
    // Predicated region
    $region34: #{res_block_forward_nhwc.1} parent=1 // pred_check
      _
    $region35: #{res_block_forward_nhwc.1} parent=1 // pred_check_branch
      %42 = sbr.rel (0) target = $region37
    $region36: #{res_block_forward_nhwc.1} parent=1 // pred_region
      %43 = dma.done [#allocation4], 8192
    $region37: #{res_block_forward_nhwc.1} parent=1 // pred_fallthru
      _
    %v45 = vld [vmem:[#allocation3] sm:$0xff]
    %v46 = vld [vmem:[#allocation3 + $0x8] sm:$0xff]
    %v47 = vld [vmem:[#allocation3 + $0x10] sm:$0xff]
    %v48 = vld [vmem:[#allocation3 + $0x18] sm:$0xff]
    %v49 = vld [vmem:[#allocation3 + $0x20] sm:$0xff]
    %v50 = vld [vmem:[#allocation3 + $0x28] sm:$0xff]
    %v51 = vld [vmem:[#allocation3 + $0x30] sm:$0xff]
    %v52 = vld [vmem:[#allocation3 + $0x38] sm:$0xff]
    %v53 = vld [vmem:[#allocation3 + $0x40] sm:$0xff]
    %v54 = vld [vmem:[#allocation3 + $0x48] sm:$0xff]
    %v55 = vld [vmem:[#allocation3 + $0x50] sm:$0xff]
    %v56 = vld [vmem:[#allocation3 + $0x58] sm:$0xff]
    %v57 = vld [vmem:[#allocation3 + $0x60] sm:$0xff]
    %v58 = vld [vmem:[#allocation3 + $0x68] sm:$0xff]
    %v59 = vld [vmem:[#allocation3 + $0x70] sm:$0xff]
    %v60 = vld [vmem:[#allocation3 + $0x78] sm:$0xff]
    %v61 = vld [vmem:[#allocation3 + $0x80] sm:$0xff]
    %v62 = vld [vmem:[#allocation3 + $0x88] sm:$0xff]
    %v63 = vld [vmem:[#allocation3 + $0x90] sm:$0xff]
    %v64 = vld [vmem:[#allocation3 + $0x98] sm:$0xff]
    %v65 = vld [vmem:[#allocation3 + $0xa0] sm:$0xff]
    %v66 = vld [vmem:[#allocation3 + $0xa8] sm:$0xff]
    %v67 = vld [vmem:[#allocation3 + $0xb0] sm:$0xff]
    %v68 = vld [vmem:[#allocation3 + $0xb8] sm:$0xff]
    %v69 = vld [vmem:[#allocation3 + $0xc0] sm:$0xff]
    %v70 = vld [vmem:[#allocation3 + $0xc8] sm:$0xff]
    %v71 = vld [vmem:[#allocation3 + $0xd0] sm:$0xff]
    %v72 = vld [vmem:[#allocation3 + $0xd8] sm:$0xff]
    %v73 = vld [vmem:[#allocation3 + $0xe0] sm:$0xff]
    %v74 = vld [vmem:[#allocation3 + $0xe8] sm:$0xff]
    %v75 = vld [vmem:[#allocation3 + $0xf0] sm:$0xff]
    %v76 = vld [vmem:[#allocation3 + $0xf8] sm:$0xff]
    %v77 = vld [vmem:[#allocation3 + $0x100] sm:$0xff]
    %v78 = vld [vmem:[#allocation3 + $0x108] sm:$0xff]
    %v79 = vld [vmem:[#allocation3 + $0x110] sm:$0xff]
    %v80 = vld [vmem:[#allocation3 + $0x118] sm:$0xff]
    %v81 = vld [vmem:[#allocation3 + $0x120] sm:$0xff]
    %v82 = vld [vmem:[#allocation3 + $0x128] sm:$0xff]
    %v83 = vld [vmem:[#allocation3 + $0x130] sm:$0xff]
    %v84 = vld [vmem:[#allocation3 + $0x138] sm:$0xff]
    %v85 = vld [vmem:[#allocation3 + $0x140] sm:$0xff]
    %v86 = vld [vmem:[#allocation3 + $0x148] sm:$0xff]
    %v87 = vld [vmem:[#allocation3 + $0x150] sm:$0xff]
    %v88 = vld [vmem:[#allocation3 + $0x158] sm:$0xff]
    %v89 = vld [vmem:[#allocation3 + $0x160] sm:$0xff]
    %v90 = vld [vmem:[#allocation3 + $0x168] sm:$0xff]
    %v91 = vld [vmem:[#allocation3 + $0x170] sm:$0xff]
    %v92 = vld [vmem:[#allocation3 + $0x178] sm:$0xff]
    %v93 = vld [vmem:[#allocation3 + $0x180] sm:$0xff]
    %v94 = vld [vmem:[#allocation3 + $0x188] sm:$0xff]
    %v95 = vld [vmem:[#allocation3 + $0x190] sm:$0xff]
    %v96 = vld [vmem:[#allocation3 + $0x198] sm:$0xff]
    %v97 = vld [vmem:[#allocation3 + $0x1a0] sm:$0xff]
    %v98 = vld [vmem:[#allocation3 + $0x1a8] sm:$0xff]
    %v99 = vld [vmem:[#allocation3 + $0x1b0] sm:$0xff]
    %v100 = vld [vmem:[#allocation3 + $0x1b8] sm:$0xff]
    %v101 = vld [vmem:[#allocation3 + $0x1c0] sm:$0xff]
    %v102 = vld [vmem:[#allocation3 + $0x1c8] sm:$0xff]
    %v103 = vld [vmem:[#allocation3 + $0x1d0] sm:$0xff]
    %v104 = vld [vmem:[#allocation3 + $0x1d8] sm:$0xff]
    %v105 = vld [vmem:[#allocation3 + $0x1e0] sm:$0xff]
    %v106 = vld [vmem:[#allocation3 + $0x1e8] sm:$0xff]
    %v107 = vld [vmem:[#allocation3 + $0x1f0] sm:$0xff]
    %v108 = vld [vmem:[#allocation3 + $0x1f8] sm:$0xff]
    %v109 = vpack.c.bf16 %v46, %v45
    %v110 = vpack.c.bf16 %v48, %v47
    %v111 = vpack.c.bf16 %v50, %v49
    %v112 = vpack.c.bf16 %v52, %v51
    %v113 = vpack.c.bf16 %v54, %v53
    %v114 = vpack.c.bf16 %v56, %v55
    %v115 = vpack.c.bf16 %v58, %v57
    %v116 = vpack.c.bf16 %v60, %v59
    %v117 = vpack.c.bf16 %v62, %v61
    %v118 = vpack.c.bf16 %v64, %v63
    %v119 = vpack.c.bf16 %v66, %v65
    %v120 = vpack.c.bf16 %v68, %v67
    %v121 = vpack.c.bf16 %v70, %v69
    %v122 = vpack.c.bf16 %v72, %v71
    %v123 = vpack.c.bf16 %v74, %v73
    %v124 = vpack.c.bf16 %v76, %v75
    %v125 = vpack.c.bf16 %v78, %v77
    %v126 = vpack.c.bf16 %v80, %v79
    %v127 = vpack.c.bf16 %v82, %v81
    %v128 = vpack.c.bf16 %v84, %v83
    %v129 = vpack.c.bf16 %v86, %v85
    %v130 = vpack.c.bf16 %v88, %v87
    %v131 = vpack.c.bf16 %v90, %v89
    %v132 = vpack.c.bf16 %v92, %v91
    %v133 = vpack.c.bf16 %v94, %v93
    %v134 = vpack.c.bf16 %v96, %v95
    %v135 = vpack.c.bf16 %v98, %v97
    %v136 = vpack.c.bf16 %v100, %v99
    %v137 = vpack.c.bf16 %v102, %v101
    %v138 = vpack.c.bf16 %v104, %v103
    %v139 = vpack.c.bf16 %v106, %v105
    %v140 = vpack.c.bf16 %v108, %v107
    %v141 = vld [vmem:[%s1] sm:$0xf]
    %v142 = vld [vmem:[%s1 + $0x4] sm:$0xf]
    %v143 = vld [vmem:[%s1 + $0x8] sm:$0xf]
    %v144 = vld [vmem:[%s1 + $0xc] sm:$0xf]
    %v145 = vld [vmem:[%s1 + $0x10] sm:$0xf]
    %v146 = vld [vmem:[%s1 + $0x14] sm:$0xf]
    %v147 = vld [vmem:[%s1 + $0x18] sm:$0xf]
    %v148 = vld [vmem:[%s1 + $0x1c] sm:$0xf]
    %v149 = vld [vmem:[%s1 + $0x20] sm:$0xf]
    %v150 = vld [vmem:[%s1 + $0x24] sm:$0xf]
    %v151 = vld [vmem:[%s1 + $0x28] sm:$0xf]
    %v152 = vld [vmem:[%s1 + $0x2c] sm:$0xf]
    %v153 = vld [vmem:[%s1 + $0x30] sm:$0xf]
    %v154 = vld [vmem:[%s1 + $0x34] sm:$0xf]
    %v155 = vld [vmem:[%s1 + $0x38] sm:$0xf]
    %v156 = vld [vmem:[%s1 + $0x3c] sm:$0xf]
    %v157 = vld [vmem:[%s2] sm:$0x1]
    %v159 = vlaneseq
    %v160 = vshrl.u32 %v159, 7
    %v161 = vsub.s32 0, %v160
    %v162 = vrot.slane %v157, %v161
    %v180 = vunpack.c.l.b16 %v141
    %v181 = vunpack.c.l.b16 %v142
    %v182 = vunpack.c.l.b16 %v143
    %v183 = vunpack.c.l.b16 %v144
    %v184 = vunpack.c.l.b16 %v145
    %v185 = vunpack.c.l.b16 %v146
    %v186 = vunpack.c.l.b16 %v147
    %v187 = vunpack.c.l.b16 %v148
    %v188 = vunpack.c.l.b16 %v149
    %v189 = vunpack.c.l.b16 %v150
    %v190 = vunpack.c.l.b16 %v151
    %v191 = vunpack.c.l.b16 %v152
    %v192 = vunpack.c.l.b16 %v153
    %v193 = vunpack.c.l.b16 %v154
    %v194 = vunpack.c.l.b16 %v155
    %v195 = vunpack.c.l.b16 %v156
    %v196 = vpack.c.b16 %v181, %v180
    %v197 = vpack.c.b16 %v183, %v182
    %v198 = vpack.c.b16 %v185, %v184
    %v199 = vpack.c.b16 %v187, %v186
    %v200 = vpack.c.b16 %v189, %v188
    %v201 = vpack.c.b16 %v191, %v190
    %v202 = vpack.c.b16 %v193, %v192
    %v203 = vpack.c.b16 %v195, %v194
    %212 = vmatprep.subr.bf16.mxu0 0
    %213 = vmatpush1.bf16.msra.mxu0 %v196
    %214 = vmatprep.subr.bf16.mxu0 0
    %215 = vmatpush1.bf16.msra.mxu0 %v197
    %216 = vmatprep.subr.bf16.mxu0 0
    %217 = vmatpush1.bf16.msra.mxu0 %v198
    %218 = vmatprep.subr.bf16.mxu0 0
    %219 = vmatpush1.bf16.msra.mxu0 %v199
    %220 = vmatprep.subr.bf16.mxu0 0
    %221 = vmatpush1.bf16.msra.mxu0 %v200
    %222 = vmatprep.subr.bf16.mxu0 0
    %223 = vmatpush1.bf16.msra.mxu0 %v201
    %224 = vmatprep.subr.bf16.mxu0 0
    %225 = vmatpush1.bf16.msra.mxu0 %v202
    %226 = vmatprep.subr.bf16.mxu0 0
    %227 = vmatpush1.bf16.msra.mxu0 %v203
    %228 = vmatprep.subr.bf16.mxu0 0
    %229 = vmatpush1.bf16.msra.mxu0 0
    %230 = vmatprep.subr.bf16.mxu0 0
    %231 = vmatpush1.bf16.msra.mxu0 0
    %232 = vmatprep.subr.bf16.mxu0 0
    %233 = vmatpush1.bf16.msra.mxu0 0
    %234 = vmatprep.subr.bf16.mxu0 0
    %235 = vmatpush1.bf16.msra.mxu0 0
    %236 = vmatprep.subr.bf16.mxu0 0
    %237 = vmatpush1.bf16.msra.mxu0 0
    %238 = vmatprep.subr.bf16.mxu0 0
    %239 = vmatpush1.bf16.msra.mxu0 0
    %240 = vmatprep.subr.bf16.mxu0 0
    %241 = vmatpush1.bf16.msra.mxu0 0
    %242 = vmatprep.subr.bf16.mxu0 0
    %243 = vmatpush1.bf16.msra.mxu0 0
    %244 = vmatprep.mubr.bf16.mxu0 0
    %245 = vmatmul.mubr.bf16.gmra.mrb[0].mxu0 %v109
    %v246 = vpop.f32.mrb[0].mxu0
    %v247 = vadd.f32 %v162, %v246
    %v248 = vpop.f32.mrb[0].mxu0
    %v249 = vpop.f32.mrb[0].mxu0
    %v250 = vadd.f32 %v162, %v249
    %v251 = vpop.f32.mrb[0].mxu0
    %252 = vmatprep.mubr.bf16.mxu0 0
    %253 = vmatmul.mubr.bf16.gmra.mrb[0].mxu0 %v110
    %v254 = vpop.f32.mrb[0].mxu0
    %v255 = vadd.f32 %v162, %v254
    %v256 = vpop.f32.mrb[0].mxu0
    %v257 = vpop.f32.mrb[0].mxu0
    %v258 = vadd.f32 %v162, %v257
    %v259 = vpop.f32.mrb[0].mxu0
    %260 = vmatprep.mubr.bf16.mxu0 0
    %261 = vmatmul.mubr.bf16.gmra.mrb[0].mxu0 %v111
    %v262 = vpop.f32.mrb[0].mxu0
    %v263 = vadd.f32 %v162, %v262
    %v264 = vpop.f32.mrb[0].mxu0
    %v265 = vpop.f32.mrb[0].mxu0
    %v266 = vadd.f32 %v162, %v265
    %v267 = vpop.f32.mrb[0].mxu0
    %268 = vmatprep.mubr.bf16.mxu0 0
    %269 = vmatmul.mubr.bf16.gmra.mrb[0].mxu0 %v112
    %v270 = vpop.f32.mrb[0].mxu0
    %v271 = vadd.f32 %v162, %v270
    %v272 = vpop.f32.mrb[0].mxu0
    %v273 = vpop.f32.mrb[0].mxu0
    %v274 = vadd.f32 %v162, %v273
    %v275 = vpop.f32.mrb[0].mxu0
    %276 = vmatprep.mubr.bf16.mxu0 0
    %277 = vmatmul.mubr.bf16.gmra.mrb[0].mxu0 %v113
    %v278 = vpop.f32.mrb[0].mxu0
    %v279 = vadd.f32 %v162, %v278
    %v280 = vpop.f32.mrb[0].mxu0
    %v281 = vpop.f32.mrb[0].mxu0
    %v282 = vadd.f32 %v162, %v281
    %v283 = vpop.f32.mrb[0].mxu0
    %284 = vmatprep.mubr.bf16.mxu0 0
    %285 = vmatmul.mubr.bf16.gmra.mrb[0].mxu0 %v114
    %v286 = vpop.f32.mrb[0].mxu0
    %v287 = vadd.f32 %v162, %v286
    %v288 = vpop.f32.mrb[0].mxu0
    %v289 = vpop.f32.mrb[0].mxu0
    %v290 = vadd.f32 %v162, %v289
    %v291 = vpop.f32.mrb[0].mxu0
    %292 = vmatprep.mubr.bf16.mxu0 0
    %293 = vmatmul.mubr.bf16.gmra.mrb[0].mxu0 %v115
    %v294 = vpop.f32.mrb[0].mxu0
    %v295 = vadd.f32 %v162, %v294
    %v296 = vpop.f32.mrb[0].mxu0
    %v297 = vpop.f32.mrb[0].mxu0
    %v298 = vadd.f32 %v162, %v297
    %v299 = vpop.f32.mrb[0].mxu0
    %300 = vmatprep.mubr.bf16.mxu0 0
    %301 = vmatmul.mubr.bf16.gmra.mrb[0].mxu0 %v116
    %v302 = vpop.f32.mrb[0].mxu0
    %v303 = vadd.f32 %v162, %v302
    %v304 = vpop.f32.mrb[0].mxu0
    %v305 = vpop.f32.mrb[0].mxu0
    %v306 = vadd.f32 %v162, %v305
    %v307 = vpop.f32.mrb[0].mxu0
    %308 = vmatprep.mubr.bf16.mxu0 0
    %309 = vmatmul.mubr.bf16.gmra.mrb[0].mxu0 %v117
    %v310 = vpop.f32.mrb[0].mxu0
    %v311 = vadd.f32 %v162, %v310
    %v312 = vpop.f32.mrb[0].mxu0
    %v313 = vpop.f32.mrb[0].mxu0
    %v314 = vadd.f32 %v162, %v313
    %v315 = vpop.f32.mrb[0].mxu0
    %316 = vmatprep.mubr.bf16.mxu0 0
    %317 = vmatmul.mubr.bf16.gmra.mrb[0].mxu0 %v118
    %v318 = vpop.f32.mrb[0].mxu0
    %v319 = vadd.f32 %v162, %v318
    %v320 = vpop.f32.mrb[0].mxu0
    %v321 = vpop.f32.mrb[0].mxu0
    %v322 = vadd.f32 %v162, %v321
    %v323 = vpop.f32.mrb[0].mxu0
    %324 = vmatprep.mubr.bf16.mxu0 0
    %325 = vmatmul.mubr.bf16.gmra.mrb[0].mxu0 %v119
    %v326 = vpop.f32.mrb[0].mxu0
    %v327 = vadd.f32 %v162, %v326
    %v328 = vpop.f32.mrb[0].mxu0
    %v329 = vpop.f32.mrb[0].mxu0
    %v330 = vadd.f32 %v162, %v329
    %v331 = vpop.f32.mrb[0].mxu0
    %332 = vmatprep.mubr.bf16.mxu0 0
    %333 = vmatmul.mubr.bf16.gmra.mrb[0].mxu0 %v120
    %v334 = vpop.f32.mrb[0].mxu0
    %v335 = vadd.f32 %v162, %v334
    %v336 = vpop.f32.mrb[0].mxu0
    %v337 = vpop.f32.mrb[0].mxu0
    %v338 = vadd.f32 %v162, %v337
    %v339 = vpop.f32.mrb[0].mxu0
    %340 = vmatprep.mubr.bf16.mxu0 0
    %341 = vmatmul.mubr.bf16.gmra.mrb[0].mxu0 %v121
    %v342 = vpop.f32.mrb[0].mxu0
    %v343 = vadd.f32 %v162, %v342
    %v344 = vpop.f32.mrb[0].mxu0
    %v345 = vpop.f32.mrb[0].mxu0
    %v346 = vadd.f32 %v162, %v345
    %v347 = vpop.f32.mrb[0].mxu0
    %348 = vmatprep.mubr.bf16.mxu0 0
    %349 = vmatmul.mubr.bf16.gmra.mrb[0].mxu0 %v122
    %v350 = vpop.f32.mrb[0].mxu0
    %v351 = vadd.f32 %v162, %v350
    %v352 = vpop.f32.mrb[0].mxu0
    %v353 = vpop.f32.mrb[0].mxu0
    %v354 = vadd.f32 %v162, %v353
    %v355 = vpop.f32.mrb[0].mxu0
    %356 = vmatprep.mubr.bf16.mxu0 0
    %357 = vmatmul.mubr.bf16.gmra.mrb[0].mxu0 %v123
    %v358 = vpop.f32.mrb[0].mxu0
    %v359 = vadd.f32 %v162, %v358
    %v360 = vpop.f32.mrb[0].mxu0
    %v361 = vpop.f32.mrb[0].mxu0
    %v362 = vadd.f32 %v162, %v361
    %v363 = vpop.f32.mrb[0].mxu0
    %364 = vmatprep.mubr.bf16.mxu0 0
    %365 = vmatmul.mubr.bf16.gmra.mrb[0].mxu0 %v124
    %v366 = vpop.f32.mrb[0].mxu0
    %v367 = vadd.f32 %v162, %v366
    %v368 = vpop.f32.mrb[0].mxu0
    %v369 = vpop.f32.mrb[0].mxu0
    %v370 = vadd.f32 %v162, %v369
    %v371 = vpop.f32.mrb[0].mxu0
    %372 = vmatprep.mubr.bf16.mxu0 0
    %373 = vmatmul.mubr.bf16.gmra.mrb[0].mxu0 %v125
    %v374 = vpop.f32.mrb[0].mxu0
    %v375 = vadd.f32 %v162, %v374
    %v376 = vpop.f32.mrb[0].mxu0
    %v377 = vpop.f32.mrb[0].mxu0
    %v378 = vadd.f32 %v162, %v377
    %v379 = vpop.f32.mrb[0].mxu0
    %380 = vmatprep.mubr.bf16.mxu0 0
    %381 = vmatmul.mubr.bf16.gmra.mrb[0].mxu0 %v126
    %v382 = vpop.f32.mrb[0].mxu0
    %v383 = vadd.f32 %v162, %v382
    %v384 = vpop.f32.mrb[0].mxu0
    %v385 = vpop.f32.mrb[0].mxu0
    %v386 = vadd.f32 %v162, %v385
    %v387 = vpop.f32.mrb[0].mxu0
    %388 = vmatprep.mubr.bf16.mxu0 0
    %389 = vmatmul.mubr.bf16.gmra.mrb[0].mxu0 %v127
    %v390 = vpop.f32.mrb[0].mxu0
    %v391 = vadd.f32 %v162, %v390
    %v392 = vpop.f32.mrb[0].mxu0
    %v393 = vpop.f32.mrb[0].mxu0
    %v394 = vadd.f32 %v162, %v393
    %v395 = vpop.f32.mrb[0].mxu0
    %396 = vmatprep.mubr.bf16.mxu0 0
    %397 = vmatmul.mubr.bf16.gmra.mrb[0].mxu0 %v128
    %v398 = vpop.f32.mrb[0].mxu0
    %v399 = vadd.f32 %v162, %v398
    %v400 = vpop.f32.mrb[0].mxu0
    %v401 = vpop.f32.mrb[0].mxu0
    %v402 = vadd.f32 %v162, %v401
    %v403 = vpop.f32.mrb[0].mxu0
    %404 = vmatprep.mubr.bf16.mxu0 0
    %405 = vmatmul.mubr.bf16.gmra.mrb[0].mxu0 %v129
    %v406 = vpop.f32.mrb[0].mxu0
    %v407 = vadd.f32 %v162, %v406
    %v408 = vpop.f32.mrb[0].mxu0
    %v409 = vpop.f32.mrb[0].mxu0
    %v410 = vadd.f32 %v162, %v409
    %v411 = vpop.f32.mrb[0].mxu0
    %412 = vmatprep.mubr.bf16.mxu0 0
    %413 = vmatmul.mubr.bf16.gmra.mrb[0].mxu0 %v130
    %v414 = vpop.f32.mrb[0].mxu0
    %v415 = vadd.f32 %v162, %v414
    %v416 = vpop.f32.mrb[0].mxu0
    %v417 = vpop.f32.mrb[0].mxu0
    %v418 = vadd.f32 %v162, %v417
    %v419 = vpop.f32.mrb[0].mxu0
    %420 = vmatprep.mubr.bf16.mxu0 0
    %421 = vmatmul.mubr.bf16.gmra.mrb[0].mxu0 %v131
    %v422 = vpop.f32.mrb[0].mxu0
    %v423 = vadd.f32 %v162, %v422
    %v424 = vpop.f32.mrb[0].mxu0
    %v425 = vpop.f32.mrb[0].mxu0
    %v426 = vadd.f32 %v162, %v425
    %v427 = vpop.f32.mrb[0].mxu0
    %428 = vmatprep.mubr.bf16.mxu0 0
    %429 = vmatmul.mubr.bf16.gmra.mrb[0].mxu0 %v132
    %v430 = vpop.f32.mrb[0].mxu0
    %v431 = vadd.f32 %v162, %v430
    %v432 = vpop.f32.mrb[0].mxu0
    %v433 = vpop.f32.mrb[0].mxu0
    %v434 = vadd.f32 %v162, %v433
    %v435 = vpop.f32.mrb[0].mxu0
    %436 = vmatprep.mubr.bf16.mxu0 0
    %437 = vmatmul.mubr.bf16.gmra.mrb[0].mxu0 %v133
    %v438 = vpop.f32.mrb[0].mxu0
    %v439 = vadd.f32 %v162, %v438
    %v440 = vpop.f32.mrb[0].mxu0
    %v441 = vpop.f32.mrb[0].mxu0
    %v442 = vadd.f32 %v162, %v441
    %v443 = vpop.f32.mrb[0].mxu0
    %444 = vmatprep.mubr.bf16.mxu0 0
    %445 = vmatmul.mubr.bf16.gmra.mrb[0].mxu0 %v134
    %v446 = vpop.f32.mrb[0].mxu0
    %v447 = vadd.f32 %v162, %v446
    %v448 = vpop.f32.mrb[0].mxu0
    %v449 = vpop.f32.mrb[0].mxu0
    %v450 = vadd.f32 %v162, %v449
    %v451 = vpop.f32.mrb[0].mxu0
    %452 = vmatprep.mubr.bf16.mxu0 0
    %453 = vmatmul.mubr.bf16.gmra.mrb[0].mxu0 %v135
    %v454 = vpop.f32.mrb[0].mxu0
    %v455 = vadd.f32 %v162, %v454
    %v456 = vpop.f32.mrb[0].mxu0
    %v457 = vpop.f32.mrb[0].mxu0
    %v458 = vadd.f32 %v162, %v457
    %v459 = vpop.f32.mrb[0].mxu0
    %460 = vmatprep.mubr.bf16.mxu0 0
    %461 = vmatmul.mubr.bf16.gmra.mrb[0].mxu0 %v136
    %v462 = vpop.f32.mrb[0].mxu0
    %v463 = vadd.f32 %v162, %v462
    %v464 = vpop.f32.mrb[0].mxu0
    %v465 = vpop.f32.mrb[0].mxu0
    %v466 = vadd.f32 %v162, %v465
    %v467 = vpop.f32.mrb[0].mxu0
    %468 = vmatprep.mubr.bf16.mxu0 0
    %469 = vmatmul.mubr.bf16.gmra.mrb[0].mxu0 %v137
    %v470 = vpop.f32.mrb[0].mxu0
    %v471 = vadd.f32 %v162, %v470
    %v472 = vpop.f32.mrb[0].mxu0
    %v473 = vpop.f32.mrb[0].mxu0
    %v474 = vadd.f32 %v162, %v473
    %v475 = vpop.f32.mrb[0].mxu0
    %476 = vmatprep.mubr.bf16.mxu0 0
    %477 = vmatmul.mubr.bf16.gmra.mrb[0].mxu0 %v138
    %v478 = vpop.f32.mrb[0].mxu0
    %v479 = vadd.f32 %v162, %v478
    %v480 = vpop.f32.mrb[0].mxu0
    %v481 = vpop.f32.mrb[0].mxu0
    %v482 = vadd.f32 %v162, %v481
    %v483 = vpop.f32.mrb[0].mxu0
    %484 = vmatprep.mubr.bf16.mxu0 0
    %485 = vmatmul.mubr.bf16.gmra.mrb[0].mxu0 %v139
    %v486 = vpop.f32.mrb[0].mxu0
    %v487 = vadd.f32 %v162, %v486
    %v488 = vpop.f32.mrb[0].mxu0
    %v489 = vpop.f32.mrb[0].mxu0
    %v490 = vadd.f32 %v162, %v489
    %v491 = vpop.f32.mrb[0].mxu0
    %492 = vmatprep.mubr.bf16.mxu0 0
    %493 = vmatmul.mubr.bf16.gmra.mrb[0].mxu0 %v140
    %v494 = vpop.f32.mrb[0].mxu0
    %v495 = vadd.f32 %v162, %v494
    %v496 = vpop.f32.mrb[0].mxu0
    %v497 = vpop.f32.mrb[0].mxu0
    %v498 = vadd.f32 %v162, %v497
    %v499 = vpop.f32.mrb[0].mxu0
    %500 = vdwg.mxu0
    %vm501 = vcmp.ge.f32.partialorder %v247, 0.0
    %vm502 = vcmp.ge.f32.partialorder %v250, 0.0
    %vm503 = vcmp.ge.f32.partialorder %v255, 0.0
    %vm504 = vcmp.ge.f32.partialorder %v258, 0.0
    %vm505 = vcmp.ge.f32.partialorder %v263, 0.0
    %vm506 = vcmp.ge.f32.partialorder %v266, 0.0
    %vm507 = vcmp.ge.f32.partialorder %v271, 0.0
    %vm508 = vcmp.ge.f32.partialorder %v274, 0.0
    %vm509 = vcmp.ge.f32.partialorder %v279, 0.0
    %vm510 = vcmp.ge.f32.partialorder %v282, 0.0
    %vm511 = vcmp.ge.f32.partialorder %v287, 0.0
    %vm512 = vcmp.ge.f32.partialorder %v290, 0.0
    %vm513 = vcmp.ge.f32.partialorder %v295, 0.0
    %vm514 = vcmp.ge.f32.partialorder %v298, 0.0
    %vm515 = vcmp.ge.f32.partialorder %v303, 0.0
    %vm516 = vcmp.ge.f32.partialorder %v306, 0.0
    %vm517 = vcmp.ge.f32.partialorder %v311, 0.0
    %vm518 = vcmp.ge.f32.partialorder %v314, 0.0
    %vm519 = vcmp.ge.f32.partialorder %v319, 0.0
    %vm520 = vcmp.ge.f32.partialorder %v322, 0.0
    %vm521 = vcmp.ge.f32.partialorder %v327, 0.0
    %vm522 = vcmp.ge.f32.partialorder %v330, 0.0
    %vm523 = vcmp.ge.f32.partialorder %v335, 0.0
    %vm524 = vcmp.ge.f32.partialorder %v338, 0.0
    %vm525 = vcmp.ge.f32.partialorder %v343, 0.0
    %vm526 = vcmp.ge.f32.partialorder %v346, 0.0
    %vm527 = vcmp.ge.f32.partialorder %v351, 0.0
    %vm528 = vcmp.ge.f32.partialorder %v354, 0.0
    %vm529 = vcmp.ge.f32.partialorder %v359, 0.0
    %vm530 = vcmp.ge.f32.partialorder %v362, 0.0
    %vm531 = vcmp.ge.f32.partialorder %v367, 0.0
    %vm532 = vcmp.ge.f32.partialorder %v370, 0.0
    %vm533 = vcmp.ge.f32.partialorder %v375, 0.0
    %vm534 = vcmp.ge.f32.partialorder %v378, 0.0
    %vm535 = vcmp.ge.f32.partialorder %v383, 0.0
    %vm536 = vcmp.ge.f32.partialorder %v386, 0.0
    %vm537 = vcmp.ge.f32.partialorder %v391, 0.0
    %vm538 = vcmp.ge.f32.partialorder %v394, 0.0
    %vm539 = vcmp.ge.f32.partialorder %v399, 0.0
    %vm540 = vcmp.ge.f32.partialorder %v402, 0.0
    %vm541 = vcmp.ge.f32.partialorder %v407, 0.0
    %vm542 = vcmp.ge.f32.partialorder %v410, 0.0
    %vm543 = vcmp.ge.f32.partialorder %v415, 0.0
    %vm544 = vcmp.ge.f32.partialorder %v418, 0.0
    %vm545 = vcmp.ge.f32.partialorder %v423, 0.0
    %vm546 = vcmp.ge.f32.partialorder %v426, 0.0
    %vm547 = vcmp.ge.f32.partialorder %v431, 0.0
    %vm548 = vcmp.ge.f32.partialorder %v434, 0.0
    %vm549 = vcmp.ge.f32.partialorder %v439, 0.0
    %vm550 = vcmp.ge.f32.partialorder %v442, 0.0
    %vm551 = vcmp.ge.f32.partialorder %v447, 0.0
    %vm552 = vcmp.ge.f32.partialorder %v450, 0.0
    %vm553 = vcmp.ge.f32.partialorder %v455, 0.0
    %vm554 = vcmp.ge.f32.partialorder %v458, 0.0
    %vm555 = vcmp.ge.f32.partialorder %v463, 0.0
    %vm556 = vcmp.ge.f32.partialorder %v466, 0.0
    %vm557 = vcmp.ge.f32.partialorder %v471, 0.0
    %vm558 = vcmp.ge.f32.partialorder %v474, 0.0
    %vm559 = vcmp.ge.f32.partialorder %v479, 0.0
    %vm560 = vcmp.ge.f32.partialorder %v482, 0.0
    %vm561 = vcmp.ge.f32.partialorder %v487, 0.0
    %vm562 = vcmp.ge.f32.partialorder %v490, 0.0
    %vm563 = vcmp.ge.f32.partialorder %v495, 0.0
    %vm564 = vcmp.ge.f32.partialorder %v498, 0.0
    %v565 = vmul.f32 %v247, 0.01
    %v566 = vmul.f32 %v250, 0.01
    %v567 = vmul.f32 %v255, 0.01
    %v568 = vmul.f32 %v258, 0.01
    %v569 = vmul.f32 %v263, 0.01
    %v570 = vmul.f32 %v266, 0.01
    %v571 = vmul.f32 %v271, 0.01
    %v572 = vmul.f32 %v274, 0.01
    %v573 = vmul.f32 %v279, 0.01
    %v574 = vmul.f32 %v282, 0.01
    %v575 = vmul.f32 %v287, 0.01
    %v576 = vmul.f32 %v290, 0.01
    %v577 = vmul.f32 %v295, 0.01
    %v578 = vmul.f32 %v298, 0.01
    %v579 = vmul.f32 %v303, 0.01
    %v580 = vmul.f32 %v306, 0.01
    %v581 = vmul.f32 %v311, 0.01
    %v582 = vmul.f32 %v314, 0.01
    %v583 = vmul.f32 %v319, 0.01
    %v584 = vmul.f32 %v322, 0.01
    %v585 = vmul.f32 %v327, 0.01
    %v586 = vmul.f32 %v330, 0.01
    %v587 = vmul.f32 %v335, 0.01
    %v588 = vmul.f32 %v338, 0.01
    %v589 = vmul.f32 %v343, 0.01
    %v590 = vmul.f32 %v346, 0.01
    %v591 = vmul.f32 %v351, 0.01
    %v592 = vmul.f32 %v354, 0.01
    %v593 = vmul.f32 %v359, 0.01
    %v594 = vmul.f32 %v362, 0.01
    %v595 = vmul.f32 %v367, 0.01
    %v596 = vmul.f32 %v370, 0.01
    %v597 = vmul.f32 %v375, 0.01
    %v598 = vmul.f32 %v378, 0.01
    %v599 = vmul.f32 %v383, 0.01
    %v600 = vmul.f32 %v386, 0.01
    %v601 = vmul.f32 %v391, 0.01
    %v602 = vmul.f32 %v394, 0.01
    %v603 = vmul.f32 %v399, 0.01
    %v604 = vmul.f32 %v402, 0.01
    %v605 = vmul.f32 %v407, 0.01
    %v606 = vmul.f32 %v410, 0.01
    %v607 = vmul.f32 %v415, 0.01
    %v608 = vmul.f32 %v418, 0.01
    %v609 = vmul.f32 %v423, 0.01
    %v610 = vmul.f32 %v426, 0.01
    %v611 = vmul.f32 %v431, 0.01
    %v612 = vmul.f32 %v434, 0.01
    %v613 = vmul.f32 %v439, 0.01
    %v614 = vmul.f32 %v442, 0.01
    %v615 = vmul.f32 %v447, 0.01
    %v616 = vmul.f32 %v450, 0.01
    %v617 = vmul.f32 %v455, 0.01
    %v618 = vmul.f32 %v458, 0.01
    %v619 = vmul.f32 %v463, 0.01
    %v620 = vmul.f32 %v466, 0.01
    %v621 = vmul.f32 %v471, 0.01
    %v622 = vmul.f32 %v474, 0.01
    %v623 = vmul.f32 %v479, 0.01
    %v624 = vmul.f32 %v482, 0.01
    %v625 = vmul.f32 %v487, 0.01
    %v626 = vmul.f32 %v490, 0.01
    %v627 = vmul.f32 %v495, 0.01
    %v628 = vmul.f32 %v498, 0.01
    %v629 = vsel %vm501, %v247, %v565
    %v630 = vsel %vm502, %v250, %v566
    %v631 = vsel %vm503, %v255, %v567
    %v632 = vsel %vm504, %v258, %v568
    %v633 = vsel %vm505, %v263, %v569
    %v634 = vsel %vm506, %v266, %v570
    %v635 = vsel %vm507, %v271, %v571
    %v636 = vsel %vm508, %v274, %v572
    %v637 = vsel %vm509, %v279, %v573
    %v638 = vsel %vm510, %v282, %v574
    %v639 = vsel %vm511, %v287, %v575
    %v640 = vsel %vm512, %v290, %v576
    %v641 = vsel %vm513, %v295, %v577
    %v642 = vsel %vm514, %v298, %v578
    %v643 = vsel %vm515, %v303, %v579
    %v644 = vsel %vm516, %v306, %v580
    %v645 = vsel %vm517, %v311, %v581
    %v646 = vsel %vm518, %v314, %v582
    %v647 = vsel %vm519, %v319, %v583
    %v648 = vsel %vm520, %v322, %v584
    %v649 = vsel %vm521, %v327, %v585
    %v650 = vsel %vm522, %v330, %v586
    %v651 = vsel %vm523, %v335, %v587
    %v652 = vsel %vm524, %v338, %v588
    %v653 = vsel %vm525, %v343, %v589
    %v654 = vsel %vm526, %v346, %v590
    %v655 = vsel %vm527, %v351, %v591
    %v656 = vsel %vm528, %v354, %v592
    %v657 = vsel %vm529, %v359, %v593
    %v658 = vsel %vm530, %v362, %v594
    %v659 = vsel %vm531, %v367, %v595
    %v660 = vsel %vm532, %v370, %v596
    %v661 = vsel %vm533, %v375, %v597
    %v662 = vsel %vm534, %v378, %v598
    %v663 = vsel %vm535, %v383, %v599
    %v664 = vsel %vm536, %v386, %v600
    %v665 = vsel %vm537, %v391, %v601
    %v666 = vsel %vm538, %v394, %v602
    %v667 = vsel %vm539, %v399, %v603
    %v668 = vsel %vm540, %v402, %v604
    %v669 = vsel %vm541, %v407, %v605
    %v670 = vsel %vm542, %v410, %v606
    %v671 = vsel %vm543, %v415, %v607
    %v672 = vsel %vm544, %v418, %v608
    %v673 = vsel %vm545, %v423, %v609
    %v674 = vsel %vm546, %v426, %v610
    %v675 = vsel %vm547, %v431, %v611
    %v676 = vsel %vm548, %v434, %v612
    %v677 = vsel %vm549, %v439, %v613
    %v678 = vsel %vm550, %v442, %v614
    %v679 = vsel %vm551, %v447, %v615
    %v680 = vsel %vm552, %v450, %v616
    %v681 = vsel %vm553, %v455, %v617
    %v682 = vsel %vm554, %v458, %v618
    %v683 = vsel %vm555, %v463, %v619
    %v684 = vsel %vm556, %v466, %v620
    %v685 = vsel %vm557, %v471, %v621
    %v686 = vsel %vm558, %v474, %v622
    %v687 = vsel %vm559, %v479, %v623
    %v688 = vsel %vm560, %v482, %v624
    %v689 = vsel %vm561, %v487, %v625
    %v690 = vsel %vm562, %v490, %v626
    %v691 = vsel %vm563, %v495, %v627
    %v692 = vsel %vm564, %v498, %v628
    %v693 = vpack.c.bf16 %v630, %v629
    %v694 = vpack.c.bf16 %v632, %v631
    %v695 = vpack.c.bf16 %v634, %v633
    %v696 = vpack.c.bf16 %v636, %v635
    %v697 = vpack.c.bf16 %v638, %v637
    %v698 = vpack.c.bf16 %v640, %v639
    %v699 = vpack.c.bf16 %v642, %v641
    %v700 = vpack.c.bf16 %v644, %v643
    %v701 = vpack.c.bf16 %v646, %v645
    %v702 = vpack.c.bf16 %v648, %v647
    %v703 = vpack.c.bf16 %v650, %v649
    %v704 = vpack.c.bf16 %v652, %v651
    %v705 = vpack.c.bf16 %v654, %v653
    %v706 = vpack.c.bf16 %v656, %v655
    %v707 = vpack.c.bf16 %v658, %v657
    %v708 = vpack.c.bf16 %v660, %v659
    %v709 = vpack.c.bf16 %v662, %v661
    %v710 = vpack.c.bf16 %v664, %v663
    %v711 = vpack.c.bf16 %v666, %v665
    %v712 = vpack.c.bf16 %v668, %v667
    %v713 = vpack.c.bf16 %v670, %v669
    %v714 = vpack.c.bf16 %v672, %v671
    %v715 = vpack.c.bf16 %v674, %v673
    %v716 = vpack.c.bf16 %v676, %v675
    %v717 = vpack.c.bf16 %v678, %v677
    %v718 = vpack.c.bf16 %v680, %v679
    %v719 = vpack.c.bf16 %v682, %v681
    %v720 = vpack.c.bf16 %v684, %v683
    %v721 = vpack.c.bf16 %v686, %v685
    %v722 = vpack.c.bf16 %v688, %v687
    %v723 = vpack.c.bf16 %v690, %v689
    %v724 = vpack.c.bf16 %v692, %v691
    %vm725 = vcmask 257024
    %726 = vst.msk [vmem:[#allocation2] sm:$0xf] %vm725, 0
    %727 = vst.msk [vmem:[#allocation2 + $0x4] sm:$0xf] %vm725, 0
    %vm728 = vcmask 253952
    %729 = vst.msk [vmem:[#allocation2 + $0x8] sm:$0x1] %vm728, 0
    %s730 = scalar_lea.vmem [#allocation2], 204
    %731 = vst.msk [vmem:[%s730] sm:$0xf] %vm725, 0
    %732 = vst.msk [vmem:[%s730 + $0x4] sm:$0xf] %vm725, 0
    %733 = vst.msk [vmem:[%s730 + $0x8] sm:$0x1] %vm728, 0
    %s734 = scalar_lea.vmem [#allocation2], 12
    %vm735 = vcmask 253952
    %vm736 = vsmask.f32 256
    %vm737 = vmand %vm735, %vm736
    %v738 = vld [vmem:[%s734] sm:$0x1]
    %v739 = vsel %vm737, 0, %v738
    %740 = vst [vmem:[%s734] sm:$0x1] %v739
    %v741 = vld [vmem:[%s734 + $0xc] sm:$0x1]
    %v742 = vsel %vm737, 0, %v741
    %743 = vst [vmem:[%s734 + $0xc] sm:$0x1] %v742
    %v744 = vld [vmem:[%s734 + $0x18] sm:$0x1]
    %v745 = vsel %vm737, 0, %v744
    %746 = vst [vmem:[%s734 + $0x18] sm:$0x1] %v745
    %v747 = vld [vmem:[%s734 + $0x24] sm:$0x1]
    %v748 = vsel %vm737, 0, %v747
    %749 = vst [vmem:[%s734 + $0x24] sm:$0x1] %v748
    %v750 = vld [vmem:[%s734 + $0x30] sm:$0x1]
    %v751 = vsel %vm737, 0, %v750
    %752 = vst [vmem:[%s734 + $0x30] sm:$0x1] %v751
    %v753 = vld [vmem:[%s734 + $0x3c] sm:$0x1]
    %v754 = vsel %vm737, 0, %v753
    %755 = vst [vmem:[%s734 + $0x3c] sm:$0x1] %v754
    %v756 = vld [vmem:[%s734 + $0x48] sm:$0x1]
    %v757 = vsel %vm737, 0, %v756
    %758 = vst [vmem:[%s734 + $0x48] sm:$0x1] %v757
    %v759 = vld [vmem:[%s734 + $0x54] sm:$0x1]
    %v760 = vsel %vm737, 0, %v759
    %761 = vst [vmem:[%s734 + $0x54] sm:$0x1] %v760
    %v762 = vld [vmem:[%s734 + $0x60] sm:$0x1]
    %v763 = vsel %vm737, 0, %v762
    %764 = vst [vmem:[%s734 + $0x60] sm:$0x1] %v763
    %v765 = vld [vmem:[%s734 + $0x6c] sm:$0x1]
    %v766 = vsel %vm737, 0, %v765
    %767 = vst [vmem:[%s734 + $0x6c] sm:$0x1] %v766
    %v768 = vld [vmem:[%s734 + $0x78] sm:$0x1]
    %v769 = vsel %vm737, 0, %v768
    %770 = vst [vmem:[%s734 + $0x78] sm:$0x1] %v769
    %v771 = vld [vmem:[%s734 + $0x84] sm:$0x1]
    %v772 = vsel %vm737, 0, %v771
    %773 = vst [vmem:[%s734 + $0x84] sm:$0x1] %v772
    %v774 = vld [vmem:[%s734 + $0x90] sm:$0x1]
    %v775 = vsel %vm737, 0, %v774
    %776 = vst [vmem:[%s734 + $0x90] sm:$0x1] %v775
    %v777 = vld [vmem:[%s734 + $0x9c] sm:$0x1]
    %v778 = vsel %vm737, 0, %v777
    %779 = vst [vmem:[%s734 + $0x9c] sm:$0x1] %v778
    %v780 = vld [vmem:[%s734 + $0xa8] sm:$0x1]
    %v781 = vsel %vm737, 0, %v780
    %782 = vst [vmem:[%s734 + $0xa8] sm:$0x1] %v781
    %v783 = vld [vmem:[%s734 + $0xb4] sm:$0x1]
    %v784 = vsel %vm737, 0, %v783
    %785 = vst [vmem:[%s734 + $0xb4] sm:$0x1] %v784
    %vm786 = vsmask.f32 7938
    %vm787 = vmand %vm735, %vm786
    %v788 = vld [vmem:[%s734 + $0x8] sm:$0x1]
    %v789 = vsel %vm787, 0, %v788
    %790 = vst [vmem:[%s734 + $0x8] sm:$0x1] %v789
    %v791 = vld [vmem:[%s734 + $0x14] sm:$0x1]
    %v792 = vsel %vm787, 0, %v791
    %793 = vst [vmem:[%s734 + $0x14] sm:$0x1] %v792
    %v794 = vld [vmem:[%s734 + $0x20] sm:$0x1]
    %v795 = vsel %vm787, 0, %v794
    %796 = vst [vmem:[%s734 + $0x20] sm:$0x1] %v795
    %v797 = vld [vmem:[%s734 + $0x2c] sm:$0x1]
    %v798 = vsel %vm787, 0, %v797
    %799 = vst [vmem:[%s734 + $0x2c] sm:$0x1] %v798
    %v800 = vld [vmem:[%s734 + $0x38] sm:$0x1]
    %v801 = vsel %vm787, 0, %v800
    %802 = vst [vmem:[%s734 + $0x38] sm:$0x1] %v801
    %v803 = vld [vmem:[%s734 + $0x44] sm:$0x1]
    %v804 = vsel %vm787, 0, %v803
    %805 = vst [vmem:[%s734 + $0x44] sm:$0x1] %v804
    %v806 = vld [vmem:[%s734 + $0x50] sm:$0x1]
    %v807 = vsel %vm787, 0, %v806
    %808 = vst [vmem:[%s734 + $0x50] sm:$0x1] %v807
    %v809 = vld [vmem:[%s734 + $0x5c] sm:$0x1]
    %v810 = vsel %vm787, 0, %v809
    %811 = vst [vmem:[%s734 + $0x5c] sm:$0x1] %v810
    %v812 = vld [vmem:[%s734 + $0x68] sm:$0x1]
    %v813 = vsel %vm787, 0, %v812
    %814 = vst [vmem:[%s734 + $0x68] sm:$0x1] %v813
    %v815 = vld [vmem:[%s734 + $0x74] sm:$0x1]
    %v816 = vsel %vm787, 0, %v815
    %817 = vst [vmem:[%s734 + $0x74] sm:$0x1] %v816
    %v818 = vld [vmem:[%s734 + $0x80] sm:$0x1]
    %v819 = vsel %vm787, 0, %v818
    %820 = vst [vmem:[%s734 + $0x80] sm:$0x1] %v819
    %v821 = vld [vmem:[%s734 + $0x8c] sm:$0x1]
    %v822 = vsel %vm787, 0, %v821
    %823 = vst [vmem:[%s734 + $0x8c] sm:$0x1] %v822
    %v824 = vld [vmem:[%s734 + $0x98] sm:$0x1]
    %v825 = vsel %vm787, 0, %v824
    %826 = vst [vmem:[%s734 + $0x98] sm:$0x1] %v825
    %v827 = vld [vmem:[%s734 + $0xa4] sm:$0x1]
    %v828 = vsel %vm787, 0, %v827
    %829 = vst [vmem:[%s734 + $0xa4] sm:$0x1] %v828
    %v830 = vld [vmem:[%s734 + $0xb0] sm:$0x1]
    %v831 = vsel %vm787, 0, %v830
    %832 = vst [vmem:[%s734 + $0xb0] sm:$0x1] %v831
    %v833 = vld [vmem:[%s734 + $0xbc] sm:$0x1]
    %v834 = vsel %vm787, 0, %v833
    %835 = vst [vmem:[%s734 + $0xbc] sm:$0x1] %v834
    %v852 = vunpack.c.l.b16 %v693
    %v853 = vunpack.c.h.b16 %v693
    %v854 = vunpack.c.l.b16 %v694
    %v855 = vunpack.c.h.b16 %v694
    %v856 = vunpack.c.l.b16 %v695
    %v857 = vunpack.c.h.b16 %v695
    %v858 = vunpack.c.l.b16 %v696
    %v859 = vunpack.c.h.b16 %v696
    %v860 = vunpack.c.l.b16 %v697
    %v861 = vunpack.c.h.b16 %v697
    %v862 = vunpack.c.l.b16 %v698
    %v863 = vunpack.c.h.b16 %v698
    %v864 = vunpack.c.l.b16 %v699
    %v865 = vunpack.c.h.b16 %v699
    %v866 = vunpack.c.l.b16 %v700
    %v867 = vunpack.c.h.b16 %v700
    %v868 = vunpack.c.l.b16 %v701
    %v869 = vunpack.c.h.b16 %v701
    %v870 = vunpack.c.l.b16 %v702
    %v871 = vunpack.c.h.b16 %v702
    %v872 = vunpack.c.l.b16 %v703
    %v873 = vunpack.c.h.b16 %v703
    %v874 = vunpack.c.l.b16 %v704
    %v875 = vunpack.c.h.b16 %v704
    %v876 = vunpack.c.l.b16 %v705
    %v877 = vunpack.c.h.b16 %v705
    %v878 = vunpack.c.l.b16 %v706
    %v879 = vunpack.c.h.b16 %v706
    %v880 = vunpack.c.l.b16 %v707
    %v881 = vunpack.c.h.b16 %v707
    %v882 = vunpack.c.l.b16 %v708
    %v883 = vunpack.c.h.b16 %v708
    %v884 = vpack.c.b16 %v852, %v852
    %v885 = vpack.c.b16 %v853, %v853
    %v886 = vpack.c.b16 %v854, %v854
    %v887 = vpack.c.b16 %v855, %v855
    %v888 = vpack.c.b16 %v856, %v856
    %v889 = vpack.c.b16 %v857, %v857
    %v890 = vpack.c.b16 %v858, %v858
    %v891 = vpack.c.b16 %v859, %v859
    %v892 = vpack.c.b16 %v860, %v860
    %v893 = vpack.c.b16 %v861, %v861
    %v894 = vpack.c.b16 %v862, %v862
    %v895 = vpack.c.b16 %v863, %v863
    %v896 = vpack.c.b16 %v864, %v864
    %v897 = vpack.c.b16 %v865, %v865
    %v898 = vpack.c.b16 %v866, %v866
    %v899 = vpack.c.b16 %v867, %v867
    %v900 = vpack.c.b16 %v868, %v868
    %v901 = vpack.c.b16 %v869, %v869
    %v902 = vpack.c.b16 %v870, %v870
    %v903 = vpack.c.b16 %v871, %v871
    %v904 = vpack.c.b16 %v872, %v872
    %v905 = vpack.c.b16 %v873, %v873
    %v906 = vpack.c.b16 %v874, %v874
    %v907 = vpack.c.b16 %v875, %v875
    %v908 = vpack.c.b16 %v876, %v876
    %v909 = vpack.c.b16 %v877, %v877
    %v910 = vpack.c.b16 %v878, %v878
    %v911 = vpack.c.b16 %v879, %v879
    %v912 = vpack.c.b16 %v880, %v880
    %v913 = vpack.c.b16 %v881, %v881
    %v914 = vpack.c.b16 %v882, %v882
    %v915 = vpack.c.b16 %v883, %v883
    %vm916 = vsmask.f32 4368
    %vm917 = vmor %vm736, %vm916
    %v919 = vshrl.u32 %v884, 16
    %v921 = vrot.slane %v919, 7
    %v922 = vshll.u32 %v884, 16
    %v924 = vor.u32 %v921, %v922
    %v925 = vrot.slane %v921, 4
    %v927 = vshrl.u32 %v885, 16
    %v929 = vrot.slane %v927, 7
    %v930 = vshll.u32 %v885, 16
    %v932 = vor.u32 %v929, %v930
    %v933 = vsel %vm917, %v925, %v932
    %v934 = vrot.slane %v929, 4
    %v936 = vshrl.u32 %v886, 16
    %v938 = vrot.slane %v936, 7
    %v939 = vshll.u32 %v886, 16
    %v941 = vor.u32 %v938, %v939
    %v942 = vrot.slane %v938, 4
    %v944 = vshrl.u32 %v887, 16
    %v946 = vrot.slane %v944, 7
    %v947 = vshll.u32 %v887, 16
    %v949 = vor.u32 %v946, %v947
    %v950 = vsel %vm917, %v942, %v949
    %v951 = vrot.slane %v946, 4
    %v953 = vshrl.u32 %v888, 16
    %v955 = vrot.slane %v953, 7
    %v956 = vshll.u32 %v888, 16
    %v958 = vor.u32 %v955, %v956
    %v959 = vrot.slane %v955, 4
    %v961 = vshrl.u32 %v889, 16
    %v963 = vrot.slane %v961, 7
    %v964 = vshll.u32 %v889, 16
    %v966 = vor.u32 %v963, %v964
    %v967 = vsel %vm917, %v959, %v966
    %v968 = vrot.slane %v963, 4
    %v970 = vshrl.u32 %v890, 16
    %v972 = vrot.slane %v970, 7
    %v973 = vshll.u32 %v890, 16
    %v975 = vor.u32 %v972, %v973
    %v976 = vrot.slane %v972, 4
    %v978 = vshrl.u32 %v891, 16
    %v980 = vrot.slane %v978, 7
    %v981 = vshll.u32 %v891, 16
    %v983 = vor.u32 %v980, %v981
    %v984 = vsel %vm917, %v976, %v983
    %v985 = vrot.slane %v980, 4
    %v987 = vshrl.u32 %v892, 16
    %v989 = vrot.slane %v987, 7
    %v990 = vshll.u32 %v892, 16
    %v992 = vor.u32 %v989, %v990
    %v993 = vrot.slane %v989, 4
    %v995 = vshrl.u32 %v893, 16
    %v997 = vrot.slane %v995, 7
    %v998 = vshll.u32 %v893, 16
    %v1000 = vor.u32 %v997, %v998
    %v1001 = vsel %vm917, %v993, %v1000
    %v1002 = vrot.slane %v997, 4
    %v1004 = vshrl.u32 %v894, 16
    %v1006 = vrot.slane %v1004, 7
    %v1007 = vshll.u32 %v894, 16
    %v1009 = vor.u32 %v1006, %v1007
    %v1010 = vrot.slane %v1006, 4
    %v1012 = vshrl.u32 %v895, 16
    %v1014 = vrot.slane %v1012, 7
    %v1015 = vshll.u32 %v895, 16
    %v1017 = vor.u32 %v1014, %v1015
    %v1018 = vsel %vm917, %v1010, %v1017
    %v1019 = vrot.slane %v1014, 4
    %v1021 = vshrl.u32 %v896, 16
    %v1023 = vrot.slane %v1021, 7
    %v1024 = vshll.u32 %v896, 16
    %v1026 = vor.u32 %v1023, %v1024
    %v1027 = vrot.slane %v1023, 4
    %v1029 = vshrl.u32 %v897, 16
    %v1031 = vrot.slane %v1029, 7
    %v1032 = vshll.u32 %v897, 16
    %v1034 = vor.u32 %v1031, %v1032
    %v1035 = vsel %vm917, %v1027, %v1034
    %v1036 = vrot.slane %v1031, 4
    %v1038 = vshrl.u32 %v898, 16
    %v1040 = vrot.slane %v1038, 7
    %v1041 = vshll.u32 %v898, 16
    %v1043 = vor.u32 %v1040, %v1041
    %v1044 = vrot.slane %v1040, 4
    %v1046 = vshrl.u32 %v899, 16
    %v1048 = vrot.slane %v1046, 7
    %v1049 = vshll.u32 %v899, 16
    %v1051 = vor.u32 %v1048, %v1049
    %v1052 = vsel %vm917, %v1044, %v1051
    %v1053 = vrot.slane %v1048, 4
    %v1055 = vshrl.u32 %v900, 16
    %v1057 = vrot.slane %v1055, 7
    %v1058 = vshll.u32 %v900, 16
    %v1060 = vor.u32 %v1057, %v1058
    %v1061 = vrot.slane %v1057, 4
    %v1063 = vshrl.u32 %v901, 16
    %v1065 = vrot.slane %v1063, 7
    %v1066 = vshll.u32 %v901, 16
    %v1068 = vor.u32 %v1065, %v1066
    %v1069 = vsel %vm917, %v1061, %v1068
    %v1070 = vrot.slane %v1065, 4
    %v1072 = vshrl.u32 %v902, 16
    %v1074 = vrot.slane %v1072, 7
    %v1075 = vshll.u32 %v902, 16
    %v1077 = vor.u32 %v1074, %v1075
    %v1078 = vrot.slane %v1074, 4
    %v1080 = vshrl.u32 %v903, 16
    %v1082 = vrot.slane %v1080, 7
    %v1083 = vshll.u32 %v903, 16
    %v1085 = vor.u32 %v1082, %v1083
    %v1086 = vsel %vm917, %v1078, %v1085
    %v1087 = vrot.slane %v1082, 4
    %v1089 = vshrl.u32 %v904, 16
    %v1091 = vrot.slane %v1089, 7
    %v1092 = vshll.u32 %v904, 16
    %v1094 = vor.u32 %v1091, %v1092
    %v1095 = vrot.slane %v1091, 4
    %v1097 = vshrl.u32 %v905, 16
    %v1099 = vrot.slane %v1097, 7
    %v1100 = vshll.u32 %v905, 16
    %v1102 = vor.u32 %v1099, %v1100
    %v1103 = vsel %vm917, %v1095, %v1102
    %v1104 = vrot.slane %v1099, 4
    %v1106 = vshrl.u32 %v906, 16
    %v1108 = vrot.slane %v1106, 7
    %v1109 = vshll.u32 %v906, 16
    %v1111 = vor.u32 %v1108, %v1109
    %v1112 = vrot.slane %v1108, 4
    %v1114 = vshrl.u32 %v907, 16
    %v1116 = vrot.slane %v1114, 7
    %v1117 = vshll.u32 %v907, 16
    %v1119 = vor.u32 %v1116, %v1117
    %v1120 = vsel %vm917, %v1112, %v1119
    %v1121 = vrot.slane %v1116, 4
    %v1123 = vshrl.u32 %v908, 16
    %v1125 = vrot.slane %v1123, 7
    %v1126 = vshll.u32 %v908, 16
    %v1128 = vor.u32 %v1125, %v1126
    %v1129 = vrot.slane %v1125, 4
    %v1131 = vshrl.u32 %v909, 16
    %v1133 = vrot.slane %v1131, 7
    %v1134 = vshll.u32 %v909, 16
    %v1136 = vor.u32 %v1133, %v1134
    %v1137 = vsel %vm917, %v1129, %v1136
    %v1138 = vrot.slane %v1133, 4
    %v1140 = vshrl.u32 %v910, 16
    %v1142 = vrot.slane %v1140, 7
    %v1143 = vshll.u32 %v910, 16
    %v1145 = vor.u32 %v1142, %v1143
    %v1146 = vrot.slane %v1142, 4
    %v1148 = vshrl.u32 %v911, 16
    %v1150 = vrot.slane %v1148, 7
    %v1151 = vshll.u32 %v911, 16
    %v1153 = vor.u32 %v1150, %v1151
    %v1154 = vsel %vm917, %v1146, %v1153
    %v1155 = vrot.slane %v1150, 4
    %v1157 = vshrl.u32 %v912, 16
    %v1159 = vrot.slane %v1157, 7
    %v1160 = vshll.u32 %v912, 16
    %v1162 = vor.u32 %v1159, %v1160
    %v1163 = vrot.slane %v1159, 4
    %v1165 = vshrl.u32 %v913, 16
    %v1167 = vrot.slane %v1165, 7
    %v1168 = vshll.u32 %v913, 16
    %v1170 = vor.u32 %v1167, %v1168
    %v1171 = vsel %vm917, %v1163, %v1170
    %v1172 = vrot.slane %v1167, 4
    %v1174 = vshrl.u32 %v914, 16
    %v1176 = vrot.slane %v1174, 7
    %v1177 = vshll.u32 %v914, 16
    %v1179 = vor.u32 %v1176, %v1177
    %v1180 = vrot.slane %v1176, 4
    %v1182 = vshrl.u32 %v915, 16
    %v1184 = vrot.slane %v1182, 7
    %v1185 = vshll.u32 %v915, 16
    %v1187 = vor.u32 %v1184, %v1185
    %v1188 = vsel %vm917, %v1180, %v1187
    %v1189 = vrot.slane %v1184, 4
    %vm1238 = vcmask 257024
    %vm1239 = vmand %vm1238, %vm786
    %v1240 = vld [vmem:[%s734] sm:$0xf]
    %v1241 = vsel %vm1239, %v924, %v1240
    %1242 = vst [vmem:[%s734] sm:$0xf] %v1241
    %1243 = vst.msk [vmem:[%s734 + $0x4] sm:$0xf] %vm725, %v933
    %v1244 = vld [vmem:[%s734 + $0x8] sm:$0x1]
    %v1245 = vsel %vm737, %v934, %v1244
    %1246 = vst [vmem:[%s734 + $0x8] sm:$0x1] %v1245
    %v1247 = vld [vmem:[%s734 + $0xc] sm:$0xf]
    %v1248 = vsel %vm1239, %v941, %v1247
    %1249 = vst [vmem:[%s734 + $0xc] sm:$0xf] %v1248
    %1250 = vst.msk [vmem:[%s734 + $0x10] sm:$0xf] %vm725, %v950
    %v1251 = vld [vmem:[%s734 + $0x14] sm:$0x1]
    %v1252 = vsel %vm737, %v951, %v1251
    %1253 = vst [vmem:[%s734 + $0x14] sm:$0x1] %v1252
    %v1254 = vld [vmem:[%s734 + $0x18] sm:$0xf]
    %v1255 = vsel %vm1239, %v958, %v1254
    %1256 = vst [vmem:[%s734 + $0x18] sm:$0xf] %v1255
    %1257 = vst.msk [vmem:[%s734 + $0x1c] sm:$0xf] %vm725, %v967
    %v1258 = vld [vmem:[%s734 + $0x20] sm:$0x1]
    %v1259 = vsel %vm737, %v968, %v1258
    %1260 = vst [vmem:[%s734 + $0x20] sm:$0x1] %v1259
    %v1261 = vld [vmem:[%s734 + $0x24] sm:$0xf]
    %v1262 = vsel %vm1239, %v975, %v1261
    %1263 = vst [vmem:[%s734 + $0x24] sm:$0xf] %v1262
    %1264 = vst.msk [vmem:[%s734 + $0x28] sm:$0xf] %vm725, %v984
    %v1265 = vld [vmem:[%s734 + $0x2c] sm:$0x1]
    %v1266 = vsel %vm737, %v985, %v1265
    %1267 = vst [vmem:[%s734 + $0x2c] sm:$0x1] %v1266
    %v1268 = vld [vmem:[%s734 + $0x30] sm:$0xf]
    %v1269 = vsel %vm1239, %v992, %v1268
    %1270 = vst [vmem:[%s734 + $0x30] sm:$0xf] %v1269
    %1271 = vst.msk [vmem:[%s734 + $0x34] sm:$0xf] %vm725, %v1001
    %v1272 = vld [vmem:[%s734 + $0x38] sm:$0x1]
    %v1273 = vsel %vm737, %v1002, %v1272
    %1274 = vst [vmem:[%s734 + $0x38] sm:$0x1] %v1273
    %v1275 = vld [vmem:[%s734 + $0x3c] sm:$0xf]
    %v1276 = vsel %vm1239, %v1009, %v1275
    %1277 = vst [vmem:[%s734 + $0x3c] sm:$0xf] %v1276
    %1278 = vst.msk [vmem:[%s734 + $0x40] sm:$0xf] %vm725, %v1018
    %v1279 = vld [vmem:[%s734 + $0x44] sm:$0x1]
    %v1280 = vsel %vm737, %v1019, %v1279
    %1281 = vst [vmem:[%s734 + $0x44] sm:$0x1] %v1280
    %v1282 = vld [vmem:[%s734 + $0x48] sm:$0xf]
    %v1283 = vsel %vm1239, %v1026, %v1282
    %1284 = vst [vmem:[%s734 + $0x48] sm:$0xf] %v1283
    %1285 = vst.msk [vmem:[%s734 + $0x4c] sm:$0xf] %vm725, %v1035
    %v1286 = vld [vmem:[%s734 + $0x50] sm:$0x1]
    %v1287 = vsel %vm737, %v1036, %v1286
    %1288 = vst [vmem:[%s734 + $0x50] sm:$0x1] %v1287
    %v1289 = vld [vmem:[%s734 + $0x54] sm:$0xf]
    %v1290 = vsel %vm1239, %v1043, %v1289
    %1291 = vst [vmem:[%s734 + $0x54] sm:$0xf] %v1290
    %1292 = vst.msk [vmem:[%s734 + $0x58] sm:$0xf] %vm725, %v1052
    %v1293 = vld [vmem:[%s734 + $0x5c] sm:$0x1]
    %v1294 = vsel %vm737, %v1053, %v1293
    %1295 = vst [vmem:[%s734 + $0x5c] sm:$0x1] %v1294
    %v1296 = vld [vmem:[%s734 + $0x60] sm:$0xf]
    %v1297 = vsel %vm1239, %v1060, %v1296
    %1298 = vst [vmem:[%s734 + $0x60] sm:$0xf] %v1297
    %1299 = vst.msk [vmem:[%s734 + $0x64] sm:$0xf] %vm725, %v1069
    %v1300 = vld [vmem:[%s734 + $0x68] sm:$0x1]
    %v1301 = vsel %vm737, %v1070, %v1300
    %1302 = vst [vmem:[%s734 + $0x68] sm:$0x1] %v1301
    %v1303 = vld [vmem:[%s734 + $0x6c] sm:$0xf]
    %v1304 = vsel %vm1239, %v1077, %v1303
    %1305 = vst [vmem:[%s734 + $0x6c] sm:$0xf] %v1304
    %1306 = vst.msk [vmem:[%s734 + $0x70] sm:$0xf] %vm725, %v1086
    %v1307 = vld [vmem:[%s734 + $0x74] sm:$0x1]
    %v1308 = vsel %vm737, %v1087, %v1307
    %1309 = vst [vmem:[%s734 + $0x74] sm:$0x1] %v1308
    %v1310 = vld [vmem:[%s734 + $0x78] sm:$0xf]
    %v1311 = vsel %vm1239, %v1094, %v1310
    %1312 = vst [vmem:[%s734 + $0x78] sm:$0xf] %v1311
    %1313 = vst.msk [vmem:[%s734 + $0x7c] sm:$0xf] %vm725, %v1103
    %v1314 = vld [vmem:[%s734 + $0x80] sm:$0x1]
    %v1315 = vsel %vm737, %v1104, %v1314
    %1316 = vst [vmem:[%s734 + $0x80] sm:$0x1] %v1315
    %v1317 = vld [vmem:[%s734 + $0x84] sm:$0xf]
    %v1318 = vsel %vm1239, %v1111, %v1317
    %1319 = vst [vmem:[%s734 + $0x84] sm:$0xf] %v1318
    %1320 = vst.msk [vmem:[%s734 + $0x88] sm:$0xf] %vm725, %v1120
    %v1321 = vld [vmem:[%s734 + $0x8c] sm:$0x1]
    %v1322 = vsel %vm737, %v1121, %v1321
    %1323 = vst [vmem:[%s734 + $0x8c] sm:$0x1] %v1322
    %v1324 = vld [vmem:[%s734 + $0x90] sm:$0xf]
    %v1325 = vsel %vm1239, %v1128, %v1324
    %1326 = vst [vmem:[%s734 + $0x90] sm:$0xf] %v1325
    %1327 = vst.msk [vmem:[%s734 + $0x94] sm:$0xf] %vm725, %v1137
    %v1328 = vld [vmem:[%s734 + $0x98] sm:$0x1]
    %v1329 = vsel %vm737, %v1138, %v1328
    %1330 = vst [vmem:[%s734 + $0x98] sm:$0x1] %v1329
    %v1331 = vld [vmem:[%s734 + $0x9c] sm:$0xf]
    %v1332 = vsel %vm1239, %v1145, %v1331
    %1333 = vst [vmem:[%s734 + $0x9c] sm:$0xf] %v1332
    %1334 = vst.msk [vmem:[%s734 + $0xa0] sm:$0xf] %vm725, %v1154
    %v1335 = vld [vmem:[%s734 + $0xa4] sm:$0x1]
    %v1336 = vsel %vm737, %v1155, %v1335
    %1337 = vst [vmem:[%s734 + $0xa4] sm:$0x1] %v1336
    %v1338 = vld [vmem:[%s734 + $0xa8] sm:$0xf]
    %v1339 = vsel %vm1239, %v1162, %v1338
    %1340 = vst [vmem:[%s734 + $0xa8] sm:$0xf] %v1339
    %1341 = vst.msk [vmem:[%s734 + $0xac] sm:$0xf] %vm725, %v1171
    %v1342 = vld [vmem:[%s734 + $0xb0] sm:$0x1]
    %v1343 = vsel %vm737, %v1172, %v1342
    %1344 = vst [vmem:[%s734 + $0xb0] sm:$0x1] %v1343
    %v1345 = vld [vmem:[%s734 + $0xb4] sm:$0xf]
    %v1346 = vsel %vm1239, %v1179, %v1345
    %1347 = vst [vmem:[%s734 + $0xb4] sm:$0xf] %v1346
    %1348 = vst.msk [vmem:[%s734 + $0xb8] sm:$0xf] %vm725, %v1188
    %v1349 = vld [vmem:[%s734 + $0xbc] sm:$0x1]
    %v1350 = vsel %vm737, %v1189, %v1349
    %1351 = vst [vmem:[%s734 + $0xbc] sm:$0x1] %v1350
    %s1352 = scalar_lea.vmem [#allocation2], 216
    %1353 = vst.msk [vmem:[%s1352] sm:$0xf] %vm725, 0
    %1354 = vst.msk [vmem:[%s1352 + $0x4] sm:$0xf] %vm725, 0
    %1355 = vst.msk [vmem:[%s1352 + $0x8] sm:$0x1] %vm728, 0
    %s1356 = scalar_lea.vmem [#allocation2], 420
    %1357 = vst.msk [vmem:[%s1356] sm:$0xf] %vm725, 0
    %1358 = vst.msk [vmem:[%s1356 + $0x4] sm:$0xf] %vm725, 0
    %1359 = vst.msk [vmem:[%s1356 + $0x8] sm:$0x1] %vm728, 0
    %s1360 = scalar_lea.vmem [#allocation2], 228
    %v1361 = vld [vmem:[%s1360] sm:$0x1]
    %v1362 = vsel %vm737, 0, %v1361
    %1363 = vst [vmem:[%s1360] sm:$0x1] %v1362
    %v1364 = vld [vmem:[%s1360 + $0xc] sm:$0x1]
    %v1365 = vsel %vm737, 0, %v1364
    %1366 = vst [vmem:[%s1360 + $0xc] sm:$0x1] %v1365
    %v1367 = vld [vmem:[%s1360 + $0x18] sm:$0x1]
    %v1368 = vsel %vm737, 0, %v1367
    %1369 = vst [vmem:[%s1360 + $0x18] sm:$0x1] %v1368
    %v1370 = vld [vmem:[%s1360 + $0x24] sm:$0x1]
    %v1371 = vsel %vm737, 0, %v1370
    %1372 = vst [vmem:[%s1360 + $0x24] sm:$0x1] %v1371
    %v1373 = vld [vmem:[%s1360 + $0x30] sm:$0x1]
    %v1374 = vsel %vm737, 0, %v1373
    %1375 = vst [vmem:[%s1360 + $0x30] sm:$0x1] %v1374
    %v1376 = vld [vmem:[%s1360 + $0x3c] sm:$0x1]
    %v1377 = vsel %vm737, 0, %v1376
    %1378 = vst [vmem:[%s1360 + $0x3c] sm:$0x1] %v1377
    %v1379 = vld [vmem:[%s1360 + $0x48] sm:$0x1]
    %v1380 = vsel %vm737, 0, %v1379
    %1381 = vst [vmem:[%s1360 + $0x48] sm:$0x1] %v1380
    %v1382 = vld [vmem:[%s1360 + $0x54] sm:$0x1]
    %v1383 = vsel %vm737, 0, %v1382
    %1384 = vst [vmem:[%s1360 + $0x54] sm:$0x1] %v1383
    %v1385 = vld [vmem:[%s1360 + $0x60] sm:$0x1]
    %v1386 = vsel %vm737, 0, %v1385
    %1387 = vst [vmem:[%s1360 + $0x60] sm:$0x1] %v1386
    %v1388 = vld [vmem:[%s1360 + $0x6c] sm:$0x1]
    %v1389 = vsel %vm737, 0, %v1388
    %1390 = vst [vmem:[%s1360 + $0x6c] sm:$0x1] %v1389
    %v1391 = vld [vmem:[%s1360 + $0x78] sm:$0x1]
    %v1392 = vsel %vm737, 0, %v1391
    %1393 = vst [vmem:[%s1360 + $0x78] sm:$0x1] %v1392
    %v1394 = vld [vmem:[%s1360 + $0x84] sm:$0x1]
    %v1395 = vsel %vm737, 0, %v1394
    %1396 = vst [vmem:[%s1360 + $0x84] sm:$0x1] %v1395
    %v1397 = vld [vmem:[%s1360 + $0x90] sm:$0x1]
    %v1398 = vsel %vm737, 0, %v1397
    %1399 = vst [vmem:[%s1360 + $0x90] sm:$0x1] %v1398
    %v1400 = vld [vmem:[%s1360 + $0x9c] sm:$0x1]
    %v1401 = vsel %vm737, 0, %v1400
    %1402 = vst [vmem:[%s1360 + $0x9c] sm:$0x1] %v1401
    %v1403 = vld [vmem:[%s1360 + $0xa8] sm:$0x1]
    %v1404 = vsel %vm737, 0, %v1403
    %1405 = vst [vmem:[%s1360 + $0xa8] sm:$0x1] %v1404
    %v1406 = vld [vmem:[%s1360 + $0xb4] sm:$0x1]
    %v1407 = vsel %vm737, 0, %v1406
    %1408 = vst [vmem:[%s1360 + $0xb4] sm:$0x1] %v1407
    %v1409 = vld [vmem:[%s1360 + $0x8] sm:$0x1]
    %v1410 = vsel %vm787, 0, %v1409
    %1411 = vst [vmem:[%s1360 + $0x8] sm:$0x1] %v1410
    %v1412 = vld [vmem:[%s1360 + $0x14] sm:$0x1]
    %v1413 = vsel %vm787, 0, %v1412
    %1414 = vst [vmem:[%s1360 + $0x14] sm:$0x1] %v1413
    %v1415 = vld [vmem:[%s1360 + $0x20] sm:$0x1]
    %v1416 = vsel %vm787, 0, %v1415
    %1417 = vst [vmem:[%s1360 + $0x20] sm:$0x1] %v1416
    %v1418 = vld [vmem:[%s1360 + $0x2c] sm:$0x1]
    %v1419 = vsel %vm787, 0, %v1418
    %1420 = vst [vmem:[%s1360 + $0x2c] sm:$0x1] %v1419
    %v1421 = vld [vmem:[%s1360 + $0x38] sm:$0x1]
    %v1422 = vsel %vm787, 0, %v1421
    %1423 = vst [vmem:[%s1360 + $0x38] sm:$0x1] %v1422
    %v1424 = vld [vmem:[%s1360 + $0x44] sm:$0x1]
    %v1425 = vsel %vm787, 0, %v1424
    %1426 = vst [vmem:[%s1360 + $0x44] sm:$0x1] %v1425
    %v1427 = vld [vmem:[%s1360 + $0x50] sm:$0x1]
    %v1428 = vsel %vm787, 0, %v1427
    %1429 = vst [vmem:[%s1360 + $0x50] sm:$0x1] %v1428
    %v1430 = vld [vmem:[%s1360 + $0x5c] sm:$0x1]
    %v1431 = vsel %vm787, 0, %v1430
    %1432 = vst [vmem:[%s1360 + $0x5c] sm:$0x1] %v1431
    %v1433 = vld [vmem:[%s1360 + $0x68] sm:$0x1]
    %v1434 = vsel %vm787, 0, %v1433
    %1435 = vst [vmem:[%s1360 + $0x68] sm:$0x1] %v1434
    %v1436 = vld [vmem:[%s1360 + $0x74] sm:$0x1]
    %v1437 = vsel %vm787, 0, %v1436
    %1438 = vst [vmem:[%s1360 + $0x74] sm:$0x1] %v1437
    %v1439 = vld [vmem:[%s1360 + $0x80] sm:$0x1]
    %v1440 = vsel %vm787, 0, %v1439
    %1441 = vst [vmem:[%s1360 + $0x80] sm:$0x1] %v1440
    %v1442 = vld [vmem:[%s1360 + $0x8c] sm:$0x1]
    %v1443 = vsel %vm787, 0, %v1442
    %1444 = vst [vmem:[%s1360 + $0x8c] sm:$0x1] %v1443
    %v1445 = vld [vmem:[%s1360 + $0x98] sm:$0x1]
    %v1446 = vsel %vm787, 0, %v1445
    %1447 = vst [vmem:[%s1360 + $0x98] sm:$0x1] %v1446
    %v1448 = vld [vmem:[%s1360 + $0xa4] sm:$0x1]
    %v1449 = vsel %vm787, 0, %v1448
    %1450 = vst [vmem:[%s1360 + $0xa4] sm:$0x1] %v1449
    %v1451 = vld [vmem:[%s1360 + $0xb0] sm:$0x1]
    %v1452 = vsel %vm787, 0, %v1451
    %1453 = vst [vmem:[%s1360 + $0xb0] sm:$0x1] %v1452
    %v1454 = vld [vmem:[%s1360 + $0xbc] sm:$0x1]
    %v1455 = vsel %vm787, 0, %v1454
    %1456 = vst [vmem:[%s1360 + $0xbc] sm:$0x1] %v1455
    %v1473 = vunpack.c.l.b16 %v709
    %v1474 = vunpack.c.h.b16 %v709
    %v1475 = vunpack.c.l.b16 %v710
    %v1476 = vunpack.c.h.b16 %v710
    %v1477 = vunpack.c.l.b16 %v711
    %v1478 = vunpack.c.h.b16 %v711
    %v1479 = vunpack.c.l.b16 %v712
    %v1480 = vunpack.c.h.b16 %v712
    %v1481 = vunpack.c.l.b16 %v713
    %v1482 = vunpack.c.h.b16 %v713
    %v1483 = vunpack.c.l.b16 %v714
    %v1484 = vunpack.c.h.b16 %v714
    %v1485 = vunpack.c.l.b16 %v715
    %v1486 = vunpack.c.h.b16 %v715
    %v1487 = vunpack.c.l.b16 %v716
    %v1488 = vunpack.c.h.b16 %v716
    %v1489 = vunpack.c.l.b16 %v717
    %v1490 = vunpack.c.h.b16 %v717
    %v1491 = vunpack.c.l.b16 %v718
    %v1492 = vunpack.c.h.b16 %v718
    %v1493 = vunpack.c.l.b16 %v719
    %v1494 = vunpack.c.h.b16 %v719
    %v1495 = vunpack.c.l.b16 %v720
    %v1496 = vunpack.c.h.b16 %v720
    %v1497 = vunpack.c.l.b16 %v721
    %v1498 = vunpack.c.h.b16 %v721
    %v1499 = vunpack.c.l.b16 %v722
    %v1500 = vunpack.c.h.b16 %v722
    %v1501 = vunpack.c.l.b16 %v723
    %v1502 = vunpack.c.h.b16 %v723
    %v1503 = vunpack.c.l.b16 %v724
    %v1504 = vunpack.c.h.b16 %v724
    %v1505 = vpack.c.b16 %v1473, %v1473
    %v1506 = vpack.c.b16 %v1474, %v1474
    %v1507 = vpack.c.b16 %v1475, %v1475
    %v1508 = vpack.c.b16 %v1476, %v1476
    %v1509 = vpack.c.b16 %v1477, %v1477
    %v1510 = vpack.c.b16 %v1478, %v1478
    %v1511 = vpack.c.b16 %v1479, %v1479
    %v1512 = vpack.c.b16 %v1480, %v1480
    %v1513 = vpack.c.b16 %v1481, %v1481
    %v1514 = vpack.c.b16 %v1482, %v1482
    %v1515 = vpack.c.b16 %v1483, %v1483
    %v1516 = vpack.c.b16 %v1484, %v1484
    %v1517 = vpack.c.b16 %v1485, %v1485
    %v1518 = vpack.c.b16 %v1486, %v1486
    %v1519 = vpack.c.b16 %v1487, %v1487
    %v1520 = vpack.c.b16 %v1488, %v1488
    %v1521 = vpack.c.b16 %v1489, %v1489
    %v1522 = vpack.c.b16 %v1490, %v1490
    %v1523 = vpack.c.b16 %v1491, %v1491
    %v1524 = vpack.c.b16 %v1492, %v1492
    %v1525 = vpack.c.b16 %v1493, %v1493
    %v1526 = vpack.c.b16 %v1494, %v1494
    %v1527 = vpack.c.b16 %v1495, %v1495
    %v1528 = vpack.c.b16 %v1496, %v1496
    %v1529 = vpack.c.b16 %v1497, %v1497
    %v1530 = vpack.c.b16 %v1498, %v1498
    %v1531 = vpack.c.b16 %v1499, %v1499
    %v1532 = vpack.c.b16 %v1500, %v1500
    %v1533 = vpack.c.b16 %v1501, %v1501
    %v1534 = vpack.c.b16 %v1502, %v1502
    %v1535 = vpack.c.b16 %v1503, %v1503
    %v1536 = vpack.c.b16 %v1504, %v1504
    %v1538 = vshrl.u32 %v1505, 16
    %v1540 = vrot.slane %v1538, 7
    %v1541 = vshll.u32 %v1505, 16
    %v1543 = vor.u32 %v1540, %v1541
    %v1544 = vrot.slane %v1540, 4
    %v1546 = vshrl.u32 %v1506, 16
    %v1548 = vrot.slane %v1546, 7
    %v1549 = vshll.u32 %v1506, 16
    %v1551 = vor.u32 %v1548, %v1549
    %v1552 = vsel %vm917, %v1544, %v1551
    %v1553 = vrot.slane %v1548, 4
    %v1555 = vshrl.u32 %v1507, 16
    %v1557 = vrot.slane %v1555, 7
    %v1558 = vshll.u32 %v1507, 16
    %v1560 = vor.u32 %v1557, %v1558
    %v1561 = vrot.slane %v1557, 4
    %v1563 = vshrl.u32 %v1508, 16
    %v1565 = vrot.slane %v1563, 7
    %v1566 = vshll.u32 %v1508, 16
    %v1568 = vor.u32 %v1565, %v1566
    %v1569 = vsel %vm917, %v1561, %v1568
    %v1570 = vrot.slane %v1565, 4
    %v1572 = vshrl.u32 %v1509, 16
    %v1574 = vrot.slane %v1572, 7
    %v1575 = vshll.u32 %v1509, 16
    %v1577 = vor.u32 %v1574, %v1575
    %v1578 = vrot.slane %v1574, 4
    %v1580 = vshrl.u32 %v1510, 16
    %v1582 = vrot.slane %v1580, 7
    %v1583 = vshll.u32 %v1510, 16
    %v1585 = vor.u32 %v1582, %v1583
    %v1586 = vsel %vm917, %v1578, %v1585
    %v1587 = vrot.slane %v1582, 4
    %v1589 = vshrl.u32 %v1511, 16
    %v1591 = vrot.slane %v1589, 7
    %v1592 = vshll.u32 %v1511, 16
    %v1594 = vor.u32 %v1591, %v1592
    %v1595 = vrot.slane %v1591, 4
    %v1597 = vshrl.u32 %v1512, 16
    %v1599 = vrot.slane %v1597, 7
    %v1600 = vshll.u32 %v1512, 16
    %v1602 = vor.u32 %v1599, %v1600
    %v1603 = vsel %vm917, %v1595, %v1602
    %v1604 = vrot.slane %v1599, 4
    %v1606 = vshrl.u32 %v1513, 16
    %v1608 = vrot.slane %v1606, 7
    %v1609 = vshll.u32 %v1513, 16
    %v1611 = vor.u32 %v1608, %v1609
    %v1612 = vrot.slane %v1608, 4
    %v1614 = vshrl.u32 %v1514, 16
    %v1616 = vrot.slane %v1614, 7
    %v1617 = vshll.u32 %v1514, 16
    %v1619 = vor.u32 %v1616, %v1617
    %v1620 = vsel %vm917, %v1612, %v1619
    %v1621 = vrot.slane %v1616, 4
    %v1623 = vshrl.u32 %v1515, 16
    %v1625 = vrot.slane %v1623, 7
    %v1626 = vshll.u32 %v1515, 16
    %v1628 = vor.u32 %v1625, %v1626
    %v1629 = vrot.slane %v1625, 4
    %v1631 = vshrl.u32 %v1516, 16
    %v1633 = vrot.slane %v1631, 7
    %v1634 = vshll.u32 %v1516, 16
    %v1636 = vor.u32 %v1633, %v1634
    %v1637 = vsel %vm917, %v1629, %v1636
    %v1638 = vrot.slane %v1633, 4
    %v1640 = vshrl.u32 %v1517, 16
    %v1642 = vrot.slane %v1640, 7
    %v1643 = vshll.u32 %v1517, 16
    %v1645 = vor.u32 %v1642, %v1643
    %v1646 = vrot.slane %v1642, 4
    %v1648 = vshrl.u32 %v1518, 16
    %v1650 = vrot.slane %v1648, 7
    %v1651 = vshll.u32 %v1518, 16
    %v1653 = vor.u32 %v1650, %v1651
    %v1654 = vsel %vm917, %v1646, %v1653
    %v1655 = vrot.slane %v1650, 4
    %v1657 = vshrl.u32 %v1519, 16
    %v1659 = vrot.slane %v1657, 7
    %v1660 = vshll.u32 %v1519, 16
    %v1662 = vor.u32 %v1659, %v1660
    %v1663 = vrot.slane %v1659, 4
    %v1665 = vshrl.u32 %v1520, 16
    %v1667 = vrot.slane %v1665, 7
    %v1668 = vshll.u32 %v1520, 16
    %v1670 = vor.u32 %v1667, %v1668
    %v1671 = vsel %vm917, %v1663, %v1670
    %v1672 = vrot.slane %v1667, 4
    %v1674 = vshrl.u32 %v1521, 16
    %v1676 = vrot.slane %v1674, 7
    %v1677 = vshll.u32 %v1521, 16
    %v1679 = vor.u32 %v1676, %v1677
    %v1680 = vrot.slane %v1676, 4
    %v1682 = vshrl.u32 %v1522, 16
    %v1684 = vrot.slane %v1682, 7
    %v1685 = vshll.u32 %v1522, 16
    %v1687 = vor.u32 %v1684, %v1685
    %v1688 = vsel %vm917, %v1680, %v1687
    %v1689 = vrot.slane %v1684, 4
    %v1691 = vshrl.u32 %v1523, 16
    %v1693 = vrot.slane %v1691, 7
    %v1694 = vshll.u32 %v1523, 16
    %v1696 = vor.u32 %v1693, %v1694
    %v1697 = vrot.slane %v1693, 4
    %v1699 = vshrl.u32 %v1524, 16
    %v1701 = vrot.slane %v1699, 7
    %v1702 = vshll.u32 %v1524, 16
    %v1704 = vor.u32 %v1701, %v1702
    %v1705 = vsel %vm917, %v1697, %v1704
    %v1706 = vrot.slane %v1701, 4
    %v1708 = vshrl.u32 %v1525, 16
    %v1710 = vrot.slane %v1708, 7
    %v1711 = vshll.u32 %v1525, 16
    %v1713 = vor.u32 %v1710, %v1711
    %v1714 = vrot.slane %v1710, 4
    %v1716 = vshrl.u32 %v1526, 16
    %v1718 = vrot.slane %v1716, 7
    %v1719 = vshll.u32 %v1526, 16
    %v1721 = vor.u32 %v1718, %v1719
    %v1722 = vsel %vm917, %v1714, %v1721
    %v1723 = vrot.slane %v1718, 4
    %v1725 = vshrl.u32 %v1527, 16
    %v1727 = vrot.slane %v1725, 7
    %v1728 = vshll.u32 %v1527, 16
    %v1730 = vor.u32 %v1727, %v1728
    %v1731 = vrot.slane %v1727, 4
    %v1733 = vshrl.u32 %v1528, 16
    %v1735 = vrot.slane %v1733, 7
    %v1736 = vshll.u32 %v1528, 16
    %v1738 = vor.u32 %v1735, %v1736
    %v1739 = vsel %vm917, %v1731, %v1738
    %v1740 = vrot.slane %v1735, 4
    %v1742 = vshrl.u32 %v1529, 16
    %v1744 = vrot.slane %v1742, 7
    %v1745 = vshll.u32 %v1529, 16
    %v1747 = vor.u32 %v1744, %v1745
    %v1748 = vrot.slane %v1744, 4
    %v1750 = vshrl.u32 %v1530, 16
    %v1752 = vrot.slane %v1750, 7
    %v1753 = vshll.u32 %v1530, 16
    %v1755 = vor.u32 %v1752, %v1753
    %v1756 = vsel %vm917, %v1748, %v1755
    %v1757 = vrot.slane %v1752, 4
    %v1759 = vshrl.u32 %v1531, 16
    %v1761 = vrot.slane %v1759, 7
    %v1762 = vshll.u32 %v1531, 16
    %v1764 = vor.u32 %v1761, %v1762
    %v1765 = vrot.slane %v1761, 4
    %v1767 = vshrl.u32 %v1532, 16
    %v1769 = vrot.slane %v1767, 7
    %v1770 = vshll.u32 %v1532, 16
    %v1772 = vor.u32 %v1769, %v1770
    %v1773 = vsel %vm917, %v1765, %v1772
    %v1774 = vrot.slane %v1769, 4
    %v1776 = vshrl.u32 %v1533, 16
    %v1778 = vrot.slane %v1776, 7
    %v1779 = vshll.u32 %v1533, 16
    %v1781 = vor.u32 %v1778, %v1779
    %v1782 = vrot.slane %v1778, 4
    %v1784 = vshrl.u32 %v1534, 16
    %v1786 = vrot.slane %v1784, 7
    %v1787 = vshll.u32 %v1534, 16
    %v1789 = vor.u32 %v1786, %v1787
    %v1790 = vsel %vm917, %v1782, %v1789
    %v1791 = vrot.slane %v1786, 4
    %v1793 = vshrl.u32 %v1535, 16
    %v1795 = vrot.slane %v1793, 7
    %v1796 = vshll.u32 %v1535, 16
    %v1798 = vor.u32 %v1795, %v1796
    %v1799 = vrot.slane %v1795, 4
    %v1801 = vshrl.u32 %v1536, 16
    %v1803 = vrot.slane %v1801, 7
    %v1804 = vshll.u32 %v1536, 16
    %v1806 = vor.u32 %v1803, %v1804
    %v1807 = vsel %vm917, %v1799, %v1806
    %v1808 = vrot.slane %v1803, 4
    %v1857 = vld [vmem:[%s1360] sm:$0xf]
    %v1858 = vsel %vm1239, %v1543, %v1857
    %1859 = vst [vmem:[%s1360] sm:$0xf] %v1858
    %1860 = vst.msk [vmem:[%s1360 + $0x4] sm:$0xf] %vm725, %v1552
    %v1861 = vld [vmem:[%s1360 + $0x8] sm:$0x1]
    %v1862 = vsel %vm737, %v1553, %v1861
    %1863 = vst [vmem:[%s1360 + $0x8] sm:$0x1] %v1862
    %v1864 = vld [vmem:[%s1360 + $0xc] sm:$0xf]
    %v1865 = vsel %vm1239, %v1560, %v1864
    %1866 = vst [vmem:[%s1360 + $0xc] sm:$0xf] %v1865
    %1867 = vst.msk [vmem:[%s1360 + $0x10] sm:$0xf] %vm725, %v1569
    %v1868 = vld [vmem:[%s1360 + $0x14] sm:$0x1]
    %v1869 = vsel %vm737, %v1570, %v1868
    %1870 = vst [vmem:[%s1360 + $0x14] sm:$0x1] %v1869
    %v1871 = vld [vmem:[%s1360 + $0x18] sm:$0xf]
    %v1872 = vsel %vm1239, %v1577, %v1871
    %1873 = vst [vmem:[%s1360 + $0x18] sm:$0xf] %v1872
    %1874 = vst.msk [vmem:[%s1360 + $0x1c] sm:$0xf] %vm725, %v1586
    %v1875 = vld [vmem:[%s1360 + $0x20] sm:$0x1]
    %v1876 = vsel %vm737, %v1587, %v1875
    %1877 = vst [vmem:[%s1360 + $0x20] sm:$0x1] %v1876
    %v1878 = vld [vmem:[%s1360 + $0x24] sm:$0xf]
    %v1879 = vsel %vm1239, %v1594, %v1878
    %1880 = vst [vmem:[%s1360 + $0x24] sm:$0xf] %v1879
    %1881 = vst.msk [vmem:[%s1360 + $0x28] sm:$0xf] %vm725, %v1603
    %v1882 = vld [vmem:[%s1360 + $0x2c] sm:$0x1]
    %v1883 = vsel %vm737, %v1604, %v1882
    %1884 = vst [vmem:[%s1360 + $0x2c] sm:$0x1] %v1883
    %v1885 = vld [vmem:[%s1360 + $0x30] sm:$0xf]
    %v1886 = vsel %vm1239, %v1611, %v1885
    %1887 = vst [vmem:[%s1360 + $0x30] sm:$0xf] %v1886
    %1888 = vst.msk [vmem:[%s1360 + $0x34] sm:$0xf] %vm725, %v1620
    %v1889 = vld [vmem:[%s1360 + $0x38] sm:$0x1]
    %v1890 = vsel %vm737, %v1621, %v1889
    %1891 = vst [vmem:[%s1360 + $0x38] sm:$0x1] %v1890
    %v1892 = vld [vmem:[%s1360 + $0x3c] sm:$0xf]
    %v1893 = vsel %vm1239, %v1628, %v1892
    %1894 = vst [vmem:[%s1360 + $0x3c] sm:$0xf] %v1893
    %1895 = vst.msk [vmem:[%s1360 + $0x40] sm:$0xf] %vm725, %v1637
    %v1896 = vld [vmem:[%s1360 + $0x44] sm:$0x1]
    %v1897 = vsel %vm737, %v1638, %v1896
    %1898 = vst [vmem:[%s1360 + $0x44] sm:$0x1] %v1897
    %v1899 = vld [vmem:[%s1360 + $0x48] sm:$0xf]
    %v1900 = vsel %vm1239, %v1645, %v1899
    %1901 = vst [vmem:[%s1360 + $0x48] sm:$0xf] %v1900
    %1902 = vst.msk [vmem:[%s1360 + $0x4c] sm:$0xf] %vm725, %v1654
    %v1903 = vld [vmem:[%s1360 + $0x50] sm:$0x1]
    %v1904 = vsel %vm737, %v1655, %v1903
    %1905 = vst [vmem:[%s1360 + $0x50] sm:$0x1] %v1904
    %v1906 = vld [vmem:[%s1360 + $0x54] sm:$0xf]
    %v1907 = vsel %vm1239, %v1662, %v1906
    %1908 = vst [vmem:[%s1360 + $0x54] sm:$0xf] %v1907
    %1909 = vst.msk [vmem:[%s1360 + $0x58] sm:$0xf] %vm725, %v1671
    %v1910 = vld [vmem:[%s1360 + $0x5c] sm:$0x1]
    %v1911 = vsel %vm737, %v1672, %v1910
    %1912 = vst [vmem:[%s1360 + $0x5c] sm:$0x1] %v1911
    %v1913 = vld [vmem:[%s1360 + $0x60] sm:$0xf]
    %v1914 = vsel %vm1239, %v1679, %v1913
    %1915 = vst [vmem:[%s1360 + $0x60] sm:$0xf] %v1914
    %1916 = vst.msk [vmem:[%s1360 + $0x64] sm:$0xf] %vm725, %v1688
    %v1917 = vld [vmem:[%s1360 + $0x68] sm:$0x1]
    %v1918 = vsel %vm737, %v1689, %v1917
    %1919 = vst [vmem:[%s1360 + $0x68] sm:$0x1] %v1918
    %v1920 = vld [vmem:[%s1360 + $0x6c] sm:$0xf]
    %v1921 = vsel %vm1239, %v1696, %v1920
    %1922 = vst [vmem:[%s1360 + $0x6c] sm:$0xf] %v1921
    %1923 = vst.msk [vmem:[%s1360 + $0x70] sm:$0xf] %vm725, %v1705
    %v1924 = vld [vmem:[%s1360 + $0x74] sm:$0x1]
    %v1925 = vsel %vm737, %v1706, %v1924
    %1926 = vst [vmem:[%s1360 + $0x74] sm:$0x1] %v1925
    %v1927 = vld [vmem:[%s1360 + $0x78] sm:$0xf]
    %v1928 = vsel %vm1239, %v1713, %v1927
    %1929 = vst [vmem:[%s1360 + $0x78] sm:$0xf] %v1928
    %1930 = vst.msk [vmem:[%s1360 + $0x7c] sm:$0xf] %vm725, %v1722
    %v1931 = vld [vmem:[%s1360 + $0x80] sm:$0x1]
    %v1932 = vsel %vm737, %v1723, %v1931
    %1933 = vst [vmem:[%s1360 + $0x80] sm:$0x1] %v1932
    %v1934 = vld [vmem:[%s1360 + $0x84] sm:$0xf]
    %v1935 = vsel %vm1239, %v1730, %v1934
    %1936 = vst [vmem:[%s1360 + $0x84] sm:$0xf] %v1935
    %1937 = vst.msk [vmem:[%s1360 + $0x88] sm:$0xf] %vm725, %v1739
    %v1938 = vld [vmem:[%s1360 + $0x8c] sm:$0x1]
    %v1939 = vsel %vm737, %v1740, %v1938
    %1940 = vst [vmem:[%s1360 + $0x8c] sm:$0x1] %v1939
    %v1941 = vld [vmem:[%s1360 + $0x90] sm:$0xf]
    %v1942 = vsel %vm1239, %v1747, %v1941
    %1943 = vst [vmem:[%s1360 + $0x90] sm:$0xf] %v1942
    %1944 = vst.msk [vmem:[%s1360 + $0x94] sm:$0xf] %vm725, %v1756
    %v1945 = vld [vmem:[%s1360 + $0x98] sm:$0x1]
    %v1946 = vsel %vm737, %v1757, %v1945
    %1947 = vst [vmem:[%s1360 + $0x98] sm:$0x1] %v1946
    %v1948 = vld [vmem:[%s1360 + $0x9c] sm:$0xf]
    %v1949 = vsel %vm1239, %v1764, %v1948
    %1950 = vst [vmem:[%s1360 + $0x9c] sm:$0xf] %v1949
    %1951 = vst.msk [vmem:[%s1360 + $0xa0] sm:$0xf] %vm725, %v1773
    %v1952 = vld [vmem:[%s1360 + $0xa4] sm:$0x1]
    %v1953 = vsel %vm737, %v1774, %v1952
    %1954 = vst [vmem:[%s1360 + $0xa4] sm:$0x1] %v1953
    %v1955 = vld [vmem:[%s1360 + $0xa8] sm:$0xf]
    %v1956 = vsel %vm1239, %v1781, %v1955
    %1957 = vst [vmem:[%s1360 + $0xa8] sm:$0xf] %v1956
    %1958 = vst.msk [vmem:[%s1360 + $0xac] sm:$0xf] %vm725, %v1790
    %v1959 = vld [vmem:[%s1360 + $0xb0] sm:$0x1]
    %v1960 = vsel %vm737, %v1791, %v1959
    %1961 = vst [vmem:[%s1360 + $0xb0] sm:$0x1] %v1960
    %v1962 = vld [vmem:[%s1360 + $0xb4] sm:$0xf]
    %v1963 = vsel %vm1239, %v1798, %v1962
    %1964 = vst [vmem:[%s1360 + $0xb4] sm:$0xf] %v1963
    %1965 = vst.msk [vmem:[%s1360 + $0xb8] sm:$0xf] %vm725, %v1807
    %v1966 = vld [vmem:[%s1360 + $0xbc] sm:$0x1]
    %v1967 = vsel %vm737, %v1808, %v1966
    %1968 = vst [vmem:[%s1360 + $0xbc] sm:$0x1] %v1967
    %v1969 = vld [vmem:[#allocation2] sm:$0xf]
    %v1970 = vld [vmem:[#allocation2 + $0x4] sm:$0xf]
    %v1971 = vld [vmem:[#allocation2 + $0xc] sm:$0xf]
    %v1972 = vld [vmem:[#allocation2 + $0x10] sm:$0xf]
    %v1973 = vld [vmem:[#allocation2 + $0x18] sm:$0xf]
    %v1974 = vld [vmem:[#allocation2 + $0x1c] sm:$0xf]
    %v1975 = vld [vmem:[#allocation2 + $0x24] sm:$0xf]
    %v1976 = vld [vmem:[#allocation2 + $0x28] sm:$0xf]
    %v1977 = vld [vmem:[#allocation2 + $0x30] sm:$0xf]
    %v1978 = vld [vmem:[#allocation2 + $0x34] sm:$0xf]
    %v1979 = vld [vmem:[#allocation2 + $0x3c] sm:$0xf]
    %v1980 = vld [vmem:[#allocation2 + $0x40] sm:$0xf]
    %v1981 = vld [vmem:[#allocation2 + $0x48] sm:$0xf]
    %v1982 = vld [vmem:[#allocation2 + $0x4c] sm:$0xf]
    %v1983 = vld [vmem:[#allocation2 + $0x54] sm:$0xf]
    %v1984 = vld [vmem:[#allocation2 + $0x58] sm:$0xf]
    %v1985 = vld [vmem:[#allocation2 + $0x60] sm:$0xf]
    %v1986 = vld [vmem:[#allocation2 + $0x64] sm:$0xf]
    %v1987 = vld [vmem:[#allocation2 + $0x6c] sm:$0xf]
    %v1988 = vld [vmem:[#allocation2 + $0x70] sm:$0xf]
    %v1989 = vld [vmem:[#allocation2 + $0x78] sm:$0xf]
    %v1990 = vld [vmem:[#allocation2 + $0x7c] sm:$0xf]
    %v1991 = vld [vmem:[#allocation2 + $0x84] sm:$0xf]
    %v1992 = vld [vmem:[#allocation2 + $0x88] sm:$0xf]
    %v1993 = vld [vmem:[#allocation2 + $0x90] sm:$0xf]
    %v1994 = vld [vmem:[#allocation2 + $0x94] sm:$0xf]
    %v1995 = vld [vmem:[#allocation2 + $0x9c] sm:$0xf]
    %v1996 = vld [vmem:[#allocation2 + $0xa0] sm:$0xf]
    %v1997 = vld [vmem:[#allocation2 + $0xa8] sm:$0xf]
    %v1998 = vld [vmem:[#allocation2 + $0xac] sm:$0xf]
    %v1999 = vld [vmem:[#allocation2 + $0xb4] sm:$0xf]
    %v2000 = vld [vmem:[#allocation2 + $0xb8] sm:$0xf]
    %v2001 = vld [vmem:[#allocation2 + $0x8] sm:$0x1]
    %v2002 = vld [vmem:[#allocation2 + $0x14] sm:$0x1]
    %v2003 = vld [vmem:[#allocation2 + $0x20] sm:$0x1]
    %v2004 = vld [vmem:[#allocation2 + $0x2c] sm:$0x1]
    %v2005 = vld [vmem:[#allocation2 + $0x38] sm:$0x1]
    %v2006 = vld [vmem:[#allocation2 + $0x44] sm:$0x1]
    %v2007 = vld [vmem:[#allocation2 + $0x50] sm:$0x1]
    %v2008 = vld [vmem:[#allocation2 + $0x5c] sm:$0x1]
    %v2009 = vld [vmem:[#allocation2 + $0x68] sm:$0x1]
    %v2010 = vld [vmem:[#allocation2 + $0x74] sm:$0x1]
    %v2011 = vld [vmem:[#allocation2 + $0x80] sm:$0x1]
    %v2012 = vld [vmem:[#allocation2 + $0x8c] sm:$0x1]
    %v2013 = vld [vmem:[#allocation2 + $0x98] sm:$0x1]
    %v2014 = vld [vmem:[#allocation2 + $0xa4] sm:$0x1]
    %v2015 = vld [vmem:[#allocation2 + $0xb0] sm:$0x1]
    %v2016 = vld [vmem:[#allocation2 + $0xbc] sm:$0x1]
    %v2017 = vld [vmem:[#allocation2] sm:$0xe]
    %v2018 = vld [vmem:[#allocation2 + $0xc] sm:$0xe]
    %v2019 = vld [vmem:[#allocation2 + $0x18] sm:$0xe]
    %v2020 = vld [vmem:[#allocation2 + $0x24] sm:$0xe]
    %v2021 = vld [vmem:[#allocation2 + $0x30] sm:$0xe]
    %v2022 = vld [vmem:[#allocation2 + $0x3c] sm:$0xe]
    %v2023 = vld [vmem:[#allocation2 + $0x48] sm:$0xe]
    %v2024 = vld [vmem:[#allocation2 + $0x54] sm:$0xe]
    %v2025 = vld [vmem:[#allocation2 + $0x60] sm:$0xe]
    %v2026 = vld [vmem:[#allocation2 + $0x6c] sm:$0xe]
    %v2027 = vld [vmem:[#allocation2 + $0x78] sm:$0xe]
    %v2028 = vld [vmem:[#allocation2 + $0x84] sm:$0xe]
    %v2029 = vld [vmem:[#allocation2 + $0x90] sm:$0xe]
    %v2030 = vld [vmem:[#allocation2 + $0x9c] sm:$0xe]
    %v2031 = vld [vmem:[#allocation2 + $0xa8] sm:$0xe]
    %v2032 = vld [vmem:[#allocation2 + $0xb4] sm:$0xe]
    %v2033 = vld [vmem:[%s734] sm:$0xf]
    %v2034 = vld [vmem:[%s734 + $0x4] sm:$0xf]
    %v2035 = vld [vmem:[%s734 + $0xc] sm:$0xf]
    %v2036 = vld [vmem:[%s734 + $0x10] sm:$0xf]
    %v2037 = vld [vmem:[%s734 + $0x18] sm:$0xf]
    %v2038 = vld [vmem:[%s734 + $0x1c] sm:$0xf]
    %v2039 = vld [vmem:[%s734 + $0x24] sm:$0xf]
    %v2040 = vld [vmem:[%s734 + $0x28] sm:$0xf]
    %v2041 = vld [vmem:[%s734 + $0x30] sm:$0xf]
    %v2042 = vld [vmem:[%s734 + $0x34] sm:$0xf]
    %v2043 = vld [vmem:[%s734 + $0x3c] sm:$0xf]
    %v2044 = vld [vmem:[%s734 + $0x40] sm:$0xf]
    %v2045 = vld [vmem:[%s734 + $0x48] sm:$0xf]
    %v2046 = vld [vmem:[%s734 + $0x4c] sm:$0xf]
    %v2047 = vld [vmem:[%s734 + $0x54] sm:$0xf]
    %v2048 = vld [vmem:[%s734 + $0x58] sm:$0xf]
    %v2049 = vld [vmem:[%s734 + $0x60] sm:$0xf]
    %v2050 = vld [vmem:[%s734 + $0x64] sm:$0xf]
    %v2051 = vld [vmem:[%s734 + $0x6c] sm:$0xf]
    %v2052 = vld [vmem:[%s734 + $0x70] sm:$0xf]
    %v2053 = vld [vmem:[%s734 + $0x78] sm:$0xf]
    %v2054 = vld [vmem:[%s734 + $0x7c] sm:$0xf]
    %v2055 = vld [vmem:[%s734 + $0x84] sm:$0xf]
    %v2056 = vld [vmem:[%s734 + $0x88] sm:$0xf]
    %v2057 = vld [vmem:[%s734 + $0x90] sm:$0xf]
    %v2058 = vld [vmem:[%s734 + $0x94] sm:$0xf]
    %v2059 = vld [vmem:[%s734 + $0x9c] sm:$0xf]
    %v2060 = vld [vmem:[%s734 + $0xa0] sm:$0xf]
    %v2061 = vld [vmem:[%s734 + $0xa8] sm:$0xf]
    %v2062 = vld [vmem:[%s734 + $0xac] sm:$0xf]
    %v2063 = vld [vmem:[%s734 + $0xb4] sm:$0xf]
    %v2064 = vld [vmem:[%s734 + $0xb8] sm:$0xf]
    %v2065 = vld [vmem:[%s734 + $0x8] sm:$0x1]
    %v2066 = vld [vmem:[%s734 + $0x14] sm:$0x1]
    %v2067 = vld [vmem:[%s734 + $0x20] sm:$0x1]
    %v2068 = vld [vmem:[%s734 + $0x2c] sm:$0x1]
    %v2069 = vld [vmem:[%s734 + $0x38] sm:$0x1]
    %v2070 = vld [vmem:[%s734 + $0x44] sm:$0x1]
    %v2071 = vld [vmem:[%s734 + $0x50] sm:$0x1]
    %v2072 = vld [vmem:[%s734 + $0x5c] sm:$0x1]
    %v2073 = vld [vmem:[%s734 + $0x68] sm:$0x1]
    %v2074 = vld [vmem:[%s734 + $0x74] sm:$0x1]
    %v2075 = vld [vmem:[%s734 + $0x80] sm:$0x1]
    %v2076 = vld [vmem:[%s734 + $0x8c] sm:$0x1]
    %v2077 = vld [vmem:[%s734 + $0x98] sm:$0x1]
    %v2078 = vld [vmem:[%s734 + $0xa4] sm:$0x1]
    %v2079 = vld [vmem:[%s734 + $0xb0] sm:$0x1]
    %v2080 = vld [vmem:[%s734 + $0xbc] sm:$0x1]
    %v2081 = vld [vmem:[%s734] sm:$0xe]
    %v2082 = vld [vmem:[%s734 + $0xc] sm:$0xe]
    %v2083 = vld [vmem:[%s734 + $0x18] sm:$0xe]
    %v2084 = vld [vmem:[%s734 + $0x24] sm:$0xe]
    %v2085 = vld [vmem:[%s734 + $0x30] sm:$0xe]
    %v2086 = vld [vmem:[%s734 + $0x3c] sm:$0xe]
    %v2087 = vld [vmem:[%s734 + $0x48] sm:$0xe]
    %v2088 = vld [vmem:[%s734 + $0x54] sm:$0xe]
    %v2089 = vld [vmem:[%s734 + $0x60] sm:$0xe]
    %v2090 = vld [vmem:[%s734 + $0x6c] sm:$0xe]
    %v2091 = vld [vmem:[%s734 + $0x78] sm:$0xe]
    %v2092 = vld [vmem:[%s734 + $0x84] sm:$0xe]
    %v2093 = vld [vmem:[%s734 + $0x90] sm:$0xe]
    %v2094 = vld [vmem:[%s734 + $0x9c] sm:$0xe]
    %v2095 = vld [vmem:[%s734 + $0xa8] sm:$0xe]
    %v2096 = vld [vmem:[%s734 + $0xb4] sm:$0xe]
    %s2097 = scalar_lea.vmem [#allocation2], 24
    %v2098 = vld [vmem:[%s2097] sm:$0xf]
    %v2099 = vld [vmem:[%s2097 + $0x4] sm:$0xf]
    %v2100 = vld [vmem:[%s2097 + $0xc] sm:$0xf]
    %v2101 = vld [vmem:[%s2097 + $0x10] sm:$0xf]
    %v2102 = vld [vmem:[%s2097 + $0x18] sm:$0xf]
    %v2103 = vld [vmem:[%s2097 + $0x1c] sm:$0xf]
    %v2104 = vld [vmem:[%s2097 + $0x24] sm:$0xf]
    %v2105 = vld [vmem:[%s2097 + $0x28] sm:$0xf]
    %v2106 = vld [vmem:[%s2097 + $0x30] sm:$0xf]
    %v2107 = vld [vmem:[%s2097 + $0x34] sm:$0xf]
    %v2108 = vld [vmem:[%s2097 + $0x3c] sm:$0xf]
    %v2109 = vld [vmem:[%s2097 + $0x40] sm:$0xf]
    %v2110 = vld [vmem:[%s2097 + $0x48] sm:$0xf]
    %v2111 = vld [vmem:[%s2097 + $0x4c] sm:$0xf]
    %v2112 = vld [vmem:[%s2097 + $0x54] sm:$0xf]
    %v2113 = vld [vmem:[%s2097 + $0x58] sm:$0xf]
    %v2114 = vld [vmem:[%s2097 + $0x60] sm:$0xf]
    %v2115 = vld [vmem:[%s2097 + $0x64] sm:$0xf]
    %v2116 = vld [vmem:[%s2097 + $0x6c] sm:$0xf]
    %v2117 = vld [vmem:[%s2097 + $0x70] sm:$0xf]
    %v2118 = vld [vmem:[%s2097 + $0x78] sm:$0xf]
    %v2119 = vld [vmem:[%s2097 + $0x7c] sm:$0xf]
    %v2120 = vld [vmem:[%s2097 + $0x84] sm:$0xf]
    %v2121 = vld [vmem:[%s2097 + $0x88] sm:$0xf]
    %v2122 = vld [vmem:[%s2097 + $0x90] sm:$0xf]
    %v2123 = vld [vmem:[%s2097 + $0x94] sm:$0xf]
    %v2124 = vld [vmem:[%s2097 + $0x9c] sm:$0xf]
    %v2125 = vld [vmem:[%s2097 + $0xa0] sm:$0xf]
    %v2126 = vld [vmem:[%s2097 + $0xa8] sm:$0xf]
    %v2127 = vld [vmem:[%s2097 + $0xac] sm:$0xf]
    %v2128 = vld [vmem:[%s2097 + $0xb4] sm:$0xf]
    %v2129 = vld [vmem:[%s2097 + $0xb8] sm:$0xf]
    %v2130 = vld [vmem:[%s2097 + $0x8] sm:$0x1]
    %v2131 = vld [vmem:[%s2097 + $0x14] sm:$0x1]
    %v2132 = vld [vmem:[%s2097 + $0x20] sm:$0x1]
    %v2133 = vld [vmem:[%s2097 + $0x2c] sm:$0x1]
    %v2134 = vld [vmem:[%s2097 + $0x38] sm:$0x1]
    %v2135 = vld [vmem:[%s2097 + $0x44] sm:$0x1]
    %v2136 = vld [vmem:[%s2097 + $0x50] sm:$0x1]
    %v2137 = vld [vmem:[%s2097 + $0x5c] sm:$0x1]
    %v2138 = vld [vmem:[%s2097 + $0x68] sm:$0x1]
    %v2139 = vld [vmem:[%s2097 + $0x74] sm:$0x1]
    %v2140 = vld [vmem:[%s2097 + $0x80] sm:$0x1]
    %v2141 = vld [vmem:[%s2097 + $0x8c] sm:$0x1]
    %v2142 = vld [vmem:[%s2097 + $0x98] sm:$0x1]
    %v2143 = vld [vmem:[%s2097 + $0xa4] sm:$0x1]
    %v2144 = vld [vmem:[%s2097 + $0xb0] sm:$0x1]
    %v2145 = vld [vmem:[%s2097 + $0xbc] sm:$0x1]
    %v2146 = vld [vmem:[%s2097] sm:$0xe]
    %v2147 = vld [vmem:[%s2097 + $0xc] sm:$0xe]
    %v2148 = vld [vmem:[%s2097 + $0x18] sm:$0xe]
    %v2149 = vld [vmem:[%s2097 + $0x24] sm:$0xe]
    %v2150 = vld [vmem:[%s2097 + $0x30] sm:$0xe]
    %v2151 = vld [vmem:[%s2097 + $0x3c] sm:$0xe]
    %v2152 = vld [vmem:[%s2097 + $0x48] sm:$0xe]
    %v2153 = vld [vmem:[%s2097 + $0x54] sm:$0xe]
    %v2154 = vld [vmem:[%s2097 + $0x60] sm:$0xe]
    %v2155 = vld [vmem:[%s2097 + $0x6c] sm:$0xe]
    %v2156 = vld [vmem:[%s2097 + $0x78] sm:$0xe]
    %v2157 = vld [vmem:[%s2097 + $0x84] sm:$0xe]
    %v2158 = vld [vmem:[%s2097 + $0x90] sm:$0xe]
    %v2159 = vld [vmem:[%s2097 + $0x9c] sm:$0xe]
    %v2160 = vld [vmem:[%s2097 + $0xa8] sm:$0xe]
    %v2161 = vld [vmem:[%s2097 + $0xb4] sm:$0xe]
    %v2194 = vunpack.c.l.b16 %v1969
    %v2195 = vunpack.c.l.b16 %v1970
    %v2196 = vunpack.c.l.b16 %v1971
    %v2197 = vunpack.c.l.b16 %v1972
    %v2198 = vunpack.c.l.b16 %v1973
    %v2199 = vunpack.c.l.b16 %v1974
    %v2200 = vunpack.c.l.b16 %v1975
    %v2201 = vunpack.c.l.b16 %v1976
    %v2202 = vunpack.c.l.b16 %v1977
    %v2203 = vunpack.c.l.b16 %v1978
    %v2204 = vunpack.c.l.b16 %v1979
    %v2205 = vunpack.c.l.b16 %v1980
    %v2206 = vunpack.c.l.b16 %v1981
    %v2207 = vunpack.c.l.b16 %v1982
    %v2208 = vunpack.c.l.b16 %v1983
    %v2209 = vunpack.c.l.b16 %v1984
    %v2210 = vunpack.c.l.b16 %v1985
    %v2211 = vunpack.c.l.b16 %v1986
    %v2212 = vunpack.c.l.b16 %v1987
    %v2213 = vunpack.c.l.b16 %v1988
    %v2214 = vunpack.c.l.b16 %v1989
    %v2215 = vunpack.c.l.b16 %v1990
    %v2216 = vunpack.c.l.b16 %v1991
    %v2217 = vunpack.c.l.b16 %v1992
    %v2218 = vunpack.c.l.b16 %v1993
    %v2219 = vunpack.c.l.b16 %v1994
    %v2220 = vunpack.c.l.b16 %v1995
    %v2221 = vunpack.c.l.b16 %v1996
    %v2222 = vunpack.c.l.b16 %v1997
    %v2223 = vunpack.c.l.b16 %v1998
    %v2224 = vunpack.c.l.b16 %v1999
    %v2225 = vunpack.c.l.b16 %v2000
    %v2226 = vpack.c.b16 %v2195, %v2194
    %v2227 = vpack.c.b16 %v2197, %v2196
    %v2228 = vpack.c.b16 %v2199, %v2198
    %v2229 = vpack.c.b16 %v2201, %v2200
    %v2230 = vpack.c.b16 %v2203, %v2202
    %v2231 = vpack.c.b16 %v2205, %v2204
    %v2232 = vpack.c.b16 %v2207, %v2206
    %v2233 = vpack.c.b16 %v2209, %v2208
    %v2234 = vpack.c.b16 %v2211, %v2210
    %v2235 = vpack.c.b16 %v2213, %v2212
    %v2236 = vpack.c.b16 %v2215, %v2214
    %v2237 = vpack.c.b16 %v2217, %v2216
    %v2238 = vpack.c.b16 %v2219, %v2218
    %v2239 = vpack.c.b16 %v2221, %v2220
    %v2240 = vpack.c.b16 %v2223, %v2222
    %v2241 = vpack.c.b16 %v2225, %v2224
    %v2258 = vunpack.c.l.b16 %v2001
    %v2259 = vunpack.c.l.b16 %v2002
    %v2260 = vunpack.c.l.b16 %v2003
    %v2261 = vunpack.c.l.b16 %v2004
    %v2262 = vunpack.c.l.b16 %v2005
    %v2263 = vunpack.c.l.b16 %v2006
    %v2264 = vunpack.c.l.b16 %v2007
    %v2265 = vunpack.c.l.b16 %v2008
    %v2266 = vunpack.c.l.b16 %v2009
    %v2267 = vunpack.c.l.b16 %v2010
    %v2268 = vunpack.c.l.b16 %v2011
    %v2269 = vunpack.c.l.b16 %v2012
    %v2270 = vunpack.c.l.b16 %v2013
    %v2271 = vunpack.c.l.b16 %v2014
    %v2272 = vunpack.c.l.b16 %v2015
    %v2273 = vunpack.c.l.b16 %v2016
    %v2274 = vpack.c.b16 %v2258, %v2258
    %v2275 = vpack.c.b16 %v2259, %v2259
    %v2276 = vpack.c.b16 %v2260, %v2260
    %v2277 = vpack.c.b16 %v2261, %v2261
    %v2278 = vpack.c.b16 %v2262, %v2262
    %v2279 = vpack.c.b16 %v2263, %v2263
    %v2280 = vpack.c.b16 %v2264, %v2264
    %v2281 = vpack.c.b16 %v2265, %v2265
    %v2282 = vpack.c.b16 %v2266, %v2266
    %v2283 = vpack.c.b16 %v2267, %v2267
    %v2284 = vpack.c.b16 %v2268, %v2268
    %v2285 = vpack.c.b16 %v2269, %v2269
    %v2286 = vpack.c.b16 %v2270, %v2270
    %v2287 = vpack.c.b16 %v2271, %v2271
    %v2288 = vpack.c.b16 %v2272, %v2272
    %v2289 = vpack.c.b16 %v2273, %v2273
    %vm2290 = vsmask.f32 7424
    %v2292 = vshrl.u32 %v2226, 16
    %v2294 = vshll.u32 %v2226, 16
    %v2296 = vrot.slane %v2294, 1
    %v2297 = vor.u32 %v2292, %v2296
    %v2299 = vshll.u32 %v2274, 16
    %v2301 = vrot.slane %v2299, 1
    %v2302 = vsel %vm2290, %v2297, %v2301
    %v2304 = vshrl.u32 %v2227, 16
    %v2306 = vshll.u32 %v2227, 16
    %v2308 = vrot.slane %v2306, 1
    %v2309 = vor.u32 %v2304, %v2308
    %v2311 = vshll.u32 %v2275, 16
    %v2313 = vrot.slane %v2311, 1
    %v2314 = vsel %vm2290, %v2309, %v2313
    %v2316 = vshrl.u32 %v2228, 16
    %v2318 = vshll.u32 %v2228, 16
    %v2320 = vrot.slane %v2318, 1
    %v2321 = vor.u32 %v2316, %v2320
    %v2323 = vshll.u32 %v2276, 16
    %v2325 = vrot.slane %v2323, 1
    %v2326 = vsel %vm2290, %v2321, %v2325
    %v2328 = vshrl.u32 %v2229, 16
    %v2330 = vshll.u32 %v2229, 16
    %v2332 = vrot.slane %v2330, 1
    %v2333 = vor.u32 %v2328, %v2332
    %v2335 = vshll.u32 %v2277, 16
    %v2337 = vrot.slane %v2335, 1
    %v2338 = vsel %vm2290, %v2333, %v2337
    %v2340 = vshrl.u32 %v2230, 16
    %v2342 = vshll.u32 %v2230, 16
    %v2344 = vrot.slane %v2342, 1
    %v2345 = vor.u32 %v2340, %v2344
    %v2347 = vshll.u32 %v2278, 16
    %v2349 = vrot.slane %v2347, 1
    %v2350 = vsel %vm2290, %v2345, %v2349
    %v2352 = vshrl.u32 %v2231, 16
    %v2354 = vshll.u32 %v2231, 16
    %v2356 = vrot.slane %v2354, 1
    %v2357 = vor.u32 %v2352, %v2356
    %v2359 = vshll.u32 %v2279, 16
    %v2361 = vrot.slane %v2359, 1
    %v2362 = vsel %vm2290, %v2357, %v2361
    %v2364 = vshrl.u32 %v2232, 16
    %v2366 = vshll.u32 %v2232, 16
    %v2368 = vrot.slane %v2366, 1
    %v2369 = vor.u32 %v2364, %v2368
    %v2371 = vshll.u32 %v2280, 16
    %v2373 = vrot.slane %v2371, 1
    %v2374 = vsel %vm2290, %v2369, %v2373
    %v2376 = vshrl.u32 %v2233, 16
    %v2378 = vshll.u32 %v2233, 16
    %v2380 = vrot.slane %v2378, 1
    %v2381 = vor.u32 %v2376, %v2380
    %v2383 = vshll.u32 %v2281, 16
    %v2385 = vrot.slane %v2383, 1
    %v2386 = vsel %vm2290, %v2381, %v2385
    %v2388 = vshrl.u32 %v2234, 16
    %v2390 = vshll.u32 %v2234, 16
    %v2392 = vrot.slane %v2390, 1
    %v2393 = vor.u32 %v2388, %v2392
    %v2395 = vshll.u32 %v2282, 16
    %v2397 = vrot.slane %v2395, 1
    %v2398 = vsel %vm2290, %v2393, %v2397
    %v2400 = vshrl.u32 %v2235, 16
    %v2402 = vshll.u32 %v2235, 16
    %v2404 = vrot.slane %v2402, 1
    %v2405 = vor.u32 %v2400, %v2404
    %v2407 = vshll.u32 %v2283, 16
    %v2409 = vrot.slane %v2407, 1
    %v2410 = vsel %vm2290, %v2405, %v2409
    %v2412 = vshrl.u32 %v2236, 16
    %v2414 = vshll.u32 %v2236, 16
    %v2416 = vrot.slane %v2414, 1
    %v2417 = vor.u32 %v2412, %v2416
    %v2419 = vshll.u32 %v2284, 16
    %v2421 = vrot.slane %v2419, 1
    %v2422 = vsel %vm2290, %v2417, %v2421
    %v2424 = vshrl.u32 %v2237, 16
    %v2426 = vshll.u32 %v2237, 16
    %v2428 = vrot.slane %v2426, 1
    %v2429 = vor.u32 %v2424, %v2428
    %v2431 = vshll.u32 %v2285, 16
    %v2433 = vrot.slane %v2431, 1
    %v2434 = vsel %vm2290, %v2429, %v2433
    %v2436 = vshrl.u32 %v2238, 16
    %v2438 = vshll.u32 %v2238, 16
    %v2440 = vrot.slane %v2438, 1
    %v2441 = vor.u32 %v2436, %v2440
    %v2443 = vshll.u32 %v2286, 16
    %v2445 = vrot.slane %v2443, 1
    %v2446 = vsel %vm2290, %v2441, %v2445
    %v2448 = vshrl.u32 %v2239, 16
    %v2450 = vshll.u32 %v2239, 16
    %v2452 = vrot.slane %v2450, 1
    %v2453 = vor.u32 %v2448, %v2452
    %v2455 = vshll.u32 %v2287, 16
    %v2457 = vrot.slane %v2455, 1
    %v2458 = vsel %vm2290, %v2453, %v2457
    %v2460 = vshrl.u32 %v2240, 16
    %v2462 = vshll.u32 %v2240, 16
    %v2464 = vrot.slane %v2462, 1
    %v2465 = vor.u32 %v2460, %v2464
    %v2467 = vshll.u32 %v2288, 16
    %v2469 = vrot.slane %v2467, 1
    %v2470 = vsel %vm2290, %v2465, %v2469
    %v2472 = vshrl.u32 %v2241, 16
    %v2474 = vshll.u32 %v2241, 16
    %v2476 = vrot.slane %v2474, 1
    %v2477 = vor.u32 %v2472, %v2476
    %v2479 = vshll.u32 %v2289, 16
    %v2481 = vrot.slane %v2479, 1
    %v2482 = vsel %vm2290, %v2477, %v2481
    %2483 = vrot.lane.b32.xlu0 %v2302, 32
    %v2484 = vpop.permute.xlu0 %2483
    %2485 = vrot.lane.b32.xlu0 %v2314, 32
    %v2486 = vpop.permute.xlu0 %2485
    %2487 = vrot.lane.b32.xlu0 %v2326, 32
    %v2488 = vpop.permute.xlu0 %2487
    %2489 = vrot.lane.b32.xlu0 %v2338, 32
    %v2490 = vpop.permute.xlu0 %2489
    %2491 = vrot.lane.b32.xlu0 %v2350, 32
    %v2492 = vpop.permute.xlu0 %2491
    %2493 = vrot.lane.b32.xlu0 %v2362, 32
    %v2494 = vpop.permute.xlu0 %2493
    %2495 = vrot.lane.b32.xlu0 %v2374, 32
    %v2496 = vpop.permute.xlu0 %2495
    %2497 = vrot.lane.b32.xlu0 %v2386, 32
    %v2498 = vpop.permute.xlu0 %2497
    %2499 = vrot.lane.b32.xlu0 %v2398, 32
    %v2500 = vpop.permute.xlu0 %2499
    %2501 = vrot.lane.b32.xlu0 %v2410, 32
    %v2502 = vpop.permute.xlu0 %2501
    %2503 = vrot.lane.b32.xlu0 %v2422, 32
    %v2504 = vpop.permute.xlu0 %2503
    %2505 = vrot.lane.b32.xlu0 %v2434, 32
    %v2506 = vpop.permute.xlu0 %2505
    %2507 = vrot.lane.b32.xlu0 %v2446, 32
    %v2508 = vpop.permute.xlu0 %2507
    %2509 = vrot.lane.b32.xlu0 %v2458, 32
    %v2510 = vpop.permute.xlu0 %2509
    %2511 = vrot.lane.b32.xlu0 %v2470, 32
    %v2512 = vpop.permute.xlu0 %2511
    %2513 = vrot.lane.b32.xlu0 %v2482, 32
    %v2514 = vpop.permute.xlu0 %2513
    %v2531 = vunpack.c.l.b16 %v2017
    %v2532 = vunpack.c.l.b16 %v2018
    %v2533 = vunpack.c.l.b16 %v2019
    %v2534 = vunpack.c.l.b16 %v2020
    %v2535 = vunpack.c.l.b16 %v2021
    %v2536 = vunpack.c.l.b16 %v2022
    %v2537 = vunpack.c.l.b16 %v2023
    %v2538 = vunpack.c.l.b16 %v2024
    %v2539 = vunpack.c.l.b16 %v2025
    %v2540 = vunpack.c.l.b16 %v2026
    %v2541 = vunpack.c.l.b16 %v2027
    %v2542 = vunpack.c.l.b16 %v2028
    %v2543 = vunpack.c.l.b16 %v2029
    %v2544 = vunpack.c.l.b16 %v2030
    %v2545 = vunpack.c.l.b16 %v2031
    %v2546 = vunpack.c.l.b16 %v2032
    %v2547 = vpack.c.b16 %v2195, %v2531
    %v2548 = vpack.c.b16 %v2197, %v2532
    %v2549 = vpack.c.b16 %v2199, %v2533
    %v2550 = vpack.c.b16 %v2201, %v2534
    %v2551 = vpack.c.b16 %v2203, %v2535
    %v2552 = vpack.c.b16 %v2205, %v2536
    %v2553 = vpack.c.b16 %v2207, %v2537
    %v2554 = vpack.c.b16 %v2209, %v2538
    %v2555 = vpack.c.b16 %v2211, %v2539
    %v2556 = vpack.c.b16 %v2213, %v2540
    %v2557 = vpack.c.b16 %v2215, %v2541
    %v2558 = vpack.c.b16 %v2217, %v2542
    %v2559 = vpack.c.b16 %v2219, %v2543
    %v2560 = vpack.c.b16 %v2221, %v2544
    %v2561 = vpack.c.b16 %v2223, %v2545
    %v2562 = vpack.c.b16 %v2225, %v2546
    %vm2563 = vcmask 1046528
    %v2564 = vrot.slane %v2547, 1
    %v2565 = vrot.slane %v2274, 1
    %v2566 = vsel %vm2563, %v2564, %v2565
    %v2567 = vrot.slane %v2548, 1
    %v2568 = vrot.slane %v2275, 1
    %v2569 = vsel %vm2563, %v2567, %v2568
    %v2570 = vrot.slane %v2549, 1
    %v2571 = vrot.slane %v2276, 1
    %v2572 = vsel %vm2563, %v2570, %v2571
    %v2573 = vrot.slane %v2550, 1
    %v2574 = vrot.slane %v2277, 1
    %v2575 = vsel %vm2563, %v2573, %v2574
    %v2576 = vrot.slane %v2551, 1
    %v2577 = vrot.slane %v2278, 1
    %v2578 = vsel %vm2563, %v2576, %v2577
    %v2579 = vrot.slane %v2552, 1
    %v2580 = vrot.slane %v2279, 1
    %v2581 = vsel %vm2563, %v2579, %v2580
    %v2582 = vrot.slane %v2553, 1
    %v2583 = vrot.slane %v2280, 1
    %v2584 = vsel %vm2563, %v2582, %v2583
    %v2585 = vrot.slane %v2554, 1
    %v2586 = vrot.slane %v2281, 1
    %v2587 = vsel %vm2563, %v2585, %v2586
    %v2588 = vrot.slane %v2555, 1
    %v2589 = vrot.slane %v2282, 1
    %v2590 = vsel %vm2563, %v2588, %v2589
    %v2591 = vrot.slane %v2556, 1
    %v2592 = vrot.slane %v2283, 1
    %v2593 = vsel %vm2563, %v2591, %v2592
    %v2594 = vrot.slane %v2557, 1
    %v2595 = vrot.slane %v2284, 1
    %v2596 = vsel %vm2563, %v2594, %v2595
    %v2597 = vrot.slane %v2558, 1
    %v2598 = vrot.slane %v2285, 1
    %v2599 = vsel %vm2563, %v2597, %v2598
    %v2600 = vrot.slane %v2559, 1
    %v2601 = vrot.slane %v2286, 1
    %v2602 = vsel %vm2563, %v2600, %v2601
    %v2603 = vrot.slane %v2560, 1
    %v2604 = vrot.slane %v2287, 1
    %v2605 = vsel %vm2563, %v2603, %v2604
    %v2606 = vrot.slane %v2561, 1
    %v2607 = vrot.slane %v2288, 1
    %v2608 = vsel %vm2563, %v2606, %v2607
    %v2609 = vrot.slane %v2562, 1
    %v2610 = vrot.slane %v2289, 1
    %v2611 = vsel %vm2563, %v2609, %v2610
    %2612 = vrot.lane.b32.xlu0 %v2566, 64
    %v2613 = vpop.permute.xlu0 %2612
    %2614 = vrot.lane.b32.xlu0 %v2569, 64
    %v2615 = vpop.permute.xlu0 %2614
    %2616 = vrot.lane.b32.xlu0 %v2572, 64
    %v2617 = vpop.permute.xlu0 %2616
    %2618 = vrot.lane.b32.xlu0 %v2575, 64
    %v2619 = vpop.permute.xlu0 %2618
    %2620 = vrot.lane.b32.xlu0 %v2578, 64
    %v2621 = vpop.permute.xlu0 %2620
    %2622 = vrot.lane.b32.xlu0 %v2581, 64
    %v2623 = vpop.permute.xlu0 %2622
    %2624 = vrot.lane.b32.xlu0 %v2584, 64
    %v2625 = vpop.permute.xlu0 %2624
    %2626 = vrot.lane.b32.xlu0 %v2587, 64
    %v2627 = vpop.permute.xlu0 %2626
    %2628 = vrot.lane.b32.xlu0 %v2590, 64
    %v2629 = vpop.permute.xlu0 %2628
    %2630 = vrot.lane.b32.xlu0 %v2593, 64
    %v2631 = vpop.permute.xlu0 %2630
    %2632 = vrot.lane.b32.xlu0 %v2596, 64
    %v2633 = vpop.permute.xlu0 %2632
    %2634 = vrot.lane.b32.xlu0 %v2599, 64
    %v2635 = vpop.permute.xlu0 %2634
    %2636 = vrot.lane.b32.xlu0 %v2602, 64
    %v2637 = vpop.permute.xlu0 %2636
    %2638 = vrot.lane.b32.xlu0 %v2605, 64
    %v2639 = vpop.permute.xlu0 %2638
    %2640 = vrot.lane.b32.xlu0 %v2608, 64
    %v2641 = vpop.permute.xlu0 %2640
    %2642 = vrot.lane.b32.xlu0 %v2611, 64
    %v2643 = vpop.permute.xlu0 %2642
    %v2676 = vunpack.c.l.b16 %v2033
    %v2677 = vunpack.c.l.b16 %v2034
    %v2678 = vunpack.c.l.b16 %v2035
    %v2679 = vunpack.c.l.b16 %v2036
    %v2680 = vunpack.c.l.b16 %v2037
    %v2681 = vunpack.c.l.b16 %v2038
    %v2682 = vunpack.c.l.b16 %v2039
    %v2683 = vunpack.c.l.b16 %v2040
    %v2684 = vunpack.c.l.b16 %v2041
    %v2685 = vunpack.c.l.b16 %v2042
    %v2686 = vunpack.c.l.b16 %v2043
    %v2687 = vunpack.c.l.b16 %v2044
    %v2688 = vunpack.c.l.b16 %v2045
    %v2689 = vunpack.c.l.b16 %v2046
    %v2690 = vunpack.c.l.b16 %v2047
    %v2691 = vunpack.c.l.b16 %v2048
    %v2692 = vunpack.c.l.b16 %v2049
    %v2693 = vunpack.c.l.b16 %v2050
    %v2694 = vunpack.c.l.b16 %v2051
    %v2695 = vunpack.c.l.b16 %v2052
    %v2696 = vunpack.c.l.b16 %v2053
    %v2697 = vunpack.c.l.b16 %v2054
    %v2698 = vunpack.c.l.b16 %v2055
    %v2699 = vunpack.c.l.b16 %v2056
    %v2700 = vunpack.c.l.b16 %v2057
    %v2701 = vunpack.c.l.b16 %v2058
    %v2702 = vunpack.c.l.b16 %v2059
    %v2703 = vunpack.c.l.b16 %v2060
    %v2704 = vunpack.c.l.b16 %v2061
    %v2705 = vunpack.c.l.b16 %v2062
    %v2706 = vunpack.c.l.b16 %v2063
    %v2707 = vunpack.c.l.b16 %v2064
    %v2708 = vpack.c.b16 %v2677, %v2676
    %v2709 = vpack.c.b16 %v2679, %v2678
    %v2710 = vpack.c.b16 %v2681, %v2680
    %v2711 = vpack.c.b16 %v2683, %v2682
    %v2712 = vpack.c.b16 %v2685, %v2684
    %v2713 = vpack.c.b16 %v2687, %v2686
    %v2714 = vpack.c.b16 %v2689, %v2688
    %v2715 = vpack.c.b16 %v2691, %v2690
    %v2716 = vpack.c.b16 %v2693, %v2692
    %v2717 = vpack.c.b16 %v2695, %v2694
    %v2718 = vpack.c.b16 %v2697, %v2696
    %v2719 = vpack.c.b16 %v2699, %v2698
    %v2720 = vpack.c.b16 %v2701, %v2700
    %v2721 = vpack.c.b16 %v2703, %v2702
    %v2722 = vpack.c.b16 %v2705, %v2704
    %v2723 = vpack.c.b16 %v2707, %v2706
    %2724 = vrot.lane.b32.xlu0 %v2708, 96
    %v2725 = vpop.permute.xlu0 %2724
    %2726 = vrot.lane.b32.xlu0 %v2709, 96
    %v2727 = vpop.permute.xlu0 %2726
    %2728 = vrot.lane.b32.xlu0 %v2710, 96
    %v2729 = vpop.permute.xlu0 %2728
    %2730 = vrot.lane.b32.xlu0 %v2711, 96
    %v2731 = vpop.permute.xlu0 %2730
    %2732 = vrot.lane.b32.xlu0 %v2712, 96
    %v2733 = vpop.permute.xlu0 %2732
    %2734 = vrot.lane.b32.xlu0 %v2713, 96
    %v2735 = vpop.permute.xlu0 %2734
    %2736 = vrot.lane.b32.xlu0 %v2714, 96
    %v2737 = vpop.permute.xlu0 %2736
    %2738 = vrot.lane.b32.xlu0 %v2715, 96
    %v2739 = vpop.permute.xlu0 %2738
    %2740 = vrot.lane.b32.xlu0 %v2716, 96
    %v2741 = vpop.permute.xlu0 %2740
    %2742 = vrot.lane.b32.xlu0 %v2717, 96
    %v2743 = vpop.permute.xlu0 %2742
    %2744 = vrot.lane.b32.xlu0 %v2718, 96
    %v2745 = vpop.permute.xlu0 %2744
    %2746 = vrot.lane.b32.xlu0 %v2719, 96
    %v2747 = vpop.permute.xlu0 %2746
    %2748 = vrot.lane.b32.xlu0 %v2720, 96
    %v2749 = vpop.permute.xlu0 %2748
    %2750 = vrot.lane.b32.xlu0 %v2721, 96
    %v2751 = vpop.permute.xlu0 %2750
    %2752 = vrot.lane.b32.xlu0 %v2722, 96
    %v2753 = vpop.permute.xlu0 %2752
    %2754 = vrot.lane.b32.xlu0 %v2723, 96
    %v2755 = vpop.permute.xlu0 %2754
    %v2772 = vunpack.c.l.b16 %v2065
    %v2773 = vunpack.c.l.b16 %v2066
    %v2774 = vunpack.c.l.b16 %v2067
    %v2775 = vunpack.c.l.b16 %v2068
    %v2776 = vunpack.c.l.b16 %v2069
    %v2777 = vunpack.c.l.b16 %v2070
    %v2778 = vunpack.c.l.b16 %v2071
    %v2779 = vunpack.c.l.b16 %v2072
    %v2780 = vunpack.c.l.b16 %v2073
    %v2781 = vunpack.c.l.b16 %v2074
    %v2782 = vunpack.c.l.b16 %v2075
    %v2783 = vunpack.c.l.b16 %v2076
    %v2784 = vunpack.c.l.b16 %v2077
    %v2785 = vunpack.c.l.b16 %v2078
    %v2786 = vunpack.c.l.b16 %v2079
    %v2787 = vunpack.c.l.b16 %v2080
    %v2788 = vpack.c.b16 %v2772, %v2772
    %v2789 = vpack.c.b16 %v2773, %v2773
    %v2790 = vpack.c.b16 %v2774, %v2774
    %v2791 = vpack.c.b16 %v2775, %v2775
    %v2792 = vpack.c.b16 %v2776, %v2776
    %v2793 = vpack.c.b16 %v2777, %v2777
    %v2794 = vpack.c.b16 %v2778, %v2778
    %v2795 = vpack.c.b16 %v2779, %v2779
    %v2796 = vpack.c.b16 %v2780, %v2780
    %v2797 = vpack.c.b16 %v2781, %v2781
    %v2798 = vpack.c.b16 %v2782, %v2782
    %v2799 = vpack.c.b16 %v2783, %v2783
    %v2800 = vpack.c.b16 %v2784, %v2784
    %v2801 = vpack.c.b16 %v2785, %v2785
    %v2802 = vpack.c.b16 %v2786, %v2786
    %v2803 = vpack.c.b16 %v2787, %v2787
    %v2805 = vshrl.u32 %v2708, 16
    %v2807 = vshll.u32 %v2708, 16
    %v2809 = vrot.slane %v2807, 1
    %v2810 = vor.u32 %v2805, %v2809
    %v2812 = vshll.u32 %v2788, 16
    %v2814 = vrot.slane %v2812, 1
    %v2815 = vsel %vm2290, %v2810, %v2814
    %v2817 = vshrl.u32 %v2709, 16
    %v2819 = vshll.u32 %v2709, 16
    %v2821 = vrot.slane %v2819, 1
    %v2822 = vor.u32 %v2817, %v2821
    %v2824 = vshll.u32 %v2789, 16
    %v2826 = vrot.slane %v2824, 1
    %v2827 = vsel %vm2290, %v2822, %v2826
    %v2829 = vshrl.u32 %v2710, 16
    %v2831 = vshll.u32 %v2710, 16
    %v2833 = vrot.slane %v2831, 1
    %v2834 = vor.u32 %v2829, %v2833
    %v2836 = vshll.u32 %v2790, 16
    %v2838 = vrot.slane %v2836, 1
    %v2839 = vsel %vm2290, %v2834, %v2838
    %v2841 = vshrl.u32 %v2711, 16
    %v2843 = vshll.u32 %v2711, 16
    %v2845 = vrot.slane %v2843, 1
    %v2846 = vor.u32 %v2841, %v2845
    %v2848 = vshll.u32 %v2791, 16
    %v2850 = vrot.slane %v2848, 1
    %v2851 = vsel %vm2290, %v2846, %v2850
    %v2853 = vshrl.u32 %v2712, 16
    %v2855 = vshll.u32 %v2712, 16
    %v2857 = vrot.slane %v2855, 1
    %v2858 = vor.u32 %v2853, %v2857
    %v2860 = vshll.u32 %v2792, 16
    %v2862 = vrot.slane %v2860, 1
    %v2863 = vsel %vm2290, %v2858, %v2862
    %v2865 = vshrl.u32 %v2713, 16
    %v2867 = vshll.u32 %v2713, 16
    %v2869 = vrot.slane %v2867, 1
    %v2870 = vor.u32 %v2865, %v2869
    %v2872 = vshll.u32 %v2793, 16
    %v2874 = vrot.slane %v2872, 1
    %v2875 = vsel %vm2290, %v2870, %v2874
    %v2877 = vshrl.u32 %v2714, 16
    %v2879 = vshll.u32 %v2714, 16
    %v2881 = vrot.slane %v2879, 1
    %v2882 = vor.u32 %v2877, %v2881
    %v2884 = vshll.u32 %v2794, 16
    %v2886 = vrot.slane %v2884, 1
    %v2887 = vsel %vm2290, %v2882, %v2886
    %v2889 = vshrl.u32 %v2715, 16
    %v2891 = vshll.u32 %v2715, 16
    %v2893 = vrot.slane %v2891, 1
    %v2894 = vor.u32 %v2889, %v2893
    %v2896 = vshll.u32 %v2795, 16
    %v2898 = vrot.slane %v2896, 1
    %v2899 = vsel %vm2290, %v2894, %v2898
    %v2901 = vshrl.u32 %v2716, 16
    %v2903 = vshll.u32 %v2716, 16
    %v2905 = vrot.slane %v2903, 1
    %v2906 = vor.u32 %v2901, %v2905
    %v2908 = vshll.u32 %v2796, 16
    %v2910 = vrot.slane %v2908, 1
    %v2911 = vsel %vm2290, %v2906, %v2910
    %v2913 = vshrl.u32 %v2717, 16
    %v2915 = vshll.u32 %v2717, 16
    %v2917 = vrot.slane %v2915, 1
    %v2918 = vor.u32 %v2913, %v2917
    %v2920 = vshll.u32 %v2797, 16
    %v2922 = vrot.slane %v2920, 1
    %v2923 = vsel %vm2290, %v2918, %v2922
    %v2925 = vshrl.u32 %v2718, 16
    %v2927 = vshll.u32 %v2718, 16
    %v2929 = vrot.slane %v2927, 1
    %v2930 = vor.u32 %v2925, %v2929
    %v2932 = vshll.u32 %v2798, 16
    %v2934 = vrot.slane %v2932, 1
    %v2935 = vsel %vm2290, %v2930, %v2934
    %v2937 = vshrl.u32 %v2719, 16
    %v2939 = vshll.u32 %v2719, 16
    %v2941 = vrot.slane %v2939, 1
    %v2942 = vor.u32 %v2937, %v2941
    %v2944 = vshll.u32 %v2799, 16
    %v2946 = vrot.slane %v2944, 1
    %v2947 = vsel %vm2290, %v2942, %v2946
    %v2949 = vshrl.u32 %v2720, 16
    %v2951 = vshll.u32 %v2720, 16
    %v2953 = vrot.slane %v2951, 1
    %v2954 = vor.u32 %v2949, %v2953
    %v2956 = vshll.u32 %v2800, 16
    %v2958 = vrot.slane %v2956, 1
    %v2959 = vsel %vm2290, %v2954, %v2958
    %v2961 = vshrl.u32 %v2721, 16
    %v2963 = vshll.u32 %v2721, 16
    %v2965 = vrot.slane %v2963, 1
    %v2966 = vor.u32 %v2961, %v2965
    %v2968 = vshll.u32 %v2801, 16
    %v2970 = vrot.slane %v2968, 1
    %v2971 = vsel %vm2290, %v2966, %v2970
    %v2973 = vshrl.u32 %v2722, 16
    %v2975 = vshll.u32 %v2722, 16
    %v2977 = vrot.slane %v2975, 1
    %v2978 = vor.u32 %v2973, %v2977
    %v2980 = vshll.u32 %v2802, 16
    %v2982 = vrot.slane %v2980, 1
    %v2983 = vsel %vm2290, %v2978, %v2982
    %v2985 = vshrl.u32 %v2723, 16
    %v2987 = vshll.u32 %v2723, 16
    %v2989 = vrot.slane %v2987, 1
    %v2990 = vor.u32 %v2985, %v2989
    %v2992 = vshll.u32 %v2803, 16
    %v2994 = vrot.slane %v2992, 1
    %v2995 = vsel %vm2290, %v2990, %v2994
    %v3012 = vunpack.c.l.b16 %v2081
    %v3013 = vunpack.c.l.b16 %v2082
    %v3014 = vunpack.c.l.b16 %v2083
    %v3015 = vunpack.c.l.b16 %v2084
    %v3016 = vunpack.c.l.b16 %v2085
    %v3017 = vunpack.c.l.b16 %v2086
    %v3018 = vunpack.c.l.b16 %v2087
    %v3019 = vunpack.c.l.b16 %v2088
    %v3020 = vunpack.c.l.b16 %v2089
    %v3021 = vunpack.c.l.b16 %v2090
    %v3022 = vunpack.c.l.b16 %v2091
    %v3023 = vunpack.c.l.b16 %v2092
    %v3024 = vunpack.c.l.b16 %v2093
    %v3025 = vunpack.c.l.b16 %v2094
    %v3026 = vunpack.c.l.b16 %v2095
    %v3027 = vunpack.c.l.b16 %v2096
    %v3028 = vpack.c.b16 %v2677, %v3012
    %v3029 = vpack.c.b16 %v2679, %v3013
    %v3030 = vpack.c.b16 %v2681, %v3014
    %v3031 = vpack.c.b16 %v2683, %v3015
    %v3032 = vpack.c.b16 %v2685, %v3016
    %v3033 = vpack.c.b16 %v2687, %v3017
    %v3034 = vpack.c.b16 %v2689, %v3018
    %v3035 = vpack.c.b16 %v2691, %v3019
    %v3036 = vpack.c.b16 %v2693, %v3020
    %v3037 = vpack.c.b16 %v2695, %v3021
    %v3038 = vpack.c.b16 %v2697, %v3022
    %v3039 = vpack.c.b16 %v2699, %v3023
    %v3040 = vpack.c.b16 %v2701, %v3024
    %v3041 = vpack.c.b16 %v2703, %v3025
    %v3042 = vpack.c.b16 %v2705, %v3026
    %v3043 = vpack.c.b16 %v2707, %v3027
    %v3044 = vrot.slane %v3028, 1
    %v3045 = vrot.slane %v2788, 1
    %v3046 = vsel %vm2563, %v3044, %v3045
    %v3047 = vrot.slane %v3029, 1
    %v3048 = vrot.slane %v2789, 1
    %v3049 = vsel %vm2563, %v3047, %v3048
    %v3050 = vrot.slane %v3030, 1
    %v3051 = vrot.slane %v2790, 1
    %v3052 = vsel %vm2563, %v3050, %v3051
    %v3053 = vrot.slane %v3031, 1
    %v3054 = vrot.slane %v2791, 1
    %v3055 = vsel %vm2563, %v3053, %v3054
    %v3056 = vrot.slane %v3032, 1
    %v3057 = vrot.slane %v2792, 1
    %v3058 = vsel %vm2563, %v3056, %v3057
    %v3059 = vrot.slane %v3033, 1
    %v3060 = vrot.slane %v2793, 1
    %v3061 = vsel %vm2563, %v3059, %v3060
    %v3062 = vrot.slane %v3034, 1
    %v3063 = vrot.slane %v2794, 1
    %v3064 = vsel %vm2563, %v3062, %v3063
    %v3065 = vrot.slane %v3035, 1
    %v3066 = vrot.slane %v2795, 1
    %v3067 = vsel %vm2563, %v3065, %v3066
    %v3068 = vrot.slane %v3036, 1
    %v3069 = vrot.slane %v2796, 1
    %v3070 = vsel %vm2563, %v3068, %v3069
    %v3071 = vrot.slane %v3037, 1
    %v3072 = vrot.slane %v2797, 1
    %v3073 = vsel %vm2563, %v3071, %v3072
    %v3074 = vrot.slane %v3038, 1
    %v3075 = vrot.slane %v2798, 1
    %v3076 = vsel %vm2563, %v3074, %v3075
    %v3077 = vrot.slane %v3039, 1
    %v3078 = vrot.slane %v2799, 1
    %v3079 = vsel %vm2563, %v3077, %v3078
    %v3080 = vrot.slane %v3040, 1
    %v3081 = vrot.slane %v2800, 1
    %v3082 = vsel %vm2563, %v3080, %v3081
    %v3083 = vrot.slane %v3041, 1
    %v3084 = vrot.slane %v2801, 1
    %v3085 = vsel %vm2563, %v3083, %v3084
    %v3086 = vrot.slane %v3042, 1
    %v3087 = vrot.slane %v2802, 1
    %v3088 = vsel %vm2563, %v3086, %v3087
    %v3089 = vrot.slane %v3043, 1
    %v3090 = vrot.slane %v2803, 1
    %v3091 = vsel %vm2563, %v3089, %v3090
    %3092 = vrot.lane.b32.xlu0 %v3046, 32
    %v3093 = vpop.permute.xlu0 %3092
    %3094 = vrot.lane.b32.xlu0 %v3049, 32
    %v3095 = vpop.permute.xlu0 %3094
    %3096 = vrot.lane.b32.xlu0 %v3052, 32
    %v3097 = vpop.permute.xlu0 %3096
    %3098 = vrot.lane.b32.xlu0 %v3055, 32
    %v3099 = vpop.permute.xlu0 %3098
    %3100 = vrot.lane.b32.xlu0 %v3058, 32
    %v3101 = vpop.permute.xlu0 %3100
    %3102 = vrot.lane.b32.xlu0 %v3061, 32
    %v3103 = vpop.permute.xlu0 %3102
    %3104 = vrot.lane.b32.xlu0 %v3064, 32
    %v3105 = vpop.permute.xlu0 %3104
    %3106 = vrot.lane.b32.xlu0 %v3067, 32
    %v3107 = vpop.permute.xlu0 %3106
    %3108 = vrot.lane.b32.xlu0 %v3070, 32
    %v3109 = vpop.permute.xlu0 %3108
    %3110 = vrot.lane.b32.xlu0 %v3073, 32
    %v3111 = vpop.permute.xlu0 %3110
    %3112 = vrot.lane.b32.xlu0 %v3076, 32
    %v3113 = vpop.permute.xlu0 %3112
    %3114 = vrot.lane.b32.xlu0 %v3079, 32
    %v3115 = vpop.permute.xlu0 %3114
    %3116 = vrot.lane.b32.xlu0 %v3082, 32
    %v3117 = vpop.permute.xlu0 %3116
    %3118 = vrot.lane.b32.xlu0 %v3085, 32
    %v3119 = vpop.permute.xlu0 %3118
    %3120 = vrot.lane.b32.xlu0 %v3088, 32
    %v3121 = vpop.permute.xlu0 %3120
    %3122 = vrot.lane.b32.xlu0 %v3091, 32
    %v3123 = vpop.permute.xlu0 %3122
    %v3156 = vunpack.c.l.b16 %v2098
    %v3157 = vunpack.c.l.b16 %v2099
    %v3158 = vunpack.c.l.b16 %v2100
    %v3159 = vunpack.c.l.b16 %v2101
    %v3160 = vunpack.c.l.b16 %v2102
    %v3161 = vunpack.c.l.b16 %v2103
    %v3162 = vunpack.c.l.b16 %v2104
    %v3163 = vunpack.c.l.b16 %v2105
    %v3164 = vunpack.c.l.b16 %v2106
    %v3165 = vunpack.c.l.b16 %v2107
    %v3166 = vunpack.c.l.b16 %v2108
    %v3167 = vunpack.c.l.b16 %v2109
    %v3168 = vunpack.c.l.b16 %v2110
    %v3169 = vunpack.c.l.b16 %v2111
    %v3170 = vunpack.c.l.b16 %v2112
    %v3171 = vunpack.c.l.b16 %v2113
    %v3172 = vunpack.c.l.b16 %v2114
    %v3173 = vunpack.c.l.b16 %v2115
    %v3174 = vunpack.c.l.b16 %v2116
    %v3175 = vunpack.c.l.b16 %v2117
    %v3176 = vunpack.c.l.b16 %v2118
    %v3177 = vunpack.c.l.b16 %v2119
    %v3178 = vunpack.c.l.b16 %v2120
    %v3179 = vunpack.c.l.b16 %v2121
    %v3180 = vunpack.c.l.b16 %v2122
    %v3181 = vunpack.c.l.b16 %v2123
    %v3182 = vunpack.c.l.b16 %v2124
    %v3183 = vunpack.c.l.b16 %v2125
    %v3184 = vunpack.c.l.b16 %v2126
    %v3185 = vunpack.c.l.b16 %v2127
    %v3186 = vunpack.c.l.b16 %v2128
    %v3187 = vunpack.c.l.b16 %v2129
    %v3188 = vpack.c.b16 %v3157, %v3156
    %v3189 = vpack.c.b16 %v3159, %v3158
    %v3190 = vpack.c.b16 %v3161, %v3160
    %v3191 = vpack.c.b16 %v3163, %v3162
    %v3192 = vpack.c.b16 %v3165, %v3164
    %v3193 = vpack.c.b16 %v3167, %v3166
    %v3194 = vpack.c.b16 %v3169, %v3168
    %v3195 = vpack.c.b16 %v3171, %v3170
    %v3196 = vpack.c.b16 %v3173, %v3172
    %v3197 = vpack.c.b16 %v3175, %v3174
    %v3198 = vpack.c.b16 %v3177, %v3176
    %v3199 = vpack.c.b16 %v3179, %v3178
    %v3200 = vpack.c.b16 %v3181, %v3180
    %v3201 = vpack.c.b16 %v3183, %v3182
    %v3202 = vpack.c.b16 %v3185, %v3184
    %v3203 = vpack.c.b16 %v3187, %v3186
    %3204 = vrot.lane.b32.xlu0 %v3188, 64
    %v3205 = vpop.permute.xlu0 %3204
    %3206 = vrot.lane.b32.xlu0 %v3189, 64
    %v3207 = vpop.permute.xlu0 %3206
    %3208 = vrot.lane.b32.xlu0 %v3190, 64
    %v3209 = vpop.permute.xlu0 %3208
    %3210 = vrot.lane.b32.xlu0 %v3191, 64
    %v3211 = vpop.permute.xlu0 %3210
    %3212 = vrot.lane.b32.xlu0 %v3192, 64
    %v3213 = vpop.permute.xlu0 %3212
    %3214 = vrot.lane.b32.xlu0 %v3193, 64
    %v3215 = vpop.permute.xlu0 %3214
    %3216 = vrot.lane.b32.xlu0 %v3194, 64
    %v3217 = vpop.permute.xlu0 %3216
    %3218 = vrot.lane.b32.xlu0 %v3195, 64
    %v3219 = vpop.permute.xlu0 %3218
    %3220 = vrot.lane.b32.xlu0 %v3196, 64
    %v3221 = vpop.permute.xlu0 %3220
    %3222 = vrot.lane.b32.xlu0 %v3197, 64
    %v3223 = vpop.permute.xlu0 %3222
    %3224 = vrot.lane.b32.xlu0 %v3198, 64
    %v3225 = vpop.permute.xlu0 %3224
    %3226 = vrot.lane.b32.xlu0 %v3199, 64
    %v3227 = vpop.permute.xlu0 %3226
    %3228 = vrot.lane.b32.xlu0 %v3200, 64
    %v3229 = vpop.permute.xlu0 %3228
    %3230 = vrot.lane.b32.xlu0 %v3201, 64
    %v3231 = vpop.permute.xlu0 %3230
    %3232 = vrot.lane.b32.xlu0 %v3202, 64
    %v3233 = vpop.permute.xlu0 %3232
    %3234 = vrot.lane.b32.xlu0 %v3203, 64
    %v3235 = vpop.permute.xlu0 %3234
    %v3252 = vunpack.c.l.b16 %v2130
    %v3253 = vunpack.c.l.b16 %v2131
    %v3254 = vunpack.c.l.b16 %v2132
    %v3255 = vunpack.c.l.b16 %v2133
    %v3256 = vunpack.c.l.b16 %v2134
    %v3257 = vunpack.c.l.b16 %v2135
    %v3258 = vunpack.c.l.b16 %v2136
    %v3259 = vunpack.c.l.b16 %v2137
    %v3260 = vunpack.c.l.b16 %v2138
    %v3261 = vunpack.c.l.b16 %v2139
    %v3262 = vunpack.c.l.b16 %v2140
    %v3263 = vunpack.c.l.b16 %v2141
    %v3264 = vunpack.c.l.b16 %v2142
    %v3265 = vunpack.c.l.b16 %v2143
    %v3266 = vunpack.c.l.b16 %v2144
    %v3267 = vunpack.c.l.b16 %v2145
    %v3268 = vpack.c.b16 %v3252, %v3252
    %v3269 = vpack.c.b16 %v3253, %v3253
    %v3270 = vpack.c.b16 %v3254, %v3254
    %v3271 = vpack.c.b16 %v3255, %v3255
    %v3272 = vpack.c.b16 %v3256, %v3256
    %v3273 = vpack.c.b16 %v3257, %v3257
    %v3274 = vpack.c.b16 %v3258, %v3258
    %v3275 = vpack.c.b16 %v3259, %v3259
    %v3276 = vpack.c.b16 %v3260, %v3260
    %v3277 = vpack.c.b16 %v3261, %v3261
    %v3278 = vpack.c.b16 %v3262, %v3262
    %v3279 = vpack.c.b16 %v3263, %v3263
    %v3280 = vpack.c.b16 %v3264, %v3264
    %v3281 = vpack.c.b16 %v3265, %v3265
    %v3282 = vpack.c.b16 %v3266, %v3266
    %v3283 = vpack.c.b16 %v3267, %v3267
    %v3285 = vshrl.u32 %v3188, 16
    %v3287 = vshll.u32 %v3188, 16
    %v3289 = vrot.slane %v3287, 1
    %v3290 = vor.u32 %v3285, %v3289
    %v3292 = vshll.u32 %v3268, 16
    %v3294 = vrot.slane %v3292, 1
    %v3295 = vsel %vm2290, %v3290, %v3294
    %v3297 = vshrl.u32 %v3189, 16
    %v3299 = vshll.u32 %v3189, 16
    %v3301 = vrot.slane %v3299, 1
    %v3302 = vor.u32 %v3297, %v3301
    %v3304 = vshll.u32 %v3269, 16
    %v3306 = vrot.slane %v3304, 1
    %v3307 = vsel %vm2290, %v3302, %v3306
    %v3309 = vshrl.u32 %v3190, 16
    %v3311 = vshll.u32 %v3190, 16
    %v3313 = vrot.slane %v3311, 1
    %v3314 = vor.u32 %v3309, %v3313
    %v3316 = vshll.u32 %v3270, 16
    %v3318 = vrot.slane %v3316, 1
    %v3319 = vsel %vm2290, %v3314, %v3318
    %v3321 = vshrl.u32 %v3191, 16
    %v3323 = vshll.u32 %v3191, 16
    %v3325 = vrot.slane %v3323, 1
    %v3326 = vor.u32 %v3321, %v3325
    %v3328 = vshll.u32 %v3271, 16
    %v3330 = vrot.slane %v3328, 1
    %v3331 = vsel %vm2290, %v3326, %v3330
    %v3333 = vshrl.u32 %v3192, 16
    %v3335 = vshll.u32 %v3192, 16
    %v3337 = vrot.slane %v3335, 1
    %v3338 = vor.u32 %v3333, %v3337
    %v3340 = vshll.u32 %v3272, 16
    %v3342 = vrot.slane %v3340, 1
    %v3343 = vsel %vm2290, %v3338, %v3342
    %v3345 = vshrl.u32 %v3193, 16
    %v3347 = vshll.u32 %v3193, 16
    %v3349 = vrot.slane %v3347, 1
    %v3350 = vor.u32 %v3345, %v3349
    %v3352 = vshll.u32 %v3273, 16
    %v3354 = vrot.slane %v3352, 1
    %v3355 = vsel %vm2290, %v3350, %v3354
    %v3357 = vshrl.u32 %v3194, 16
    %v3359 = vshll.u32 %v3194, 16
    %v3361 = vrot.slane %v3359, 1
    %v3362 = vor.u32 %v3357, %v3361
    %v3364 = vshll.u32 %v3274, 16
    %v3366 = vrot.slane %v3364, 1
    %v3367 = vsel %vm2290, %v3362, %v3366
    %v3369 = vshrl.u32 %v3195, 16
    %v3371 = vshll.u32 %v3195, 16
    %v3373 = vrot.slane %v3371, 1
    %v3374 = vor.u32 %v3369, %v3373
    %v3376 = vshll.u32 %v3275, 16
    %v3378 = vrot.slane %v3376, 1
    %v3379 = vsel %vm2290, %v3374, %v3378
    %v3381 = vshrl.u32 %v3196, 16
    %v3383 = vshll.u32 %v3196, 16
    %v3385 = vrot.slane %v3383, 1
    %v3386 = vor.u32 %v3381, %v3385
    %v3388 = vshll.u32 %v3276, 16
    %v3390 = vrot.slane %v3388, 1
    %v3391 = vsel %vm2290, %v3386, %v3390
    %v3393 = vshrl.u32 %v3197, 16
    %v3395 = vshll.u32 %v3197, 16
    %v3397 = vrot.slane %v3395, 1
    %v3398 = vor.u32 %v3393, %v3397
    %v3400 = vshll.u32 %v3277, 16
    %v3402 = vrot.slane %v3400, 1
    %v3403 = vsel %vm2290, %v3398, %v3402
    %v3405 = vshrl.u32 %v3198, 16
    %v3407 = vshll.u32 %v3198, 16
    %v3409 = vrot.slane %v3407, 1
    %v3410 = vor.u32 %v3405, %v3409
    %v3412 = vshll.u32 %v3278, 16
    %v3414 = vrot.slane %v3412, 1
    %v3415 = vsel %vm2290, %v3410, %v3414
    %v3417 = vshrl.u32 %v3199, 16
    %v3419 = vshll.u32 %v3199, 16
    %v3421 = vrot.slane %v3419, 1
    %v3422 = vor.u32 %v3417, %v3421
    %v3424 = vshll.u32 %v3279, 16
    %v3426 = vrot.slane %v3424, 1
    %v3427 = vsel %vm2290, %v3422, %v3426
    %v3429 = vshrl.u32 %v3200, 16
    %v3431 = vshll.u32 %v3200, 16
    %v3433 = vrot.slane %v3431, 1
    %v3434 = vor.u32 %v3429, %v3433
    %v3436 = vshll.u32 %v3280, 16
    %v3438 = vrot.slane %v3436, 1
    %v3439 = vsel %vm2290, %v3434, %v3438
    %v3441 = vshrl.u32 %v3201, 16
    %v3443 = vshll.u32 %v3201, 16
    %v3445 = vrot.slane %v3443, 1
    %v3446 = vor.u32 %v3441, %v3445
    %v3448 = vshll.u32 %v3281, 16
    %v3450 = vrot.slane %v3448, 1
    %v3451 = vsel %vm2290, %v3446, %v3450
    %v3453 = vshrl.u32 %v3202, 16
    %v3455 = vshll.u32 %v3202, 16
    %v3457 = vrot.slane %v3455, 1
    %v3458 = vor.u32 %v3453, %v3457
    %v3460 = vshll.u32 %v3282, 16
    %v3462 = vrot.slane %v3460, 1
    %v3463 = vsel %vm2290, %v3458, %v3462
    %v3465 = vshrl.u32 %v3203, 16
    %v3467 = vshll.u32 %v3203, 16
    %v3469 = vrot.slane %v3467, 1
    %v3470 = vor.u32 %v3465, %v3469
    %v3472 = vshll.u32 %v3283, 16
    %v3474 = vrot.slane %v3472, 1
    %v3475 = vsel %vm2290, %v3470, %v3474
    %3476 = vrot.lane.b32.xlu0 %v3295, 96
    %v3477 = vpop.permute.xlu0 %3476
    %3478 = vrot.lane.b32.xlu0 %v3307, 96
    %v3479 = vpop.permute.xlu0 %3478
    %3480 = vrot.lane.b32.xlu0 %v3319, 96
    %v3481 = vpop.permute.xlu0 %3480
    %3482 = vrot.lane.b32.xlu0 %v3331, 96
    %v3483 = vpop.permute.xlu0 %3482
    %3484 = vrot.lane.b32.xlu0 %v3343, 96
    %v3485 = vpop.permute.xlu0 %3484
    %3486 = vrot.lane.b32.xlu0 %v3355, 96
    %v3487 = vpop.permute.xlu0 %3486
    %3488 = vrot.lane.b32.xlu0 %v3367, 96
    %v3489 = vpop.permute.xlu0 %3488
    %3490 = vrot.lane.b32.xlu0 %v3379, 96
    %v3491 = vpop.permute.xlu0 %3490
    %3492 = vrot.lane.b32.xlu0 %v3391, 96
    %v3493 = vpop.permute.xlu0 %3492
    %3494 = vrot.lane.b32.xlu0 %v3403, 96
    %v3495 = vpop.permute.xlu0 %3494
    %3496 = vrot.lane.b32.xlu0 %v3415, 96
    %v3497 = vpop.permute.xlu0 %3496
    %3498 = vrot.lane.b32.xlu0 %v3427, 96
    %v3499 = vpop.permute.xlu0 %3498
    %3500 = vrot.lane.b32.xlu0 %v3439, 96
    %v3501 = vpop.permute.xlu0 %3500
    %3502 = vrot.lane.b32.xlu0 %v3451, 96
    %v3503 = vpop.permute.xlu0 %3502
    %3504 = vrot.lane.b32.xlu0 %v3463, 96
    %v3505 = vpop.permute.xlu0 %3504
    %3506 = vrot.lane.b32.xlu0 %v3475, 96
    %v3507 = vpop.permute.xlu0 %3506
    %v3524 = vunpack.c.l.b16 %v2146
    %v3525 = vunpack.c.l.b16 %v2147
    %v3526 = vunpack.c.l.b16 %v2148
    %v3527 = vunpack.c.l.b16 %v2149
    %v3528 = vunpack.c.l.b16 %v2150
    %v3529 = vunpack.c.l.b16 %v2151
    %v3530 = vunpack.c.l.b16 %v2152
    %v3531 = vunpack.c.l.b16 %v2153
    %v3532 = vunpack.c.l.b16 %v2154
    %v3533 = vunpack.c.l.b16 %v2155
    %v3534 = vunpack.c.l.b16 %v2156
    %v3535 = vunpack.c.l.b16 %v2157
    %v3536 = vunpack.c.l.b16 %v2158
    %v3537 = vunpack.c.l.b16 %v2159
    %v3538 = vunpack.c.l.b16 %v2160
    %v3539 = vunpack.c.l.b16 %v2161
    %v3540 = vpack.c.b16 %v3157, %v3524
    %v3541 = vpack.c.b16 %v3159, %v3525
    %v3542 = vpack.c.b16 %v3161, %v3526
    %v3543 = vpack.c.b16 %v3163, %v3527
    %v3544 = vpack.c.b16 %v3165, %v3528
    %v3545 = vpack.c.b16 %v3167, %v3529
    %v3546 = vpack.c.b16 %v3169, %v3530
    %v3547 = vpack.c.b16 %v3171, %v3531
    %v3548 = vpack.c.b16 %v3173, %v3532
    %v3549 = vpack.c.b16 %v3175, %v3533
    %v3550 = vpack.c.b16 %v3177, %v3534
    %v3551 = vpack.c.b16 %v3179, %v3535
    %v3552 = vpack.c.b16 %v3181, %v3536
    %v3553 = vpack.c.b16 %v3183, %v3537
    %v3554 = vpack.c.b16 %v3185, %v3538
    %v3555 = vpack.c.b16 %v3187, %v3539
    %v3556 = vrot.slane %v3540, 1
    %v3557 = vrot.slane %v3268, 1
    %v3558 = vsel %vm2563, %v3556, %v3557
    %v3559 = vrot.slane %v3541, 1
    %v3560 = vrot.slane %v3269, 1
    %v3561 = vsel %vm2563, %v3559, %v3560
    %v3562 = vrot.slane %v3542, 1
    %v3563 = vrot.slane %v3270, 1
    %v3564 = vsel %vm2563, %v3562, %v3563
    %v3565 = vrot.slane %v3543, 1
    %v3566 = vrot.slane %v3271, 1
    %v3567 = vsel %vm2563, %v3565, %v3566
    %v3568 = vrot.slane %v3544, 1
    %v3569 = vrot.slane %v3272, 1
    %v3570 = vsel %vm2563, %v3568, %v3569
    %v3571 = vrot.slane %v3545, 1
    %v3572 = vrot.slane %v3273, 1
    %v3573 = vsel %vm2563, %v3571, %v3572
    %v3574 = vrot.slane %v3546, 1
    %v3575 = vrot.slane %v3274, 1
    %v3576 = vsel %vm2563, %v3574, %v3575
    %v3577 = vrot.slane %v3547, 1
    %v3578 = vrot.slane %v3275, 1
    %v3579 = vsel %vm2563, %v3577, %v3578
    %v3580 = vrot.slane %v3548, 1
    %v3581 = vrot.slane %v3276, 1
    %v3582 = vsel %vm2563, %v3580, %v3581
    %v3583 = vrot.slane %v3549, 1
    %v3584 = vrot.slane %v3277, 1
    %v3585 = vsel %vm2563, %v3583, %v3584
    %v3586 = vrot.slane %v3550, 1
    %v3587 = vrot.slane %v3278, 1
    %v3588 = vsel %vm2563, %v3586, %v3587
    %v3589 = vrot.slane %v3551, 1
    %v3590 = vrot.slane %v3279, 1
    %v3591 = vsel %vm2563, %v3589, %v3590
    %v3592 = vrot.slane %v3552, 1
    %v3593 = vrot.slane %v3280, 1
    %v3594 = vsel %vm2563, %v3592, %v3593
    %v3595 = vrot.slane %v3553, 1
    %v3596 = vrot.slane %v3281, 1
    %v3597 = vsel %vm2563, %v3595, %v3596
    %v3598 = vrot.slane %v3554, 1
    %v3599 = vrot.slane %v3282, 1
    %v3600 = vsel %vm2563, %v3598, %v3599
    %v3601 = vrot.slane %v3555, 1
    %v3602 = vrot.slane %v3283, 1
    %v3603 = vsel %vm2563, %v3601, %v3602
    %vm3604 = vcmask 261120
    %v3606 = vsel %vm3604, %v2226, %v2484
    %v3608 = vsel %vm3604, %v2227, %v2486
    %v3610 = vsel %vm3604, %v2228, %v2488
    %v3612 = vsel %vm3604, %v2229, %v2490
    %v3614 = vsel %vm3604, %v2230, %v2492
    %v3616 = vsel %vm3604, %v2231, %v2494
    %v3618 = vsel %vm3604, %v2232, %v2496
    %v3620 = vsel %vm3604, %v2233, %v2498
    %v3622 = vsel %vm3604, %v2234, %v2500
    %v3624 = vsel %vm3604, %v2235, %v2502
    %v3626 = vsel %vm3604, %v2236, %v2504
    %v3628 = vsel %vm3604, %v2237, %v2506
    %v3630 = vsel %vm3604, %v2238, %v2508
    %v3632 = vsel %vm3604, %v2239, %v2510
    %v3634 = vsel %vm3604, %v2240, %v2512
    %v3636 = vsel %vm3604, %v2241, %v2514
    %vm3637 = vcmask 523264
    %v3639 = vsel %vm3637, %v3606, %v2613
    %v3641 = vsel %vm3637, %v3608, %v2615
    %v3643 = vsel %vm3637, %v3610, %v2617
    %v3645 = vsel %vm3637, %v3612, %v2619
    %v3647 = vsel %vm3637, %v3614, %v2621
    %v3649 = vsel %vm3637, %v3616, %v2623
    %v3651 = vsel %vm3637, %v3618, %v2625
    %v3653 = vsel %vm3637, %v3620, %v2627
    %v3655 = vsel %vm3637, %v3622, %v2629
    %v3657 = vsel %vm3637, %v3624, %v2631
    %v3659 = vsel %vm3637, %v3626, %v2633
    %v3661 = vsel %vm3637, %v3628, %v2635
    %v3663 = vsel %vm3637, %v3630, %v2637
    %v3665 = vsel %vm3637, %v3632, %v2639
    %v3667 = vsel %vm3637, %v3634, %v2641
    %v3669 = vsel %vm3637, %v3636, %v2643
    %vm3670 = vcmask 785408
    %v3672 = vsel %vm3670, %v3639, %v2725
    %v3675 = vsel %vm3670, %v3641, %v2727
    %v3678 = vsel %vm3670, %v3643, %v2729
    %v3681 = vsel %vm3670, %v3645, %v2731
    %v3684 = vsel %vm3670, %v3647, %v2733
    %v3687 = vsel %vm3670, %v3649, %v2735
    %v3690 = vsel %vm3670, %v3651, %v2737
    %v3693 = vsel %vm3670, %v3653, %v2739
    %v3696 = vsel %vm3670, %v3655, %v2741
    %v3699 = vsel %vm3670, %v3657, %v2743
    %v3702 = vsel %vm3670, %v3659, %v2745
    %v3705 = vsel %vm3670, %v3661, %v2747
    %v3708 = vsel %vm3670, %v3663, %v2749
    %v3711 = vsel %vm3670, %v3665, %v2751
    %v3714 = vsel %vm3670, %v3667, %v2753
    %v3717 = vsel %vm3670, %v3669, %v2755
    %v3721 = vsel %vm3604, %v2815, %v3093
    %v3724 = vsel %vm3604, %v2827, %v3095
    %v3727 = vsel %vm3604, %v2839, %v3097
    %v3730 = vsel %vm3604, %v2851, %v3099
    %v3733 = vsel %vm3604, %v2863, %v3101
    %v3736 = vsel %vm3604, %v2875, %v3103
    %v3739 = vsel %vm3604, %v2887, %v3105
    %v3742 = vsel %vm3604, %v2899, %v3107
    %v3745 = vsel %vm3604, %v2911, %v3109
    %v3748 = vsel %vm3604, %v2923, %v3111
    %v3751 = vsel %vm3604, %v2935, %v3113
    %v3754 = vsel %vm3604, %v2947, %v3115
    %v3757 = vsel %vm3604, %v2959, %v3117
    %v3760 = vsel %vm3604, %v2971, %v3119
    %v3763 = vsel %vm3604, %v2983, %v3121
    %v3766 = vsel %vm3604, %v2995, %v3123
    %v3768 = vsel %vm3637, %v3721, %v3205
    %v3770 = vsel %vm3637, %v3724, %v3207
    %v3772 = vsel %vm3637, %v3727, %v3209
    %v3774 = vsel %vm3637, %v3730, %v3211
    %v3776 = vsel %vm3637, %v3733, %v3213
    %v3778 = vsel %vm3637, %v3736, %v3215
    %v3780 = vsel %vm3637, %v3739, %v3217
    %v3782 = vsel %vm3637, %v3742, %v3219
    %v3784 = vsel %vm3637, %v3745, %v3221
    %v3786 = vsel %vm3637, %v3748, %v3223
    %v3788 = vsel %vm3637, %v3751, %v3225
    %v3790 = vsel %vm3637, %v3754, %v3227
    %v3792 = vsel %vm3637, %v3757, %v3229
    %v3794 = vsel %vm3637, %v3760, %v3231
    %v3796 = vsel %vm3637, %v3763, %v3233
    %v3798 = vsel %vm3637, %v3766, %v3235
    %v3800 = vsel %vm3670, %v3768, %v3477
    %v3803 = vsel %vm3670, %v3770, %v3479
    %v3806 = vsel %vm3670, %v3772, %v3481
    %v3809 = vsel %vm3670, %v3774, %v3483
    %v3812 = vsel %vm3670, %v3776, %v3485
    %v3815 = vsel %vm3670, %v3778, %v3487
    %v3818 = vsel %vm3670, %v3780, %v3489
    %v3821 = vsel %vm3670, %v3782, %v3491
    %v3824 = vsel %vm3670, %v3784, %v3493
    %v3827 = vsel %vm3670, %v3786, %v3495
    %v3830 = vsel %vm3670, %v3788, %v3497
    %v3833 = vsel %vm3670, %v3790, %v3499
    %v3836 = vsel %vm3670, %v3792, %v3501
    %v3839 = vsel %vm3670, %v3794, %v3503
    %v3842 = vsel %vm3670, %v3796, %v3505
    %v3845 = vsel %vm3670, %v3798, %v3507
    %v3847 = vld [vmem:[%s1352] sm:$0xf]
    %v3848 = vld [vmem:[%s1352 + $0x4] sm:$0xf]
    %v3849 = vld [vmem:[%s1352 + $0xc] sm:$0xf]
    %v3850 = vld [vmem:[%s1352 + $0x10] sm:$0xf]
    %v3851 = vld [vmem:[%s1352 + $0x18] sm:$0xf]
    %v3852 = vld [vmem:[%s1352 + $0x1c] sm:$0xf]
    %v3853 = vld [vmem:[%s1352 + $0x24] sm:$0xf]
    %v3854 = vld [vmem:[%s1352 + $0x28] sm:$0xf]
    %v3855 = vld [vmem:[%s1352 + $0x30] sm:$0xf]
    %v3856 = vld [vmem:[%s1352 + $0x34] sm:$0xf]
    %v3857 = vld [vmem:[%s1352 + $0x3c] sm:$0xf]
    %v3858 = vld [vmem:[%s1352 + $0x40] sm:$0xf]
    %v3859 = vld [vmem:[%s1352 + $0x48] sm:$0xf]
    %v3860 = vld [vmem:[%s1352 + $0x4c] sm:$0xf]
    %v3861 = vld [vmem:[%s1352 + $0x54] sm:$0xf]
    %v3862 = vld [vmem:[%s1352 + $0x58] sm:$0xf]
    %v3863 = vld [vmem:[%s1352 + $0x60] sm:$0xf]
    %v3864 = vld [vmem:[%s1352 + $0x64] sm:$0xf]
    %v3865 = vld [vmem:[%s1352 + $0x6c] sm:$0xf]
    %v3866 = vld [vmem:[%s1352 + $0x70] sm:$0xf]
    %v3867 = vld [vmem:[%s1352 + $0x78] sm:$0xf]
    %v3868 = vld [vmem:[%s1352 + $0x7c] sm:$0xf]
    %v3869 = vld [vmem:[%s1352 + $0x84] sm:$0xf]
    %v3870 = vld [vmem:[%s1352 + $0x88] sm:$0xf]
    %v3871 = vld [vmem:[%s1352 + $0x90] sm:$0xf]
    %v3872 = vld [vmem:[%s1352 + $0x94] sm:$0xf]
    %v3873 = vld [vmem:[%s1352 + $0x9c] sm:$0xf]
    %v3874 = vld [vmem:[%s1352 + $0xa0] sm:$0xf]
    %v3875 = vld [vmem:[%s1352 + $0xa8] sm:$0xf]
    %v3876 = vld [vmem:[%s1352 + $0xac] sm:$0xf]
    %v3877 = vld [vmem:[%s1352 + $0xb4] sm:$0xf]
    %v3878 = vld [vmem:[%s1352 + $0xb8] sm:$0xf]
    %v3879 = vld [vmem:[%s1352 + $0x8] sm:$0x1]
    %v3880 = vld [vmem:[%s1352 + $0x14] sm:$0x1]
    %v3881 = vld [vmem:[%s1352 + $0x20] sm:$0x1]
    %v3882 = vld [vmem:[%s1352 + $0x2c] sm:$0x1]
    %v3883 = vld [vmem:[%s1352 + $0x38] sm:$0x1]
    %v3884 = vld [vmem:[%s1352 + $0x44] sm:$0x1]
    %v3885 = vld [vmem:[%s1352 + $0x50] sm:$0x1]
    %v3886 = vld [vmem:[%s1352 + $0x5c] sm:$0x1]
    %v3887 = vld [vmem:[%s1352 + $0x68] sm:$0x1]
    %v3888 = vld [vmem:[%s1352 + $0x74] sm:$0x1]
    %v3889 = vld [vmem:[%s1352 + $0x80] sm:$0x1]
    %v3890 = vld [vmem:[%s1352 + $0x8c] sm:$0x1]
    %v3891 = vld [vmem:[%s1352 + $0x98] sm:$0x1]
    %v3892 = vld [vmem:[%s1352 + $0xa4] sm:$0x1]
    %v3893 = vld [vmem:[%s1352 + $0xb0] sm:$0x1]
    %v3894 = vld [vmem:[%s1352 + $0xbc] sm:$0x1]
    %v3895 = vld [vmem:[%s1352] sm:$0xe]
    %v3896 = vld [vmem:[%s1352 + $0xc] sm:$0xe]
    %v3897 = vld [vmem:[%s1352 + $0x18] sm:$0xe]
    %v3898 = vld [vmem:[%s1352 + $0x24] sm:$0xe]
    %v3899 = vld [vmem:[%s1352 + $0x30] sm:$0xe]
    %v3900 = vld [vmem:[%s1352 + $0x3c] sm:$0xe]
    %v3901 = vld [vmem:[%s1352 + $0x48] sm:$0xe]
    %v3902 = vld [vmem:[%s1352 + $0x54] sm:$0xe]
    %v3903 = vld [vmem:[%s1352 + $0x60] sm:$0xe]
    %v3904 = vld [vmem:[%s1352 + $0x6c] sm:$0xe]
    %v3905 = vld [vmem:[%s1352 + $0x78] sm:$0xe]
    %v3906 = vld [vmem:[%s1352 + $0x84] sm:$0xe]
    %v3907 = vld [vmem:[%s1352 + $0x90] sm:$0xe]
    %v3908 = vld [vmem:[%s1352 + $0x9c] sm:$0xe]
    %v3909 = vld [vmem:[%s1352 + $0xa8] sm:$0xe]
    %v3910 = vld [vmem:[%s1352 + $0xb4] sm:$0xe]
    %v3911 = vld [vmem:[%s1360] sm:$0xf]
    %v3912 = vld [vmem:[%s1360 + $0x4] sm:$0xf]
    %v3913 = vld [vmem:[%s1360 + $0xc] sm:$0xf]
    %v3914 = vld [vmem:[%s1360 + $0x10] sm:$0xf]
    %v3915 = vld [vmem:[%s1360 + $0x18] sm:$0xf]
    %v3916 = vld [vmem:[%s1360 + $0x1c] sm:$0xf]
    %v3917 = vld [vmem:[%s1360 + $0x24] sm:$0xf]
    %v3918 = vld [vmem:[%s1360 + $0x28] sm:$0xf]
    %v3919 = vld [vmem:[%s1360 + $0x30] sm:$0xf]
    %v3920 = vld [vmem:[%s1360 + $0x34] sm:$0xf]
    %v3921 = vld [vmem:[%s1360 + $0x3c] sm:$0xf]
    %v3922 = vld [vmem:[%s1360 + $0x40] sm:$0xf]
    %v3923 = vld [vmem:[%s1360 + $0x48] sm:$0xf]
    %v3924 = vld [vmem:[%s1360 + $0x4c] sm:$0xf]
    %v3925 = vld [vmem:[%s1360 + $0x54] sm:$0xf]
    %v3926 = vld [vmem:[%s1360 + $0x58] sm:$0xf]
    %v3927 = vld [vmem:[%s1360 + $0x60] sm:$0xf]
    %v3928 = vld [vmem:[%s1360 + $0x64] sm:$0xf]
    %v3929 = vld [vmem:[%s1360 + $0x6c] sm:$0xf]
    %v3930 = vld [vmem:[%s1360 + $0x70] sm:$0xf]
    %v3931 = vld [vmem:[%s1360 + $0x78] sm:$0xf]
    %v3932 = vld [vmem:[%s1360 + $0x7c] sm:$0xf]
    %v3933 = vld [vmem:[%s1360 + $0x84] sm:$0xf]
    %v3934 = vld [vmem:[%s1360 + $0x88] sm:$0xf]
    %v3935 = vld [vmem:[%s1360 + $0x90] sm:$0xf]
    %v3936 = vld [vmem:[%s1360 + $0x94] sm:$0xf]
    %v3937 = vld [vmem:[%s1360 + $0x9c] sm:$0xf]
    %v3938 = vld [vmem:[%s1360 + $0xa0] sm:$0xf]
    %v3939 = vld [vmem:[%s1360 + $0xa8] sm:$0xf]
    %v3940 = vld [vmem:[%s1360 + $0xac] sm:$0xf]
    %v3941 = vld [vmem:[%s1360 + $0xb4] sm:$0xf]
    %v3942 = vld [vmem:[%s1360 + $0xb8] sm:$0xf]
    %v3943 = vld [vmem:[%s1360 + $0x8] sm:$0x1]
    %v3944 = vld [vmem:[%s1360 + $0x14] sm:$0x1]
    %v3945 = vld [vmem:[%s1360 + $0x20] sm:$0x1]
    %v3946 = vld [vmem:[%s1360 + $0x2c] sm:$0x1]
    %v3947 = vld [vmem:[%s1360 + $0x38] sm:$0x1]
    %v3948 = vld [vmem:[%s1360 + $0x44] sm:$0x1]
    %v3949 = vld [vmem:[%s1360 + $0x50] sm:$0x1]
    %v3950 = vld [vmem:[%s1360 + $0x5c] sm:$0x1]
    %v3951 = vld [vmem:[%s1360 + $0x68] sm:$0x1]
    %v3952 = vld [vmem:[%s1360 + $0x74] sm:$0x1]
    %v3953 = vld [vmem:[%s1360 + $0x80] sm:$0x1]
    %v3954 = vld [vmem:[%s1360 + $0x8c] sm:$0x1]
    %v3955 = vld [vmem:[%s1360 + $0x98] sm:$0x1]
    %v3956 = vld [vmem:[%s1360 + $0xa4] sm:$0x1]
    %v3957 = vld [vmem:[%s1360 + $0xb0] sm:$0x1]
    %v3958 = vld [vmem:[%s1360 + $0xbc] sm:$0x1]
    %v3959 = vld [vmem:[%s1360] sm:$0xe]
    %v3960 = vld [vmem:[%s1360 + $0xc] sm:$0xe]
    %v3961 = vld [vmem:[%s1360 + $0x18] sm:$0xe]
    %v3962 = vld [vmem:[%s1360 + $0x24] sm:$0xe]
    %v3963 = vld [vmem:[%s1360 + $0x30] sm:$0xe]
    %v3964 = vld [vmem:[%s1360 + $0x3c] sm:$0xe]
    %v3965 = vld [vmem:[%s1360 + $0x48] sm:$0xe]
    %v3966 = vld [vmem:[%s1360 + $0x54] sm:$0xe]
    %v3967 = vld [vmem:[%s1360 + $0x60] sm:$0xe]
    %v3968 = vld [vmem:[%s1360 + $0x6c] sm:$0xe]
    %v3969 = vld [vmem:[%s1360 + $0x78] sm:$0xe]
    %v3970 = vld [vmem:[%s1360 + $0x84] sm:$0xe]
    %v3971 = vld [vmem:[%s1360 + $0x90] sm:$0xe]
    %v3972 = vld [vmem:[%s1360 + $0x9c] sm:$0xe]
    %v3973 = vld [vmem:[%s1360 + $0xa8] sm:$0xe]
    %v3974 = vld [vmem:[%s1360 + $0xb4] sm:$0xe]
    %s3975 = scalar_lea.vmem [#allocation2], 240
    %v3976 = vld [vmem:[%s3975] sm:$0xf]
    %v3977 = vld [vmem:[%s3975 + $0x4] sm:$0xf]
    %v3978 = vld [vmem:[%s3975 + $0xc] sm:$0xf]
    %v3979 = vld [vmem:[%s3975 + $0x10] sm:$0xf]
    %v3980 = vld [vmem:[%s3975 + $0x18] sm:$0xf]
    %v3981 = vld [vmem:[%s3975 + $0x1c] sm:$0xf]
    %v3982 = vld [vmem:[%s3975 + $0x24] sm:$0xf]
    %v3983 = vld [vmem:[%s3975 + $0x28] sm:$0xf]
    %v3984 = vld [vmem:[%s3975 + $0x30] sm:$0xf]
    %v3985 = vld [vmem:[%s3975 + $0x34] sm:$0xf]
    %v3986 = vld [vmem:[%s3975 + $0x3c] sm:$0xf]
    %v3987 = vld [vmem:[%s3975 + $0x40] sm:$0xf]
    %v3988 = vld [vmem:[%s3975 + $0x48] sm:$0xf]
    %v3989 = vld [vmem:[%s3975 + $0x4c] sm:$0xf]
    %v3990 = vld [vmem:[%s3975 + $0x54] sm:$0xf]
    %v3991 = vld [vmem:[%s3975 + $0x58] sm:$0xf]
    %v3992 = vld [vmem:[%s3975 + $0x60] sm:$0xf]
    %v3993 = vld [vmem:[%s3975 + $0x64] sm:$0xf]
    %v3994 = vld [vmem:[%s3975 + $0x6c] sm:$0xf]
    %v3995 = vld [vmem:[%s3975 + $0x70] sm:$0xf]
    %v3996 = vld [vmem:[%s3975 + $0x78] sm:$0xf]
    %v3997 = vld [vmem:[%s3975 + $0x7c] sm:$0xf]
    %v3998 = vld [vmem:[%s3975 + $0x84] sm:$0xf]
    %v3999 = vld [vmem:[%s3975 + $0x88] sm:$0xf]
    %v4000 = vld [vmem:[%s3975 + $0x90] sm:$0xf]
    %v4001 = vld [vmem:[%s3975 + $0x94] sm:$0xf]
    %v4002 = vld [vmem:[%s3975 + $0x9c] sm:$0xf]
    %v4003 = vld [vmem:[%s3975 + $0xa0] sm:$0xf]
    %v4004 = vld [vmem:[%s3975 + $0xa8] sm:$0xf]
    %v4005 = vld [vmem:[%s3975 + $0xac] sm:$0xf]
    %v4006 = vld [vmem:[%s3975 + $0xb4] sm:$0xf]
    %v4007 = vld [vmem:[%s3975 + $0xb8] sm:$0xf]
    %v4008 = vld [vmem:[%s3975 + $0x8] sm:$0x1]
    %v4009 = vld [vmem:[%s3975 + $0x14] sm:$0x1]
    %v4010 = vld [vmem:[%s3975 + $0x20] sm:$0x1]
    %v4011 = vld [vmem:[%s3975 + $0x2c] sm:$0x1]
    %v4012 = vld [vmem:[%s3975 + $0x38] sm:$0x1]
    %v4013 = vld [vmem:[%s3975 + $0x44] sm:$0x1]
    %v4014 = vld [vmem:[%s3975 + $0x50] sm:$0x1]
    %v4015 = vld [vmem:[%s3975 + $0x5c] sm:$0x1]
    %v4016 = vld [vmem:[%s3975 + $0x68] sm:$0x1]
    %v4017 = vld [vmem:[%s3975 + $0x74] sm:$0x1]
    %v4018 = vld [vmem:[%s3975 + $0x80] sm:$0x1]
    %v4019 = vld [vmem:[%s3975 + $0x8c] sm:$0x1]
    %v4020 = vld [vmem:[%s3975 + $0x98] sm:$0x1]
    %v4021 = vld [vmem:[%s3975 + $0xa4] sm:$0x1]
    %v4022 = vld [vmem:[%s3975 + $0xb0] sm:$0x1]
    %v4023 = vld [vmem:[%s3975 + $0xbc] sm:$0x1]
    %v4024 = vld [vmem:[%s3975] sm:$0xe]
    %v4025 = vld [vmem:[%s3975 + $0xc] sm:$0xe]
    %v4026 = vld [vmem:[%s3975 + $0x18] sm:$0xe]
    %v4027 = vld [vmem:[%s3975 + $0x24] sm:$0xe]
    %v4028 = vld [vmem:[%s3975 + $0x30] sm:$0xe]
    %v4029 = vld [vmem:[%s3975 + $0x3c] sm:$0xe]
    %v4030 = vld [vmem:[%s3975 + $0x48] sm:$0xe]
    %v4031 = vld [vmem:[%s3975 + $0x54] sm:$0xe]
    %v4032 = vld [vmem:[%s3975 + $0x60] sm:$0xe]
    %v4033 = vld [vmem:[%s3975 + $0x6c] sm:$0xe]
    %v4034 = vld [vmem:[%s3975 + $0x78] sm:$0xe]
    %v4035 = vld [vmem:[%s3975 + $0x84] sm:$0xe]
    %v4036 = vld [vmem:[%s3975 + $0x90] sm:$0xe]
    %v4037 = vld [vmem:[%s3975 + $0x9c] sm:$0xe]
    %v4038 = vld [vmem:[%s3975 + $0xa8] sm:$0xe]
    %v4039 = vld [vmem:[%s3975 + $0xb4] sm:$0xe]
    %v4072 = vunpack.c.l.b16 %v3847
    %v4073 = vunpack.c.l.b16 %v3848
    %v4074 = vunpack.c.l.b16 %v3849
    %v4075 = vunpack.c.l.b16 %v3850
    %v4076 = vunpack.c.l.b16 %v3851
    %v4077 = vunpack.c.l.b16 %v3852
    %v4078 = vunpack.c.l.b16 %v3853
    %v4079 = vunpack.c.l.b16 %v3854
    %v4080 = vunpack.c.l.b16 %v3855
    %v4081 = vunpack.c.l.b16 %v3856
    %v4082 = vunpack.c.l.b16 %v3857
    %v4083 = vunpack.c.l.b16 %v3858
    %v4084 = vunpack.c.l.b16 %v3859
    %v4085 = vunpack.c.l.b16 %v3860
    %v4086 = vunpack.c.l.b16 %v3861
    %v4087 = vunpack.c.l.b16 %v3862
    %v4088 = vunpack.c.l.b16 %v3863
    %v4089 = vunpack.c.l.b16 %v3864
    %v4090 = vunpack.c.l.b16 %v3865
    %v4091 = vunpack.c.l.b16 %v3866
    %v4092 = vunpack.c.l.b16 %v3867
    %v4093 = vunpack.c.l.b16 %v3868
    %v4094 = vunpack.c.l.b16 %v3869
    %v4095 = vunpack.c.l.b16 %v3870
    %v4096 = vunpack.c.l.b16 %v3871
    %v4097 = vunpack.c.l.b16 %v3872
    %v4098 = vunpack.c.l.b16 %v3873
    %v4099 = vunpack.c.l.b16 %v3874
    %v4100 = vunpack.c.l.b16 %v3875
    %v4101 = vunpack.c.l.b16 %v3876
    %v4102 = vunpack.c.l.b16 %v3877
    %v4103 = vunpack.c.l.b16 %v3878
    %v4104 = vpack.c.b16 %v4073, %v4072
    %v4105 = vpack.c.b16 %v4075, %v4074
    %v4106 = vpack.c.b16 %v4077, %v4076
    %v4107 = vpack.c.b16 %v4079, %v4078
    %v4108 = vpack.c.b16 %v4081, %v4080
    %v4109 = vpack.c.b16 %v4083, %v4082
    %v4110 = vpack.c.b16 %v4085, %v4084
    %v4111 = vpack.c.b16 %v4087, %v4086
    %v4112 = vpack.c.b16 %v4089, %v4088
    %v4113 = vpack.c.b16 %v4091, %v4090
    %v4114 = vpack.c.b16 %v4093, %v4092
    %v4115 = vpack.c.b16 %v4095, %v4094
    %v4116 = vpack.c.b16 %v4097, %v4096
    %v4117 = vpack.c.b16 %v4099, %v4098
    %v4118 = vpack.c.b16 %v4101, %v4100
    %v4119 = vpack.c.b16 %v4103, %v4102
    %v4136 = vunpack.c.l.b16 %v3879
    %v4137 = vunpack.c.l.b16 %v3880
    %v4138 = vunpack.c.l.b16 %v3881
    %v4139 = vunpack.c.l.b16 %v3882
    %v4140 = vunpack.c.l.b16 %v3883
    %v4141 = vunpack.c.l.b16 %v3884
    %v4142 = vunpack.c.l.b16 %v3885
    %v4143 = vunpack.c.l.b16 %v3886
    %v4144 = vunpack.c.l.b16 %v3887
    %v4145 = vunpack.c.l.b16 %v3888
    %v4146 = vunpack.c.l.b16 %v3889
    %v4147 = vunpack.c.l.b16 %v3890
    %v4148 = vunpack.c.l.b16 %v3891
    %v4149 = vunpack.c.l.b16 %v3892
    %v4150 = vunpack.c.l.b16 %v3893
    %v4151 = vunpack.c.l.b16 %v3894
    %v4152 = vpack.c.b16 %v4136, %v4136
    %v4153 = vpack.c.b16 %v4137, %v4137
    %v4154 = vpack.c.b16 %v4138, %v4138
    %v4155 = vpack.c.b16 %v4139, %v4139
    %v4156 = vpack.c.b16 %v4140, %v4140
    %v4157 = vpack.c.b16 %v4141, %v4141
    %v4158 = vpack.c.b16 %v4142, %v4142
    %v4159 = vpack.c.b16 %v4143, %v4143
    %v4160 = vpack.c.b16 %v4144, %v4144
    %v4161 = vpack.c.b16 %v4145, %v4145
    %v4162 = vpack.c.b16 %v4146, %v4146
    %v4163 = vpack.c.b16 %v4147, %v4147
    %v4164 = vpack.c.b16 %v4148, %v4148
    %v4165 = vpack.c.b16 %v4149, %v4149
    %v4166 = vpack.c.b16 %v4150, %v4150
    %v4167 = vpack.c.b16 %v4151, %v4151
    %v4169 = vshrl.u32 %v4104, 16
    %v4171 = vshll.u32 %v4104, 16
    %v4173 = vrot.slane %v4171, 1
    %v4174 = vor.u32 %v4169, %v4173
    %v4176 = vshll.u32 %v4152, 16
    %v4178 = vrot.slane %v4176, 1
    %v4179 = vsel %vm2290, %v4174, %v4178
    %v4181 = vshrl.u32 %v4105, 16
    %v4183 = vshll.u32 %v4105, 16
    %v4185 = vrot.slane %v4183, 1
    %v4186 = vor.u32 %v4181, %v4185
    %v4188 = vshll.u32 %v4153, 16
    %v4190 = vrot.slane %v4188, 1
    %v4191 = vsel %vm2290, %v4186, %v4190
    %v4193 = vshrl.u32 %v4106, 16
    %v4195 = vshll.u32 %v4106, 16
    %v4197 = vrot.slane %v4195, 1
    %v4198 = vor.u32 %v4193, %v4197
    %v4200 = vshll.u32 %v4154, 16
    %v4202 = vrot.slane %v4200, 1
    %v4203 = vsel %vm2290, %v4198, %v4202
    %v4205 = vshrl.u32 %v4107, 16
    %v4207 = vshll.u32 %v4107, 16
    %v4209 = vrot.slane %v4207, 1
    %v4210 = vor.u32 %v4205, %v4209
    %v4212 = vshll.u32 %v4155, 16
    %v4214 = vrot.slane %v4212, 1
    %v4215 = vsel %vm2290, %v4210, %v4214
    %v4217 = vshrl.u32 %v4108, 16
    %v4219 = vshll.u32 %v4108, 16
    %v4221 = vrot.slane %v4219, 1
    %v4222 = vor.u32 %v4217, %v4221
    %v4224 = vshll.u32 %v4156, 16
    %v4226 = vrot.slane %v4224, 1
    %v4227 = vsel %vm2290, %v4222, %v4226
    %v4229 = vshrl.u32 %v4109, 16
    %v4231 = vshll.u32 %v4109, 16
    %v4233 = vrot.slane %v4231, 1
    %v4234 = vor.u32 %v4229, %v4233
    %v4236 = vshll.u32 %v4157, 16
    %v4238 = vrot.slane %v4236, 1
    %v4239 = vsel %vm2290, %v4234, %v4238
    %v4241 = vshrl.u32 %v4110, 16
    %v4243 = vshll.u32 %v4110, 16
    %v4245 = vrot.slane %v4243, 1
    %v4246 = vor.u32 %v4241, %v4245
    %v4248 = vshll.u32 %v4158, 16
    %v4250 = vrot.slane %v4248, 1
    %v4251 = vsel %vm2290, %v4246, %v4250
    %v4253 = vshrl.u32 %v4111, 16
    %v4255 = vshll.u32 %v4111, 16
    %v4257 = vrot.slane %v4255, 1
    %v4258 = vor.u32 %v4253, %v4257
    %v4260 = vshll.u32 %v4159, 16
    %v4262 = vrot.slane %v4260, 1
    %v4263 = vsel %vm2290, %v4258, %v4262
    %v4265 = vshrl.u32 %v4112, 16
    %v4267 = vshll.u32 %v4112, 16
    %v4269 = vrot.slane %v4267, 1
    %v4270 = vor.u32 %v4265, %v4269
    %v4272 = vshll.u32 %v4160, 16
    %v4274 = vrot.slane %v4272, 1
    %v4275 = vsel %vm2290, %v4270, %v4274
    %v4277 = vshrl.u32 %v4113, 16
    %v4279 = vshll.u32 %v4113, 16
    %v4281 = vrot.slane %v4279, 1
    %v4282 = vor.u32 %v4277, %v4281
    %v4284 = vshll.u32 %v4161, 16
    %v4286 = vrot.slane %v4284, 1
    %v4287 = vsel %vm2290, %v4282, %v4286
    %v4289 = vshrl.u32 %v4114, 16
    %v4291 = vshll.u32 %v4114, 16
    %v4293 = vrot.slane %v4291, 1
    %v4294 = vor.u32 %v4289, %v4293
    %v4296 = vshll.u32 %v4162, 16
    %v4298 = vrot.slane %v4296, 1
    %v4299 = vsel %vm2290, %v4294, %v4298
    %v4301 = vshrl.u32 %v4115, 16
    %v4303 = vshll.u32 %v4115, 16
    %v4305 = vrot.slane %v4303, 1
    %v4306 = vor.u32 %v4301, %v4305
    %v4308 = vshll.u32 %v4163, 16
    %v4310 = vrot.slane %v4308, 1
    %v4311 = vsel %vm2290, %v4306, %v4310
    %v4313 = vshrl.u32 %v4116, 16
    %v4315 = vshll.u32 %v4116, 16
    %v4317 = vrot.slane %v4315, 1
    %v4318 = vor.u32 %v4313, %v4317
    %v4320 = vshll.u32 %v4164, 16
    %v4322 = vrot.slane %v4320, 1
    %v4323 = vsel %vm2290, %v4318, %v4322
    %v4325 = vshrl.u32 %v4117, 16
    %v4327 = vshll.u32 %v4117, 16
    %v4329 = vrot.slane %v4327, 1
    %v4330 = vor.u32 %v4325, %v4329
    %v4332 = vshll.u32 %v4165, 16
    %v4334 = vrot.slane %v4332, 1
    %v4335 = vsel %vm2290, %v4330, %v4334
    %v4337 = vshrl.u32 %v4118, 16
    %v4339 = vshll.u32 %v4118, 16
    %v4341 = vrot.slane %v4339, 1
    %v4342 = vor.u32 %v4337, %v4341
    %v4344 = vshll.u32 %v4166, 16
    %v4346 = vrot.slane %v4344, 1
    %v4347 = vsel %vm2290, %v4342, %v4346
    %v4349 = vshrl.u32 %v4119, 16
    %v4351 = vshll.u32 %v4119, 16
    %v4353 = vrot.slane %v4351, 1
    %v4354 = vor.u32 %v4349, %v4353
    %v4356 = vshll.u32 %v4167, 16
    %v4358 = vrot.slane %v4356, 1
    %v4359 = vsel %vm2290, %v4354, %v4358
    %4360 = vrot.lane.b32.xlu0 %v4179, 32
    %v4361 = vpop.permute.xlu0 %4360
    %4362 = vrot.lane.b32.xlu0 %v4191, 32
    %v4363 = vpop.permute.xlu0 %4362
    %4364 = vrot.lane.b32.xlu0 %v4203, 32
    %v4365 = vpop.permute.xlu0 %4364
    %4366 = vrot.lane.b32.xlu0 %v4215, 32
    %v4367 = vpop.permute.xlu0 %4366
    %4368 = vrot.lane.b32.xlu0 %v4227, 32
    %v4369 = vpop.permute.xlu0 %4368
    %4370 = vrot.lane.b32.xlu0 %v4239, 32
    %v4371 = vpop.permute.xlu0 %4370
    %4372 = vrot.lane.b32.xlu0 %v4251, 32
    %v4373 = vpop.permute.xlu0 %4372
    %4374 = vrot.lane.b32.xlu0 %v4263, 32
    %v4375 = vpop.permute.xlu0 %4374
    %4376 = vrot.lane.b32.xlu0 %v4275, 32
    %v4377 = vpop.permute.xlu0 %4376
    %4378 = vrot.lane.b32.xlu0 %v4287, 32
    %v4379 = vpop.permute.xlu0 %4378
    %4380 = vrot.lane.b32.xlu0 %v4299, 32
    %v4381 = vpop.permute.xlu0 %4380
    %4382 = vrot.lane.b32.xlu0 %v4311, 32
    %v4383 = vpop.permute.xlu0 %4382
    %4384 = vrot.lane.b32.xlu0 %v4323, 32
    %v4385 = vpop.permute.xlu0 %4384
    %4386 = vrot.lane.b32.xlu0 %v4335, 32
    %v4387 = vpop.permute.xlu0 %4386
    %4388 = vrot.lane.b32.xlu0 %v4347, 32
    %v4389 = vpop.permute.xlu0 %4388
    %4390 = vrot.lane.b32.xlu0 %v4359, 32
    %v4391 = vpop.permute.xlu0 %4390
    %v4408 = vunpack.c.l.b16 %v3895
    %v4409 = vunpack.c.l.b16 %v3896
    %v4410 = vunpack.c.l.b16 %v3897
    %v4411 = vunpack.c.l.b16 %v3898
    %v4412 = vunpack.c.l.b16 %v3899
    %v4413 = vunpack.c.l.b16 %v3900
    %v4414 = vunpack.c.l.b16 %v3901
    %v4415 = vunpack.c.l.b16 %v3902
    %v4416 = vunpack.c.l.b16 %v3903
    %v4417 = vunpack.c.l.b16 %v3904
    %v4418 = vunpack.c.l.b16 %v3905
    %v4419 = vunpack.c.l.b16 %v3906
    %v4420 = vunpack.c.l.b16 %v3907
    %v4421 = vunpack.c.l.b16 %v3908
    %v4422 = vunpack.c.l.b16 %v3909
    %v4423 = vunpack.c.l.b16 %v3910
    %v4424 = vpack.c.b16 %v4073, %v4408
    %v4425 = vpack.c.b16 %v4075, %v4409
    %v4426 = vpack.c.b16 %v4077, %v4410
    %v4427 = vpack.c.b16 %v4079, %v4411
    %v4428 = vpack.c.b16 %v4081, %v4412
    %v4429 = vpack.c.b16 %v4083, %v4413
    %v4430 = vpack.c.b16 %v4085, %v4414
    %v4431 = vpack.c.b16 %v4087, %v4415
    %v4432 = vpack.c.b16 %v4089, %v4416
    %v4433 = vpack.c.b16 %v4091, %v4417
    %v4434 = vpack.c.b16 %v4093, %v4418
    %v4435 = vpack.c.b16 %v4095, %v4419
    %v4436 = vpack.c.b16 %v4097, %v4420
    %v4437 = vpack.c.b16 %v4099, %v4421
    %v4438 = vpack.c.b16 %v4101, %v4422
    %v4439 = vpack.c.b16 %v4103, %v4423
    %v4440 = vrot.slane %v4424, 1
    %v4441 = vrot.slane %v4152, 1
    %v4442 = vsel %vm2563, %v4440, %v4441
    %v4443 = vrot.slane %v4425, 1
    %v4444 = vrot.slane %v4153, 1
    %v4445 = vsel %vm2563, %v4443, %v4444
    %v4446 = vrot.slane %v4426, 1
    %v4447 = vrot.slane %v4154, 1
    %v4448 = vsel %vm2563, %v4446, %v4447
    %v4449 = vrot.slane %v4427, 1
    %v4450 = vrot.slane %v4155, 1
    %v4451 = vsel %vm2563, %v4449, %v4450
    %v4452 = vrot.slane %v4428, 1
    %v4453 = vrot.slane %v4156, 1
    %v4454 = vsel %vm2563, %v4452, %v4453
    %v4455 = vrot.slane %v4429, 1
    %v4456 = vrot.slane %v4157, 1
    %v4457 = vsel %vm2563, %v4455, %v4456
    %v4458 = vrot.slane %v4430, 1
    %v4459 = vrot.slane %v4158, 1
    %v4460 = vsel %vm2563, %v4458, %v4459
    %v4461 = vrot.slane %v4431, 1
    %v4462 = vrot.slane %v4159, 1
    %v4463 = vsel %vm2563, %v4461, %v4462
    %v4464 = vrot.slane %v4432, 1
    %v4465 = vrot.slane %v4160, 1
    %v4466 = vsel %vm2563, %v4464, %v4465
    %v4467 = vrot.slane %v4433, 1
    %v4468 = vrot.slane %v4161, 1
    %v4469 = vsel %vm2563, %v4467, %v4468
    %v4470 = vrot.slane %v4434, 1
    %v4471 = vrot.slane %v4162, 1
    %v4472 = vsel %vm2563, %v4470, %v4471
    %v4473 = vrot.slane %v4435, 1
    %v4474 = vrot.slane %v4163, 1
    %v4475 = vsel %vm2563, %v4473, %v4474
    %v4476 = vrot.slane %v4436, 1
    %v4477 = vrot.slane %v4164, 1
    %v4478 = vsel %vm2563, %v4476, %v4477
    %v4479 = vrot.slane %v4437, 1
    %v4480 = vrot.slane %v4165, 1
    %v4481 = vsel %vm2563, %v4479, %v4480
    %v4482 = vrot.slane %v4438, 1
    %v4483 = vrot.slane %v4166, 1
    %v4484 = vsel %vm2563, %v4482, %v4483
    %v4485 = vrot.slane %v4439, 1
    %v4486 = vrot.slane %v4167, 1
    %v4487 = vsel %vm2563, %v4485, %v4486
    %4488 = vrot.lane.b32.xlu0 %v4442, 64
    %v4489 = vpop.permute.xlu0 %4488
    %4490 = vrot.lane.b32.xlu0 %v4445, 64
    %v4491 = vpop.permute.xlu0 %4490
    %4492 = vrot.lane.b32.xlu0 %v4448, 64
    %v4493 = vpop.permute.xlu0 %4492
    %4494 = vrot.lane.b32.xlu0 %v4451, 64
    %v4495 = vpop.permute.xlu0 %4494
    %4496 = vrot.lane.b32.xlu0 %v4454, 64
    %v4497 = vpop.permute.xlu0 %4496
    %4498 = vrot.lane.b32.xlu0 %v4457, 64
    %v4499 = vpop.permute.xlu0 %4498
    %4500 = vrot.lane.b32.xlu0 %v4460, 64
    %v4501 = vpop.permute.xlu0 %4500
    %4502 = vrot.lane.b32.xlu0 %v4463, 64
    %v4503 = vpop.permute.xlu0 %4502
    %4504 = vrot.lane.b32.xlu0 %v4466, 64
    %v4505 = vpop.permute.xlu0 %4504
    %4506 = vrot.lane.b32.xlu0 %v4469, 64
    %v4507 = vpop.permute.xlu0 %4506
    %4508 = vrot.lane.b32.xlu0 %v4472, 64
    %v4509 = vpop.permute.xlu0 %4508
    %4510 = vrot.lane.b32.xlu0 %v4475, 64
    %v4511 = vpop.permute.xlu0 %4510
    %4512 = vrot.lane.b32.xlu0 %v4478, 64
    %v4513 = vpop.permute.xlu0 %4512
    %4514 = vrot.lane.b32.xlu0 %v4481, 64
    %v4515 = vpop.permute.xlu0 %4514
    %4516 = vrot.lane.b32.xlu0 %v4484, 64
    %v4517 = vpop.permute.xlu0 %4516
    %4518 = vrot.lane.b32.xlu0 %v4487, 64
    %v4519 = vpop.permute.xlu0 %4518
    %v4552 = vunpack.c.l.b16 %v3911
    %v4553 = vunpack.c.l.b16 %v3912
    %v4554 = vunpack.c.l.b16 %v3913
    %v4555 = vunpack.c.l.b16 %v3914
    %v4556 = vunpack.c.l.b16 %v3915
    %v4557 = vunpack.c.l.b16 %v3916
    %v4558 = vunpack.c.l.b16 %v3917
    %v4559 = vunpack.c.l.b16 %v3918
    %v4560 = vunpack.c.l.b16 %v3919
    %v4561 = vunpack.c.l.b16 %v3920
    %v4562 = vunpack.c.l.b16 %v3921
    %v4563 = vunpack.c.l.b16 %v3922
    %v4564 = vunpack.c.l.b16 %v3923
    %v4565 = vunpack.c.l.b16 %v3924
    %v4566 = vunpack.c.l.b16 %v3925
    %v4567 = vunpack.c.l.b16 %v3926
    %v4568 = vunpack.c.l.b16 %v3927
    %v4569 = vunpack.c.l.b16 %v3928
    %v4570 = vunpack.c.l.b16 %v3929
    %v4571 = vunpack.c.l.b16 %v3930
    %v4572 = vunpack.c.l.b16 %v3931
    %v4573 = vunpack.c.l.b16 %v3932
    %v4574 = vunpack.c.l.b16 %v3933
    %v4575 = vunpack.c.l.b16 %v3934
    %v4576 = vunpack.c.l.b16 %v3935
    %v4577 = vunpack.c.l.b16 %v3936
    %v4578 = vunpack.c.l.b16 %v3937
    %v4579 = vunpack.c.l.b16 %v3938
    %v4580 = vunpack.c.l.b16 %v3939
    %v4581 = vunpack.c.l.b16 %v3940
    %v4582 = vunpack.c.l.b16 %v3941
    %v4583 = vunpack.c.l.b16 %v3942
    %v4584 = vpack.c.b16 %v4553, %v4552
    %v4585 = vpack.c.b16 %v4555, %v4554
    %v4586 = vpack.c.b16 %v4557, %v4556
    %v4587 = vpack.c.b16 %v4559, %v4558
    %v4588 = vpack.c.b16 %v4561, %v4560
    %v4589 = vpack.c.b16 %v4563, %v4562
    %v4590 = vpack.c.b16 %v4565, %v4564
    %v4591 = vpack.c.b16 %v4567, %v4566
    %v4592 = vpack.c.b16 %v4569, %v4568
    %v4593 = vpack.c.b16 %v4571, %v4570
    %v4594 = vpack.c.b16 %v4573, %v4572
    %v4595 = vpack.c.b16 %v4575, %v4574
    %v4596 = vpack.c.b16 %v4577, %v4576
    %v4597 = vpack.c.b16 %v4579, %v4578
    %v4598 = vpack.c.b16 %v4581, %v4580
    %v4599 = vpack.c.b16 %v4583, %v4582
    %4600 = vrot.lane.b32.xlu0 %v4584, 96
    %v4601 = vpop.permute.xlu0 %4600
    %4602 = vrot.lane.b32.xlu0 %v4585, 96
    %v4603 = vpop.permute.xlu0 %4602
    %4604 = vrot.lane.b32.xlu0 %v4586, 96
    %v4605 = vpop.permute.xlu0 %4604
    %4606 = vrot.lane.b32.xlu0 %v4587, 96
    %v4607 = vpop.permute.xlu0 %4606
    %4608 = vrot.lane.b32.xlu0 %v4588, 96
    %v4609 = vpop.permute.xlu0 %4608
    %4610 = vrot.lane.b32.xlu0 %v4589, 96
    %v4611 = vpop.permute.xlu0 %4610
    %4612 = vrot.lane.b32.xlu0 %v4590, 96
    %v4613 = vpop.permute.xlu0 %4612
    %4614 = vrot.lane.b32.xlu0 %v4591, 96
    %v4615 = vpop.permute.xlu0 %4614
    %4616 = vrot.lane.b32.xlu0 %v4592, 96
    %v4617 = vpop.permute.xlu0 %4616
    %4618 = vrot.lane.b32.xlu0 %v4593, 96
    %v4619 = vpop.permute.xlu0 %4618
    %4620 = vrot.lane.b32.xlu0 %v4594, 96
    %v4621 = vpop.permute.xlu0 %4620
    %4622 = vrot.lane.b32.xlu0 %v4595, 96
    %v4623 = vpop.permute.xlu0 %4622
    %4624 = vrot.lane.b32.xlu0 %v4596, 96
    %v4625 = vpop.permute.xlu0 %4624
    %4626 = vrot.lane.b32.xlu0 %v4597, 96
    %v4627 = vpop.permute.xlu0 %4626
    %4628 = vrot.lane.b32.xlu0 %v4598, 96
    %v4629 = vpop.permute.xlu0 %4628
    %4630 = vrot.lane.b32.xlu0 %v4599, 96
    %v4631 = vpop.permute.xlu0 %4630
    %v4648 = vunpack.c.l.b16 %v3943
    %v4649 = vunpack.c.l.b16 %v3944
    %v4650 = vunpack.c.l.b16 %v3945
    %v4651 = vunpack.c.l.b16 %v3946
    %v4652 = vunpack.c.l.b16 %v3947
    %v4653 = vunpack.c.l.b16 %v3948
    %v4654 = vunpack.c.l.b16 %v3949
    %v4655 = vunpack.c.l.b16 %v3950
    %v4656 = vunpack.c.l.b16 %v3951
    %v4657 = vunpack.c.l.b16 %v3952
    %v4658 = vunpack.c.l.b16 %v3953
    %v4659 = vunpack.c.l.b16 %v3954
    %v4660 = vunpack.c.l.b16 %v3955
    %v4661 = vunpack.c.l.b16 %v3956
    %v4662 = vunpack.c.l.b16 %v3957
    %v4663 = vunpack.c.l.b16 %v3958
    %v4664 = vpack.c.b16 %v4648, %v4648
    %v4665 = vpack.c.b16 %v4649, %v4649
    %v4666 = vpack.c.b16 %v4650, %v4650
    %v4667 = vpack.c.b16 %v4651, %v4651
    %v4668 = vpack.c.b16 %v4652, %v4652
    %v4669 = vpack.c.b16 %v4653, %v4653
    %v4670 = vpack.c.b16 %v4654, %v4654
    %v4671 = vpack.c.b16 %v4655, %v4655
    %v4672 = vpack.c.b16 %v4656, %v4656
    %v4673 = vpack.c.b16 %v4657, %v4657
    %v4674 = vpack.c.b16 %v4658, %v4658
    %v4675 = vpack.c.b16 %v4659, %v4659
    %v4676 = vpack.c.b16 %v4660, %v4660
    %v4677 = vpack.c.b16 %v4661, %v4661
    %v4678 = vpack.c.b16 %v4662, %v4662
    %v4679 = vpack.c.b16 %v4663, %v4663
    %v4681 = vshrl.u32 %v4584, 16
    %v4683 = vshll.u32 %v4584, 16
    %v4685 = vrot.slane %v4683, 1
    %v4686 = vor.u32 %v4681, %v4685
    %v4688 = vshll.u32 %v4664, 16
    %v4690 = vrot.slane %v4688, 1
    %v4691 = vsel %vm2290, %v4686, %v4690
    %v4693 = vshrl.u32 %v4585, 16
    %v4695 = vshll.u32 %v4585, 16
    %v4697 = vrot.slane %v4695, 1
    %v4698 = vor.u32 %v4693, %v4697
    %v4700 = vshll.u32 %v4665, 16
    %v4702 = vrot.slane %v4700, 1
    %v4703 = vsel %vm2290, %v4698, %v4702
    %v4705 = vshrl.u32 %v4586, 16
    %v4707 = vshll.u32 %v4586, 16
    %v4709 = vrot.slane %v4707, 1
    %v4710 = vor.u32 %v4705, %v4709
    %v4712 = vshll.u32 %v4666, 16
    %v4714 = vrot.slane %v4712, 1
    %v4715 = vsel %vm2290, %v4710, %v4714
    %v4717 = vshrl.u32 %v4587, 16
    %v4719 = vshll.u32 %v4587, 16
    %v4721 = vrot.slane %v4719, 1
    %v4722 = vor.u32 %v4717, %v4721
    %v4724 = vshll.u32 %v4667, 16
    %v4726 = vrot.slane %v4724, 1
    %v4727 = vsel %vm2290, %v4722, %v4726
    %v4729 = vshrl.u32 %v4588, 16
    %v4731 = vshll.u32 %v4588, 16
    %v4733 = vrot.slane %v4731, 1
    %v4734 = vor.u32 %v4729, %v4733
    %v4736 = vshll.u32 %v4668, 16
    %v4738 = vrot.slane %v4736, 1
    %v4739 = vsel %vm2290, %v4734, %v4738
    %v4741 = vshrl.u32 %v4589, 16
    %v4743 = vshll.u32 %v4589, 16
    %v4745 = vrot.slane %v4743, 1
    %v4746 = vor.u32 %v4741, %v4745
    %v4748 = vshll.u32 %v4669, 16
    %v4750 = vrot.slane %v4748, 1
    %v4751 = vsel %vm2290, %v4746, %v4750
    %v4753 = vshrl.u32 %v4590, 16
    %v4755 = vshll.u32 %v4590, 16
    %v4757 = vrot.slane %v4755, 1
    %v4758 = vor.u32 %v4753, %v4757
    %v4760 = vshll.u32 %v4670, 16
    %v4762 = vrot.slane %v4760, 1
    %v4763 = vsel %vm2290, %v4758, %v4762
    %v4765 = vshrl.u32 %v4591, 16
    %v4767 = vshll.u32 %v4591, 16
    %v4769 = vrot.slane %v4767, 1
    %v4770 = vor.u32 %v4765, %v4769
    %v4772 = vshll.u32 %v4671, 16
    %v4774 = vrot.slane %v4772, 1
    %v4775 = vsel %vm2290, %v4770, %v4774
    %v4777 = vshrl.u32 %v4592, 16
    %v4779 = vshll.u32 %v4592, 16
    %v4781 = vrot.slane %v4779, 1
    %v4782 = vor.u32 %v4777, %v4781
    %v4784 = vshll.u32 %v4672, 16
    %v4786 = vrot.slane %v4784, 1
    %v4787 = vsel %vm2290, %v4782, %v4786
    %v4789 = vshrl.u32 %v4593, 16
    %v4791 = vshll.u32 %v4593, 16
    %v4793 = vrot.slane %v4791, 1
    %v4794 = vor.u32 %v4789, %v4793
    %v4796 = vshll.u32 %v4673, 16
    %v4798 = vrot.slane %v4796, 1
    %v4799 = vsel %vm2290, %v4794, %v4798
    %v4801 = vshrl.u32 %v4594, 16
    %v4803 = vshll.u32 %v4594, 16
    %v4805 = vrot.slane %v4803, 1
    %v4806 = vor.u32 %v4801, %v4805
    %v4808 = vshll.u32 %v4674, 16
    %v4810 = vrot.slane %v4808, 1
    %v4811 = vsel %vm2290, %v4806, %v4810
    %v4813 = vshrl.u32 %v4595, 16
    %v4815 = vshll.u32 %v4595, 16
    %v4817 = vrot.slane %v4815, 1
    %v4818 = vor.u32 %v4813, %v4817
    %v4820 = vshll.u32 %v4675, 16
    %v4822 = vrot.slane %v4820, 1
    %v4823 = vsel %vm2290, %v4818, %v4822
    %v4825 = vshrl.u32 %v4596, 16
    %v4827 = vshll.u32 %v4596, 16
    %v4829 = vrot.slane %v4827, 1
    %v4830 = vor.u32 %v4825, %v4829
    %v4832 = vshll.u32 %v4676, 16
    %v4834 = vrot.slane %v4832, 1
    %v4835 = vsel %vm2290, %v4830, %v4834
    %v4837 = vshrl.u32 %v4597, 16
    %v4839 = vshll.u32 %v4597, 16
    %v4841 = vrot.slane %v4839, 1
    %v4842 = vor.u32 %v4837, %v4841
    %v4844 = vshll.u32 %v4677, 16
    %v4846 = vrot.slane %v4844, 1
    %v4847 = vsel %vm2290, %v4842, %v4846
    %v4849 = vshrl.u32 %v4598, 16
    %v4851 = vshll.u32 %v4598, 16
    %v4853 = vrot.slane %v4851, 1
    %v4854 = vor.u32 %v4849, %v4853
    %v4856 = vshll.u32 %v4678, 16
    %v4858 = vrot.slane %v4856, 1
    %v4859 = vsel %vm2290, %v4854, %v4858
    %v4861 = vshrl.u32 %v4599, 16
    %v4863 = vshll.u32 %v4599, 16
    %v4865 = vrot.slane %v4863, 1
    %v4866 = vor.u32 %v4861, %v4865
    %v4868 = vshll.u32 %v4679, 16
    %v4870 = vrot.slane %v4868, 1
    %v4871 = vsel %vm2290, %v4866, %v4870
    %v4888 = vunpack.c.l.b16 %v3959
    %v4889 = vunpack.c.l.b16 %v3960
    %v4890 = vunpack.c.l.b16 %v3961
    %v4891 = vunpack.c.l.b16 %v3962
    %v4892 = vunpack.c.l.b16 %v3963
    %v4893 = vunpack.c.l.b16 %v3964
    %v4894 = vunpack.c.l.b16 %v3965
    %v4895 = vunpack.c.l.b16 %v3966
    %v4896 = vunpack.c.l.b16 %v3967
    %v4897 = vunpack.c.l.b16 %v3968
    %v4898 = vunpack.c.l.b16 %v3969
    %v4899 = vunpack.c.l.b16 %v3970
    %v4900 = vunpack.c.l.b16 %v3971
    %v4901 = vunpack.c.l.b16 %v3972
    %v4902 = vunpack.c.l.b16 %v3973
    %v4903 = vunpack.c.l.b16 %v3974
    %v4904 = vpack.c.b16 %v4553, %v4888
    %v4905 = vpack.c.b16 %v4555, %v4889
    %v4906 = vpack.c.b16 %v4557, %v4890
    %v4907 = vpack.c.b16 %v4559, %v4891
    %v4908 = vpack.c.b16 %v4561, %v4892
    %v4909 = vpack.c.b16 %v4563, %v4893
    %v4910 = vpack.c.b16 %v4565, %v4894
    %v4911 = vpack.c.b16 %v4567, %v4895
    %v4912 = vpack.c.b16 %v4569, %v4896
    %v4913 = vpack.c.b16 %v4571, %v4897
    %v4914 = vpack.c.b16 %v4573, %v4898
    %v4915 = vpack.c.b16 %v4575, %v4899
    %v4916 = vpack.c.b16 %v4577, %v4900
    %v4917 = vpack.c.b16 %v4579, %v4901
    %v4918 = vpack.c.b16 %v4581, %v4902
    %v4919 = vpack.c.b16 %v4583, %v4903
    %v4920 = vrot.slane %v4904, 1
    %v4921 = vrot.slane %v4664, 1
    %v4922 = vsel %vm2563, %v4920, %v4921
    %v4923 = vrot.slane %v4905, 1
    %v4924 = vrot.slane %v4665, 1
    %v4925 = vsel %vm2563, %v4923, %v4924
    %v4926 = vrot.slane %v4906, 1
    %v4927 = vrot.slane %v4666, 1
    %v4928 = vsel %vm2563, %v4926, %v4927
    %v4929 = vrot.slane %v4907, 1
    %v4930 = vrot.slane %v4667, 1
    %v4931 = vsel %vm2563, %v4929, %v4930
    %v4932 = vrot.slane %v4908, 1
    %v4933 = vrot.slane %v4668, 1
    %v4934 = vsel %vm2563, %v4932, %v4933
    %v4935 = vrot.slane %v4909, 1
    %v4936 = vrot.slane %v4669, 1
    %v4937 = vsel %vm2563, %v4935, %v4936
    %v4938 = vrot.slane %v4910, 1
    %v4939 = vrot.slane %v4670, 1
    %v4940 = vsel %vm2563, %v4938, %v4939
    %v4941 = vrot.slane %v4911, 1
    %v4942 = vrot.slane %v4671, 1
    %v4943 = vsel %vm2563, %v4941, %v4942
    %v4944 = vrot.slane %v4912, 1
    %v4945 = vrot.slane %v4672, 1
    %v4946 = vsel %vm2563, %v4944, %v4945
    %v4947 = vrot.slane %v4913, 1
    %v4948 = vrot.slane %v4673, 1
    %v4949 = vsel %vm2563, %v4947, %v4948
    %v4950 = vrot.slane %v4914, 1
    %v4951 = vrot.slane %v4674, 1
    %v4952 = vsel %vm2563, %v4950, %v4951
    %v4953 = vrot.slane %v4915, 1
    %v4954 = vrot.slane %v4675, 1
    %v4955 = vsel %vm2563, %v4953, %v4954
    %v4956 = vrot.slane %v4916, 1
    %v4957 = vrot.slane %v4676, 1
    %v4958 = vsel %vm2563, %v4956, %v4957
    %v4959 = vrot.slane %v4917, 1
    %v4960 = vrot.slane %v4677, 1
    %v4961 = vsel %vm2563, %v4959, %v4960
    %v4962 = vrot.slane %v4918, 1
    %v4963 = vrot.slane %v4678, 1
    %v4964 = vsel %vm2563, %v4962, %v4963
    %v4965 = vrot.slane %v4919, 1
    %v4966 = vrot.slane %v4679, 1
    %v4967 = vsel %vm2563, %v4965, %v4966
    %4968 = vrot.lane.b32.xlu0 %v4922, 32
    %v4969 = vpop.permute.xlu0 %4968
    %4970 = vrot.lane.b32.xlu0 %v4925, 32
    %v4971 = vpop.permute.xlu0 %4970
    %4972 = vrot.lane.b32.xlu0 %v4928, 32
    %v4973 = vpop.permute.xlu0 %4972
    %4974 = vrot.lane.b32.xlu0 %v4931, 32
    %v4975 = vpop.permute.xlu0 %4974
    %4976 = vrot.lane.b32.xlu0 %v4934, 32
    %v4977 = vpop.permute.xlu0 %4976
    %4978 = vrot.lane.b32.xlu0 %v4937, 32
    %v4979 = vpop.permute.xlu0 %4978
    %4980 = vrot.lane.b32.xlu0 %v4940, 32
    %v4981 = vpop.permute.xlu0 %4980
    %4982 = vrot.lane.b32.xlu0 %v4943, 32
    %v4983 = vpop.permute.xlu0 %4982
    %4984 = vrot.lane.b32.xlu0 %v4946, 32
    %v4985 = vpop.permute.xlu0 %4984
    %4986 = vrot.lane.b32.xlu0 %v4949, 32
    %v4987 = vpop.permute.xlu0 %4986
    %4988 = vrot.lane.b32.xlu0 %v4952, 32
    %v4989 = vpop.permute.xlu0 %4988
    %4990 = vrot.lane.b32.xlu0 %v4955, 32
    %v4991 = vpop.permute.xlu0 %4990
    %4992 = vrot.lane.b32.xlu0 %v4958, 32
    %v4993 = vpop.permute.xlu0 %4992
    %4994 = vrot.lane.b32.xlu0 %v4961, 32
    %v4995 = vpop.permute.xlu0 %4994
    %4996 = vrot.lane.b32.xlu0 %v4964, 32
    %v4997 = vpop.permute.xlu0 %4996
    %4998 = vrot.lane.b32.xlu0 %v4967, 32
    %v4999 = vpop.permute.xlu0 %4998
    %v5032 = vunpack.c.l.b16 %v3976
    %v5033 = vunpack.c.l.b16 %v3977
    %v5034 = vunpack.c.l.b16 %v3978
    %v5035 = vunpack.c.l.b16 %v3979
    %v5036 = vunpack.c.l.b16 %v3980
    %v5037 = vunpack.c.l.b16 %v3981
    %v5038 = vunpack.c.l.b16 %v3982
    %v5039 = vunpack.c.l.b16 %v3983
    %v5040 = vunpack.c.l.b16 %v3984
    %v5041 = vunpack.c.l.b16 %v3985
    %v5042 = vunpack.c.l.b16 %v3986
    %v5043 = vunpack.c.l.b16 %v3987
    %v5044 = vunpack.c.l.b16 %v3988
    %v5045 = vunpack.c.l.b16 %v3989
    %v5046 = vunpack.c.l.b16 %v3990
    %v5047 = vunpack.c.l.b16 %v3991
    %v5048 = vunpack.c.l.b16 %v3992
    %v5049 = vunpack.c.l.b16 %v3993
    %v5050 = vunpack.c.l.b16 %v3994
    %v5051 = vunpack.c.l.b16 %v3995
    %v5052 = vunpack.c.l.b16 %v3996
    %v5053 = vunpack.c.l.b16 %v3997
    %v5054 = vunpack.c.l.b16 %v3998
    %v5055 = vunpack.c.l.b16 %v3999
    %v5056 = vunpack.c.l.b16 %v4000
    %v5057 = vunpack.c.l.b16 %v4001
    %v5058 = vunpack.c.l.b16 %v4002
    %v5059 = vunpack.c.l.b16 %v4003
    %v5060 = vunpack.c.l.b16 %v4004
    %v5061 = vunpack.c.l.b16 %v4005
    %v5062 = vunpack.c.l.b16 %v4006
    %v5063 = vunpack.c.l.b16 %v4007
    %v5064 = vpack.c.b16 %v5033, %v5032
    %v5065 = vpack.c.b16 %v5035, %v5034
    %v5066 = vpack.c.b16 %v5037, %v5036
    %v5067 = vpack.c.b16 %v5039, %v5038
    %v5068 = vpack.c.b16 %v5041, %v5040
    %v5069 = vpack.c.b16 %v5043, %v5042
    %v5070 = vpack.c.b16 %v5045, %v5044
    %v5071 = vpack.c.b16 %v5047, %v5046
    %v5072 = vpack.c.b16 %v5049, %v5048
    %v5073 = vpack.c.b16 %v5051, %v5050
    %v5074 = vpack.c.b16 %v5053, %v5052
    %v5075 = vpack.c.b16 %v5055, %v5054
    %v5076 = vpack.c.b16 %v5057, %v5056
    %v5077 = vpack.c.b16 %v5059, %v5058
    %v5078 = vpack.c.b16 %v5061, %v5060
    %v5079 = vpack.c.b16 %v5063, %v5062
    %5080 = vrot.lane.b32.xlu0 %v5064, 64
    %v5081 = vpop.permute.xlu0 %5080
    %5082 = vrot.lane.b32.xlu0 %v5065, 64
    %v5083 = vpop.permute.xlu0 %5082
    %5084 = vrot.lane.b32.xlu0 %v5066, 64
    %v5085 = vpop.permute.xlu0 %5084
    %5086 = vrot.lane.b32.xlu0 %v5067, 64
    %v5087 = vpop.permute.xlu0 %5086
    %5088 = vrot.lane.b32.xlu0 %v5068, 64
    %v5089 = vpop.permute.xlu0 %5088
    %5090 = vrot.lane.b32.xlu0 %v5069, 64
    %v5091 = vpop.permute.xlu0 %5090
    %5092 = vrot.lane.b32.xlu0 %v5070, 64
    %v5093 = vpop.permute.xlu0 %5092
    %5094 = vrot.lane.b32.xlu0 %v5071, 64
    %v5095 = vpop.permute.xlu0 %5094
    %5096 = vrot.lane.b32.xlu0 %v5072, 64
    %v5097 = vpop.permute.xlu0 %5096
    %5098 = vrot.lane.b32.xlu0 %v5073, 64
    %v5099 = vpop.permute.xlu0 %5098
    %5100 = vrot.lane.b32.xlu0 %v5074, 64
    %v5101 = vpop.permute.xlu0 %5100
    %5102 = vrot.lane.b32.xlu0 %v5075, 64
    %v5103 = vpop.permute.xlu0 %5102
    %5104 = vrot.lane.b32.xlu0 %v5076, 64
    %v5105 = vpop.permute.xlu0 %5104
    %5106 = vrot.lane.b32.xlu0 %v5077, 64
    %v5107 = vpop.permute.xlu0 %5106
    %5108 = vrot.lane.b32.xlu0 %v5078, 64
    %v5109 = vpop.permute.xlu0 %5108
    %5110 = vrot.lane.b32.xlu0 %v5079, 64
    %v5111 = vpop.permute.xlu0 %5110
    %v5128 = vunpack.c.l.b16 %v4008
    %v5129 = vunpack.c.l.b16 %v4009
    %v5130 = vunpack.c.l.b16 %v4010
    %v5131 = vunpack.c.l.b16 %v4011
    %v5132 = vunpack.c.l.b16 %v4012
    %v5133 = vunpack.c.l.b16 %v4013
    %v5134 = vunpack.c.l.b16 %v4014
    %v5135 = vunpack.c.l.b16 %v4015
    %v5136 = vunpack.c.l.b16 %v4016
    %v5137 = vunpack.c.l.b16 %v4017
    %v5138 = vunpack.c.l.b16 %v4018
    %v5139 = vunpack.c.l.b16 %v4019
    %v5140 = vunpack.c.l.b16 %v4020
    %v5141 = vunpack.c.l.b16 %v4021
    %v5142 = vunpack.c.l.b16 %v4022
    %v5143 = vunpack.c.l.b16 %v4023
    %v5144 = vpack.c.b16 %v5128, %v5128
    %v5145 = vpack.c.b16 %v5129, %v5129
    %v5146 = vpack.c.b16 %v5130, %v5130
    %v5147 = vpack.c.b16 %v5131, %v5131
    %v5148 = vpack.c.b16 %v5132, %v5132
    %v5149 = vpack.c.b16 %v5133, %v5133
    %v5150 = vpack.c.b16 %v5134, %v5134
    %v5151 = vpack.c.b16 %v5135, %v5135
    %v5152 = vpack.c.b16 %v5136, %v5136
    %v5153 = vpack.c.b16 %v5137, %v5137
    %v5154 = vpack.c.b16 %v5138, %v5138
    %v5155 = vpack.c.b16 %v5139, %v5139
    %v5156 = vpack.c.b16 %v5140, %v5140
    %v5157 = vpack.c.b16 %v5141, %v5141
    %v5158 = vpack.c.b16 %v5142, %v5142
    %v5159 = vpack.c.b16 %v5143, %v5143
    %v5161 = vshrl.u32 %v5064, 16
    %v5163 = vshll.u32 %v5064, 16
    %v5165 = vrot.slane %v5163, 1
    %v5166 = vor.u32 %v5161, %v5165
    %v5168 = vshll.u32 %v5144, 16
    %v5170 = vrot.slane %v5168, 1
    %v5171 = vsel %vm2290, %v5166, %v5170
    %v5173 = vshrl.u32 %v5065, 16
    %v5175 = vshll.u32 %v5065, 16
    %v5177 = vrot.slane %v5175, 1
    %v5178 = vor.u32 %v5173, %v5177
    %v5180 = vshll.u32 %v5145, 16
    %v5182 = vrot.slane %v5180, 1
    %v5183 = vsel %vm2290, %v5178, %v5182
    %v5185 = vshrl.u32 %v5066, 16
    %v5187 = vshll.u32 %v5066, 16
    %v5189 = vrot.slane %v5187, 1
    %v5190 = vor.u32 %v5185, %v5189
    %v5192 = vshll.u32 %v5146, 16
    %v5194 = vrot.slane %v5192, 1
    %v5195 = vsel %vm2290, %v5190, %v5194
    %v5197 = vshrl.u32 %v5067, 16
    %v5199 = vshll.u32 %v5067, 16
    %v5201 = vrot.slane %v5199, 1
    %v5202 = vor.u32 %v5197, %v5201
    %v5204 = vshll.u32 %v5147, 16
    %v5206 = vrot.slane %v5204, 1
    %v5207 = vsel %vm2290, %v5202, %v5206
    %v5209 = vshrl.u32 %v5068, 16
    %v5211 = vshll.u32 %v5068, 16
    %v5213 = vrot.slane %v5211, 1
    %v5214 = vor.u32 %v5209, %v5213
    %v5216 = vshll.u32 %v5148, 16
    %v5218 = vrot.slane %v5216, 1
    %v5219 = vsel %vm2290, %v5214, %v5218
    %v5221 = vshrl.u32 %v5069, 16
    %v5223 = vshll.u32 %v5069, 16
    %v5225 = vrot.slane %v5223, 1
    %v5226 = vor.u32 %v5221, %v5225
    %v5228 = vshll.u32 %v5149, 16
    %v5230 = vrot.slane %v5228, 1
    %v5231 = vsel %vm2290, %v5226, %v5230
    %v5233 = vshrl.u32 %v5070, 16
    %v5235 = vshll.u32 %v5070, 16
    %v5237 = vrot.slane %v5235, 1
    %v5238 = vor.u32 %v5233, %v5237
    %v5240 = vshll.u32 %v5150, 16
    %v5242 = vrot.slane %v5240, 1
    %v5243 = vsel %vm2290, %v5238, %v5242
    %v5245 = vshrl.u32 %v5071, 16
    %v5247 = vshll.u32 %v5071, 16
    %v5249 = vrot.slane %v5247, 1
    %v5250 = vor.u32 %v5245, %v5249
    %v5252 = vshll.u32 %v5151, 16
    %v5254 = vrot.slane %v5252, 1
    %v5255 = vsel %vm2290, %v5250, %v5254
    %v5257 = vshrl.u32 %v5072, 16
    %v5259 = vshll.u32 %v5072, 16
    %v5261 = vrot.slane %v5259, 1
    %v5262 = vor.u32 %v5257, %v5261
    %v5264 = vshll.u32 %v5152, 16
    %v5266 = vrot.slane %v5264, 1
    %v5267 = vsel %vm2290, %v5262, %v5266
    %v5269 = vshrl.u32 %v5073, 16
    %v5271 = vshll.u32 %v5073, 16
    %v5273 = vrot.slane %v5271, 1
    %v5274 = vor.u32 %v5269, %v5273
    %v5276 = vshll.u32 %v5153, 16
    %v5278 = vrot.slane %v5276, 1
    %v5279 = vsel %vm2290, %v5274, %v5278
    %v5281 = vshrl.u32 %v5074, 16
    %v5283 = vshll.u32 %v5074, 16
    %v5285 = vrot.slane %v5283, 1
    %v5286 = vor.u32 %v5281, %v5285
    %v5288 = vshll.u32 %v5154, 16
    %v5290 = vrot.slane %v5288, 1
    %v5291 = vsel %vm2290, %v5286, %v5290
    %v5293 = vshrl.u32 %v5075, 16
    %v5295 = vshll.u32 %v5075, 16
    %v5297 = vrot.slane %v5295, 1
    %v5298 = vor.u32 %v5293, %v5297
    %v5300 = vshll.u32 %v5155, 16
    %v5302 = vrot.slane %v5300, 1
    %v5303 = vsel %vm2290, %v5298, %v5302
    %v5305 = vshrl.u32 %v5076, 16
    %v5307 = vshll.u32 %v5076, 16
    %v5309 = vrot.slane %v5307, 1
    %v5310 = vor.u32 %v5305, %v5309
    %v5312 = vshll.u32 %v5156, 16
    %v5314 = vrot.slane %v5312, 1
    %v5315 = vsel %vm2290, %v5310, %v5314
    %v5317 = vshrl.u32 %v5077, 16
    %v5319 = vshll.u32 %v5077, 16
    %v5321 = vrot.slane %v5319, 1
    %v5322 = vor.u32 %v5317, %v5321
    %v5324 = vshll.u32 %v5157, 16
    %v5326 = vrot.slane %v5324, 1
    %v5327 = vsel %vm2290, %v5322, %v5326
    %v5329 = vshrl.u32 %v5078, 16
    %v5331 = vshll.u32 %v5078, 16
    %v5333 = vrot.slane %v5331, 1
    %v5334 = vor.u32 %v5329, %v5333
    %v5336 = vshll.u32 %v5158, 16
    %v5338 = vrot.slane %v5336, 1
    %v5339 = vsel %vm2290, %v5334, %v5338
    %v5341 = vshrl.u32 %v5079, 16
    %v5343 = vshll.u32 %v5079, 16
    %v5345 = vrot.slane %v5343, 1
    %v5346 = vor.u32 %v5341, %v5345
    %v5348 = vshll.u32 %v5159, 16
    %v5350 = vrot.slane %v5348, 1
    %v5351 = vsel %vm2290, %v5346, %v5350
    %5352 = vrot.lane.b32.xlu0 %v5171, 96
    %v5353 = vpop.permute.xlu0 %5352
    %5354 = vrot.lane.b32.xlu0 %v5183, 96
    %v5355 = vpop.permute.xlu0 %5354
    %5356 = vrot.lane.b32.xlu0 %v5195, 96
    %v5357 = vpop.permute.xlu0 %5356
    %5358 = vrot.lane.b32.xlu0 %v5207, 96
    %v5359 = vpop.permute.xlu0 %5358
    %5360 = vrot.lane.b32.xlu0 %v5219, 96
    %v5361 = vpop.permute.xlu0 %5360
    %5362 = vrot.lane.b32.xlu0 %v5231, 96
    %v5363 = vpop.permute.xlu0 %5362
    %5364 = vrot.lane.b32.xlu0 %v5243, 96
    %v5365 = vpop.permute.xlu0 %5364
    %5366 = vrot.lane.b32.xlu0 %v5255, 96
    %v5367 = vpop.permute.xlu0 %5366
    %5368 = vrot.lane.b32.xlu0 %v5267, 96
    %v5369 = vpop.permute.xlu0 %5368
    %5370 = vrot.lane.b32.xlu0 %v5279, 96
    %v5371 = vpop.permute.xlu0 %5370
    %5372 = vrot.lane.b32.xlu0 %v5291, 96
    %v5373 = vpop.permute.xlu0 %5372
    %5374 = vrot.lane.b32.xlu0 %v5303, 96
    %v5375 = vpop.permute.xlu0 %5374
    %5376 = vrot.lane.b32.xlu0 %v5315, 96
    %v5377 = vpop.permute.xlu0 %5376
    %5378 = vrot.lane.b32.xlu0 %v5327, 96
    %v5379 = vpop.permute.xlu0 %5378
    %5380 = vrot.lane.b32.xlu0 %v5339, 96
    %v5381 = vpop.permute.xlu0 %5380
    %5382 = vrot.lane.b32.xlu0 %v5351, 96
    %v5383 = vpop.permute.xlu0 %5382
    %v5400 = vunpack.c.l.b16 %v4024
    %v5401 = vunpack.c.l.b16 %v4025
    %v5402 = vunpack.c.l.b16 %v4026
    %v5403 = vunpack.c.l.b16 %v4027
    %v5404 = vunpack.c.l.b16 %v4028
    %v5405 = vunpack.c.l.b16 %v4029
    %v5406 = vunpack.c.l.b16 %v4030
    %v5407 = vunpack.c.l.b16 %v4031
    %v5408 = vunpack.c.l.b16 %v4032
    %v5409 = vunpack.c.l.b16 %v4033
    %v5410 = vunpack.c.l.b16 %v4034
    %v5411 = vunpack.c.l.b16 %v4035
    %v5412 = vunpack.c.l.b16 %v4036
    %v5413 = vunpack.c.l.b16 %v4037
    %v5414 = vunpack.c.l.b16 %v4038
    %v5415 = vunpack.c.l.b16 %v4039
    %v5416 = vpack.c.b16 %v5033, %v5400
    %v5417 = vpack.c.b16 %v5035, %v5401
    %v5418 = vpack.c.b16 %v5037, %v5402
    %v5419 = vpack.c.b16 %v5039, %v5403
    %v5420 = vpack.c.b16 %v5041, %v5404
    %v5421 = vpack.c.b16 %v5043, %v5405
    %v5422 = vpack.c.b16 %v5045, %v5406
    %v5423 = vpack.c.b16 %v5047, %v5407
    %v5424 = vpack.c.b16 %v5049, %v5408
    %v5425 = vpack.c.b16 %v5051, %v5409
    %v5426 = vpack.c.b16 %v5053, %v5410
    %v5427 = vpack.c.b16 %v5055, %v5411
    %v5428 = vpack.c.b16 %v5057, %v5412
    %v5429 = vpack.c.b16 %v5059, %v5413
    %v5430 = vpack.c.b16 %v5061, %v5414
    %v5431 = vpack.c.b16 %v5063, %v5415
    %v5432 = vrot.slane %v5416, 1
    %v5433 = vrot.slane %v5144, 1
    %v5434 = vsel %vm2563, %v5432, %v5433
    %v5435 = vrot.slane %v5417, 1
    %v5436 = vrot.slane %v5145, 1
    %v5437 = vsel %vm2563, %v5435, %v5436
    %v5438 = vrot.slane %v5418, 1
    %v5439 = vrot.slane %v5146, 1
    %v5440 = vsel %vm2563, %v5438, %v5439
    %v5441 = vrot.slane %v5419, 1
    %v5442 = vrot.slane %v5147, 1
    %v5443 = vsel %vm2563, %v5441, %v5442
    %v5444 = vrot.slane %v5420, 1
    %v5445 = vrot.slane %v5148, 1
    %v5446 = vsel %vm2563, %v5444, %v5445
    %v5447 = vrot.slane %v5421, 1
    %v5448 = vrot.slane %v5149, 1
    %v5449 = vsel %vm2563, %v5447, %v5448
    %v5450 = vrot.slane %v5422, 1
    %v5451 = vrot.slane %v5150, 1
    %v5452 = vsel %vm2563, %v5450, %v5451
    %v5453 = vrot.slane %v5423, 1
    %v5454 = vrot.slane %v5151, 1
    %v5455 = vsel %vm2563, %v5453, %v5454
    %v5456 = vrot.slane %v5424, 1
    %v5457 = vrot.slane %v5152, 1
    %v5458 = vsel %vm2563, %v5456, %v5457
    %v5459 = vrot.slane %v5425, 1
    %v5460 = vrot.slane %v5153, 1
    %v5461 = vsel %vm2563, %v5459, %v5460
    %v5462 = vrot.slane %v5426, 1
    %v5463 = vrot.slane %v5154, 1
    %v5464 = vsel %vm2563, %v5462, %v5463
    %v5465 = vrot.slane %v5427, 1
    %v5466 = vrot.slane %v5155, 1
    %v5467 = vsel %vm2563, %v5465, %v5466
    %v5468 = vrot.slane %v5428, 1
    %v5469 = vrot.slane %v5156, 1
    %v5470 = vsel %vm2563, %v5468, %v5469
    %v5471 = vrot.slane %v5429, 1
    %v5472 = vrot.slane %v5157, 1
    %v5473 = vsel %vm2563, %v5471, %v5472
    %v5474 = vrot.slane %v5430, 1
    %v5475 = vrot.slane %v5158, 1
    %v5476 = vsel %vm2563, %v5474, %v5475
    %v5477 = vrot.slane %v5431, 1
    %v5478 = vrot.slane %v5159, 1
    %v5479 = vsel %vm2563, %v5477, %v5478
    %v5481 = vsel %vm3604, %v4104, %v4361
    %v5483 = vsel %vm3604, %v4105, %v4363
    %v5485 = vsel %vm3604, %v4106, %v4365
    %v5487 = vsel %vm3604, %v4107, %v4367
    %v5489 = vsel %vm3604, %v4108, %v4369
    %v5491 = vsel %vm3604, %v4109, %v4371
    %v5493 = vsel %vm3604, %v4110, %v4373
    %v5495 = vsel %vm3604, %v4111, %v4375
    %v5497 = vsel %vm3604, %v4112, %v4377
    %v5499 = vsel %vm3604, %v4113, %v4379
    %v5501 = vsel %vm3604, %v4114, %v4381
    %v5503 = vsel %vm3604, %v4115, %v4383
    %v5505 = vsel %vm3604, %v4116, %v4385
    %v5507 = vsel %vm3604, %v4117, %v4387
    %v5509 = vsel %vm3604, %v4118, %v4389
    %v5511 = vsel %vm3604, %v4119, %v4391
    %v5513 = vsel %vm3637, %v5481, %v4489
    %v5515 = vsel %vm3637, %v5483, %v4491
    %v5517 = vsel %vm3637, %v5485, %v4493
    %v5519 = vsel %vm3637, %v5487, %v4495
    %v5521 = vsel %vm3637, %v5489, %v4497
    %v5523 = vsel %vm3637, %v5491, %v4499
    %v5525 = vsel %vm3637, %v5493, %v4501
    %v5527 = vsel %vm3637, %v5495, %v4503
    %v5529 = vsel %vm3637, %v5497, %v4505
    %v5531 = vsel %vm3637, %v5499, %v4507
    %v5533 = vsel %vm3637, %v5501, %v4509
    %v5535 = vsel %vm3637, %v5503, %v4511
    %v5537 = vsel %vm3637, %v5505, %v4513
    %v5539 = vsel %vm3637, %v5507, %v4515
    %v5541 = vsel %vm3637, %v5509, %v4517
    %v5543 = vsel %vm3637, %v5511, %v4519
    %v5545 = vsel %vm3670, %v5513, %v4601
    %v5548 = vsel %vm3670, %v5515, %v4603
    %v5551 = vsel %vm3670, %v5517, %v4605
    %v5554 = vsel %vm3670, %v5519, %v4607
    %v5557 = vsel %vm3670, %v5521, %v4609
    %v5560 = vsel %vm3670, %v5523, %v4611
    %v5563 = vsel %vm3670, %v5525, %v4613
    %v5566 = vsel %vm3670, %v5527, %v4615
    %v5569 = vsel %vm3670, %v5529, %v4617
    %v5572 = vsel %vm3670, %v5531, %v4619
    %v5575 = vsel %vm3670, %v5533, %v4621
    %v5578 = vsel %vm3670, %v5535, %v4623
    %v5581 = vsel %vm3670, %v5537, %v4625
    %v5584 = vsel %vm3670, %v5539, %v4627
    %v5587 = vsel %vm3670, %v5541, %v4629
    %v5590 = vsel %vm3670, %v5543, %v4631
    %v5594 = vsel %vm3604, %v4691, %v4969
    %v5597 = vsel %vm3604, %v4703, %v4971
    %v5600 = vsel %vm3604, %v4715, %v4973
    %v5603 = vsel %vm3604, %v4727, %v4975
    %v5606 = vsel %vm3604, %v4739, %v4977
    %v5609 = vsel %vm3604, %v4751, %v4979
    %v5612 = vsel %vm3604, %v4763, %v4981
    %v5615 = vsel %vm3604, %v4775, %v4983
    %v5618 = vsel %vm3604, %v4787, %v4985
    %v5621 = vsel %vm3604, %v4799, %v4987
    %v5624 = vsel %vm3604, %v4811, %v4989
    %v5627 = vsel %vm3604, %v4823, %v4991
    %v5630 = vsel %vm3604, %v4835, %v4993
    %v5633 = vsel %vm3604, %v4847, %v4995
    %v5636 = vsel %vm3604, %v4859, %v4997
    %v5639 = vsel %vm3604, %v4871, %v4999
    %v5641 = vsel %vm3637, %v5594, %v5081
    %v5643 = vsel %vm3637, %v5597, %v5083
    %v5645 = vsel %vm3637, %v5600, %v5085
    %v5647 = vsel %vm3637, %v5603, %v5087
    %v5649 = vsel %vm3637, %v5606, %v5089
    %v5651 = vsel %vm3637, %v5609, %v5091
    %v5653 = vsel %vm3637, %v5612, %v5093
    %v5655 = vsel %vm3637, %v5615, %v5095
    %v5657 = vsel %vm3637, %v5618, %v5097
    %v5659 = vsel %vm3637, %v5621, %v5099
    %v5661 = vsel %vm3637, %v5624, %v5101
    %v5663 = vsel %vm3637, %v5627, %v5103
    %v5665 = vsel %vm3637, %v5630, %v5105
    %v5667 = vsel %vm3637, %v5633, %v5107
    %v5669 = vsel %vm3637, %v5636, %v5109
    %v5671 = vsel %vm3637, %v5639, %v5111
    %v5673 = vsel %vm3670, %v5641, %v5353
    %v5676 = vsel %vm3670, %v5643, %v5355
    %v5679 = vsel %vm3670, %v5645, %v5357
    %v5682 = vsel %vm3670, %v5647, %v5359
    %v5685 = vsel %vm3670, %v5649, %v5361
    %v5688 = vsel %vm3670, %v5651, %v5363
    %v5691 = vsel %vm3670, %v5653, %v5365
    %v5694 = vsel %vm3670, %v5655, %v5367
    %v5697 = vsel %vm3670, %v5657, %v5369
    %v5700 = vsel %vm3670, %v5659, %v5371
    %v5703 = vsel %vm3670, %v5661, %v5373
    %v5706 = vsel %vm3670, %v5663, %v5375
    %v5709 = vsel %vm3670, %v5665, %v5377
    %v5712 = vsel %vm3670, %v5667, %v5379
    %v5715 = vsel %vm3670, %v5669, %v5381
    %v5718 = vsel %vm3670, %v5671, %v5383
    %v5720 = vld [vmem:[%s3] sm:$0xf]
    %v5721 = vld [vmem:[%s3 + $0x4] sm:$0xf]
    %v5722 = vld [vmem:[%s3 + $0x8] sm:$0xf]
    %v5723 = vld [vmem:[%s3 + $0xc] sm:$0xf]
    %v5724 = vld [vmem:[%s3 + $0x10] sm:$0xf]
    %v5725 = vld [vmem:[%s3 + $0x14] sm:$0xf]
    %v5726 = vld [vmem:[%s3 + $0x18] sm:$0xf]
    %v5727 = vld [vmem:[%s3 + $0x1c] sm:$0xf]
    %v5728 = vld [vmem:[%s3 + $0x20] sm:$0xf]
    %v5729 = vld [vmem:[%s3 + $0x24] sm:$0xf]
    %v5730 = vld [vmem:[%s3 + $0x28] sm:$0xf]
    %v5731 = vld [vmem:[%s3 + $0x2c] sm:$0xf]
    %v5732 = vld [vmem:[%s3 + $0x30] sm:$0xf]
    %v5733 = vld [vmem:[%s3 + $0x34] sm:$0xf]
    %v5734 = vld [vmem:[%s3 + $0x38] sm:$0xf]
    %v5735 = vld [vmem:[%s3 + $0x3c] sm:$0xf]
    %v5736 = vld [vmem:[%s3 + $0x40] sm:$0xf]
    %v5737 = vld [vmem:[%s3 + $0x44] sm:$0xf]
    %v5738 = vld [vmem:[%s3 + $0x48] sm:$0xf]
    %v5739 = vld [vmem:[%s3 + $0x4c] sm:$0xf]
    %v5740 = vld [vmem:[%s3 + $0x50] sm:$0xf]
    %v5741 = vld [vmem:[%s3 + $0x54] sm:$0xf]
    %v5742 = vld [vmem:[%s3 + $0x58] sm:$0xf]
    %v5743 = vld [vmem:[%s3 + $0x5c] sm:$0xf]
    %v5744 = vld [vmem:[%s3 + $0x60] sm:$0xf]
    %v5745 = vld [vmem:[%s3 + $0x64] sm:$0xf]
    %v5746 = vld [vmem:[%s3 + $0x68] sm:$0xf]
    %v5747 = vld [vmem:[%s3 + $0x6c] sm:$0xf]
    %v5748 = vld [vmem:[%s3 + $0x70] sm:$0xf]
    %v5749 = vld [vmem:[%s3 + $0x74] sm:$0xf]
    %v5750 = vld [vmem:[%s3 + $0x78] sm:$0xf]
    %v5751 = vld [vmem:[%s3 + $0x7c] sm:$0xf]
    %v5752 = vld [vmem:[%s3 + $0x80] sm:$0xf]
    %v5753 = vld [vmem:[%s3 + $0x84] sm:$0xf]
    %v5754 = vld [vmem:[%s3 + $0x88] sm:$0xf]
    %v5755 = vld [vmem:[%s3 + $0x8c] sm:$0xf]
    %v5756 = vld [vmem:[%s4] sm:$0x1]
    %v5758 = vlaneseq
    %v5759 = vshrl.u32 %v5758, 7
    %v5760 = vsub.s32 0, %v5759
    %v5761 = vrot.slane %v5756, %v5760
    %v5799 = vunpack.c.l.b16 %v5720
    %v5800 = vunpack.c.l.b16 %v5721
    %v5801 = vunpack.c.l.b16 %v5722
    %v5802 = vunpack.c.l.b16 %v5723
    %v5803 = vunpack.c.l.b16 %v5724
    %v5804 = vunpack.c.l.b16 %v5725
    %v5805 = vunpack.c.l.b16 %v5726
    %v5806 = vunpack.c.l.b16 %v5727
    %v5807 = vunpack.c.l.b16 %v5728
    %v5808 = vunpack.c.l.b16 %v5729
    %v5809 = vunpack.c.l.b16 %v5730
    %v5810 = vunpack.c.l.b16 %v5731
    %v5811 = vunpack.c.l.b16 %v5732
    %v5812 = vunpack.c.l.b16 %v5733
    %v5813 = vunpack.c.l.b16 %v5734
    %v5814 = vunpack.c.l.b16 %v5735
    %v5815 = vunpack.c.l.b16 %v5736
    %v5816 = vunpack.c.l.b16 %v5737
    %v5817 = vunpack.c.l.b16 %v5738
    %v5818 = vunpack.c.l.b16 %v5739
    %v5819 = vunpack.c.l.b16 %v5740
    %v5820 = vunpack.c.l.b16 %v5741
    %v5821 = vunpack.c.l.b16 %v5742
    %v5822 = vunpack.c.l.b16 %v5743
    %v5823 = vunpack.c.l.b16 %v5744
    %v5824 = vunpack.c.l.b16 %v5745
    %v5825 = vunpack.c.l.b16 %v5746
    %v5826 = vunpack.c.l.b16 %v5747
    %v5827 = vunpack.c.l.b16 %v5748
    %v5828 = vunpack.c.l.b16 %v5749
    %v5829 = vunpack.c.l.b16 %v5750
    %v5830 = vunpack.c.l.b16 %v5751
    %v5831 = vunpack.c.l.b16 %v5752
    %v5832 = vunpack.c.l.b16 %v5753
    %v5833 = vunpack.c.l.b16 %v5754
    %v5834 = vunpack.c.l.b16 %v5755
    %v5835 = vpack.c.b16 %v5800, %v5799
    %v5836 = vpack.c.b16 %v5802, %v5801
    %v5837 = vpack.c.b16 %v5804, %v5803
    %v5838 = vpack.c.b16 %v5806, %v5805
    %v5839 = vpack.c.b16 %v5808, %v5807
    %v5840 = vpack.c.b16 %v5810, %v5809
    %v5841 = vpack.c.b16 %v5812, %v5811
    %v5842 = vpack.c.b16 %v5814, %v5813
    %v5843 = vpack.c.b16 %v5816, %v5815
    %v5844 = vpack.c.b16 %v5818, %v5817
    %v5845 = vpack.c.b16 %v5820, %v5819
    %v5846 = vpack.c.b16 %v5822, %v5821
    %v5847 = vpack.c.b16 %v5824, %v5823
    %v5848 = vpack.c.b16 %v5826, %v5825
    %v5849 = vpack.c.b16 %v5828, %v5827
    %v5850 = vpack.c.b16 %v5830, %v5829
    %v5851 = vpack.c.b16 %v5832, %v5831
    %v5852 = vpack.c.b16 %v5834, %v5833
    %v5872 = vsel %vm3604, %v3558, 0
    %v5875 = vsel %vm3604, %v3561, 0
    %v5878 = vsel %vm3604, %v3564, 0
    %v5881 = vsel %vm3604, %v3567, 0
    %v5884 = vsel %vm3604, %v3570, 0
    %v5887 = vsel %vm3604, %v3573, 0
    %v5890 = vsel %vm3604, %v3576, 0
    %v5893 = vsel %vm3604, %v3579, 0
    %v5896 = vsel %vm3604, %v3582, 0
    %v5899 = vsel %vm3604, %v3585, 0
    %v5902 = vsel %vm3604, %v3588, 0
    %v5905 = vsel %vm3604, %v3591, 0
    %v5908 = vsel %vm3604, %v3594, 0
    %v5911 = vsel %vm3604, %v3597, 0
    %v5914 = vsel %vm3604, %v3600, 0
    %v5917 = vsel %vm3604, %v3603, 0
    %v5920 = vsel %vm3604, %v5434, 0
    %v5923 = vsel %vm3604, %v5437, 0
    %v5926 = vsel %vm3604, %v5440, 0
    %v5929 = vsel %vm3604, %v5443, 0
    %v5932 = vsel %vm3604, %v5446, 0
    %v5935 = vsel %vm3604, %v5449, 0
    %v5938 = vsel %vm3604, %v5452, 0
    %v5941 = vsel %vm3604, %v5455, 0
    %v5944 = vsel %vm3604, %v5458, 0
    %v5947 = vsel %vm3604, %v5461, 0
    %v5950 = vsel %vm3604, %v5464, 0
    %v5953 = vsel %vm3604, %v5467, 0
    %v5956 = vsel %vm3604, %v5470, 0
    %v5959 = vsel %vm3604, %v5473, 0
    %v5962 = vsel %vm3604, %v5476, 0
    %v5965 = vsel %vm3604, %v5479, 0
    %5967 = vmatprep.subr.bf16.mxu0 0
    %5968 = vmatpush1.bf16.msra.mxu0 %v5835
    %5969 = vmatprep.subr.bf16.mxu0 0
    %5970 = vmatpush1.bf16.msra.mxu0 %v5836
    %5971 = vmatprep.subr.bf16.mxu0 0
    %5972 = vmatpush1.bf16.msra.mxu0 %v5837
    %5973 = vmatprep.subr.bf16.mxu0 0
    %5974 = vmatpush1.bf16.msra.mxu0 %v5838
    %5975 = vmatprep.subr.bf16.mxu0 0
    %5976 = vmatpush1.bf16.msra.mxu0 %v5839
    %5977 = vmatprep.subr.bf16.mxu0 0
    %5978 = vmatpush1.bf16.msra.mxu0 %v5840
    %5979 = vmatprep.subr.bf16.mxu0 0
    %5980 = vmatpush1.bf16.msra.mxu0 %v5841
    %5981 = vmatprep.subr.bf16.mxu0 0
    %5982 = vmatpush1.bf16.msra.mxu0 %v5842
    %5983 = vmatprep.subr.bf16.mxu0 0
    %5984 = vmatpush1.bf16.msra.mxu0 %v5843
    %5985 = vmatprep.subr.bf16.mxu0 0
    %5986 = vmatpush1.bf16.msra.mxu0 %v5844
    %5987 = vmatprep.subr.bf16.mxu0 0
    %5988 = vmatpush1.bf16.msra.mxu0 %v5845
    %5989 = vmatprep.subr.bf16.mxu0 0
    %5990 = vmatpush1.bf16.msra.mxu0 %v5846
    %5991 = vmatprep.subr.bf16.mxu0 0
    %5992 = vmatpush1.bf16.msra.mxu0 %v5847
    %5993 = vmatprep.subr.bf16.mxu0 0
    %5994 = vmatpush1.bf16.msra.mxu0 %v5848
    %5995 = vmatprep.subr.bf16.mxu0 0
    %5996 = vmatpush1.bf16.msra.mxu0 %v5849
    %5997 = vmatprep.subr.bf16.mxu0 0
    %5998 = vmatpush1.bf16.msra.mxu0 %v5850
    %5999 = vmatprep.mubr.bf16.mxu0 %v3800
    %6000 = vmatmul.mubr.bf16.gmra.mrb[0].mxu0 %v3672
    %v6001 = vpop.f32.mrb[0].mxu0
    %v6002 = vadd.f32 %v5761, %v6001
    %v6003 = vpop.f32.mrb[0].mxu0
    %v6004 = vpop.f32.mrb[0].mxu0
    %v6005 = vadd.f32 %v5761, %v6004
    %v6006 = vpop.f32.mrb[0].mxu0
    %6007 = vmatprep.mubr.bf16.mxu0 %v3803
    %6008 = vmatmul.mubr.bf16.gmra.mrb[0].mxu0 %v3675
    %v6009 = vpop.f32.mrb[0].mxu0
    %v6010 = vadd.f32 %v5761, %v6009
    %v6011 = vpop.f32.mrb[0].mxu0
    %v6012 = vpop.f32.mrb[0].mxu0
    %v6013 = vadd.f32 %v5761, %v6012
    %v6014 = vpop.f32.mrb[0].mxu0
    %6015 = vmatprep.mubr.bf16.mxu0 %v3806
    %6016 = vmatmul.mubr.bf16.gmra.mrb[0].mxu0 %v3678
    %v6017 = vpop.f32.mrb[0].mxu0
    %v6018 = vadd.f32 %v5761, %v6017
    %v6019 = vpop.f32.mrb[0].mxu0
    %v6020 = vpop.f32.mrb[0].mxu0
    %v6021 = vadd.f32 %v5761, %v6020
    %v6022 = vpop.f32.mrb[0].mxu0
    %6023 = vmatprep.mubr.bf16.mxu0 %v3809
    %6024 = vmatmul.mubr.bf16.gmra.mrb[0].mxu0 %v3681
    %v6025 = vpop.f32.mrb[0].mxu0
    %v6026 = vadd.f32 %v5761, %v6025
    %v6027 = vpop.f32.mrb[0].mxu0
    %v6028 = vpop.f32.mrb[0].mxu0
    %v6029 = vadd.f32 %v5761, %v6028
    %v6030 = vpop.f32.mrb[0].mxu0
    %6031 = vmatprep.mubr.bf16.mxu0 %v3812
    %6032 = vmatmul.mubr.bf16.gmra.mrb[0].mxu0 %v3684
    %v6033 = vpop.f32.mrb[0].mxu0
    %v6034 = vadd.f32 %v5761, %v6033
    %v6035 = vpop.f32.mrb[0].mxu0
    %v6036 = vpop.f32.mrb[0].mxu0
    %v6037 = vadd.f32 %v5761, %v6036
    %v6038 = vpop.f32.mrb[0].mxu0
    %6039 = vmatprep.mubr.bf16.mxu0 %v3815
    %6040 = vmatmul.mubr.bf16.gmra.mrb[0].mxu0 %v3687
    %v6041 = vpop.f32.mrb[0].mxu0
    %v6042 = vadd.f32 %v5761, %v6041
    %v6043 = vpop.f32.mrb[0].mxu0
    %v6044 = vpop.f32.mrb[0].mxu0
    %v6045 = vadd.f32 %v5761, %v6044
    %v6046 = vpop.f32.mrb[0].mxu0
    %6047 = vmatprep.mubr.bf16.mxu0 %v3818
    %6048 = vmatmul.mubr.bf16.gmra.mrb[0].mxu0 %v3690
    %v6049 = vpop.f32.mrb[0].mxu0
    %v6050 = vadd.f32 %v5761, %v6049
    %v6051 = vpop.f32.mrb[0].mxu0
    %v6052 = vpop.f32.mrb[0].mxu0
    %v6053 = vadd.f32 %v5761, %v6052
    %v6054 = vpop.f32.mrb[0].mxu0
    %6055 = vmatprep.mubr.bf16.mxu0 %v3821
    %6056 = vmatmul.mubr.bf16.gmra.mrb[0].mxu0 %v3693
    %v6057 = vpop.f32.mrb[0].mxu0
    %v6058 = vadd.f32 %v5761, %v6057
    %v6059 = vpop.f32.mrb[0].mxu0
    %v6060 = vpop.f32.mrb[0].mxu0
    %v6061 = vadd.f32 %v5761, %v6060
    %v6062 = vpop.f32.mrb[0].mxu0
    %6063 = vmatprep.mubr.bf16.mxu0 %v3824
    %6064 = vmatmul.mubr.bf16.gmra.mrb[0].mxu0 %v3696
    %v6065 = vpop.f32.mrb[0].mxu0
    %v6066 = vadd.f32 %v5761, %v6065
    %v6067 = vpop.f32.mrb[0].mxu0
    %v6068 = vpop.f32.mrb[0].mxu0
    %v6069 = vadd.f32 %v5761, %v6068
    %v6070 = vpop.f32.mrb[0].mxu0
    %6071 = vmatprep.mubr.bf16.mxu0 %v3827
    %6072 = vmatmul.mubr.bf16.gmra.mrb[0].mxu0 %v3699
    %v6073 = vpop.f32.mrb[0].mxu0
    %v6074 = vadd.f32 %v5761, %v6073
    %v6075 = vpop.f32.mrb[0].mxu0
    %v6076 = vpop.f32.mrb[0].mxu0
    %v6077 = vadd.f32 %v5761, %v6076
    %v6078 = vpop.f32.mrb[0].mxu0
    %6079 = vmatprep.mubr.bf16.mxu0 %v3830
    %6080 = vmatmul.mubr.bf16.gmra.mrb[0].mxu0 %v3702
    %v6081 = vpop.f32.mrb[0].mxu0
    %v6082 = vadd.f32 %v5761, %v6081
    %v6083 = vpop.f32.mrb[0].mxu0
    %v6084 = vpop.f32.mrb[0].mxu0
    %v6085 = vadd.f32 %v5761, %v6084
    %v6086 = vpop.f32.mrb[0].mxu0
    %6087 = vmatprep.mubr.bf16.mxu0 %v3833
    %6088 = vmatmul.mubr.bf16.gmra.mrb[0].mxu0 %v3705
    %v6089 = vpop.f32.mrb[0].mxu0
    %v6090 = vadd.f32 %v5761, %v6089
    %v6091 = vpop.f32.mrb[0].mxu0
    %v6092 = vpop.f32.mrb[0].mxu0
    %v6093 = vadd.f32 %v5761, %v6092
    %v6094 = vpop.f32.mrb[0].mxu0
    %6095 = vmatprep.mubr.bf16.mxu0 %v3836
    %6096 = vmatmul.mubr.bf16.gmra.mrb[0].mxu0 %v3708
    %v6097 = vpop.f32.mrb[0].mxu0
    %v6098 = vadd.f32 %v5761, %v6097
    %v6099 = vpop.f32.mrb[0].mxu0
    %v6100 = vpop.f32.mrb[0].mxu0
    %v6101 = vadd.f32 %v5761, %v6100
    %v6102 = vpop.f32.mrb[0].mxu0
    %6103 = vmatprep.mubr.bf16.mxu0 %v3839
    %6104 = vmatmul.mubr.bf16.gmra.mrb[0].mxu0 %v3711
    %v6105 = vpop.f32.mrb[0].mxu0
    %v6106 = vadd.f32 %v5761, %v6105
    %v6107 = vpop.f32.mrb[0].mxu0
    %v6108 = vpop.f32.mrb[0].mxu0
    %v6109 = vadd.f32 %v5761, %v6108
    %v6110 = vpop.f32.mrb[0].mxu0
    %6111 = vmatprep.mubr.bf16.mxu0 %v3842
    %6112 = vmatmul.mubr.bf16.gmra.mrb[0].mxu0 %v3714
    %v6113 = vpop.f32.mrb[0].mxu0
    %v6114 = vadd.f32 %v5761, %v6113
    %v6115 = vpop.f32.mrb[0].mxu0
    %v6116 = vpop.f32.mrb[0].mxu0
    %v6117 = vadd.f32 %v5761, %v6116
    %v6118 = vpop.f32.mrb[0].mxu0
    %6119 = vmatprep.mubr.bf16.mxu0 %v3845
    %6120 = vmatmul.mubr.bf16.gmra.mrb[0].mxu0 %v3717
    %v6121 = vpop.f32.mrb[0].mxu0
    %v6122 = vadd.f32 %v5761, %v6121
    %v6123 = vpop.f32.mrb[0].mxu0
    %v6124 = vpop.f32.mrb[0].mxu0
    %v6125 = vadd.f32 %v5761, %v6124
    %v6126 = vpop.f32.mrb[0].mxu0
    %6127 = vmatprep.mubr.bf16.mxu0 %v5673
    %6128 = vmatmul.mubr.bf16.gmra.mrb[0].mxu0 %v5545
    %v6129 = vpop.f32.mrb[0].mxu0
    %v6130 = vadd.f32 %v5761, %v6129
    %v6131 = vpop.f32.mrb[0].mxu0
    %v6132 = vpop.f32.mrb[0].mxu0
    %v6133 = vadd.f32 %v5761, %v6132
    %v6134 = vpop.f32.mrb[0].mxu0
    %6135 = vmatprep.mubr.bf16.mxu0 %v5676
    %6136 = vmatmul.mubr.bf16.gmra.mrb[0].mxu0 %v5548
    %v6137 = vpop.f32.mrb[0].mxu0
    %v6138 = vadd.f32 %v5761, %v6137
    %v6139 = vpop.f32.mrb[0].mxu0
    %v6140 = vpop.f32.mrb[0].mxu0
    %v6141 = vadd.f32 %v5761, %v6140
    %v6142 = vpop.f32.mrb[0].mxu0
    %6143 = vmatprep.mubr.bf16.mxu0 %v5679
    %6144 = vmatmul.mubr.bf16.gmra.mrb[0].mxu0 %v5551
    %v6145 = vpop.f32.mrb[0].mxu0
    %v6146 = vadd.f32 %v5761, %v6145
    %v6147 = vpop.f32.mrb[0].mxu0
    %v6148 = vpop.f32.mrb[0].mxu0
    %v6149 = vadd.f32 %v5761, %v6148
    %v6150 = vpop.f32.mrb[0].mxu0
    %6151 = vmatprep.mubr.bf16.mxu0 %v5682
    %6152 = vmatmul.mubr.bf16.gmra.mrb[0].mxu0 %v5554
    %v6153 = vpop.f32.mrb[0].mxu0
    %v6154 = vadd.f32 %v5761, %v6153
    %v6155 = vpop.f32.mrb[0].mxu0
    %v6156 = vpop.f32.mrb[0].mxu0
    %v6157 = vadd.f32 %v5761, %v6156
    %v6158 = vpop.f32.mrb[0].mxu0
    %6159 = vmatprep.mubr.bf16.mxu0 %v5685
    %6160 = vmatmul.mubr.bf16.gmra.mrb[0].mxu0 %v5557
    %v6161 = vpop.f32.mrb[0].mxu0
    %v6162 = vadd.f32 %v5761, %v6161
    %v6163 = vpop.f32.mrb[0].mxu0
    %v6164 = vpop.f32.mrb[0].mxu0
    %v6165 = vadd.f32 %v5761, %v6164
    %v6166 = vpop.f32.mrb[0].mxu0
    %6167 = vmatprep.mubr.bf16.mxu0 %v5688
    %6168 = vmatmul.mubr.bf16.gmra.mrb[0].mxu0 %v5560
    %v6169 = vpop.f32.mrb[0].mxu0
    %v6170 = vadd.f32 %v5761, %v6169
    %v6171 = vpop.f32.mrb[0].mxu0
    %v6172 = vpop.f32.mrb[0].mxu0
    %v6173 = vadd.f32 %v5761, %v6172
    %v6174 = vpop.f32.mrb[0].mxu0
    %6175 = vmatprep.mubr.bf16.mxu0 %v5691
    %6176 = vmatmul.mubr.bf16.gmra.mrb[0].mxu0 %v5563
    %v6177 = vpop.f32.mrb[0].mxu0
    %v6178 = vadd.f32 %v5761, %v6177
    %v6179 = vpop.f32.mrb[0].mxu0
    %v6180 = vpop.f32.mrb[0].mxu0
    %v6181 = vadd.f32 %v5761, %v6180
    %v6182 = vpop.f32.mrb[0].mxu0
    %6183 = vmatprep.mubr.bf16.mxu0 %v5694
    %6184 = vmatmul.mubr.bf16.gmra.mrb[0].mxu0 %v5566
    %v6185 = vpop.f32.mrb[0].mxu0
    %v6186 = vadd.f32 %v5761, %v6185
    %v6187 = vpop.f32.mrb[0].mxu0
    %v6188 = vpop.f32.mrb[0].mxu0
    %v6189 = vadd.f32 %v5761, %v6188
    %v6190 = vpop.f32.mrb[0].mxu0
    %6191 = vmatprep.mubr.bf16.mxu0 %v5697
    %6192 = vmatmul.mubr.bf16.gmra.mrb[0].mxu0 %v5569
    %v6193 = vpop.f32.mrb[0].mxu0
    %v6194 = vadd.f32 %v5761, %v6193
    %v6195 = vpop.f32.mrb[0].mxu0
    %v6196 = vpop.f32.mrb[0].mxu0
    %v6197 = vadd.f32 %v5761, %v6196
    %v6198 = vpop.f32.mrb[0].mxu0
    %6199 = vmatprep.mubr.bf16.mxu0 %v5700
    %6200 = vmatmul.mubr.bf16.gmra.mrb[0].mxu0 %v5572
    %v6201 = vpop.f32.mrb[0].mxu0
    %v6202 = vadd.f32 %v5761, %v6201
    %v6203 = vpop.f32.mrb[0].mxu0
    %v6204 = vpop.f32.mrb[0].mxu0
    %v6205 = vadd.f32 %v5761, %v6204
    %v6206 = vpop.f32.mrb[0].mxu0
    %6207 = vmatprep.mubr.bf16.mxu0 %v5703
    %6208 = vmatmul.mubr.bf16.gmra.mrb[0].mxu0 %v5575
    %v6209 = vpop.f32.mrb[0].mxu0
    %v6210 = vadd.f32 %v5761, %v6209
    %v6211 = vpop.f32.mrb[0].mxu0
    %v6212 = vpop.f32.mrb[0].mxu0
    %v6213 = vadd.f32 %v5761, %v6212
    %v6214 = vpop.f32.mrb[0].mxu0
    %6215 = vmatprep.mubr.bf16.mxu0 %v5706
    %6216 = vmatmul.mubr.bf16.gmra.mrb[0].mxu0 %v5578
    %v6217 = vpop.f32.mrb[0].mxu0
    %v6218 = vadd.f32 %v5761, %v6217
    %v6219 = vpop.f32.mrb[0].mxu0
    %v6220 = vpop.f32.mrb[0].mxu0
    %v6221 = vadd.f32 %v5761, %v6220
    %v6222 = vpop.f32.mrb[0].mxu0
    %6223 = vmatprep.mubr.bf16.mxu0 %v5709
    %6224 = vmatmul.mubr.bf16.gmra.mrb[0].mxu0 %v5581
    %v6225 = vpop.f32.mrb[0].mxu0
    %v6226 = vadd.f32 %v5761, %v6225
    %v6227 = vpop.f32.mrb[0].mxu0
    %v6228 = vpop.f32.mrb[0].mxu0
    %v6229 = vadd.f32 %v5761, %v6228
    %v6230 = vpop.f32.mrb[0].mxu0
    %6231 = vmatprep.mubr.bf16.mxu0 %v5712
    %6232 = vmatmul.mubr.bf16.gmra.mrb[0].mxu0 %v5584
    %v6233 = vpop.f32.mrb[0].mxu0
    %v6234 = vadd.f32 %v5761, %v6233
    %v6235 = vpop.f32.mrb[0].mxu0
    %v6236 = vpop.f32.mrb[0].mxu0
    %v6237 = vadd.f32 %v5761, %v6236
    %v6238 = vpop.f32.mrb[0].mxu0
    %6239 = vmatprep.mubr.bf16.mxu0 %v5715
    %6240 = vmatmul.mubr.bf16.gmra.mrb[0].mxu0 %v5587
    %v6241 = vpop.f32.mrb[0].mxu0
    %v6242 = vadd.f32 %v5761, %v6241
    %v6243 = vpop.f32.mrb[0].mxu0
    %v6244 = vpop.f32.mrb[0].mxu0
    %v6245 = vadd.f32 %v5761, %v6244
    %v6246 = vpop.f32.mrb[0].mxu0
    %6247 = vmatprep.mubr.bf16.mxu0 %v5718
    %6248 = vmatmul.mubr.bf16.gmra.mrb[0].mxu0 %v5590
    %v6249 = vpop.f32.mrb[0].mxu0
    %v6250 = vadd.f32 %v5761, %v6249
    %v6251 = vpop.f32.mrb[0].mxu0
    %v6252 = vpop.f32.mrb[0].mxu0
    %v6253 = vadd.f32 %v5761, %v6252
    %v6254 = vpop.f32.mrb[0].mxu0
    %6255 = vdwg.mxu0
    %6256 = vmatprep.subr.bf16.mxu0 0
    %6257 = vmatpush1.bf16.msra.mxu0 %v5851
    %6258 = vmatprep.subr.bf16.mxu0 0
    %6259 = vmatpush1.bf16.msra.mxu0 %v5852
    %6260 = vmatprep.subr.bf16.mxu0 0
    %6261 = vmatpush1.bf16.msra.mxu0 0
    %6262 = vmatprep.subr.bf16.mxu0 0
    %6263 = vmatpush1.bf16.msra.mxu0 0
    %6264 = vmatprep.subr.bf16.mxu0 0
    %6265 = vmatpush1.bf16.msra.mxu0 0
    %6266 = vmatprep.subr.bf16.mxu0 0
    %6267 = vmatpush1.bf16.msra.mxu0 0
    %6268 = vmatprep.subr.bf16.mxu0 0
    %6269 = vmatpush1.bf16.msra.mxu0 0
    %6270 = vmatprep.subr.bf16.mxu0 0
    %6271 = vmatpush1.bf16.msra.mxu0 0
    %6272 = vmatprep.subr.bf16.mxu0 0
    %6273 = vmatpush1.bf16.msra.mxu0 0
    %6274 = vmatprep.subr.bf16.mxu0 0
    %6275 = vmatpush1.bf16.msra.mxu0 0
    %6276 = vmatprep.subr.bf16.mxu0 0
    %6277 = vmatpush1.bf16.msra.mxu0 0
    %6278 = vmatprep.subr.bf16.mxu0 0
    %6279 = vmatpush1.bf16.msra.mxu0 0
    %6280 = vmatprep.subr.bf16.mxu0 0
    %6281 = vmatpush1.bf16.msra.mxu0 0
    %6282 = vmatprep.subr.bf16.mxu0 0
    %6283 = vmatpush1.bf16.msra.mxu0 0
    %6284 = vmatprep.subr.bf16.mxu0 0
    %6285 = vmatpush1.bf16.msra.mxu0 0
    %6286 = vmatprep.subr.bf16.mxu0 0
    %6287 = vmatpush1.bf16.msra.mxu0 0
    %6288 = vmatprep.mubr.bf16.mxu0 0
    %6289 = vmatmul.mubr.bf16.gmra.mrb[0].mxu0 %v5872
    %v6290 = vpop.f32.mrb[0].mxu0
    %v6291 = vadd.f32 %v6002, %v6290
    %v6292 = vpop.f32.mrb[0].mxu0
    %v6293 = vpop.f32.mrb[0].mxu0
    %v6294 = vadd.f32 %v6005, %v6293
    %v6295 = vpop.f32.mrb[0].mxu0
    %6296 = vmatprep.mubr.bf16.mxu0 0
    %6297 = vmatmul.mubr.bf16.gmra.mrb[0].mxu0 %v5875
    %v6298 = vpop.f32.mrb[0].mxu0
    %v6299 = vadd.f32 %v6010, %v6298
    %v6300 = vpop.f32.mrb[0].mxu0
    %v6301 = vpop.f32.mrb[0].mxu0
    %v6302 = vadd.f32 %v6013, %v6301
    %v6303 = vpop.f32.mrb[0].mxu0
    %6304 = vmatprep.mubr.bf16.mxu0 0
    %6305 = vmatmul.mubr.bf16.gmra.mrb[0].mxu0 %v5878
    %v6306 = vpop.f32.mrb[0].mxu0
    %v6307 = vadd.f32 %v6018, %v6306
    %v6308 = vpop.f32.mrb[0].mxu0
    %v6309 = vpop.f32.mrb[0].mxu0
    %v6310 = vadd.f32 %v6021, %v6309
    %v6311 = vpop.f32.mrb[0].mxu0
    %6312 = vmatprep.mubr.bf16.mxu0 0
    %6313 = vmatmul.mubr.bf16.gmra.mrb[0].mxu0 %v5881
    %v6314 = vpop.f32.mrb[0].mxu0
    %v6315 = vadd.f32 %v6026, %v6314
    %v6316 = vpop.f32.mrb[0].mxu0
    %v6317 = vpop.f32.mrb[0].mxu0
    %v6318 = vadd.f32 %v6029, %v6317
    %v6319 = vpop.f32.mrb[0].mxu0
    %6320 = vmatprep.mubr.bf16.mxu0 0
    %6321 = vmatmul.mubr.bf16.gmra.mrb[0].mxu0 %v5884
    %v6322 = vpop.f32.mrb[0].mxu0
    %v6323 = vadd.f32 %v6034, %v6322
    %v6324 = vpop.f32.mrb[0].mxu0
    %v6325 = vpop.f32.mrb[0].mxu0
    %v6326 = vadd.f32 %v6037, %v6325
    %v6327 = vpop.f32.mrb[0].mxu0
    %6328 = vmatprep.mubr.bf16.mxu0 0
    %6329 = vmatmul.mubr.bf16.gmra.mrb[0].mxu0 %v5887
    %v6330 = vpop.f32.mrb[0].mxu0
    %v6331 = vadd.f32 %v6042, %v6330
    %v6332 = vpop.f32.mrb[0].mxu0
    %v6333 = vpop.f32.mrb[0].mxu0
    %v6334 = vadd.f32 %v6045, %v6333
    %v6335 = vpop.f32.mrb[0].mxu0
    %6336 = vmatprep.mubr.bf16.mxu0 0
    %6337 = vmatmul.mubr.bf16.gmra.mrb[0].mxu0 %v5890
    %v6338 = vpop.f32.mrb[0].mxu0
    %v6339 = vadd.f32 %v6050, %v6338
    %v6340 = vpop.f32.mrb[0].mxu0
    %v6341 = vpop.f32.mrb[0].mxu0
    %v6342 = vadd.f32 %v6053, %v6341
    %v6343 = vpop.f32.mrb[0].mxu0
    %6344 = vmatprep.mubr.bf16.mxu0 0
    %6345 = vmatmul.mubr.bf16.gmra.mrb[0].mxu0 %v5893
    %v6346 = vpop.f32.mrb[0].mxu0
    %v6347 = vadd.f32 %v6058, %v6346
    %v6348 = vpop.f32.mrb[0].mxu0
    %v6349 = vpop.f32.mrb[0].mxu0
    %v6350 = vadd.f32 %v6061, %v6349
    %v6351 = vpop.f32.mrb[0].mxu0
    %6352 = vmatprep.mubr.bf16.mxu0 0
    %6353 = vmatmul.mubr.bf16.gmra.mrb[0].mxu0 %v5896
    %v6354 = vpop.f32.mrb[0].mxu0
    %v6355 = vadd.f32 %v6066, %v6354
    %v6356 = vpop.f32.mrb[0].mxu0
    %v6357 = vpop.f32.mrb[0].mxu0
    %v6358 = vadd.f32 %v6069, %v6357
    %v6359 = vpop.f32.mrb[0].mxu0
    %6360 = vmatprep.mubr.bf16.mxu0 0
    %6361 = vmatmul.mubr.bf16.gmra.mrb[0].mxu0 %v5899
    %v6362 = vpop.f32.mrb[0].mxu0
    %v6363 = vadd.f32 %v6074, %v6362
    %v6364 = vpop.f32.mrb[0].mxu0
    %v6365 = vpop.f32.mrb[0].mxu0
    %v6366 = vadd.f32 %v6077, %v6365
    %v6367 = vpop.f32.mrb[0].mxu0
    %6368 = vmatprep.mubr.bf16.mxu0 0
    %6369 = vmatmul.mubr.bf16.gmra.mrb[0].mxu0 %v5902
    %v6370 = vpop.f32.mrb[0].mxu0
    %v6371 = vadd.f32 %v6082, %v6370
    %v6372 = vpop.f32.mrb[0].mxu0
    %v6373 = vpop.f32.mrb[0].mxu0
    %v6374 = vadd.f32 %v6085, %v6373
    %v6375 = vpop.f32.mrb[0].mxu0
    %6376 = vmatprep.mubr.bf16.mxu0 0
    %6377 = vmatmul.mubr.bf16.gmra.mrb[0].mxu0 %v5905
    %v6378 = vpop.f32.mrb[0].mxu0
    %v6379 = vadd.f32 %v6090, %v6378
    %v6380 = vpop.f32.mrb[0].mxu0
    %v6381 = vpop.f32.mrb[0].mxu0
    %v6382 = vadd.f32 %v6093, %v6381
    %v6383 = vpop.f32.mrb[0].mxu0
    %6384 = vmatprep.mubr.bf16.mxu0 0
    %6385 = vmatmul.mubr.bf16.gmra.mrb[0].mxu0 %v5908
    %v6386 = vpop.f32.mrb[0].mxu0
    %v6387 = vadd.f32 %v6098, %v6386
    %v6388 = vpop.f32.mrb[0].mxu0
    %v6389 = vpop.f32.mrb[0].mxu0
    %v6390 = vadd.f32 %v6101, %v6389
    %v6391 = vpop.f32.mrb[0].mxu0
    %6392 = vmatprep.mubr.bf16.mxu0 0
    %6393 = vmatmul.mubr.bf16.gmra.mrb[0].mxu0 %v5911
    %v6394 = vpop.f32.mrb[0].mxu0
    %v6395 = vadd.f32 %v6106, %v6394
    %v6396 = vpop.f32.mrb[0].mxu0
    %v6397 = vpop.f32.mrb[0].mxu0
    %v6398 = vadd.f32 %v6109, %v6397
    %v6399 = vpop.f32.mrb[0].mxu0
    %6400 = vmatprep.mubr.bf16.mxu0 0
    %6401 = vmatmul.mubr.bf16.gmra.mrb[0].mxu0 %v5914
    %v6402 = vpop.f32.mrb[0].mxu0
    %v6403 = vadd.f32 %v6114, %v6402
    %v6404 = vpop.f32.mrb[0].mxu0
    %v6405 = vpop.f32.mrb[0].mxu0
    %v6406 = vadd.f32 %v6117, %v6405
    %v6407 = vpop.f32.mrb[0].mxu0
    %6408 = vmatprep.mubr.bf16.mxu0 0
    %6409 = vmatmul.mubr.bf16.gmra.mrb[0].mxu0 %v5917
    %v6410 = vpop.f32.mrb[0].mxu0
    %v6411 = vadd.f32 %v6122, %v6410
    %v6412 = vpop.f32.mrb[0].mxu0
    %v6413 = vpop.f32.mrb[0].mxu0
    %v6414 = vadd.f32 %v6125, %v6413
    %v6415 = vpop.f32.mrb[0].mxu0
    %6416 = vmatprep.mubr.bf16.mxu0 0
    %6417 = vmatmul.mubr.bf16.gmra.mrb[0].mxu0 %v5920
    %v6418 = vpop.f32.mrb[0].mxu0
    %v6419 = vadd.f32 %v6130, %v6418
    %v6420 = vpop.f32.mrb[0].mxu0
    %v6421 = vpop.f32.mrb[0].mxu0
    %v6422 = vadd.f32 %v6133, %v6421
    %v6423 = vpop.f32.mrb[0].mxu0
    %6424 = vmatprep.mubr.bf16.mxu0 0
    %6425 = vmatmul.mubr.bf16.gmra.mrb[0].mxu0 %v5923
    %v6426 = vpop.f32.mrb[0].mxu0
    %v6427 = vadd.f32 %v6138, %v6426
    %v6428 = vpop.f32.mrb[0].mxu0
    %v6429 = vpop.f32.mrb[0].mxu0
    %v6430 = vadd.f32 %v6141, %v6429
    %v6431 = vpop.f32.mrb[0].mxu0
    %6432 = vmatprep.mubr.bf16.mxu0 0
    %6433 = vmatmul.mubr.bf16.gmra.mrb[0].mxu0 %v5926
    %v6434 = vpop.f32.mrb[0].mxu0
    %v6435 = vadd.f32 %v6146, %v6434
    %v6436 = vpop.f32.mrb[0].mxu0
    %v6437 = vpop.f32.mrb[0].mxu0
    %v6438 = vadd.f32 %v6149, %v6437
    %v6439 = vpop.f32.mrb[0].mxu0
    %6440 = vmatprep.mubr.bf16.mxu0 0
    %6441 = vmatmul.mubr.bf16.gmra.mrb[0].mxu0 %v5929
    %v6442 = vpop.f32.mrb[0].mxu0
    %v6443 = vadd.f32 %v6154, %v6442
    %v6444 = vpop.f32.mrb[0].mxu0
    %v6445 = vpop.f32.mrb[0].mxu0
    %v6446 = vadd.f32 %v6157, %v6445
    %v6447 = vpop.f32.mrb[0].mxu0
    %6448 = vmatprep.mubr.bf16.mxu0 0
    %6449 = vmatmul.mubr.bf16.gmra.mrb[0].mxu0 %v5932
    %v6450 = vpop.f32.mrb[0].mxu0
    %v6451 = vadd.f32 %v6162, %v6450
    %v6452 = vpop.f32.mrb[0].mxu0
    %v6453 = vpop.f32.mrb[0].mxu0
    %v6454 = vadd.f32 %v6165, %v6453
    %v6455 = vpop.f32.mrb[0].mxu0
    %6456 = vmatprep.mubr.bf16.mxu0 0
    %6457 = vmatmul.mubr.bf16.gmra.mrb[0].mxu0 %v5935
    %v6458 = vpop.f32.mrb[0].mxu0
    %v6459 = vadd.f32 %v6170, %v6458
    %v6460 = vpop.f32.mrb[0].mxu0
    %v6461 = vpop.f32.mrb[0].mxu0
    %v6462 = vadd.f32 %v6173, %v6461
    %v6463 = vpop.f32.mrb[0].mxu0
    %6464 = vmatprep.mubr.bf16.mxu0 0
    %6465 = vmatmul.mubr.bf16.gmra.mrb[0].mxu0 %v5938
    %v6466 = vpop.f32.mrb[0].mxu0
    %v6467 = vadd.f32 %v6178, %v6466
    %v6468 = vpop.f32.mrb[0].mxu0
    %v6469 = vpop.f32.mrb[0].mxu0
    %v6470 = vadd.f32 %v6181, %v6469
    %v6471 = vpop.f32.mrb[0].mxu0
    %6472 = vmatprep.mubr.bf16.mxu0 0
    %6473 = vmatmul.mubr.bf16.gmra.mrb[0].mxu0 %v5941
    %v6474 = vpop.f32.mrb[0].mxu0
    %v6475 = vadd.f32 %v6186, %v6474
    %v6476 = vpop.f32.mrb[0].mxu0
    %v6477 = vpop.f32.mrb[0].mxu0
    %v6478 = vadd.f32 %v6189, %v6477
    %v6479 = vpop.f32.mrb[0].mxu0
    %6480 = vmatprep.mubr.bf16.mxu0 0
    %6481 = vmatmul.mubr.bf16.gmra.mrb[0].mxu0 %v5944
    %v6482 = vpop.f32.mrb[0].mxu0
    %v6483 = vadd.f32 %v6194, %v6482
    %v6484 = vpop.f32.mrb[0].mxu0
    %v6485 = vpop.f32.mrb[0].mxu0
    %v6486 = vadd.f32 %v6197, %v6485
    %v6487 = vpop.f32.mrb[0].mxu0
    %6488 = vmatprep.mubr.bf16.mxu0 0
    %6489 = vmatmul.mubr.bf16.gmra.mrb[0].mxu0 %v5947
    %v6490 = vpop.f32.mrb[0].mxu0
    %v6491 = vadd.f32 %v6202, %v6490
    %v6492 = vpop.f32.mrb[0].mxu0
    %v6493 = vpop.f32.mrb[0].mxu0
    %v6494 = vadd.f32 %v6205, %v6493
    %v6495 = vpop.f32.mrb[0].mxu0
    %6496 = vmatprep.mubr.bf16.mxu0 0
    %6497 = vmatmul.mubr.bf16.gmra.mrb[0].mxu0 %v5950
    %v6498 = vpop.f32.mrb[0].mxu0
    %v6499 = vadd.f32 %v6210, %v6498
    %v6500 = vpop.f32.mrb[0].mxu0
    %v6501 = vpop.f32.mrb[0].mxu0
    %v6502 = vadd.f32 %v6213, %v6501
    %v6503 = vpop.f32.mrb[0].mxu0
    %6504 = vmatprep.mubr.bf16.mxu0 0
    %6505 = vmatmul.mubr.bf16.gmra.mrb[0].mxu0 %v5953
    %v6506 = vpop.f32.mrb[0].mxu0
    %v6507 = vadd.f32 %v6218, %v6506
    %v6508 = vpop.f32.mrb[0].mxu0
    %v6509 = vpop.f32.mrb[0].mxu0
    %v6510 = vadd.f32 %v6221, %v6509
    %v6511 = vpop.f32.mrb[0].mxu0
    %6512 = vmatprep.mubr.bf16.mxu0 0
    %6513 = vmatmul.mubr.bf16.gmra.mrb[0].mxu0 %v5956
    %v6514 = vpop.f32.mrb[0].mxu0
    %v6515 = vadd.f32 %v6226, %v6514
    %v6516 = vpop.f32.mrb[0].mxu0
    %v6517 = vpop.f32.mrb[0].mxu0
    %v6518 = vadd.f32 %v6229, %v6517
    %v6519 = vpop.f32.mrb[0].mxu0
    %6520 = vmatprep.mubr.bf16.mxu0 0
    %6521 = vmatmul.mubr.bf16.gmra.mrb[0].mxu0 %v5959
    %v6522 = vpop.f32.mrb[0].mxu0
    %v6523 = vadd.f32 %v6234, %v6522
    %v6524 = vpop.f32.mrb[0].mxu0
    %v6525 = vpop.f32.mrb[0].mxu0
    %v6526 = vadd.f32 %v6237, %v6525
    %v6527 = vpop.f32.mrb[0].mxu0
    %6528 = vmatprep.mubr.bf16.mxu0 0
    %6529 = vmatmul.mubr.bf16.gmra.mrb[0].mxu0 %v5962
    %v6530 = vpop.f32.mrb[0].mxu0
    %v6531 = vadd.f32 %v6242, %v6530
    %v6532 = vpop.f32.mrb[0].mxu0
    %v6533 = vpop.f32.mrb[0].mxu0
    %v6534 = vadd.f32 %v6245, %v6533
    %v6535 = vpop.f32.mrb[0].mxu0
    %6536 = vmatprep.mubr.bf16.mxu0 0
    %6537 = vmatmul.mubr.bf16.gmra.mrb[0].mxu0 %v5965
    %v6538 = vpop.f32.mrb[0].mxu0
    %v6539 = vadd.f32 %v6250, %v6538
    %v6540 = vpop.f32.mrb[0].mxu0
    %v6541 = vpop.f32.mrb[0].mxu0
    %v6542 = vadd.f32 %v6253, %v6541
    %v6543 = vpop.f32.mrb[0].mxu0
    %6544 = vdwg.mxu0
    %vm6545 = vcmp.ge.f32.partialorder %v6291, 0.0
    %vm6546 = vcmp.ge.f32.partialorder %v6294, 0.0
    %vm6547 = vcmp.ge.f32.partialorder %v6299, 0.0
    %vm6548 = vcmp.ge.f32.partialorder %v6302, 0.0
    %vm6549 = vcmp.ge.f32.partialorder %v6307, 0.0
    %vm6550 = vcmp.ge.f32.partialorder %v6310, 0.0
    %vm6551 = vcmp.ge.f32.partialorder %v6315, 0.0
    %vm6552 = vcmp.ge.f32.partialorder %v6318, 0.0
    %vm6553 = vcmp.ge.f32.partialorder %v6323, 0.0
    %vm6554 = vcmp.ge.f32.partialorder %v6326, 0.0
    %vm6555 = vcmp.ge.f32.partialorder %v6331, 0.0
    %vm6556 = vcmp.ge.f32.partialorder %v6334, 0.0
    %vm6557 = vcmp.ge.f32.partialorder %v6339, 0.0
    %vm6558 = vcmp.ge.f32.partialorder %v6342, 0.0
    %vm6559 = vcmp.ge.f32.partialorder %v6347, 0.0
    %vm6560 = vcmp.ge.f32.partialorder %v6350, 0.0
    %vm6561 = vcmp.ge.f32.partialorder %v6355, 0.0
    %vm6562 = vcmp.ge.f32.partialorder %v6358, 0.0
    %vm6563 = vcmp.ge.f32.partialorder %v6363, 0.0
    %vm6564 = vcmp.ge.f32.partialorder %v6366, 0.0
    %vm6565 = vcmp.ge.f32.partialorder %v6371, 0.0
    %vm6566 = vcmp.ge.f32.partialorder %v6374, 0.0
    %vm6567 = vcmp.ge.f32.partialorder %v6379, 0.0
    %vm6568 = vcmp.ge.f32.partialorder %v6382, 0.0
    %vm6569 = vcmp.ge.f32.partialorder %v6387, 0.0
    %vm6570 = vcmp.ge.f32.partialorder %v6390, 0.0
    %vm6571 = vcmp.ge.f32.partialorder %v6395, 0.0
    %vm6572 = vcmp.ge.f32.partialorder %v6398, 0.0
    %vm6573 = vcmp.ge.f32.partialorder %v6403, 0.0
    %vm6574 = vcmp.ge.f32.partialorder %v6406, 0.0
    %vm6575 = vcmp.ge.f32.partialorder %v6411, 0.0
    %vm6576 = vcmp.ge.f32.partialorder %v6414, 0.0
    %vm6577 = vcmp.ge.f32.partialorder %v6419, 0.0
    %vm6578 = vcmp.ge.f32.partialorder %v6422, 0.0
    %vm6579 = vcmp.ge.f32.partialorder %v6427, 0.0
    %vm6580 = vcmp.ge.f32.partialorder %v6430, 0.0
    %vm6581 = vcmp.ge.f32.partialorder %v6435, 0.0
    %vm6582 = vcmp.ge.f32.partialorder %v6438, 0.0
    %vm6583 = vcmp.ge.f32.partialorder %v6443, 0.0
    %vm6584 = vcmp.ge.f32.partialorder %v6446, 0.0
    %vm6585 = vcmp.ge.f32.partialorder %v6451, 0.0
    %vm6586 = vcmp.ge.f32.partialorder %v6454, 0.0
    %vm6587 = vcmp.ge.f32.partialorder %v6459, 0.0
    %vm6588 = vcmp.ge.f32.partialorder %v6462, 0.0
    %vm6589 = vcmp.ge.f32.partialorder %v6467, 0.0
    %vm6590 = vcmp.ge.f32.partialorder %v6470, 0.0
    %vm6591 = vcmp.ge.f32.partialorder %v6475, 0.0
    %vm6592 = vcmp.ge.f32.partialorder %v6478, 0.0
    %vm6593 = vcmp.ge.f32.partialorder %v6483, 0.0
    %vm6594 = vcmp.ge.f32.partialorder %v6486, 0.0
    %vm6595 = vcmp.ge.f32.partialorder %v6491, 0.0
    %vm6596 = vcmp.ge.f32.partialorder %v6494, 0.0
    %vm6597 = vcmp.ge.f32.partialorder %v6499, 0.0
    %vm6598 = vcmp.ge.f32.partialorder %v6502, 0.0
    %vm6599 = vcmp.ge.f32.partialorder %v6507, 0.0
    %vm6600 = vcmp.ge.f32.partialorder %v6510, 0.0
    %vm6601 = vcmp.ge.f32.partialorder %v6515, 0.0
    %vm6602 = vcmp.ge.f32.partialorder %v6518, 0.0
    %vm6603 = vcmp.ge.f32.partialorder %v6523, 0.0
    %vm6604 = vcmp.ge.f32.partialorder %v6526, 0.0
    %vm6605 = vcmp.ge.f32.partialorder %v6531, 0.0
    %vm6606 = vcmp.ge.f32.partialorder %v6534, 0.0
    %vm6607 = vcmp.ge.f32.partialorder %v6539, 0.0
    %vm6608 = vcmp.ge.f32.partialorder %v6542, 0.0
    %v6609 = vmul.f32 %v6291, 0.01
    %v6610 = vmul.f32 %v6294, 0.01
    %v6611 = vmul.f32 %v6299, 0.01
    %v6612 = vmul.f32 %v6302, 0.01
    %v6613 = vmul.f32 %v6307, 0.01
    %v6614 = vmul.f32 %v6310, 0.01
    %v6615 = vmul.f32 %v6315, 0.01
    %v6616 = vmul.f32 %v6318, 0.01
    %v6617 = vmul.f32 %v6323, 0.01
    %v6618 = vmul.f32 %v6326, 0.01
    %v6619 = vmul.f32 %v6331, 0.01
    %v6620 = vmul.f32 %v6334, 0.01
    %v6621 = vmul.f32 %v6339, 0.01
    %v6622 = vmul.f32 %v6342, 0.01
    %v6623 = vmul.f32 %v6347, 0.01
    %v6624 = vmul.f32 %v6350, 0.01
    %v6625 = vmul.f32 %v6355, 0.01
    %v6626 = vmul.f32 %v6358, 0.01
    %v6627 = vmul.f32 %v6363, 0.01
    %v6628 = vmul.f32 %v6366, 0.01
    %v6629 = vmul.f32 %v6371, 0.01
    %v6630 = vmul.f32 %v6374, 0.01
    %v6631 = vmul.f32 %v6379, 0.01
    %v6632 = vmul.f32 %v6382, 0.01
    %v6633 = vmul.f32 %v6387, 0.01
    %v6634 = vmul.f32 %v6390, 0.01
    %v6635 = vmul.f32 %v6395, 0.01
    %v6636 = vmul.f32 %v6398, 0.01
    %v6637 = vmul.f32 %v6403, 0.01
    %v6638 = vmul.f32 %v6406, 0.01
    %v6639 = vmul.f32 %v6411, 0.01
    %v6640 = vmul.f32 %v6414, 0.01
    %v6641 = vmul.f32 %v6419, 0.01
    %v6642 = vmul.f32 %v6422, 0.01
    %v6643 = vmul.f32 %v6427, 0.01
    %v6644 = vmul.f32 %v6430, 0.01
    %v6645 = vmul.f32 %v6435, 0.01
    %v6646 = vmul.f32 %v6438, 0.01
    %v6647 = vmul.f32 %v6443, 0.01
    %v6648 = vmul.f32 %v6446, 0.01
    %v6649 = vmul.f32 %v6451, 0.01
    %v6650 = vmul.f32 %v6454, 0.01
    %v6651 = vmul.f32 %v6459, 0.01
    %v6652 = vmul.f32 %v6462, 0.01
    %v6653 = vmul.f32 %v6467, 0.01
    %v6654 = vmul.f32 %v6470, 0.01
    %v6655 = vmul.f32 %v6475, 0.01
    %v6656 = vmul.f32 %v6478, 0.01
    %v6657 = vmul.f32 %v6483, 0.01
    %v6658 = vmul.f32 %v6486, 0.01
    %v6659 = vmul.f32 %v6491, 0.01
    %v6660 = vmul.f32 %v6494, 0.01
    %v6661 = vmul.f32 %v6499, 0.01
    %v6662 = vmul.f32 %v6502, 0.01
    %v6663 = vmul.f32 %v6507, 0.01
    %v6664 = vmul.f32 %v6510, 0.01
    %v6665 = vmul.f32 %v6515, 0.01
    %v6666 = vmul.f32 %v6518, 0.01
    %v6667 = vmul.f32 %v6523, 0.01
    %v6668 = vmul.f32 %v6526, 0.01
    %v6669 = vmul.f32 %v6531, 0.01
    %v6670 = vmul.f32 %v6534, 0.01
    %v6671 = vmul.f32 %v6539, 0.01
    %v6672 = vmul.f32 %v6542, 0.01
    %v6673 = vsel %vm6545, %v6291, %v6609
    %v6674 = vsel %vm6546, %v6294, %v6610
    %v6675 = vsel %vm6547, %v6299, %v6611
    %v6676 = vsel %vm6548, %v6302, %v6612
    %v6677 = vsel %vm6549, %v6307, %v6613
    %v6678 = vsel %vm6550, %v6310, %v6614
    %v6679 = vsel %vm6551, %v6315, %v6615
    %v6680 = vsel %vm6552, %v6318, %v6616
    %v6681 = vsel %vm6553, %v6323, %v6617
    %v6682 = vsel %vm6554, %v6326, %v6618
    %v6683 = vsel %vm6555, %v6331, %v6619
    %v6684 = vsel %vm6556, %v6334, %v6620
    %v6685 = vsel %vm6557, %v6339, %v6621
    %v6686 = vsel %vm6558, %v6342, %v6622
    %v6687 = vsel %vm6559, %v6347, %v6623
    %v6688 = vsel %vm6560, %v6350, %v6624
    %v6689 = vsel %vm6561, %v6355, %v6625
    %v6690 = vsel %vm6562, %v6358, %v6626
    %v6691 = vsel %vm6563, %v6363, %v6627
    %v6692 = vsel %vm6564, %v6366, %v6628
    %v6693 = vsel %vm6565, %v6371, %v6629
    %v6694 = vsel %vm6566, %v6374, %v6630
    %v6695 = vsel %vm6567, %v6379, %v6631
    %v6696 = vsel %vm6568, %v6382, %v6632
    %v6697 = vsel %vm6569, %v6387, %v6633
    %v6698 = vsel %vm6570, %v6390, %v6634
    %v6699 = vsel %vm6571, %v6395, %v6635
    %v6700 = vsel %vm6572, %v6398, %v6636
    %v6701 = vsel %vm6573, %v6403, %v6637
    %v6702 = vsel %vm6574, %v6406, %v6638
    %v6703 = vsel %vm6575, %v6411, %v6639
    %v6704 = vsel %vm6576, %v6414, %v6640
    %v6705 = vsel %vm6577, %v6419, %v6641
    %v6706 = vsel %vm6578, %v6422, %v6642
    %v6707 = vsel %vm6579, %v6427, %v6643
    %v6708 = vsel %vm6580, %v6430, %v6644
    %v6709 = vsel %vm6581, %v6435, %v6645
    %v6710 = vsel %vm6582, %v6438, %v6646
    %v6711 = vsel %vm6583, %v6443, %v6647
    %v6712 = vsel %vm6584, %v6446, %v6648
    %v6713 = vsel %vm6585, %v6451, %v6649
    %v6714 = vsel %vm6586, %v6454, %v6650
    %v6715 = vsel %vm6587, %v6459, %v6651
    %v6716 = vsel %vm6588, %v6462, %v6652
    %v6717 = vsel %vm6589, %v6467, %v6653
    %v6718 = vsel %vm6590, %v6470, %v6654
    %v6719 = vsel %vm6591, %v6475, %v6655
    %v6720 = vsel %vm6592, %v6478, %v6656
    %v6721 = vsel %vm6593, %v6483, %v6657
    %v6722 = vsel %vm6594, %v6486, %v6658
    %v6723 = vsel %vm6595, %v6491, %v6659
    %v6724 = vsel %vm6596, %v6494, %v6660
    %v6725 = vsel %vm6597, %v6499, %v6661
    %v6726 = vsel %vm6598, %v6502, %v6662
    %v6727 = vsel %vm6599, %v6507, %v6663
    %v6728 = vsel %vm6600, %v6510, %v6664
    %v6729 = vsel %vm6601, %v6515, %v6665
    %v6730 = vsel %vm6602, %v6518, %v6666
    %v6731 = vsel %vm6603, %v6523, %v6667
    %v6732 = vsel %vm6604, %v6526, %v6668
    %v6733 = vsel %vm6605, %v6531, %v6669
    %v6734 = vsel %vm6606, %v6534, %v6670
    %v6735 = vsel %vm6607, %v6539, %v6671
    %v6736 = vsel %vm6608, %v6542, %v6672
    %v6737 = vpack.c.bf16 %v6674, %v6673
    %v6738 = vpack.c.bf16 %v6676, %v6675
    %v6739 = vpack.c.bf16 %v6678, %v6677
    %v6740 = vpack.c.bf16 %v6680, %v6679
    %v6741 = vpack.c.bf16 %v6682, %v6681
    %v6742 = vpack.c.bf16 %v6684, %v6683
    %v6743 = vpack.c.bf16 %v6686, %v6685
    %v6744 = vpack.c.bf16 %v6688, %v6687
    %v6745 = vpack.c.bf16 %v6690, %v6689
    %v6746 = vpack.c.bf16 %v6692, %v6691
    %v6747 = vpack.c.bf16 %v6694, %v6693
    %v6748 = vpack.c.bf16 %v6696, %v6695
    %v6749 = vpack.c.bf16 %v6698, %v6697
    %v6750 = vpack.c.bf16 %v6700, %v6699
    %v6751 = vpack.c.bf16 %v6702, %v6701
    %v6752 = vpack.c.bf16 %v6704, %v6703
    %v6753 = vpack.c.bf16 %v6706, %v6705
    %v6754 = vpack.c.bf16 %v6708, %v6707
    %v6755 = vpack.c.bf16 %v6710, %v6709
    %v6756 = vpack.c.bf16 %v6712, %v6711
    %v6757 = vpack.c.bf16 %v6714, %v6713
    %v6758 = vpack.c.bf16 %v6716, %v6715
    %v6759 = vpack.c.bf16 %v6718, %v6717
    %v6760 = vpack.c.bf16 %v6720, %v6719
    %v6761 = vpack.c.bf16 %v6722, %v6721
    %v6762 = vpack.c.bf16 %v6724, %v6723
    %v6763 = vpack.c.bf16 %v6726, %v6725
    %v6764 = vpack.c.bf16 %v6728, %v6727
    %v6765 = vpack.c.bf16 %v6730, %v6729
    %v6766 = vpack.c.bf16 %v6732, %v6731
    %v6767 = vpack.c.bf16 %v6734, %v6733
    %v6768 = vpack.c.bf16 %v6736, %v6735
    %v6769 = vld [vmem:[%s5] sm:$0xf]
    %v6770 = vld [vmem:[#allocation3] sm:$0xff]
    %v6771 = vld [vmem:[#allocation3 + $0x8] sm:$0xff]
    %v6772 = vld [vmem:[#allocation3 + $0x10] sm:$0xff]
    %v6773 = vld [vmem:[#allocation3 + $0x18] sm:$0xff]
    %v6774 = vld [vmem:[#allocation3 + $0x20] sm:$0xff]
    %v6775 = vld [vmem:[#allocation3 + $0x28] sm:$0xff]
    %v6776 = vld [vmem:[#allocation3 + $0x30] sm:$0xff]
    %v6777 = vld [vmem:[#allocation3 + $0x38] sm:$0xff]
    %v6778 = vld [vmem:[#allocation3 + $0x40] sm:$0xff]
    %v6779 = vld [vmem:[#allocation3 + $0x48] sm:$0xff]
    %v6780 = vld [vmem:[#allocation3 + $0x50] sm:$0xff]
    %v6781 = vld [vmem:[#allocation3 + $0x58] sm:$0xff]
    %v6782 = vld [vmem:[#allocation3 + $0x60] sm:$0xff]
    %v6783 = vld [vmem:[#allocation3 + $0x68] sm:$0xff]
    %v6784 = vld [vmem:[#allocation3 + $0x70] sm:$0xff]
    %v6785 = vld [vmem:[#allocation3 + $0x78] sm:$0xff]
    %v6786 = vld [vmem:[#allocation3 + $0x80] sm:$0xff]
    %v6787 = vld [vmem:[#allocation3 + $0x88] sm:$0xff]
    %v6788 = vld [vmem:[#allocation3 + $0x90] sm:$0xff]
    %v6789 = vld [vmem:[#allocation3 + $0x98] sm:$0xff]
    %v6790 = vld [vmem:[#allocation3 + $0xa0] sm:$0xff]
    %v6791 = vld [vmem:[#allocation3 + $0xa8] sm:$0xff]
    %v6792 = vld [vmem:[#allocation3 + $0xb0] sm:$0xff]
    %v6793 = vld [vmem:[#allocation3 + $0xb8] sm:$0xff]
    %v6794 = vld [vmem:[#allocation3 + $0xc0] sm:$0xff]
    %v6795 = vld [vmem:[#allocation3 + $0xc8] sm:$0xff]
    %v6796 = vld [vmem:[#allocation3 + $0xd0] sm:$0xff]
    %v6797 = vld [vmem:[#allocation3 + $0xd8] sm:$0xff]
    %v6798 = vld [vmem:[#allocation3 + $0xe0] sm:$0xff]
    %v6799 = vld [vmem:[#allocation3 + $0xe8] sm:$0xff]
    %v6800 = vld [vmem:[#allocation3 + $0xf0] sm:$0xff]
    %v6801 = vld [vmem:[#allocation3 + $0xf8] sm:$0xff]
    %v6802 = vld [vmem:[#allocation3 + $0x100] sm:$0xff]
    %v6803 = vld [vmem:[#allocation3 + $0x108] sm:$0xff]
    %v6804 = vld [vmem:[#allocation3 + $0x110] sm:$0xff]
    %v6805 = vld [vmem:[#allocation3 + $0x118] sm:$0xff]
    %v6806 = vld [vmem:[#allocation3 + $0x120] sm:$0xff]
    %v6807 = vld [vmem:[#allocation3 + $0x128] sm:$0xff]
    %v6808 = vld [vmem:[#allocation3 + $0x130] sm:$0xff]
    %v6809 = vld [vmem:[#allocation3 + $0x138] sm:$0xff]
    %v6810 = vld [vmem:[#allocation3 + $0x140] sm:$0xff]
    %v6811 = vld [vmem:[#allocation3 + $0x148] sm:$0xff]
    %v6812 = vld [vmem:[#allocation3 + $0x150] sm:$0xff]
    %v6813 = vld [vmem:[#allocation3 + $0x158] sm:$0xff]
    %v6814 = vld [vmem:[#allocation3 + $0x160] sm:$0xff]
    %v6815 = vld [vmem:[#allocation3 + $0x168] sm:$0xff]
    %v6816 = vld [vmem:[#allocation3 + $0x170] sm:$0xff]
    %v6817 = vld [vmem:[#allocation3 + $0x178] sm:$0xff]
    %v6818 = vld [vmem:[#allocation3 + $0x180] sm:$0xff]
    %v6819 = vld [vmem:[#allocation3 + $0x188] sm:$0xff]
    %v6820 = vld [vmem:[#allocation3 + $0x190] sm:$0xff]
    %v6821 = vld [vmem:[#allocation3 + $0x198] sm:$0xff]
    %v6822 = vld [vmem:[#allocation3 + $0x1a0] sm:$0xff]
    %v6823 = vld [vmem:[#allocation3 + $0x1a8] sm:$0xff]
    %v6824 = vld [vmem:[#allocation3 + $0x1b0] sm:$0xff]
    %v6825 = vld [vmem:[#allocation3 + $0x1b8] sm:$0xff]
    %v6826 = vld [vmem:[#allocation3 + $0x1c0] sm:$0xff]
    %v6827 = vld [vmem:[#allocation3 + $0x1c8] sm:$0xff]
    %v6828 = vld [vmem:[#allocation3 + $0x1d0] sm:$0xff]
    %v6829 = vld [vmem:[#allocation3 + $0x1d8] sm:$0xff]
    %v6830 = vld [vmem:[#allocation3 + $0x1e0] sm:$0xff]
    %v6831 = vld [vmem:[#allocation3 + $0x1e8] sm:$0xff]
    %v6832 = vld [vmem:[#allocation3 + $0x1f0] sm:$0xff]
    %v6833 = vld [vmem:[#allocation3 + $0x1f8] sm:$0xff]
    %v6834 = vld [vmem:[%s6] sm:$0x1]
    %v6836 = vlaneseq
    %v6837 = vshrl.u32 %v6836, 7
    %v6838 = vsub.s32 0, %v6837
    %v6839 = vrot.slane %v6834, %v6838
    %vm6841 = vcmask 64512
    %v6843 = vsel %vm6841, %v6737, 0
    %v6846 = vsel %vm6841, %v6738, 0
    %v6849 = vsel %vm6841, %v6739, 0
    %v6852 = vsel %vm6841, %v6740, 0
    %v6855 = vsel %vm6841, %v6741, 0
    %v6858 = vsel %vm6841, %v6742, 0
    %v6861 = vsel %vm6841, %v6743, 0
    %v6864 = vsel %vm6841, %v6744, 0
    %v6867 = vsel %vm6841, %v6745, 0
    %v6870 = vsel %vm6841, %v6746, 0
    %v6873 = vsel %vm6841, %v6747, 0
    %v6876 = vsel %vm6841, %v6748, 0
    %v6879 = vsel %vm6841, %v6749, 0
    %v6882 = vsel %vm6841, %v6750, 0
    %v6885 = vsel %vm6841, %v6751, 0
    %v6888 = vsel %vm6841, %v6752, 0
    %v6891 = vsel %vm6841, %v6753, 0
    %v6894 = vsel %vm6841, %v6754, 0
    %v6897 = vsel %vm6841, %v6755, 0
    %v6900 = vsel %vm6841, %v6756, 0
    %v6903 = vsel %vm6841, %v6757, 0
    %v6906 = vsel %vm6841, %v6758, 0
    %v6909 = vsel %vm6841, %v6759, 0
    %v6912 = vsel %vm6841, %v6760, 0
    %v6915 = vsel %vm6841, %v6761, 0
    %v6918 = vsel %vm6841, %v6762, 0
    %v6921 = vsel %vm6841, %v6763, 0
    %v6924 = vsel %vm6841, %v6764, 0
    %v6927 = vsel %vm6841, %v6765, 0
    %v6930 = vsel %vm6841, %v6766, 0
    %v6933 = vsel %vm6841, %v6767, 0
    %v6936 = vsel %vm6841, %v6768, 0
    %vm6938 = vcmask 1043456
    %v6940 = vsel %vm6938, %v6769, 0
    %6942 = vmatprep.subr.bf16.mxu0 0
    %6943 = vmatpush1.bf16.msra.mxu0 %v6940
    %6944 = vmatprep.subr.bf16.mxu0 0
    %6945 = vmatpush1.bf16.msra.mxu0 0
    %6946 = vmatprep.subr.bf16.mxu0 0
    %6947 = vmatpush1.bf16.msra.mxu0 0
    %6948 = vmatprep.subr.bf16.mxu0 0
    %6949 = vmatpush1.bf16.msra.mxu0 0
    %6950 = vmatprep.subr.bf16.mxu0 0
    %6951 = vmatpush1.bf16.msra.mxu0 0
    %6952 = vmatprep.subr.bf16.mxu0 0
    %6953 = vmatpush1.bf16.msra.mxu0 0
    %6954 = vmatprep.subr.bf16.mxu0 0
    %6955 = vmatpush1.bf16.msra.mxu0 0
    %6956 = vmatprep.subr.bf16.mxu0 0
    %6957 = vmatpush1.bf16.msra.mxu0 0
    %6958 = vmatprep.subr.bf16.mxu0 0
    %6959 = vmatpush1.bf16.msra.mxu0 0
    %6960 = vmatprep.subr.bf16.mxu0 0
    %6961 = vmatpush1.bf16.msra.mxu0 0
    %6962 = vmatprep.subr.bf16.mxu0 0
    %6963 = vmatpush1.bf16.msra.mxu0 0
    %6964 = vmatprep.subr.bf16.mxu0 0
    %6965 = vmatpush1.bf16.msra.mxu0 0
    %6966 = vmatprep.subr.bf16.mxu0 0
    %6967 = vmatpush1.bf16.msra.mxu0 0
    %6968 = vmatprep.subr.bf16.mxu0 0
    %6969 = vmatpush1.bf16.msra.mxu0 0
    %6970 = vmatprep.subr.bf16.mxu0 0
    %6971 = vmatpush1.bf16.msra.mxu0 0
    %6972 = vmatprep.subr.bf16.mxu0 0
    %6973 = vmatpush1.bf16.msra.mxu0 0
    %6974 = vmatprep.mubr.bf16.mxu0 0
    %6975 = vmatmul.mubr.bf16.gmra.mrb[0].mxu0 %v6843
    %v6976 = vpop.f32.mrb[0].mxu0
    %v6977 = vadd.f32 %v6839, %v6976
    %v6978 = vpop.f32.mrb[0].mxu0
    %v6979 = vpop.f32.mrb[0].mxu0
    %v6980 = vadd.f32 %v6839, %v6979
    %v6981 = vpop.f32.mrb[0].mxu0
    %6982 = vmatprep.mubr.bf16.mxu0 0
    %6983 = vmatmul.mubr.bf16.gmra.mrb[0].mxu0 %v6846
    %v6984 = vpop.f32.mrb[0].mxu0
    %v6985 = vadd.f32 %v6839, %v6984
    %v6986 = vpop.f32.mrb[0].mxu0
    %v6987 = vpop.f32.mrb[0].mxu0
    %v6988 = vadd.f32 %v6839, %v6987
    %v6989 = vpop.f32.mrb[0].mxu0
    %6990 = vmatprep.mubr.bf16.mxu0 0
    %6991 = vmatmul.mubr.bf16.gmra.mrb[0].mxu0 %v6849
    %v6992 = vpop.f32.mrb[0].mxu0
    %v6993 = vadd.f32 %v6839, %v6992
    %v6994 = vpop.f32.mrb[0].mxu0
    %v6995 = vpop.f32.mrb[0].mxu0
    %v6996 = vadd.f32 %v6839, %v6995
    %v6997 = vpop.f32.mrb[0].mxu0
    %6998 = vmatprep.mubr.bf16.mxu0 0
    %6999 = vmatmul.mubr.bf16.gmra.mrb[0].mxu0 %v6852
    %v7000 = vpop.f32.mrb[0].mxu0
    %v7001 = vadd.f32 %v6839, %v7000
    %v7002 = vpop.f32.mrb[0].mxu0
    %v7003 = vpop.f32.mrb[0].mxu0
    %v7004 = vadd.f32 %v6839, %v7003
    %v7005 = vpop.f32.mrb[0].mxu0
    %7006 = vmatprep.mubr.bf16.mxu0 0
    %7007 = vmatmul.mubr.bf16.gmra.mrb[0].mxu0 %v6855
    %v7008 = vpop.f32.mrb[0].mxu0
    %v7009 = vadd.f32 %v6839, %v7008
    %v7010 = vpop.f32.mrb[0].mxu0
    %v7011 = vpop.f32.mrb[0].mxu0
    %v7012 = vadd.f32 %v6839, %v7011
    %v7013 = vpop.f32.mrb[0].mxu0
    %7014 = vmatprep.mubr.bf16.mxu0 0
    %7015 = vmatmul.mubr.bf16.gmra.mrb[0].mxu0 %v6858
    %v7016 = vpop.f32.mrb[0].mxu0
    %v7017 = vadd.f32 %v6839, %v7016
    %v7018 = vpop.f32.mrb[0].mxu0
    %v7019 = vpop.f32.mrb[0].mxu0
    %v7020 = vadd.f32 %v6839, %v7019
    %v7021 = vpop.f32.mrb[0].mxu0
    %7022 = vmatprep.mubr.bf16.mxu0 0
    %7023 = vmatmul.mubr.bf16.gmra.mrb[0].mxu0 %v6861
    %v7024 = vpop.f32.mrb[0].mxu0
    %v7025 = vadd.f32 %v6839, %v7024
    %v7026 = vpop.f32.mrb[0].mxu0
    %v7027 = vpop.f32.mrb[0].mxu0
    %v7028 = vadd.f32 %v6839, %v7027
    %v7029 = vpop.f32.mrb[0].mxu0
    %7030 = vmatprep.mubr.bf16.mxu0 0
    %7031 = vmatmul.mubr.bf16.gmra.mrb[0].mxu0 %v6864
    %v7032 = vpop.f32.mrb[0].mxu0
    %v7033 = vadd.f32 %v6839, %v7032
    %v7034 = vpop.f32.mrb[0].mxu0
    %v7035 = vpop.f32.mrb[0].mxu0
    %v7036 = vadd.f32 %v6839, %v7035
    %v7037 = vpop.f32.mrb[0].mxu0
    %7038 = vmatprep.mubr.bf16.mxu0 0
    %7039 = vmatmul.mubr.bf16.gmra.mrb[0].mxu0 %v6867
    %v7040 = vpop.f32.mrb[0].mxu0
    %v7041 = vadd.f32 %v6839, %v7040
    %v7042 = vpop.f32.mrb[0].mxu0
    %v7043 = vpop.f32.mrb[0].mxu0
    %v7044 = vadd.f32 %v6839, %v7043
    %v7045 = vpop.f32.mrb[0].mxu0
    %7046 = vmatprep.mubr.bf16.mxu0 0
    %7047 = vmatmul.mubr.bf16.gmra.mrb[0].mxu0 %v6870
    %v7048 = vpop.f32.mrb[0].mxu0
    %v7049 = vadd.f32 %v6839, %v7048
    %v7050 = vpop.f32.mrb[0].mxu0
    %v7051 = vpop.f32.mrb[0].mxu0
    %v7052 = vadd.f32 %v6839, %v7051
    %v7053 = vpop.f32.mrb[0].mxu0
    %7054 = vmatprep.mubr.bf16.mxu0 0
    %7055 = vmatmul.mubr.bf16.gmra.mrb[0].mxu0 %v6873
    %v7056 = vpop.f32.mrb[0].mxu0
    %v7057 = vadd.f32 %v6839, %v7056
    %v7058 = vpop.f32.mrb[0].mxu0
    %v7059 = vpop.f32.mrb[0].mxu0
    %v7060 = vadd.f32 %v6839, %v7059
    %v7061 = vpop.f32.mrb[0].mxu0
    %7062 = vmatprep.mubr.bf16.mxu0 0
    %7063 = vmatmul.mubr.bf16.gmra.mrb[0].mxu0 %v6876
    %v7064 = vpop.f32.mrb[0].mxu0
    %v7065 = vadd.f32 %v6839, %v7064
    %v7066 = vpop.f32.mrb[0].mxu0
    %v7067 = vpop.f32.mrb[0].mxu0
    %v7068 = vadd.f32 %v6839, %v7067
    %v7069 = vpop.f32.mrb[0].mxu0
    %7070 = vmatprep.mubr.bf16.mxu0 0
    %7071 = vmatmul.mubr.bf16.gmra.mrb[0].mxu0 %v6879
    %v7072 = vpop.f32.mrb[0].mxu0
    %v7073 = vadd.f32 %v6839, %v7072
    %v7074 = vpop.f32.mrb[0].mxu0
    %v7075 = vpop.f32.mrb[0].mxu0
    %v7076 = vadd.f32 %v6839, %v7075
    %v7077 = vpop.f32.mrb[0].mxu0
    %7078 = vmatprep.mubr.bf16.mxu0 0
    %7079 = vmatmul.mubr.bf16.gmra.mrb[0].mxu0 %v6882
    %v7080 = vpop.f32.mrb[0].mxu0
    %v7081 = vadd.f32 %v6839, %v7080
    %v7082 = vpop.f32.mrb[0].mxu0
    %v7083 = vpop.f32.mrb[0].mxu0
    %v7084 = vadd.f32 %v6839, %v7083
    %v7085 = vpop.f32.mrb[0].mxu0
    %7086 = vmatprep.mubr.bf16.mxu0 0
    %7087 = vmatmul.mubr.bf16.gmra.mrb[0].mxu0 %v6885
    %v7088 = vpop.f32.mrb[0].mxu0
    %v7089 = vadd.f32 %v6839, %v7088
    %v7090 = vpop.f32.mrb[0].mxu0
    %v7091 = vpop.f32.mrb[0].mxu0
    %v7092 = vadd.f32 %v6839, %v7091
    %v7093 = vpop.f32.mrb[0].mxu0
    %7094 = vmatprep.mubr.bf16.mxu0 0
    %7095 = vmatmul.mubr.bf16.gmra.mrb[0].mxu0 %v6888
    %v7096 = vpop.f32.mrb[0].mxu0
    %v7097 = vadd.f32 %v6839, %v7096
    %v7098 = vpop.f32.mrb[0].mxu0
    %v7099 = vpop.f32.mrb[0].mxu0
    %v7100 = vadd.f32 %v6839, %v7099
    %v7101 = vpop.f32.mrb[0].mxu0
    %7102 = vmatprep.mubr.bf16.mxu0 0
    %7103 = vmatmul.mubr.bf16.gmra.mrb[0].mxu0 %v6891
    %v7104 = vpop.f32.mrb[0].mxu0
    %v7105 = vadd.f32 %v6839, %v7104
    %v7106 = vpop.f32.mrb[0].mxu0
    %v7107 = vpop.f32.mrb[0].mxu0
    %v7108 = vadd.f32 %v6839, %v7107
    %v7109 = vpop.f32.mrb[0].mxu0
    %7110 = vmatprep.mubr.bf16.mxu0 0
    %7111 = vmatmul.mubr.bf16.gmra.mrb[0].mxu0 %v6894
    %v7112 = vpop.f32.mrb[0].mxu0
    %v7113 = vadd.f32 %v6839, %v7112
    %v7114 = vpop.f32.mrb[0].mxu0
    %v7115 = vpop.f32.mrb[0].mxu0
    %v7116 = vadd.f32 %v6839, %v7115
    %v7117 = vpop.f32.mrb[0].mxu0
    %7118 = vmatprep.mubr.bf16.mxu0 0
    %7119 = vmatmul.mubr.bf16.gmra.mrb[0].mxu0 %v6897
    %v7120 = vpop.f32.mrb[0].mxu0
    %v7121 = vadd.f32 %v6839, %v7120
    %v7122 = vpop.f32.mrb[0].mxu0
    %v7123 = vpop.f32.mrb[0].mxu0
    %v7124 = vadd.f32 %v6839, %v7123
    %v7125 = vpop.f32.mrb[0].mxu0
    %7126 = vmatprep.mubr.bf16.mxu0 0
    %7127 = vmatmul.mubr.bf16.gmra.mrb[0].mxu0 %v6900
    %v7128 = vpop.f32.mrb[0].mxu0
    %v7129 = vadd.f32 %v6839, %v7128
    %v7130 = vpop.f32.mrb[0].mxu0
    %v7131 = vpop.f32.mrb[0].mxu0
    %v7132 = vadd.f32 %v6839, %v7131
    %v7133 = vpop.f32.mrb[0].mxu0
    %7134 = vmatprep.mubr.bf16.mxu0 0
    %7135 = vmatmul.mubr.bf16.gmra.mrb[0].mxu0 %v6903
    %v7136 = vpop.f32.mrb[0].mxu0
    %v7137 = vadd.f32 %v6839, %v7136
    %v7138 = vpop.f32.mrb[0].mxu0
    %v7139 = vpop.f32.mrb[0].mxu0
    %v7140 = vadd.f32 %v6839, %v7139
    %v7141 = vpop.f32.mrb[0].mxu0
    %7142 = vmatprep.mubr.bf16.mxu0 0
    %7143 = vmatmul.mubr.bf16.gmra.mrb[0].mxu0 %v6906
    %v7144 = vpop.f32.mrb[0].mxu0
    %v7145 = vadd.f32 %v6839, %v7144
    %v7146 = vpop.f32.mrb[0].mxu0
    %v7147 = vpop.f32.mrb[0].mxu0
    %v7148 = vadd.f32 %v6839, %v7147
    %v7149 = vpop.f32.mrb[0].mxu0
    %7150 = vmatprep.mubr.bf16.mxu0 0
    %7151 = vmatmul.mubr.bf16.gmra.mrb[0].mxu0 %v6909
    %v7152 = vpop.f32.mrb[0].mxu0
    %v7153 = vadd.f32 %v6839, %v7152
    %v7154 = vpop.f32.mrb[0].mxu0
    %v7155 = vpop.f32.mrb[0].mxu0
    %v7156 = vadd.f32 %v6839, %v7155
    %v7157 = vpop.f32.mrb[0].mxu0
    %7158 = vmatprep.mubr.bf16.mxu0 0
    %7159 = vmatmul.mubr.bf16.gmra.mrb[0].mxu0 %v6912
    %v7160 = vpop.f32.mrb[0].mxu0
    %v7161 = vadd.f32 %v6839, %v7160
    %v7162 = vpop.f32.mrb[0].mxu0
    %v7163 = vpop.f32.mrb[0].mxu0
    %v7164 = vadd.f32 %v6839, %v7163
    %v7165 = vpop.f32.mrb[0].mxu0
    %7166 = vmatprep.mubr.bf16.mxu0 0
    %7167 = vmatmul.mubr.bf16.gmra.mrb[0].mxu0 %v6915
    %v7168 = vpop.f32.mrb[0].mxu0
    %v7169 = vadd.f32 %v6839, %v7168
    %v7170 = vpop.f32.mrb[0].mxu0
    %v7171 = vpop.f32.mrb[0].mxu0
    %v7172 = vadd.f32 %v6839, %v7171
    %v7173 = vpop.f32.mrb[0].mxu0
    %7174 = vmatprep.mubr.bf16.mxu0 0
    %7175 = vmatmul.mubr.bf16.gmra.mrb[0].mxu0 %v6918
    %v7176 = vpop.f32.mrb[0].mxu0
    %v7177 = vadd.f32 %v6839, %v7176
    %v7178 = vpop.f32.mrb[0].mxu0
    %v7179 = vpop.f32.mrb[0].mxu0
    %v7180 = vadd.f32 %v6839, %v7179
    %v7181 = vpop.f32.mrb[0].mxu0
    %7182 = vmatprep.mubr.bf16.mxu0 0
    %7183 = vmatmul.mubr.bf16.gmra.mrb[0].mxu0 %v6921
    %v7184 = vpop.f32.mrb[0].mxu0
    %v7185 = vadd.f32 %v6839, %v7184
    %v7186 = vpop.f32.mrb[0].mxu0
    %v7187 = vpop.f32.mrb[0].mxu0
    %v7188 = vadd.f32 %v6839, %v7187
    %v7189 = vpop.f32.mrb[0].mxu0
    %7190 = vmatprep.mubr.bf16.mxu0 0
    %7191 = vmatmul.mubr.bf16.gmra.mrb[0].mxu0 %v6924
    %v7192 = vpop.f32.mrb[0].mxu0
    %v7193 = vadd.f32 %v6839, %v7192
    %v7194 = vpop.f32.mrb[0].mxu0
    %v7195 = vpop.f32.mrb[0].mxu0
    %v7196 = vadd.f32 %v6839, %v7195
    %v7197 = vpop.f32.mrb[0].mxu0
    %7198 = vmatprep.mubr.bf16.mxu0 0
    %7199 = vmatmul.mubr.bf16.gmra.mrb[0].mxu0 %v6927
    %v7200 = vpop.f32.mrb[0].mxu0
    %v7201 = vadd.f32 %v6839, %v7200
    %v7202 = vpop.f32.mrb[0].mxu0
    %v7203 = vpop.f32.mrb[0].mxu0
    %v7204 = vadd.f32 %v6839, %v7203
    %v7205 = vpop.f32.mrb[0].mxu0
    %7206 = vmatprep.mubr.bf16.mxu0 0
    %7207 = vmatmul.mubr.bf16.gmra.mrb[0].mxu0 %v6930
    %v7208 = vpop.f32.mrb[0].mxu0
    %v7209 = vadd.f32 %v6839, %v7208
    %v7210 = vpop.f32.mrb[0].mxu0
    %v7211 = vpop.f32.mrb[0].mxu0
    %v7212 = vadd.f32 %v6839, %v7211
    %v7213 = vpop.f32.mrb[0].mxu0
    %7214 = vmatprep.mubr.bf16.mxu0 0
    %7215 = vmatmul.mubr.bf16.gmra.mrb[0].mxu0 %v6933
    %v7216 = vpop.f32.mrb[0].mxu0
    %v7217 = vadd.f32 %v6839, %v7216
    %v7218 = vpop.f32.mrb[0].mxu0
    %v7219 = vpop.f32.mrb[0].mxu0
    %v7220 = vadd.f32 %v6839, %v7219
    %v7221 = vpop.f32.mrb[0].mxu0
    %7222 = vmatprep.mubr.bf16.mxu0 0
    %7223 = vmatmul.mubr.bf16.gmra.mrb[0].mxu0 %v6936
    %v7224 = vpop.f32.mrb[0].mxu0
    %v7225 = vadd.f32 %v6839, %v7224
    %v7226 = vpop.f32.mrb[0].mxu0
    %v7227 = vpop.f32.mrb[0].mxu0
    %v7228 = vadd.f32 %v6839, %v7227
    %v7229 = vpop.f32.mrb[0].mxu0
    %7230 = vdwg.mxu0
    %v7231 = vld [vmem:[%s7] sm:$0x1]
    %v7233 = vlaneseq
    %v7234 = vshrl.u32 %v7233, 7
    %v7235 = vsub.s32 0, %v7234
    %v7236 = vrot.slane %v7231, %v7235
    %v7238 = vmul.f32 %v6770, %v7236
    %v7239 = vmul.f32 %v6771, %v7236
    %v7240 = vmul.f32 %v6772, %v7236
    %v7241 = vmul.f32 %v6773, %v7236
    %v7242 = vmul.f32 %v6774, %v7236
    %v7243 = vmul.f32 %v6775, %v7236
    %v7244 = vmul.f32 %v6776, %v7236
    %v7245 = vmul.f32 %v6777, %v7236
    %v7246 = vmul.f32 %v6778, %v7236
    %v7247 = vmul.f32 %v6779, %v7236
    %v7248 = vmul.f32 %v6780, %v7236
    %v7249 = vmul.f32 %v6781, %v7236
    %v7250 = vmul.f32 %v6782, %v7236
    %v7251 = vmul.f32 %v6783, %v7236
    %v7252 = vmul.f32 %v6784, %v7236
    %v7253 = vmul.f32 %v6785, %v7236
    %v7254 = vmul.f32 %v6786, %v7236
    %v7255 = vmul.f32 %v6787, %v7236
    %v7256 = vmul.f32 %v6788, %v7236
    %v7257 = vmul.f32 %v6789, %v7236
    %v7258 = vmul.f32 %v6790, %v7236
    %v7259 = vmul.f32 %v6791, %v7236
    %v7260 = vmul.f32 %v6792, %v7236
    %v7261 = vmul.f32 %v6793, %v7236
    %v7262 = vmul.f32 %v6794, %v7236
    %v7263 = vmul.f32 %v6795, %v7236
    %v7264 = vmul.f32 %v6796, %v7236
    %v7265 = vmul.f32 %v6797, %v7236
    %v7266 = vmul.f32 %v6798, %v7236
    %v7267 = vmul.f32 %v6799, %v7236
    %v7268 = vmul.f32 %v6800, %v7236
    %v7269 = vmul.f32 %v6801, %v7236
    %v7270 = vmul.f32 %v6802, %v7236
    %v7271 = vmul.f32 %v6803, %v7236
    %v7272 = vmul.f32 %v6804, %v7236
    %v7273 = vmul.f32 %v6805, %v7236
    %v7274 = vmul.f32 %v6806, %v7236
    %v7275 = vmul.f32 %v6807, %v7236
    %v7276 = vmul.f32 %v6808, %v7236
    %v7277 = vmul.f32 %v6809, %v7236
    %v7278 = vmul.f32 %v6810, %v7236
    %v7279 = vmul.f32 %v6811, %v7236
    %v7280 = vmul.f32 %v6812, %v7236
    %v7281 = vmul.f32 %v6813, %v7236
    %v7282 = vmul.f32 %v6814, %v7236
    %v7283 = vmul.f32 %v6815, %v7236
    %v7284 = vmul.f32 %v6816, %v7236
    %v7285 = vmul.f32 %v6817, %v7236
    %v7286 = vmul.f32 %v6818, %v7236
    %v7287 = vmul.f32 %v6819, %v7236
    %v7288 = vmul.f32 %v6820, %v7236
    %v7289 = vmul.f32 %v6821, %v7236
    %v7290 = vmul.f32 %v6822, %v7236
    %v7291 = vmul.f32 %v6823, %v7236
    %v7292 = vmul.f32 %v6824, %v7236
    %v7293 = vmul.f32 %v6825, %v7236
    %v7294 = vmul.f32 %v6826, %v7236
    %v7295 = vmul.f32 %v6827, %v7236
    %v7296 = vmul.f32 %v6828, %v7236
    %v7297 = vmul.f32 %v6829, %v7236
    %v7298 = vmul.f32 %v6830, %v7236
    %v7299 = vmul.f32 %v6831, %v7236
    %v7300 = vmul.f32 %v6832, %v7236
    %v7301 = vmul.f32 %v6833, %v7236
    %v7302 = vadd.f32 %v6977, %v7238
    %v7303 = vadd.f32 %v6980, %v7239
    %v7304 = vadd.f32 %v6985, %v7240
    %v7305 = vadd.f32 %v6988, %v7241
    %v7306 = vadd.f32 %v6993, %v7242
    %v7307 = vadd.f32 %v6996, %v7243
    %v7308 = vadd.f32 %v7001, %v7244
    %v7309 = vadd.f32 %v7004, %v7245
    %v7310 = vadd.f32 %v7009, %v7246
    %v7311 = vadd.f32 %v7012, %v7247
    %v7312 = vadd.f32 %v7017, %v7248
    %v7313 = vadd.f32 %v7020, %v7249
    %v7314 = vadd.f32 %v7025, %v7250
    %v7315 = vadd.f32 %v7028, %v7251
    %v7316 = vadd.f32 %v7033, %v7252
    %v7317 = vadd.f32 %v7036, %v7253
    %v7318 = vadd.f32 %v7041, %v7254
    %v7319 = vadd.f32 %v7044, %v7255
    %v7320 = vadd.f32 %v7049, %v7256
    %v7321 = vadd.f32 %v7052, %v7257
    %v7322 = vadd.f32 %v7057, %v7258
    %v7323 = vadd.f32 %v7060, %v7259
    %v7324 = vadd.f32 %v7065, %v7260
    %v7325 = vadd.f32 %v7068, %v7261
    %v7326 = vadd.f32 %v7073, %v7262
    %v7327 = vadd.f32 %v7076, %v7263
    %v7328 = vadd.f32 %v7081, %v7264
    %v7329 = vadd.f32 %v7084, %v7265
    %v7330 = vadd.f32 %v7089, %v7266
    %v7331 = vadd.f32 %v7092, %v7267
    %v7332 = vadd.f32 %v7097, %v7268
    %v7333 = vadd.f32 %v7100, %v7269
    %v7334 = vadd.f32 %v7105, %v7270
    %v7335 = vadd.f32 %v7108, %v7271
    %v7336 = vadd.f32 %v7113, %v7272
    %v7337 = vadd.f32 %v7116, %v7273
    %v7338 = vadd.f32 %v7121, %v7274
    %v7339 = vadd.f32 %v7124, %v7275
    %v7340 = vadd.f32 %v7129, %v7276
    %v7341 = vadd.f32 %v7132, %v7277
    %v7342 = vadd.f32 %v7137, %v7278
    %v7343 = vadd.f32 %v7140, %v7279
    %v7344 = vadd.f32 %v7145, %v7280
    %v7345 = vadd.f32 %v7148, %v7281
    %v7346 = vadd.f32 %v7153, %v7282
    %v7347 = vadd.f32 %v7156, %v7283
    %v7348 = vadd.f32 %v7161, %v7284
    %v7349 = vadd.f32 %v7164, %v7285
    %v7350 = vadd.f32 %v7169, %v7286
    %v7351 = vadd.f32 %v7172, %v7287
    %v7352 = vadd.f32 %v7177, %v7288
    %v7353 = vadd.f32 %v7180, %v7289
    %v7354 = vadd.f32 %v7185, %v7290
    %v7355 = vadd.f32 %v7188, %v7291
    %v7356 = vadd.f32 %v7193, %v7292
    %v7357 = vadd.f32 %v7196, %v7293
    %v7358 = vadd.f32 %v7201, %v7294
    %v7359 = vadd.f32 %v7204, %v7295
    %v7360 = vadd.f32 %v7209, %v7296
    %v7361 = vadd.f32 %v7212, %v7297
    %v7362 = vadd.f32 %v7217, %v7298
    %v7363 = vadd.f32 %v7220, %v7299
    %v7364 = vadd.f32 %v7225, %v7300
    %v7365 = vadd.f32 %v7228, %v7301
    %vm7366 = vcmp.ge.f32.partialorder %v7302, 0.0
    %vm7367 = vcmp.ge.f32.partialorder %v7303, 0.0
    %vm7368 = vcmp.ge.f32.partialorder %v7304, 0.0
    %vm7369 = vcmp.ge.f32.partialorder %v7305, 0.0
    %vm7370 = vcmp.ge.f32.partialorder %v7306, 0.0
    %vm7371 = vcmp.ge.f32.partialorder %v7307, 0.0
    %vm7372 = vcmp.ge.f32.partialorder %v7308, 0.0
    %vm7373 = vcmp.ge.f32.partialorder %v7309, 0.0
    %vm7374 = vcmp.ge.f32.partialorder %v7310, 0.0
    %vm7375 = vcmp.ge.f32.partialorder %v7311, 0.0
    %vm7376 = vcmp.ge.f32.partialorder %v7312, 0.0
    %vm7377 = vcmp.ge.f32.partialorder %v7313, 0.0
    %vm7378 = vcmp.ge.f32.partialorder %v7314, 0.0
    %vm7379 = vcmp.ge.f32.partialorder %v7315, 0.0
    %vm7380 = vcmp.ge.f32.partialorder %v7316, 0.0
    %vm7381 = vcmp.ge.f32.partialorder %v7317, 0.0
    %vm7382 = vcmp.ge.f32.partialorder %v7318, 0.0
    %vm7383 = vcmp.ge.f32.partialorder %v7319, 0.0
    %vm7384 = vcmp.ge.f32.partialorder %v7320, 0.0
    %vm7385 = vcmp.ge.f32.partialorder %v7321, 0.0
    %vm7386 = vcmp.ge.f32.partialorder %v7322, 0.0
    %vm7387 = vcmp.ge.f32.partialorder %v7323, 0.0
    %vm7388 = vcmp.ge.f32.partialorder %v7324, 0.0
    %vm7389 = vcmp.ge.f32.partialorder %v7325, 0.0
    %vm7390 = vcmp.ge.f32.partialorder %v7326, 0.0
    %vm7391 = vcmp.ge.f32.partialorder %v7327, 0.0
    %vm7392 = vcmp.ge.f32.partialorder %v7328, 0.0
    %vm7393 = vcmp.ge.f32.partialorder %v7329, 0.0
    %vm7394 = vcmp.ge.f32.partialorder %v7330, 0.0
    %vm7395 = vcmp.ge.f32.partialorder %v7331, 0.0
    %vm7396 = vcmp.ge.f32.partialorder %v7332, 0.0
    %vm7397 = vcmp.ge.f32.partialorder %v7333, 0.0
    %vm7398 = vcmp.ge.f32.partialorder %v7334, 0.0
    %vm7399 = vcmp.ge.f32.partialorder %v7335, 0.0
    %vm7400 = vcmp.ge.f32.partialorder %v7336, 0.0
    %vm7401 = vcmp.ge.f32.partialorder %v7337, 0.0
    %vm7402 = vcmp.ge.f32.partialorder %v7338, 0.0
    %vm7403 = vcmp.ge.f32.partialorder %v7339, 0.0
    %vm7404 = vcmp.ge.f32.partialorder %v7340, 0.0
    %vm7405 = vcmp.ge.f32.partialorder %v7341, 0.0
    %vm7406 = vcmp.ge.f32.partialorder %v7342, 0.0
    %vm7407 = vcmp.ge.f32.partialorder %v7343, 0.0
    %vm7408 = vcmp.ge.f32.partialorder %v7344, 0.0
    %vm7409 = vcmp.ge.f32.partialorder %v7345, 0.0
    %vm7410 = vcmp.ge.f32.partialorder %v7346, 0.0
    %vm7411 = vcmp.ge.f32.partialorder %v7347, 0.0
    %vm7412 = vcmp.ge.f32.partialorder %v7348, 0.0
    %vm7413 = vcmp.ge.f32.partialorder %v7349, 0.0
    %vm7414 = vcmp.ge.f32.partialorder %v7350, 0.0
    %vm7415 = vcmp.ge.f32.partialorder %v7351, 0.0
    %vm7416 = vcmp.ge.f32.partialorder %v7352, 0.0
    %vm7417 = vcmp.ge.f32.partialorder %v7353, 0.0
    %vm7418 = vcmp.ge.f32.partialorder %v7354, 0.0
    %vm7419 = vcmp.ge.f32.partialorder %v7355, 0.0
    %vm7420 = vcmp.ge.f32.partialorder %v7356, 0.0
    %vm7421 = vcmp.ge.f32.partialorder %v7357, 0.0
    %vm7422 = vcmp.ge.f32.partialorder %v7358, 0.0
    %vm7423 = vcmp.ge.f32.partialorder %v7359, 0.0
    %vm7424 = vcmp.ge.f32.partialorder %v7360, 0.0
    %vm7425 = vcmp.ge.f32.partialorder %v7361, 0.0
    %vm7426 = vcmp.ge.f32.partialorder %v7362, 0.0
    %vm7427 = vcmp.ge.f32.partialorder %v7363, 0.0
    %vm7428 = vcmp.ge.f32.partialorder %v7364, 0.0
    %vm7429 = vcmp.ge.f32.partialorder %v7365, 0.0
    %v7430 = vmul.f32 %v7302, 0.01
    %v7431 = vmul.f32 %v7303, 0.01
    %v7432 = vmul.f32 %v7304, 0.01
    %v7433 = vmul.f32 %v7305, 0.01
    %v7434 = vmul.f32 %v7306, 0.01
    %v7435 = vmul.f32 %v7307, 0.01
    %v7436 = vmul.f32 %v7308, 0.01
    %v7437 = vmul.f32 %v7309, 0.01
    %v7438 = vmul.f32 %v7310, 0.01
    %v7439 = vmul.f32 %v7311, 0.01
    %v7440 = vmul.f32 %v7312, 0.01
    %v7441 = vmul.f32 %v7313, 0.01
    %v7442 = vmul.f32 %v7314, 0.01
    %v7443 = vmul.f32 %v7315, 0.01
    %v7444 = vmul.f32 %v7316, 0.01
    %v7445 = vmul.f32 %v7317, 0.01
    %v7446 = vmul.f32 %v7318, 0.01
    %v7447 = vmul.f32 %v7319, 0.01
    %v7448 = vmul.f32 %v7320, 0.01
    %v7449 = vmul.f32 %v7321, 0.01
    %v7450 = vmul.f32 %v7322, 0.01
    %v7451 = vmul.f32 %v7323, 0.01
    %v7452 = vmul.f32 %v7324, 0.01
    %v7453 = vmul.f32 %v7325, 0.01
    %v7454 = vmul.f32 %v7326, 0.01
    %v7455 = vmul.f32 %v7327, 0.01
    %v7456 = vmul.f32 %v7328, 0.01
    %v7457 = vmul.f32 %v7329, 0.01
    %v7458 = vmul.f32 %v7330, 0.01
    %v7459 = vmul.f32 %v7331, 0.01
    %v7460 = vmul.f32 %v7332, 0.01
    %v7461 = vmul.f32 %v7333, 0.01
    %v7462 = vmul.f32 %v7334, 0.01
    %v7463 = vmul.f32 %v7335, 0.01
    %v7464 = vmul.f32 %v7336, 0.01
    %v7465 = vmul.f32 %v7337, 0.01
    %v7466 = vmul.f32 %v7338, 0.01
    %v7467 = vmul.f32 %v7339, 0.01
    %v7468 = vmul.f32 %v7340, 0.01
    %v7469 = vmul.f32 %v7341, 0.01
    %v7470 = vmul.f32 %v7342, 0.01
    %v7471 = vmul.f32 %v7343, 0.01
    %v7472 = vmul.f32 %v7344, 0.01
    %v7473 = vmul.f32 %v7345, 0.01
    %v7474 = vmul.f32 %v7346, 0.01
    %v7475 = vmul.f32 %v7347, 0.01
    %v7476 = vmul.f32 %v7348, 0.01
    %v7477 = vmul.f32 %v7349, 0.01
    %v7478 = vmul.f32 %v7350, 0.01
    %v7479 = vmul.f32 %v7351, 0.01
    %v7480 = vmul.f32 %v7352, 0.01
    %v7481 = vmul.f32 %v7353, 0.01
    %v7482 = vmul.f32 %v7354, 0.01
    %v7483 = vmul.f32 %v7355, 0.01
    %v7484 = vmul.f32 %v7356, 0.01
    %v7485 = vmul.f32 %v7357, 0.01
    %v7486 = vmul.f32 %v7358, 0.01
    %v7487 = vmul.f32 %v7359, 0.01
    %v7488 = vmul.f32 %v7360, 0.01
    %v7489 = vmul.f32 %v7361, 0.01
    %v7490 = vmul.f32 %v7362, 0.01
    %v7491 = vmul.f32 %v7363, 0.01
    %v7492 = vmul.f32 %v7364, 0.01
    %v7493 = vmul.f32 %v7365, 0.01
    %v7494 = vsel %vm7366, %v7302, %v7430
    %v7495 = vsel %vm7367, %v7303, %v7431
    %v7496 = vsel %vm7368, %v7304, %v7432
    %v7497 = vsel %vm7369, %v7305, %v7433
    %v7498 = vsel %vm7370, %v7306, %v7434
    %v7499 = vsel %vm7371, %v7307, %v7435
    %v7500 = vsel %vm7372, %v7308, %v7436
    %v7501 = vsel %vm7373, %v7309, %v7437
    %v7502 = vsel %vm7374, %v7310, %v7438
    %v7503 = vsel %vm7375, %v7311, %v7439
    %v7504 = vsel %vm7376, %v7312, %v7440
    %v7505 = vsel %vm7377, %v7313, %v7441
    %v7506 = vsel %vm7378, %v7314, %v7442
    %v7507 = vsel %vm7379, %v7315, %v7443
    %v7508 = vsel %vm7380, %v7316, %v7444
    %v7509 = vsel %vm7381, %v7317, %v7445
    %v7510 = vsel %vm7382, %v7318, %v7446
    %v7511 = vsel %vm7383, %v7319, %v7447
    %v7512 = vsel %vm7384, %v7320, %v7448
    %v7513 = vsel %vm7385, %v7321, %v7449
    %v7514 = vsel %vm7386, %v7322, %v7450
    %v7515 = vsel %vm7387, %v7323, %v7451
    %v7516 = vsel %vm7388, %v7324, %v7452
    %v7517 = vsel %vm7389, %v7325, %v7453
    %v7518 = vsel %vm7390, %v7326, %v7454
    %v7519 = vsel %vm7391, %v7327, %v7455
    %v7520 = vsel %vm7392, %v7328, %v7456
    %v7521 = vsel %vm7393, %v7329, %v7457
    %v7522 = vsel %vm7394, %v7330, %v7458
    %v7523 = vsel %vm7395, %v7331, %v7459
    %v7524 = vsel %vm7396, %v7332, %v7460
    %v7525 = vsel %vm7397, %v7333, %v7461
    %v7526 = vsel %vm7398, %v7334, %v7462
    %v7527 = vsel %vm7399, %v7335, %v7463
    %v7528 = vsel %vm7400, %v7336, %v7464
    %v7529 = vsel %vm7401, %v7337, %v7465
    %v7530 = vsel %vm7402, %v7338, %v7466
    %v7531 = vsel %vm7403, %v7339, %v7467
    %v7532 = vsel %vm7404, %v7340, %v7468
    %v7533 = vsel %vm7405, %v7341, %v7469
    %v7534 = vsel %vm7406, %v7342, %v7470
    %v7535 = vsel %vm7407, %v7343, %v7471
    %v7536 = vsel %vm7408, %v7344, %v7472
    %v7537 = vsel %vm7409, %v7345, %v7473
    %v7538 = vsel %vm7410, %v7346, %v7474
    %v7539 = vsel %vm7411, %v7347, %v7475
    %v7540 = vsel %vm7412, %v7348, %v7476
    %v7541 = vsel %vm7413, %v7349, %v7477
    %v7542 = vsel %vm7414, %v7350, %v7478
    %v7543 = vsel %vm7415, %v7351, %v7479
    %v7544 = vsel %vm7416, %v7352, %v7480
    %v7545 = vsel %vm7417, %v7353, %v7481
    %v7546 = vsel %vm7418, %v7354, %v7482
    %v7547 = vsel %vm7419, %v7355, %v7483
    %v7548 = vsel %vm7420, %v7356, %v7484
    %v7549 = vsel %vm7421, %v7357, %v7485
    %v7550 = vsel %vm7422, %v7358, %v7486
    %v7551 = vsel %vm7423, %v7359, %v7487
    %v7552 = vsel %vm7424, %v7360, %v7488
    %v7553 = vsel %vm7425, %v7361, %v7489
    %v7554 = vsel %vm7426, %v7362, %v7490
    %v7555 = vsel %vm7427, %v7363, %v7491
    %v7556 = vsel %vm7428, %v7364, %v7492
    %v7557 = vsel %vm7429, %v7365, %v7493
    %7558 = vst [vmem:[#allocation6] sm:$0xff] %v7494
    %7559 = vst [vmem:[#allocation6 + $0x8] sm:$0xff] %v7495
    %7560 = vst [vmem:[#allocation6 + $0x10] sm:$0xff] %v7496
    %7561 = vst [vmem:[#allocation6 + $0x18] sm:$0xff] %v7497
    %7562 = vst [vmem:[#allocation6 + $0x20] sm:$0xff] %v7498
    %7563 = vst [vmem:[#allocation6 + $0x28] sm:$0xff] %v7499
    %7564 = vst [vmem:[#allocation6 + $0x30] sm:$0xff] %v7500
    %7565 = vst [vmem:[#allocation6 + $0x38] sm:$0xff] %v7501
    %7566 = vst [vmem:[#allocation6 + $0x40] sm:$0xff] %v7502
    %7567 = vst [vmem:[#allocation6 + $0x48] sm:$0xff] %v7503
    %7568 = vst [vmem:[#allocation6 + $0x50] sm:$0xff] %v7504
    %7569 = vst [vmem:[#allocation6 + $0x58] sm:$0xff] %v7505
    %7570 = vst [vmem:[#allocation6 + $0x60] sm:$0xff] %v7506
    %7571 = vst [vmem:[#allocation6 + $0x68] sm:$0xff] %v7507
    %7572 = vst [vmem:[#allocation6 + $0x70] sm:$0xff] %v7508
    %7573 = vst [vmem:[#allocation6 + $0x78] sm:$0xff] %v7509
    %7574 = vst [vmem:[#allocation6 + $0x80] sm:$0xff] %v7510
    %7575 = vst [vmem:[#allocation6 + $0x88] sm:$0xff] %v7511
    %7576 = vst [vmem:[#allocation6 + $0x90] sm:$0xff] %v7512
    %7577 = vst [vmem:[#allocation6 + $0x98] sm:$0xff] %v7513
    %7578 = vst [vmem:[#allocation6 + $0xa0] sm:$0xff] %v7514
    %7579 = vst [vmem:[#allocation6 + $0xa8] sm:$0xff] %v7515
    %7580 = vst [vmem:[#allocation6 + $0xb0] sm:$0xff] %v7516
    %7581 = vst [vmem:[#allocation6 + $0xb8] sm:$0xff] %v7517
    %7582 = vst [vmem:[#allocation6 + $0xc0] sm:$0xff] %v7518
    %7583 = vst [vmem:[#allocation6 + $0xc8] sm:$0xff] %v7519
    %7584 = vst [vmem:[#allocation6 + $0xd0] sm:$0xff] %v7520
    %7585 = vst [vmem:[#allocation6 + $0xd8] sm:$0xff] %v7521
    %7586 = vst [vmem:[#allocation6 + $0xe0] sm:$0xff] %v7522
    %7587 = vst [vmem:[#allocation6 + $0xe8] sm:$0xff] %v7523
    %7588 = vst [vmem:[#allocation6 + $0xf0] sm:$0xff] %v7524
    %7589 = vst [vmem:[#allocation6 + $0xf8] sm:$0xff] %v7525
    %7590 = vst [vmem:[#allocation6 + $0x100] sm:$0xff] %v7526
    %7591 = vst [vmem:[#allocation6 + $0x108] sm:$0xff] %v7527
    %7592 = vst [vmem:[#allocation6 + $0x110] sm:$0xff] %v7528
    %7593 = vst [vmem:[#allocation6 + $0x118] sm:$0xff] %v7529
    %7594 = vst [vmem:[#allocation6 + $0x120] sm:$0xff] %v7530
    %7595 = vst [vmem:[#allocation6 + $0x128] sm:$0xff] %v7531
    %7596 = vst [vmem:[#allocation6 + $0x130] sm:$0xff] %v7532
    %7597 = vst [vmem:[#allocation6 + $0x138] sm:$0xff] %v7533
    %7598 = vst [vmem:[#allocation6 + $0x140] sm:$0xff] %v7534
    %7599 = vst [vmem:[#allocation6 + $0x148] sm:$0xff] %v7535
    %7600 = vst [vmem:[#allocation6 + $0x150] sm:$0xff] %v7536
    %7601 = vst [vmem:[#allocation6 + $0x158] sm:$0xff] %v7537
    %7602 = vst [vmem:[#allocation6 + $0x160] sm:$0xff] %v7538
    %7603 = vst [vmem:[#allocation6 + $0x168] sm:$0xff] %v7539
    %7604 = vst [vmem:[#allocation6 + $0x170] sm:$0xff] %v7540
    %7605 = vst [vmem:[#allocation6 + $0x178] sm:$0xff] %v7541
    %7606 = vst [vmem:[#allocation6 + $0x180] sm:$0xff] %v7542
    %7607 = vst [vmem:[#allocation6 + $0x188] sm:$0xff] %v7543
    %7608 = vst [vmem:[#allocation6 + $0x190] sm:$0xff] %v7544
    %7609 = vst [vmem:[#allocation6 + $0x198] sm:$0xff] %v7545
    %7610 = vst [vmem:[#allocation6 + $0x1a0] sm:$0xff] %v7546
    %7611 = vst [vmem:[#allocation6 + $0x1a8] sm:$0xff] %v7547
    %7612 = vst [vmem:[#allocation6 + $0x1b0] sm:$0xff] %v7548
    %7613 = vst [vmem:[#allocation6 + $0x1b8] sm:$0xff] %v7549
    %7614 = vst [vmem:[#allocation6 + $0x1c0] sm:$0xff] %v7550
    %7615 = vst [vmem:[#allocation6 + $0x1c8] sm:$0xff] %v7551
    %7616 = vst [vmem:[#allocation6 + $0x1d0] sm:$0xff] %v7552
    %7617 = vst [vmem:[#allocation6 + $0x1d8] sm:$0xff] %v7553
    %7618 = vst [vmem:[#allocation6 + $0x1e0] sm:$0xff] %v7554
    %7619 = vst [vmem:[#allocation6 + $0x1e8] sm:$0xff] %v7555
    %7620 = vst [vmem:[#allocation6 + $0x1f0] sm:$0xff] %v7556
    %7621 = vst [vmem:[#allocation6 + $0x1f8] sm:$0xff] %v7557
    // Predicated region
    $region38: #{res_block_forward_nhwc.1} parent=1 // pred_check
      _
    $region39: #{res_block_forward_nhwc.1} parent=1 // pred_check_branch
      %7623 = sbr.rel (0) target = $region41
    $region40: #{res_block_forward_nhwc.1} parent=1 // pred_region
      %s7625 = ssub.s32 8192, 8192
      %7626 = vsyncadd [#allocation5], %s7625
      %s7627 = sshll.u32 [#allocation6], 4
      %s7628 = int_to_ptr.vmem [resolvable:$true] %s7627
      %7633 = dma.vmem_to_hbm [thread:$0]  %s7628, 8192, %s8, [#allocation5], 128, 128, 8
    $region41: #{res_block_forward_nhwc.1} parent=1 // pred_fallthru
      _
    // Predicated region
    $region42: #{res_block_forward_nhwc.1} parent=1 // pred_check
      _
    $region43: #{res_block_forward_nhwc.1} parent=1 // pred_check_branch
      %7635 = sbr.rel (0) target = $region45
    $region44: #{res_block_forward_nhwc.1} parent=1 // pred_region
      %7636 = dma.done [#allocation5], 8192
    $region45: #{res_block_forward_nhwc.1} parent=1 // pred_fallthru
      _
    %7637 = vsyncpa [#allocation4], 1
    %7638 = vsyncpa [#allocation5], 1

</llo_original>
